<compile_context>
chip_gen: v6e
topology: v6e:2x2x1
jax: 0.10.0
libtpu: 0.0.40
codegen_flags: <defaults>
</compile_context>

<pallas_src>
import functools

import jax
import jax.numpy as jnp
from jax import lax
from jax.experimental import pallas as pl
from jax.experimental.pallas import tpu as pltpu

BN_EPS = 1e-5
TM_MAX = 1024          # max rows of a Pallas GEMM output tile (v7x review item)


def _cdiv(a, b):
    return -(-a // b)


def _choose_tm(m, tm_max=TM_MAX, min_blocks=2):
    """Largest M-tile <= tm_max that is a multiple of 8, divides M exactly and
    yields >= min_blocks blocks (so the 'parallel' M axis can split across the
    two v7x TensorCores).  Falls back gracefully if M has no such divisor."""
    nb = max(min_blocks, _cdiv(m, tm_max))
    for n in range(nb, m + 1):
        if m % n == 0 and (m // n) % 8 == 0:
            return m // n
    if m <= tm_max:
        return m                       # single full block (exempt from 8-row rule)
    return _cdiv(_cdiv(m, nb), 8) * 8  # masked last block


# ----------------------------------------------------------------------------
# Pallas kernel: single-K-step fused GEMM
#   bf16 operands on the MXU, f32 accumulation in registers, folded
#   BatchNorm/bias scale-shift (+ optional ReLU), one bf16 store per tile.
# ----------------------------------------------------------------------------
def _gemm_bn_act_kernel(x_ref, w_ref, s_ref, b_ref, o_ref, *, relu):
    acc = jnp.dot(x_ref[...], w_ref[...], preferred_element_type=jnp.float32)
    y = acc * s_ref[...] + b_ref[...]
    if relu:
        y = jnp.maximum(y, 0.0)
    o_ref[...] = y.astype(o_ref.dtype)


def fused_gemm(x, g, relu=True, out_dtype=jnp.bfloat16):
    """out = (maybe ReLU)((x @ W) * scale + shift).  x/W bf16, out bf16.

    K and N are always a single (full-dim) block here (K <= 384, N <= 384), so
    there are no runtime pads, no accumulation scratch and no pl.when phases;
    only M is tiled (and marked "parallel" for megacore)."""
    m, k = x.shape
    w, s, b = g['w'], g['scale'], g['shift']
    kw_, n = w.shape
    assert kw_ == k, (kw_, k)
    tm = _choose_tm(m)
    grid = (_cdiv(m, tm),)
    return pl.pallas_call(
        functools.partial(_gemm_bn_act_kernel, relu=relu),
        out_shape=jax.ShapeDtypeStruct((m, n), out_dtype),
        grid_spec=pltpu.PrefetchScalarGridSpec(
            num_scalar_prefetch=0,
            grid=grid,
            in_specs=[
                pl.BlockSpec((tm, k), lambda i: (i, 0)),   # activation rows
                pl.BlockSpec((k, n), lambda i: (0, 0)),    # whole weight
                pl.BlockSpec((1, n), lambda i: (0, 0)),    # folded BN scale
                pl.BlockSpec((1, n), lambda i: (0, 0)),    # folded BN shift/bias
            ],
            out_specs=pl.BlockSpec((tm, n), lambda i: (i, 0)),
        ),
        compiler_params=pltpu.CompilerParams(
            dimension_semantics=("parallel",)),
    )(x.astype(jnp.bfloat16), w, s, b)


# ----------------------------------------------------------------------------
# One-time parameter packing (outside jit): BN folds, layout transforms, bf16.
# ----------------------------------------------------------------------------
def _fold_bn(bias, bn):
    bias = bias.astype(jnp.float32)
    if bn is None:
        return jnp.ones_like(bias), bias
    gamma, beta, mean, var = [t.astype(jnp.float32) for t in bn]
    scale = gamma / jnp.sqrt(var + BN_EPS)
    shift = beta + scale * (bias - mean)
    return scale, shift


def _pack_gemm_conv(W, bias, bn):
    # conv weight (Cout,Cin,kh,kw) -> GEMM weight (kh*kw*Cin, Cout), tap-major
    cout, cin, kh, kw = W.shape
    scale, shift = _fold_bn(bias, bn)
    w2d = W.transpose(2, 3, 1, 0).reshape(kh * kw * cin, cout)
    return dict(w=w2d.astype(jnp.bfloat16),
                scale=scale.reshape(1, cout),
                shift=shift.reshape(1, cout))


def _pack_gemm_convT_s4(Wt):
    # tap GEMM of the stride-4 transposed conv; bias+ReLU applied after col2im
    cin, cout, kh, kw = Wt.shape
    n = kh * kw * cout
    w2d = Wt.transpose(0, 2, 3, 1).reshape(cin, n)   # (Cin, (ti,tj,Cout))
    return dict(w=w2d.astype(jnp.bfloat16),
                scale=jnp.ones((1, n), jnp.float32),
                shift=jnp.zeros((1, n), jnp.float32))


def _pack_xla_conv(W, bias, bn):
    scale, shift = _fold_bn(bias, bn)
    return dict(w=W.transpose(2, 3, 1, 0).astype(jnp.bfloat16),   # HWIO
                scale=scale, shift=shift)


def _pack_xla_convT_s1(Wt, bias, bn):
    # stride-1 transposed conv == conv with spatially flipped, channel-swapped
    # kernel and padding k-1-p
    scale, shift = _fold_bn(bias, bn)
    w = jnp.flip(Wt, axis=(2, 3)).transpose(2, 3, 0, 1)           # HWIO
    return dict(w=w.astype(jnp.bfloat16), scale=scale, shift=shift)


def _nchw_to_nhwc_perm(c, h, w):
    # flat_nhwc[p] == flat_nchw[perm[p]]
    return jnp.arange(c * h * w).reshape(c, h, w).transpose(1, 2, 0).reshape(-1)


def _pack_linear_en(W, bias, bn, perm):
    # latent = flat_nhwc @ wt ; columns permuted so NHWC flatten matches PyTorch
    scale, shift = _fold_bn(bias, bn)
    return dict(wt=W[:, perm].T.astype(jnp.bfloat16), scale=scale, shift=shift)


def _pack_linear_de(W, bias, bn, perm):
    # output features permuted so the reshape to (B,13,13,256) is NHWC
    scale, shift = _fold_bn(bias, bn)
    return dict(wt=W[perm, :].T.astype(jnp.bfloat16),
                scale=scale[perm], shift=shift[perm])


def pack_params(p):
    q = {}
    q['enc1'] = _pack_gemm_conv(p['enc1_W'], p['enc1_b'], p['bn1'])
    q['enc2'] = _pack_xla_conv(p['enc2_W'], p['enc2_b'], p['bn2'])
    q['enc3'] = _pack_xla_conv(p['enc3_W'], p['enc3_b'], p['bn3'])
    q['enc4'] = _pack_xla_conv(p['enc4_W'], p['enc4_b'], p['bn4'])
    perm = _nchw_to_nhwc_perm(256, 13, 13)
    q['lin_en'] = _pack_linear_en(p['lin_en_W'], p['lin_en_b'], p['bn_en'], perm)
    q['lin_de'] = _pack_linear_de(p['lin_de_W'], p['lin_de_b'], p['bn_de'], perm)
    q['dec4'] = _pack_xla_convT_s1(p['dec4_W'], p['dec4_b'], p['dbn4'])
    q['dec3'] = _pack_xla_convT_s1(p['dec3_W'], p['dec3_b'], p['dbn3'])
    q['dec2'] = _pack_xla_convT_s1(p['dec2_W'], p['dec2_b'], p['dbn2'])
    q['dec1'] = _pack_gemm_convT_s4(p['dec1_W'])
    q['dec1_b'] = p['dec1_b'].astype(jnp.float32)
    return q


# ----------------------------------------------------------------------------
# Layers (all NHWC)
# ----------------------------------------------------------------------------
def _im2col_nhwc(x, kh, kw, stride, pad):
    """Materialized im2col — only used for encoder1 (11x11/stride-4), where the
    patch matrix is ~4.6 MB.  Feature order: (tap_row, tap_col, channel)."""
    b, h, w, c = x.shape
    ho = (h + 2 * pad - kh) // stride + 1
    wo = (w + 2 * pad - kw) // stride + 1
    xp = jnp.pad(x, ((0, 0), (pad, pad), (pad, pad), (0, 0)))
    cols = []
    for i in range(kh):
        for j in range(kw):
            cols.append(xp[:, i:i + stride * (ho - 1) + 1:stride,
                              j:j + stride * (wo - 1) + 1:stride, :])
    patches = jnp.concatenate(cols, axis=-1)               # (B, Ho, Wo, kh*kw*C)
    return patches.reshape(b * ho * wo, kh * kw * c), ho, wo


def conv1_pallas(x, g, cout=64, k=11, stride=4, pad=2):
    b = x.shape[0]
    patches, ho, wo = _im2col_nhwc(x, k, k, stride, pad)
    out = fused_gemm(patches, g, relu=True)                 # (B*Ho*Wo, 64) bf16
    return out.reshape(b, ho, wo, cout)                     # free NHWC reshape


def conv_bn_relu_xla(x, g, stride, pad):
    """Small stride-1 3x3/5x5 layers: lax.conv (review-sanctioned) with the
    folded BN scale/shift + ReLU epilogue fused by XLA.  bf16 in/out."""
    y = lax.conv_general_dilated(
        x, g['w'],
        window_strides=(stride, stride),
        padding=((pad, pad), (pad, pad)),
        dimension_numbers=('NHWC', 'HWIO', 'NHWC'),
        preferred_element_type=jnp.float32)
    return jnp.maximum(y * g['scale'] + g['shift'], 0.0).astype(jnp.bfloat16)


def convT_s4_pallas(x, g, bias, cout=3, k=11, stride=4, pad=2):
    """Decoder1 (11x11 / stride-4 transposed conv): Pallas tap-GEMM
    (M=B*H*W, K=Cin, N=k*k*Cout, bf16 out) + channel-last, phase-decomposed
    col2im (s*s phases of shift-adds, f32 accumulation), then bias + ReLU."""
    b, h, w, cin = x.shape
    s = stride
    z = fused_gemm(x.reshape(b * h * w, cin), g, relu=False)    # (M, 363) bf16
    z = z.reshape(b, h, w, k, k, cout)                          # (..., ti, tj, C)

    npt = _cdiv(k, s)
    hs, ws = h + npt - 1, w + npt - 1
    phase_rows = []
    for pi in range(s):
        row = []
        for pj in range(s):
            acc = jnp.zeros((b, hs, ws, cout), jnp.float32)
            for mi in range(_cdiv(k - pi, s)):
                for mj in range(_cdiv(k - pj, s)):
                    tap = z[:, :, :, pi + s * mi, pj + s * mj, :]
                    acc = acc + jnp.pad(tap.astype(jnp.float32),
                                        ((0, 0), (mi, hs - h - mi),
                                         (mj, ws - w - mj), (0, 0)))
            row.append(acc)
        phase_rows.append(jnp.stack(row))
    ph = jnp.stack(phase_rows)                                  # (s,s,B,Hs,Ws,C)
    yf = ph.transpose(2, 3, 0, 4, 1, 5).reshape(b, s * hs, s * ws, cout)
    hout = (h - 1) * s + k - 2 * pad
    wout = (w - 1) * s + k - 2 * pad
    y = yf[:, pad:pad + hout, pad:pad + wout, :]
    return jnp.maximum(y + bias, 0.0)                           # (B,227,227,3) f32


def maxpool_with_indices(x, k=3, s=2):
    # TODO(synk): index tie-breaking follows jnp.argmax (first max), which may
    # differ from PyTorch on exact ties; pooled values are identical.
    b, h, w, c = x.shape
    ho = (h - k) // s + 1
    wo = (w - k) // s + 1
    wins = []
    for i in range(k):
        for j in range(k):
            wins.append(x[:, i:i + s * (ho - 1) + 1:s, j:j + s * (wo - 1) + 1:s, :])
    stacked = jnp.stack(wins, axis=0)                 # (k*k, B, Ho, Wo, C)
    val = jnp.max(stacked, axis=0)
    arg = jnp.argmax(stacked, axis=0)
    ki, kj = arg // k, arg % k
    rows = s * jnp.arange(ho).reshape(1, ho, 1, 1) + ki
    cols = s * jnp.arange(wo).reshape(1, 1, wo, 1) + kj
    idx = rows * w + cols                             # flat H*W index per (b, c)
    return val, idx.astype(jnp.int32)


def max_unpool(vals, idx, out_h, out_w):
    b, ho, wo, c = vals.shape
    v = vals.reshape(b, ho * wo, c)
    i = idx.reshape(b, ho * wo, c)
    out = jnp.zeros((b, out_h * out_w, c), vals.dtype)
    bi = jnp.arange(b)[:, None, None]
    ci = jnp.arange(c)[None, None, :]
    out = out.at[bi, i, ci].set(v)
    return out.reshape(b, out_h, out_w, c)


def linear_bn_relu(x, g):
    # M=2 FC layers: pure weight-streaming -> XLA dot with bf16 weights
    y = jnp.dot(x.astype(jnp.bfloat16), g['wt'], preferred_element_type=jnp.float32)
    return jnp.maximum(y * g['scale'] + g['shift'], 0.0)


# ----------------------------------------------------------------------------
# Forward pass (encoder_mode=False, gray=False, latent_dim=16, input 227x227)
# ----------------------------------------------------------------------------
def forward(packed, x):
    q = packed
    x = x.transpose(0, 2, 3, 1).astype(jnp.bfloat16)            # NCHW -> NHWC once

    x = conv1_pallas(x, q['enc1'])                              # (B,56,56,64)
    x, idx1 = maxpool_with_indices(x)                           # (B,27,27,64)
    x = conv_bn_relu_xla(x, q['enc2'], stride=1, pad=2)         # (B,27,27,192)
    x, idx2 = maxpool_with_indices(x)                           # (B,13,13,192)
    x = conv_bn_relu_xla(x, q['enc3'], stride=1, pad=1)         # (B,13,13,384)
    x = conv_bn_relu_xla(x, q['enc4'], stride=1, pad=1)         # (B,13,13,256)

    b, eh, ew, ec = x.shape
    latent = linear_bn_relu(x.reshape(b, -1), q['lin_en'])      # (B,16) f32

    y = linear_bn_relu(latent, q['lin_de'])                     # (B,43264) f32
    y = y.reshape(b, eh, ew, ec).astype(jnp.bfloat16)           # NHWC features
    # stride-1 transposed convs run as convs with flipped kernels, pad = k-1-p
    y = conv_bn_relu_xla(y, q['dec4'], stride=1, pad=1)         # (B,13,13,384)
    y = conv_bn_relu_xla(y, q['dec3'], stride=1, pad=1)         # (B,13,13,192)
    y = max_unpool(y, idx2, 27, 27)                             # (B,27,27,192)
    y = conv_bn_relu_xla(y, q['dec2'], stride=1, pad=2)         # (B,27,27,64)
    y = max_unpool(y, idx1, 56, 56)                             # (B,56,56,64)
    y = convT_s4_pallas(y, q['dec1'], q['dec1_b'])              # (B,227,227,3) f32

    return y.transpose(0, 3, 1, 2), latent                      # back to NCHW


# ----------------------------------------------------------------------------
# Deterministic parameter init (BN in inference mode: mean=0, var=1, g=1, b=0)
# ----------------------------------------------------------------------------
def init_params(key):
    ks = iter(jax.random.split(key, 32))

    def conv(cout, cin, k):
        fan = cin * k * k
        W = jax.random.normal(next(ks), (cout, cin, k, k), jnp.float32) / jnp.sqrt(fan)
        b = jax.random.normal(next(ks), (cout,), jnp.float32) * 0.01
        return W, b

    def convT(cin, cout, k):
        fan = cin * k * k
        W = jax.random.normal(next(ks), (cin, cout, k, k), jnp.float32) / jnp.sqrt(fan)
        b = jax.random.normal(next(ks), (cout,), jnp.float32) * 0.01
        return W, b

    def linear(nout, nin):
        W = jax.random.normal(next(ks), (nout, nin), jnp.float32) / jnp.sqrt(nin)
        b = jax.random.normal(next(ks), (nout,), jnp.float32) * 0.01
        return W, b

    def bn(n):
        return (jnp.ones((n,), jnp.float32), jnp.zeros((n,), jnp.float32),
                jnp.zeros((n,), jnp.float32), jnp.ones((n,), jnp.float32))

    flat = 256 * 13 * 13  # 43264
    p = {}
    p['enc1_W'], p['enc1_b'] = conv(64, 3, 11);   p['bn1'] = bn(64)
    p['enc2_W'], p['enc2_b'] = conv(192, 64, 5);  p['bn2'] = bn(192)
    p['enc3_W'], p['enc3_b'] = conv(384, 192, 3); p['bn3'] = bn(384)
    p['enc4_W'], p['enc4_b'] = conv(256, 384, 3); p['bn4'] = bn(256)
    p['lin_en_W'], p['lin_en_b'] = linear(16, flat);  p['bn_en'] = bn(16)
    p['lin_de_W'], p['lin_de_b'] = linear(flat, 16);  p['bn_de'] = bn(flat)
    p['dec4_W'], p['dec4_b'] = convT(256, 384, 3);  p['dbn4'] = bn(384)
    p['dec3_W'], p['dec3_b'] = convT(384, 192, 3);  p['dbn3'] = bn(192)
    p['dec2_W'], p['dec2_b'] = convT(192, 64, 5);   p['dbn2'] = bn(64)
    p['dec1_W'], p['dec1_b'] = convT(64, 3, 11)     # no BN on decoder1
    return p


if __name__ == "__main__":
    key = jax.random.PRNGKey(0)
    kp, kx = jax.random.split(key)
    params = init_params(kp)
    packed = pack_params(params)          # one-time weight packing, outside jit
    # batch=2, 3 channels, 227x227 — the spatial size the forward pass implies
    # (the hardcoded unpool output_size=(56,56) requires 227x227 input).
    x = jax.random.normal(kx, (2, 3, 227, 227), jnp.float32)

    fwd = jax.jit(forward)
    recon, latent = fwd(packed, x)
    jax.block_until_ready((recon, latent))

    assert recon.shape == (2, 3, 227, 227), recon.shape
    assert latent.shape == (2, 16), latent.shape
    assert bool(jnp.all(jnp.isfinite(recon))) and bool(jnp.all(jnp.isfinite(latent)))
    print("KERNEL_OK")
</pallas_src>

<mosaic_0001>
module attributes {stable_mosaic.version = 11 : i64} {
  func.func @_gemm_bn_act_kernel(%arg0: i32, %arg1: memref<896x363xbf16, #tpu.memory_space<vmem>>, %arg2: memref<363x64xbf16, #tpu.memory_space<vmem>>, %arg3: memref<1x64xf32, #tpu.memory_space<vmem>>, %arg4: memref<1x64xf32, #tpu.memory_space<vmem>>, %arg5: memref<896x64xbf16, #tpu.memory_space<vmem>>) attributes {dimension_semantics = [#tpu.dimension_semantics<parallel>], iteration_bounds = array<i64: 7>, scalar_prefetch = 0 : i64, scratch_operands = 0 : i64, tpu.core_type = #tpu.core_type<tc>, window_params = [{transform_indices = @transform_0, window_bounds = array<i64: 896, 363>}, {pipeline_mode = #tpu.pipeline_mode<synchronous>, transform_indices = @transform_1, window_bounds = array<i64: 363, 64>}, {pipeline_mode = #tpu.pipeline_mode<synchronous>, transform_indices = @transform_2, window_bounds = array<i64: 1, 64>}, {pipeline_mode = #tpu.pipeline_mode<synchronous>, transform_indices = @transform_3, window_bounds = array<i64: 1, 64>}, {transform_indices = @transform_4, window_bounds = array<i64: 896, 64>}]} {
    %c0 = arith.constant 0 : index
    %c0_0 = arith.constant 0 : index
    %0 = vector.load %arg1[%c0, %c0_0] : memref<896x363xbf16, #tpu.memory_space<vmem>>, vector<896x363xbf16>
    %c0_1 = arith.constant 0 : index
    %c0_2 = arith.constant 0 : index
    %1 = vector.load %arg2[%c0_1, %c0_2] : memref<363x64xbf16, #tpu.memory_space<vmem>>, vector<363x64xbf16>
    %cst = arith.constant dense<0.000000e+00> : vector<896x64xf32>
    %2 = tpu.matmul %0, %1, %cst {dimension_numbers = #tpu.dot_dimension_numbers<[1], [0], [0], [1], [0, 0, 1, 1], [], []>} : vector<896x363xbf16>, vector<363x64xbf16>, vector<896x64xf32> -> vector<896x64xf32>
    %c0_3 = arith.constant 0 : index
    %c0_4 = arith.constant 0 : index
    %3 = vector.load %arg3[%c0_3, %c0_4] : memref<1x64xf32, #tpu.memory_space<vmem>>, vector<1x64xf32>
    %4 = vector.broadcast %3 : vector<1x64xf32> to vector<896x64xf32>
    %5 = arith.mulf %2, %4 : vector<896x64xf32>
    %c0_5 = arith.constant 0 : index
    %c0_6 = arith.constant 0 : index
    %6 = vector.load %arg4[%c0_5, %c0_6] : memref<1x64xf32, #tpu.memory_space<vmem>>, vector<1x64xf32>
    %7 = vector.broadcast %6 : vector<1x64xf32> to vector<896x64xf32>
    %8 = arith.addf %5, %7 : vector<896x64xf32>
    %cst_7 = arith.constant 0.000000e+00 : f32
    %9 = vector.broadcast %cst_7 : f32 to vector<896x64xf32>
    %10 = arith.maximumf %8, %9 : vector<896x64xf32>
    %11 = arith.truncf %10 : vector<896x64xf32> to vector<896x64xbf16>
    %c0_8 = arith.constant 0 : index
    %c0_9 = arith.constant 0 : index
    %12 = vector.load %arg5[%c0_8, %c0_9] : memref<896x64xbf16, #tpu.memory_space<vmem>>, vector<896x64xbf16>
    tpu.vector_store %arg5[%c0_8, %c0_9], %11 {strides = array<i32>} : memref<896x64xbf16, #tpu.memory_space<vmem>>, vector<896x64xbf16>,
    return
  }
  func.func @transform_0(%arg0: i32) -> (i32, i32) {
    %c0_i32 = arith.constant 0 : i32
    %c0_i32_0 = arith.constant 0 : i32
    return %arg0, %c0_i32 : i32, i32
  }
  func.func @transform_1(%arg0: i32) -> (i32, i32) {
    %c0_i32 = arith.constant 0 : i32
    %c0_i32_0 = arith.constant 0 : i32
    %c0_i32_1 = arith.constant 0 : i32
    return %c0_i32, %c0_i32_0 : i32, i32
  }
  func.func @transform_2(%arg0: i32) -> (i32, i32) {
    %c0_i32 = arith.constant 0 : i32
    %c0_i32_0 = arith.constant 0 : i32
    %c0_i32_1 = arith.constant 0 : i32
    return %c0_i32, %c0_i32_0 : i32, i32
  }
  func.func @transform_3(%arg0: i32) -> (i32, i32) {
    %c0_i32 = arith.constant 0 : i32
    %c0_i32_0 = arith.constant 0 : i32
    %c0_i32_1 = arith.constant 0 : i32
    return %c0_i32, %c0_i32_0 : i32, i32
  }
  func.func @transform_4(%arg0: i32) -> (i32, i32) {
    %c0_i32 = arith.constant 0 : i32
    %c0_i32_0 = arith.constant 0 : i32
    return %arg0, %c0_i32 : i32, i32
  }
}

module attributes {stable_mosaic.version = 11 : i64} {
  func.func @_gemm_bn_act_kernel(%arg0: i32, %arg1: memref<896x64xbf16, #tpu.memory_space<vmem>>, %arg2: memref<64x363xbf16, #tpu.memory_space<vmem>>, %arg3: memref<1x363xf32, #tpu.memory_space<vmem>>, %arg4: memref<1x363xf32, #tpu.memory_space<vmem>>, %arg5: memref<896x363xbf16, #tpu.memory_space<vmem>>) attributes {dimension_semantics = [#tpu.dimension_semantics<parallel>], iteration_bounds = array<i64: 7>, scalar_prefetch = 0 : i64, scratch_operands = 0 : i64, tpu.core_type = #tpu.core_type<tc>, window_params = [{transform_indices = @transform_0, window_bounds = array<i64: 896, 64>}, {pipeline_mode = #tpu.pipeline_mode<synchronous>, transform_indices = @transform_1, window_bounds = array<i64: 64, 363>}, {pipeline_mode = #tpu.pipeline_mode<synchronous>, transform_indices = @transform_2, window_bounds = array<i64: 1, 363>}, {pipeline_mode = #tpu.pipeline_mode<synchronous>, transform_indices = @transform_3, window_bounds = array<i64: 1, 363>}, {transform_indices = @transform_4, window_bounds = array<i64: 896, 363>}]} {
    %c0 = arith.constant 0 : index
    %c0_0 = arith.constant 0 : index
    %0 = vector.load %arg1[%c0, %c0_0] : memref<896x64xbf16, #tpu.memory_space<vmem>>, vector<896x64xbf16>
    %c0_1 = arith.constant 0 : index
    %c0_2 = arith.constant 0 : index
    %1 = vector.load %arg2[%c0_1, %c0_2] : memref<64x363xbf16, #tpu.memory_space<vmem>>, vector<64x363xbf16>
    %cst = arith.constant dense<0.000000e+00> : vector<896x363xf32>
    %2 = tpu.matmul %0, %1, %cst {dimension_numbers = #tpu.dot_dimension_numbers<[1], [0], [0], [1], [0, 0, 1, 1], [], []>} : vector<896x64xbf16>, vector<64x363xbf16>, vector<896x363xf32> -> vector<896x363xf32>
    %c0_3 = arith.constant 0 : index
    %c0_4 = arith.constant 0 : index
    %3 = vector.load %arg3[%c0_3, %c0_4] : memref<1x363xf32, #tpu.memory_space<vmem>>, vector<1x363xf32>
    %4 = vector.broadcast %3 : vector<1x363xf32> to vector<896x363xf32>
    %5 = arith.mulf %2, %4 : vector<896x363xf32>
    %c0_5 = arith.constant 0 : index
    %c0_6 = arith.constant 0 : index
    %6 = vector.load %arg4[%c0_5, %c0_6] : memref<1x363xf32, #tpu.memory_space<vmem>>, vector<1x363xf32>
    %7 = vector.broadcast %6 : vector<1x363xf32> to vector<896x363xf32>
    %8 = arith.addf %5, %7 : vector<896x363xf32>
    %9 = arith.truncf %8 : vector<896x363xf32> to vector<896x363xbf16>
    %c0_7 = arith.constant 0 : index
    %c0_8 = arith.constant 0 : index
    %10 = vector.load %arg5[%c0_7, %c0_8] : memref<896x363xbf16, #tpu.memory_space<vmem>>, vector<896x363xbf16>
    tpu.vector_store %arg5[%c0_7, %c0_8], %9 {strides = array<i32>} : memref<896x363xbf16, #tpu.memory_space<vmem>>, vector<896x363xbf16>,
    return
  }
  func.func @transform_0(%arg0: i32) -> (i32, i32) {
    %c0_i32 = arith.constant 0 : i32
    %c0_i32_0 = arith.constant 0 : i32
    return %arg0, %c0_i32 : i32, i32
  }
  func.func @transform_1(%arg0: i32) -> (i32, i32) {
    %c0_i32 = arith.constant 0 : i32
    %c0_i32_0 = arith.constant 0 : i32
    %c0_i32_1 = arith.constant 0 : i32
    return %c0_i32, %c0_i32_0 : i32, i32
  }
  func.func @transform_2(%arg0: i32) -> (i32, i32) {
    %c0_i32 = arith.constant 0 : i32
    %c0_i32_0 = arith.constant 0 : i32
    %c0_i32_1 = arith.constant 0 : i32
    return %c0_i32, %c0_i32_0 : i32, i32
  }
  func.func @transform_3(%arg0: i32) -> (i32, i32) {
    %c0_i32 = arith.constant 0 : i32
    %c0_i32_0 = arith.constant 0 : i32
    %c0_i32_1 = arith.constant 0 : i32
    return %c0_i32, %c0_i32_0 : i32, i32
  }
  func.func @transform_4(%arg0: i32) -> (i32, i32) {
    %c0_i32 = arith.constant 0 : i32
    %c0_i32_0 = arith.constant 0 : i32
    return %arg0, %c0_i32 : i32, i32
  }
}

</mosaic_0001>

<llo_original>
// kernel: forward.2
$region0: #{forward.2}
  #allocation0 [shape = 'u32[]', space=smem, size = 0x4, offset = 0x4, fixed_abs, tag = 'smem constant byte address 0x4 - core index']
  #allocation1 [shape = 'u32[144,128]{1,0:T(1,128)}', space=vmem, size = 0x12000, scoped, tag = 'internal scratch']
  %s0 = inlined_call_operand.vmem [shape: bf16[6272,363], index: 0, kind: input, shape index: {}]
  %s1 = inlined_call_operand.vmem [shape: bf16[363,64], index: 1, kind: input, shape index: {}]
  %s2 = inlined_call_operand.vmem [shape: f32[1,64], index: 2, kind: input, shape index: {}]
  %s3 = inlined_call_operand.vmem [shape: f32[1,64], index: 3, kind: input, shape index: {}]
  %s4 = inlined_call_operand.vmem [shape: bf16[6272,64], index: 4, kind: output, shape index: {}]
  %s5 = sld [smem:[#allocation0]]
  $region49: #{forward.2} parent=0
    _
  %s7 = ssub.s32 1, %s5
  %s8 = scalar_select 0, %s7, %s5
  loop: start=0, step=1, limit=9
  $region2: #{forward.2} parent=0 // loop_pre_header
    _
  $region3: #{forward.2} parent=0 // loop_header
    %s10 = sphi 0, %s14
    %p11 = scmp.ge.s32.totalorder %s10, 9
    %s20 = sphi 0, %s22
    %s23 = sphi 0, %s20
    %s24 = sphi 0, %s23
    %s40 = sphi 0, %s24
    %s44 = sphi 0, %s44
    %s46 = sphi 0, %s44
    %s47 = sphi 0, %s46
    %s61 = sphi 0, %s47
    %s65 = sphi 0, %s65
    %s67 = sphi 0, %s65
    %s68 = sphi 0, %s67
    %s82 = sphi 0, %s68
    %s86 = sphi 0, %s86
    %s88 = sphi 0, %s86
    %s89 = sphi 0, %s88
    %s103 = sphi 0, %s89
    %s109 = sphi 0, %s111
    %s112 = sphi 0, %s109
    %s113 = sphi 0, %s112
    %s129 = sphi 0, %s113
  $region4: #{forward.2} parent=0 // loop_header_branch
    %13 = sbr.rel (%p11) target = $region8
  $region5: #{forward.2} parent=0 // loop_body
    %s15 = ssub.s32 %s10, 1
    %s16 = ssub.s32 %s10, 2
    %s17 = sadd.s32 %s10, 1
    %s18 = ssub.s32 %s10, %s17
    %p19 = scmp.eq.s32.totalorder %s18, 0
    %s21 = sadd.s32 %s20, 1
    %s22 = scalar_select %p19, %s20, %s21
    %p25 = pneg %p19
    %p26 = scmp.eq.s32.totalorder %s10, 6
    %p27 = por %p25, %p26
    %p28 = scmp.ne.s32.totalorder %s20, %s23
    %p29 = scmp.eq.s32.totalorder %s10, 0
    %p30 = por %p28, %p29
    %p31 = scmp.ne.s32.totalorder %s20, %s23
    %p32 = scmp.eq.s32.totalorder %s15, 6
    %p33 = por %p31, %p32
    %p34 = scmp.ne.s32.totalorder %s23, %s24
    %p35 = scmp.eq.s32.totalorder %s15, 0
    %p36 = por %p34, %p35
    %p37 = scmp.ne.s32.totalorder %s23, %s24
    %p38 = scmp.eq.s32.totalorder %s16, 6
    %p39 = por %p37, %p38
    %p41 = scmp.ne.s32.totalorder %s24, %s40
    %p42 = scmp.eq.s32.totalorder %s16, 0
    %p43 = por %p41, %p42
    %s45 = sadd.s32 %s44, 1
    %p48 = scmp.eq.s32.totalorder %s10, 6
    %p49 = scmp.ne.s32.totalorder %s44, %s46
    %p50 = scmp.eq.s32.totalorder %s10, 0
    %p51 = por %p49, %p50
    %p52 = scmp.ne.s32.totalorder %s44, %s46
    %p53 = scmp.eq.s32.totalorder %s15, 6
    %p54 = por %p52, %p53
    %p55 = scmp.ne.s32.totalorder %s46, %s47
    %p56 = scmp.eq.s32.totalorder %s15, 0
    %p57 = por %p55, %p56
    %p58 = scmp.ne.s32.totalorder %s46, %s47
    %p59 = scmp.eq.s32.totalorder %s16, 6
    %p60 = por %p58, %p59
    %p62 = scmp.ne.s32.totalorder %s47, %s61
    %p63 = scmp.eq.s32.totalorder %s16, 0
    %p64 = por %p62, %p63
    %s66 = sadd.s32 %s65, 1
    %p69 = scmp.eq.s32.totalorder %s10, 6
    %p70 = scmp.ne.s32.totalorder %s65, %s67
    %p71 = scmp.eq.s32.totalorder %s10, 0
    %p72 = por %p70, %p71
    %p73 = scmp.ne.s32.totalorder %s65, %s67
    %p74 = scmp.eq.s32.totalorder %s15, 6
    %p75 = por %p73, %p74
    %p76 = scmp.ne.s32.totalorder %s67, %s68
    %p77 = scmp.eq.s32.totalorder %s15, 0
    %p78 = por %p76, %p77
    %p79 = scmp.ne.s32.totalorder %s67, %s68
    %p80 = scmp.eq.s32.totalorder %s16, 6
    %p81 = por %p79, %p80
    %p83 = scmp.ne.s32.totalorder %s68, %s82
    %p84 = scmp.eq.s32.totalorder %s16, 0
    %p85 = por %p83, %p84
    %s87 = sadd.s32 %s86, 1
    %p90 = scmp.eq.s32.totalorder %s10, 6
    %p91 = scmp.ne.s32.totalorder %s86, %s88
    %p92 = scmp.eq.s32.totalorder %s10, 0
    %p93 = por %p91, %p92
    %p94 = scmp.ne.s32.totalorder %s86, %s88
    %p95 = scmp.eq.s32.totalorder %s15, 6
    %p96 = por %p94, %p95
    %p97 = scmp.ne.s32.totalorder %s88, %s89
    %p98 = scmp.eq.s32.totalorder %s15, 0
    %p99 = por %p97, %p98
    %p100 = scmp.ne.s32.totalorder %s88, %s89
    %p101 = scmp.eq.s32.totalorder %s16, 6
    %p102 = por %p100, %p101
    %p104 = scmp.ne.s32.totalorder %s89, %s103
    %p105 = scmp.eq.s32.totalorder %s16, 0
    %p106 = por %p104, %p105
    %s107 = ssub.s32 %s10, %s17
    %p108 = scmp.eq.s32.totalorder %s107, 0
    %s110 = sadd.s32 %s109, 1
    %s111 = scalar_select %p108, %s109, %s110
    %p114 = pneg %p108
    %p115 = scmp.eq.s32.totalorder %s10, 6
    %p116 = por %p114, %p115
    %p117 = scmp.ne.s32.totalorder %s109, %s112
    %p118 = scmp.eq.s32.totalorder %s10, 0
    %p119 = por %p117, %p118
    %p120 = scmp.ne.s32.totalorder %s109, %s112
    %p121 = scmp.eq.s32.totalorder %s15, 6
    %p122 = por %p120, %p121
    %p123 = scmp.ne.s32.totalorder %s112, %s113
    %p124 = scmp.eq.s32.totalorder %s15, 0
    %p125 = por %p123, %p124
    %p126 = scmp.ne.s32.totalorder %s112, %s113
    %p127 = scmp.eq.s32.totalorder %s16, 6
    %p128 = por %p126, %p127
    %p130 = scmp.ne.s32.totalorder %s113, %s129
    %p131 = scmp.eq.s32.totalorder %s16, 0
    %p132 = por %p130, %p131
    %p133 = scmp.le.s32.totalorder 1, %s10
    %p134 = scmp.lt.s32.totalorder %s10, 8
    %p135 = pnand %p133, %p134
    %p136 = pneg %p135
    // Predicated region
    $region9: #{forward.2} parent=5 // pred_check
      _
    $region10: #{forward.2} parent=5 // pred_check_branch
      %138 = sbr.rel (%p135) target = $region12
    $region11: #{forward.2} parent=5 // pred_region
      %s139 = ssub.s32 %s10, 1
      // Predicated region
      $region13: #{forward.2} parent=11 // pred_check
        %p140 = pneg %p57
      $region14: #{forward.2} parent=11 // pred_check_branch
        %142 = sbr.rel (%p140) target = $region16
      $region15: #{forward.2} parent=11 // pred_region
        _
      $region16: #{forward.2} parent=11 // pred_fallthru
        _
      // Predicated region
      $region17: #{forward.2} parent=11 // pred_check
        %p143 = pneg %p78
      $region18: #{forward.2} parent=11 // pred_check_branch
        %145 = sbr.rel (%p143) target = $region20
      $region19: #{forward.2} parent=11 // pred_region
        _
      $region20: #{forward.2} parent=11 // pred_fallthru
        _
      // Predicated region
      $region21: #{forward.2} parent=11 // pred_check
        %p146 = pneg %p99
      $region22: #{forward.2} parent=11 // pred_check_branch
        %148 = sbr.rel (%p146) target = $region24
      $region23: #{forward.2} parent=11 // pred_region
        _
      $region24: #{forward.2} parent=11 // pred_fallthru
        _
    $region12: #{forward.2} parent=5 // pred_fallthru
      _
    %p149 = scmp.lt.s32.totalorder %s10, 7
    // Predicated region
    $region25: #{forward.2} parent=5 // pred_check
      %p150 = pneg %p149
    $region26: #{forward.2} parent=5 // pred_check_branch
      %152 = sbr.rel (%p150) target = $region28
    $region27: #{forward.2} parent=5 // pred_region
      // Predicated region
      $region29: #{forward.2} parent=27 // pred_check
        %p153 = pneg %p30
      $region30: #{forward.2} parent=27 // pred_check_branch
        %155 = sbr.rel (%p153) target = $region32
      $region31: #{forward.2} parent=27 // pred_region
        %s156 = smul.u32 112, %s10
        %p157 = scmp.lt.s32.totalorder %s156, 783
        %s158 = scalar_select %p157, %s156, 783
        %s159 = smul.addr %s158, 3
        %s160 = smul.addr %s159, 4
        %s161 = scalar_lea.vmem %s0, %s160
        %s162 = smul.u32 112, %s10
      $region32: #{forward.2} parent=27 // pred_fallthru
        _
    $region28: #{forward.2} parent=5 // pred_fallthru
      _
    %p163 = scmp.le.s32.totalorder 1, %s10
    %p164 = scmp.lt.s32.totalorder %s10, 8
    %p165 = pnand %p163, %p164
    %p166 = pneg %p165
    // Predicated region
    $region33: #{forward.2} parent=5 // pred_check
      _
    $region34: #{forward.2} parent=5 // pred_check_branch
      %168 = sbr.rel (%p165) target = $region36
    $region35: #{forward.2} parent=5 // pred_region
      %s169 = ssub.s32 %s10, 1
      %s170 = smul.u32 112, %s15
      %p171 = scmp.lt.s32.totalorder %s170, 783
      %s172 = scalar_select %p171, %s170, 783
      %s173 = smul.addr %s172, 3
      %s174 = smul.addr %s173, 4
      %s175 = scalar_lea.vmem %s0, %s174
      %p176 = pneg %p36
      %p177 = pneg %p33
      %p178 = pneg %p57
      %p179 = pneg %p54
      %p180 = pneg %p78
      %p181 = pneg %p75
      %p182 = pneg %p99
      %p183 = pneg %p96
      %p184 = pneg %p125
      %p185 = pneg %p122
      %s186 = smul.u32 112, %s15
      %p187 = scmp.lt.s32.totalorder %s186, 783
      %s188 = scalar_select %p187, %s186, 783
      %s189 = smul.addr %s188, 4
      %s190 = scalar_lea.vmem %s4, %s189
      %s191 = smul.u32 112, %s15
      %p192 = scmp.lt.s32.totalorder %s191, 783
      %s193 = scalar_select %p192, %s191, 783
      %s194 = smul.addr %s193, 3
      %s195 = smul.addr %s194, 4
      %s196 = scalar_lea.vmem %s0, %s195
      %s197 = smul.u32 112, %s15
      %s198 = smul.u32 112, %s15
      %p199 = scmp.lt.s32.totalorder %s198, 783
      %s200 = scalar_select %p199, %s198, 783
      %s201 = smul.addr %s200, 4
      %s202 = scalar_lea.vmem %s4, %s201
      %s203 = smul.u32 112, %s15
      %v205 = vld [vmem:[%s196] sm:$0xff]
      %v206 = vld [vmem:[%s196 + $0x8] sm:$0xf]
      %v207 = vld [vmem:[%s196 + $0xc] sm:$0xff]
      %v208 = vld [vmem:[%s196 + $0x14] sm:$0xf]
      %v209 = vld [vmem:[%s196 + $0x18] sm:$0xff]
      %v210 = vld [vmem:[%s196 + $0x20] sm:$0xf]
      %v211 = vld [vmem:[%s196 + $0x24] sm:$0xff]
      %v212 = vld [vmem:[%s196 + $0x2c] sm:$0xf]
      %v213 = vld [vmem:[%s196 + $0x30] sm:$0xff]
      %v214 = vld [vmem:[%s196 + $0x38] sm:$0xf]
      %v215 = vld [vmem:[%s196 + $0x3c] sm:$0xff]
      %v216 = vld [vmem:[%s196 + $0x44] sm:$0xf]
      %v217 = vld [vmem:[%s196 + $0x48] sm:$0xff]
      %v218 = vld [vmem:[%s196 + $0x50] sm:$0xf]
      %v219 = vld [vmem:[%s196 + $0x54] sm:$0xff]
      %v220 = vld [vmem:[%s196 + $0x5c] sm:$0xf]
      %v221 = vld [vmem:[%s196 + $0x60] sm:$0xff]
      %v222 = vld [vmem:[%s196 + $0x68] sm:$0xf]
      %v223 = vld [vmem:[%s196 + $0x6c] sm:$0xff]
      %v224 = vld [vmem:[%s196 + $0x74] sm:$0xf]
      %v225 = vld [vmem:[%s196 + $0x78] sm:$0xff]
      %v226 = vld [vmem:[%s196 + $0x80] sm:$0xf]
      %v227 = vld [vmem:[%s196 + $0x84] sm:$0xff]
      %v228 = vld [vmem:[%s196 + $0x8c] sm:$0xf]
      %v229 = vld [vmem:[%s196 + $0x90] sm:$0xff]
      %v230 = vld [vmem:[%s196 + $0x98] sm:$0xf]
      %v231 = vld [vmem:[%s196 + $0x9c] sm:$0xff]
      %v232 = vld [vmem:[%s196 + $0xa4] sm:$0xf]
      %v233 = vld [vmem:[%s196 + $0xa8] sm:$0xff]
      %v234 = vld [vmem:[%s196 + $0xb0] sm:$0xf]
      %v235 = vld [vmem:[%s196 + $0xb4] sm:$0xff]
      %v236 = vld [vmem:[%s196 + $0xbc] sm:$0xf]
      %v237 = vld [vmem:[%s196 + $0xc0] sm:$0xff]
      %v238 = vld [vmem:[%s196 + $0xc8] sm:$0xf]
      %v239 = vld [vmem:[%s196 + $0xcc] sm:$0xff]
      %v240 = vld [vmem:[%s196 + $0xd4] sm:$0xf]
      %v241 = vld [vmem:[%s196 + $0xd8] sm:$0xff]
      %v242 = vld [vmem:[%s196 + $0xe0] sm:$0xf]
      %v243 = vld [vmem:[%s196 + $0xe4] sm:$0xff]
      %v244 = vld [vmem:[%s196 + $0xec] sm:$0xf]
      %v245 = vld [vmem:[%s196 + $0xf0] sm:$0xff]
      %v246 = vld [vmem:[%s196 + $0xf8] sm:$0xf]
      %v247 = vld [vmem:[%s196 + $0xfc] sm:$0xff]
      %v248 = vld [vmem:[%s196 + $0x104] sm:$0xf]
      %v249 = vld [vmem:[%s196 + $0x108] sm:$0xff]
      %v250 = vld [vmem:[%s196 + $0x110] sm:$0xf]
      %v251 = vld [vmem:[%s196 + $0x114] sm:$0xff]
      %v252 = vld [vmem:[%s196 + $0x11c] sm:$0xf]
      %v253 = vld [vmem:[%s196 + $0x120] sm:$0xff]
      %v254 = vld [vmem:[%s196 + $0x128] sm:$0xf]
      %v255 = vld [vmem:[%s196 + $0x12c] sm:$0xff]
      %v256 = vld [vmem:[%s196 + $0x134] sm:$0xf]
      %v257 = vld [vmem:[%s196 + $0x138] sm:$0xff]
      %v258 = vld [vmem:[%s196 + $0x140] sm:$0xf]
      %v259 = vld [vmem:[%s196 + $0x144] sm:$0xff]
      %v260 = vld [vmem:[%s196 + $0x14c] sm:$0xf]
      %v261 = vld [vmem:[%s196 + $0x150] sm:$0xff]
      %v262 = vld [vmem:[%s196 + $0x158] sm:$0xf]
      %v263 = vld [vmem:[%s196 + $0x15c] sm:$0xff]
      %v264 = vld [vmem:[%s196 + $0x164] sm:$0xf]
      %v265 = vld [vmem:[%s196 + $0x168] sm:$0xff]
      %v266 = vld [vmem:[%s196 + $0x170] sm:$0xf]
      %v267 = vld [vmem:[%s196 + $0x174] sm:$0xff]
      %v268 = vld [vmem:[%s196 + $0x17c] sm:$0xf]
      %v269 = vld [vmem:[%s196 + $0x180] sm:$0xff]
      %v270 = vld [vmem:[%s196 + $0x188] sm:$0xf]
      %v271 = vld [vmem:[%s196 + $0x18c] sm:$0xff]
      %v272 = vld [vmem:[%s196 + $0x194] sm:$0xf]
      %v273 = vld [vmem:[%s196 + $0x198] sm:$0xff]
      %v274 = vld [vmem:[%s196 + $0x1a0] sm:$0xf]
      %v275 = vld [vmem:[%s196 + $0x1a4] sm:$0xff]
      %v276 = vld [vmem:[%s196 + $0x1ac] sm:$0xf]
      %v277 = vld [vmem:[%s196 + $0x1b0] sm:$0xff]
      %v278 = vld [vmem:[%s196 + $0x1b8] sm:$0xf]
      %v279 = vld [vmem:[%s196 + $0x1bc] sm:$0xff]
      %v280 = vld [vmem:[%s196 + $0x1c4] sm:$0xf]
      %v281 = vld [vmem:[%s196 + $0x1c8] sm:$0xff]
      %v282 = vld [vmem:[%s196 + $0x1d0] sm:$0xf]
      %v283 = vld [vmem:[%s196 + $0x1d4] sm:$0xff]
      %v284 = vld [vmem:[%s196 + $0x1dc] sm:$0xf]
      %v285 = vld [vmem:[%s196 + $0x1e0] sm:$0xff]
      %v286 = vld [vmem:[%s196 + $0x1e8] sm:$0xf]
      %v287 = vld [vmem:[%s196 + $0x1ec] sm:$0xff]
      %v288 = vld [vmem:[%s196 + $0x1f4] sm:$0xf]
      %v289 = vld [vmem:[%s196 + $0x1f8] sm:$0xff]
      %v290 = vld [vmem:[%s196 + $0x200] sm:$0xf]
      %v291 = vld [vmem:[%s196 + $0x204] sm:$0xff]
      %v292 = vld [vmem:[%s196 + $0x20c] sm:$0xf]
      %v293 = vld [vmem:[%s196 + $0x210] sm:$0xff]
      %v294 = vld [vmem:[%s196 + $0x218] sm:$0xf]
      %v295 = vld [vmem:[%s196 + $0x21c] sm:$0xff]
      %v296 = vld [vmem:[%s196 + $0x224] sm:$0xf]
      %v297 = vld [vmem:[%s196 + $0x228] sm:$0xff]
      %v298 = vld [vmem:[%s196 + $0x230] sm:$0xf]
      %v299 = vld [vmem:[%s196 + $0x234] sm:$0xff]
      %v300 = vld [vmem:[%s196 + $0x23c] sm:$0xf]
      %v301 = vld [vmem:[%s196 + $0x240] sm:$0xff]
      %v302 = vld [vmem:[%s196 + $0x248] sm:$0xf]
      %v303 = vld [vmem:[%s196 + $0x24c] sm:$0xff]
      %v304 = vld [vmem:[%s196 + $0x254] sm:$0xf]
      %v305 = vld [vmem:[%s196 + $0x258] sm:$0xff]
      %v306 = vld [vmem:[%s196 + $0x260] sm:$0xf]
      %v307 = vld [vmem:[%s196 + $0x264] sm:$0xff]
      %v308 = vld [vmem:[%s196 + $0x26c] sm:$0xf]
      %v309 = vld [vmem:[%s196 + $0x270] sm:$0xff]
      %v310 = vld [vmem:[%s196 + $0x278] sm:$0xf]
      %v311 = vld [vmem:[%s196 + $0x27c] sm:$0xff]
      %v312 = vld [vmem:[%s196 + $0x284] sm:$0xf]
      %v313 = vld [vmem:[%s196 + $0x288] sm:$0xff]
      %v314 = vld [vmem:[%s196 + $0x290] sm:$0xf]
      %v315 = vld [vmem:[%s196 + $0x294] sm:$0xff]
      %v316 = vld [vmem:[%s196 + $0x29c] sm:$0xf]
      %v317 = vld [vmem:[%s196 + $0x2a0] sm:$0xff]
      %v318 = vld [vmem:[%s196 + $0x2a8] sm:$0xf]
      %v319 = vld [vmem:[%s196 + $0x2ac] sm:$0xff]
      %v320 = vld [vmem:[%s196 + $0x2b4] sm:$0xf]
      %v321 = vld [vmem:[%s196 + $0x2b8] sm:$0xff]
      %v322 = vld [vmem:[%s196 + $0x2c0] sm:$0xf]
      %v323 = vld [vmem:[%s196 + $0x2c4] sm:$0xff]
      %v324 = vld [vmem:[%s196 + $0x2cc] sm:$0xf]
      %v325 = vld [vmem:[%s196 + $0x2d0] sm:$0xff]
      %v326 = vld [vmem:[%s196 + $0x2d8] sm:$0xf]
      %v327 = vld [vmem:[%s196 + $0x2dc] sm:$0xff]
      %v328 = vld [vmem:[%s196 + $0x2e4] sm:$0xf]
      %v329 = vld [vmem:[%s196 + $0x2e8] sm:$0xff]
      %v330 = vld [vmem:[%s196 + $0x2f0] sm:$0xf]
      %v331 = vld [vmem:[%s196 + $0x2f4] sm:$0xff]
      %v332 = vld [vmem:[%s196 + $0x2fc] sm:$0xf]
      %v333 = vld [vmem:[%s196 + $0x300] sm:$0xff]
      %v334 = vld [vmem:[%s196 + $0x308] sm:$0xf]
      %v335 = vld [vmem:[%s196 + $0x30c] sm:$0xff]
      %v336 = vld [vmem:[%s196 + $0x314] sm:$0xf]
      %v337 = vld [vmem:[%s196 + $0x318] sm:$0xff]
      %v338 = vld [vmem:[%s196 + $0x320] sm:$0xf]
      %v339 = vld [vmem:[%s196 + $0x324] sm:$0xff]
      %v340 = vld [vmem:[%s196 + $0x32c] sm:$0xf]
      %v341 = vld [vmem:[%s196 + $0x330] sm:$0xff]
      %v342 = vld [vmem:[%s196 + $0x338] sm:$0xf]
      %v343 = vld [vmem:[%s196 + $0x33c] sm:$0xff]
      %v344 = vld [vmem:[%s196 + $0x344] sm:$0xf]
      %v345 = vld [vmem:[%s196 + $0x348] sm:$0xff]
      %v346 = vld [vmem:[%s196 + $0x350] sm:$0xf]
      %v347 = vld [vmem:[%s196 + $0x354] sm:$0xff]
      %v348 = vld [vmem:[%s196 + $0x35c] sm:$0xf]
      %v349 = vld [vmem:[%s196 + $0x360] sm:$0xff]
      %v350 = vld [vmem:[%s196 + $0x368] sm:$0xf]
      %v351 = vld [vmem:[%s196 + $0x36c] sm:$0xff]
      %v352 = vld [vmem:[%s196 + $0x374] sm:$0xf]
      %v353 = vld [vmem:[%s196 + $0x378] sm:$0xff]
      %v354 = vld [vmem:[%s196 + $0x380] sm:$0xf]
      %v355 = vld [vmem:[%s196 + $0x384] sm:$0xff]
      %v356 = vld [vmem:[%s196 + $0x38c] sm:$0xf]
      %v357 = vld [vmem:[%s196 + $0x390] sm:$0xff]
      %v358 = vld [vmem:[%s196 + $0x398] sm:$0xf]
      %v359 = vld [vmem:[%s196 + $0x39c] sm:$0xff]
      %v360 = vld [vmem:[%s196 + $0x3a4] sm:$0xf]
      %v361 = vld [vmem:[%s196 + $0x3a8] sm:$0xff]
      %v362 = vld [vmem:[%s196 + $0x3b0] sm:$0xf]
      %v363 = vld [vmem:[%s196 + $0x3b4] sm:$0xff]
      %v364 = vld [vmem:[%s196 + $0x3bc] sm:$0xf]
      %v365 = vld [vmem:[%s196 + $0x3c0] sm:$0xff]
      %v366 = vld [vmem:[%s196 + $0x3c8] sm:$0xf]
      %v367 = vld [vmem:[%s196 + $0x3cc] sm:$0xff]
      %v368 = vld [vmem:[%s196 + $0x3d4] sm:$0xf]
      %v369 = vld [vmem:[%s196 + $0x3d8] sm:$0xff]
      %v370 = vld [vmem:[%s196 + $0x3e0] sm:$0xf]
      %v371 = vld [vmem:[%s196 + $0x3e4] sm:$0xff]
      %v372 = vld [vmem:[%s196 + $0x3ec] sm:$0xf]
      %v373 = vld [vmem:[%s196 + $0x3f0] sm:$0xff]
      %v374 = vld [vmem:[%s196 + $0x3f8] sm:$0xf]
      %v375 = vld [vmem:[%s196 + $0x3fc] sm:$0xff]
      %v376 = vld [vmem:[%s196 + $0x404] sm:$0xf]
      %v377 = vld [vmem:[%s196 + $0x408] sm:$0xff]
      %v378 = vld [vmem:[%s196 + $0x410] sm:$0xf]
      %v379 = vld [vmem:[%s196 + $0x414] sm:$0xff]
      %v380 = vld [vmem:[%s196 + $0x41c] sm:$0xf]
      %v381 = vld [vmem:[%s196 + $0x420] sm:$0xff]
      %v382 = vld [vmem:[%s196 + $0x428] sm:$0xf]
      %v383 = vld [vmem:[%s196 + $0x42c] sm:$0xff]
      %v384 = vld [vmem:[%s196 + $0x434] sm:$0xf]
      %v385 = vld [vmem:[%s196 + $0x438] sm:$0xff]
      %v386 = vld [vmem:[%s196 + $0x440] sm:$0xf]
      %v387 = vld [vmem:[%s196 + $0x444] sm:$0xff]
      %v388 = vld [vmem:[%s196 + $0x44c] sm:$0xf]
      %v389 = vld [vmem:[%s196 + $0x450] sm:$0xff]
      %v390 = vld [vmem:[%s196 + $0x458] sm:$0xf]
      %v391 = vld [vmem:[%s196 + $0x45c] sm:$0xff]
      %v392 = vld [vmem:[%s196 + $0x464] sm:$0xf]
      %v393 = vld [vmem:[%s196 + $0x468] sm:$0xff]
      %v394 = vld [vmem:[%s196 + $0x470] sm:$0xf]
      %v395 = vld [vmem:[%s196 + $0x474] sm:$0xff]
      %v396 = vld [vmem:[%s196 + $0x47c] sm:$0xf]
      %v397 = vld [vmem:[%s196 + $0x480] sm:$0xff]
      %v398 = vld [vmem:[%s196 + $0x488] sm:$0xf]
      %v399 = vld [vmem:[%s196 + $0x48c] sm:$0xff]
      %v400 = vld [vmem:[%s196 + $0x494] sm:$0xf]
      %v401 = vld [vmem:[%s196 + $0x498] sm:$0xff]
      %v402 = vld [vmem:[%s196 + $0x4a0] sm:$0xf]
      %v403 = vld [vmem:[%s196 + $0x4a4] sm:$0xff]
      %v404 = vld [vmem:[%s196 + $0x4ac] sm:$0xf]
      %v405 = vld [vmem:[%s196 + $0x4b0] sm:$0xff]
      %v406 = vld [vmem:[%s196 + $0x4b8] sm:$0xf]
      %v407 = vld [vmem:[%s196 + $0x4bc] sm:$0xff]
      %v408 = vld [vmem:[%s196 + $0x4c4] sm:$0xf]
      %v409 = vld [vmem:[%s196 + $0x4c8] sm:$0xff]
      %v410 = vld [vmem:[%s196 + $0x4d0] sm:$0xf]
      %v411 = vld [vmem:[%s196 + $0x4d4] sm:$0xff]
      %v412 = vld [vmem:[%s196 + $0x4dc] sm:$0xf]
      %v413 = vld [vmem:[%s196 + $0x4e0] sm:$0xff]
      %v414 = vld [vmem:[%s196 + $0x4e8] sm:$0xf]
      %v415 = vld [vmem:[%s196 + $0x4ec] sm:$0xff]
      %v416 = vld [vmem:[%s196 + $0x4f4] sm:$0xf]
      %v417 = vld [vmem:[%s196 + $0x4f8] sm:$0xff]
      %v418 = vld [vmem:[%s196 + $0x500] sm:$0xf]
      %v419 = vld [vmem:[%s196 + $0x504] sm:$0xff]
      %v420 = vld [vmem:[%s196 + $0x50c] sm:$0xf]
      %v421 = vld [vmem:[%s196 + $0x510] sm:$0xff]
      %v422 = vld [vmem:[%s196 + $0x518] sm:$0xf]
      %v423 = vld [vmem:[%s196 + $0x51c] sm:$0xff]
      %v424 = vld [vmem:[%s196 + $0x524] sm:$0xf]
      %v425 = vld [vmem:[%s196 + $0x528] sm:$0xff]
      %v426 = vld [vmem:[%s196 + $0x530] sm:$0xf]
      %v427 = vld [vmem:[%s196 + $0x534] sm:$0xff]
      %v428 = vld [vmem:[%s196 + $0x53c] sm:$0xf]
      %v429 = vld [vmem:[%s1] sm:$0xf]
      %v430 = vld [vmem:[%s1 + $0x4] sm:$0xf]
      %v431 = vld [vmem:[%s1 + $0x8] sm:$0xf]
      %v432 = vld [vmem:[%s1 + $0xc] sm:$0xf]
      %v433 = vld [vmem:[%s1 + $0x10] sm:$0xf]
      %v434 = vld [vmem:[%s1 + $0x14] sm:$0xf]
      %v435 = vld [vmem:[%s1 + $0x18] sm:$0xf]
      %v436 = vld [vmem:[%s1 + $0x1c] sm:$0xf]
      %v437 = vld [vmem:[%s1 + $0x20] sm:$0xf]
      %v438 = vld [vmem:[%s1 + $0x24] sm:$0xf]
      %v439 = vld [vmem:[%s1 + $0x28] sm:$0xf]
      %v440 = vld [vmem:[%s1 + $0x2c] sm:$0xf]
      %v441 = vld [vmem:[%s1 + $0x30] sm:$0xf]
      %v442 = vld [vmem:[%s1 + $0x34] sm:$0xf]
      %v443 = vld [vmem:[%s1 + $0x38] sm:$0xf]
      %v444 = vld [vmem:[%s1 + $0x3c] sm:$0xf]
      %v445 = vld [vmem:[%s1 + $0x40] sm:$0xf]
      %v446 = vld [vmem:[%s1 + $0x44] sm:$0xf]
      %v447 = vld [vmem:[%s1 + $0x48] sm:$0xf]
      %v448 = vld [vmem:[%s1 + $0x4c] sm:$0xf]
      %v449 = vld [vmem:[%s1 + $0x50] sm:$0xf]
      %v450 = vld [vmem:[%s1 + $0x54] sm:$0xf]
      %v451 = vld [vmem:[%s1 + $0x58] sm:$0xf]
      %v452 = vld [vmem:[%s1 + $0x5c] sm:$0xf]
      %v453 = vld [vmem:[%s1 + $0x60] sm:$0xf]
      %v454 = vld [vmem:[%s1 + $0x64] sm:$0xf]
      %v455 = vld [vmem:[%s1 + $0x68] sm:$0xf]
      %v456 = vld [vmem:[%s1 + $0x6c] sm:$0xf]
      %v457 = vld [vmem:[%s1 + $0x70] sm:$0xf]
      %v458 = vld [vmem:[%s1 + $0x74] sm:$0xf]
      %v459 = vld [vmem:[%s1 + $0x78] sm:$0xf]
      %v460 = vld [vmem:[%s1 + $0x7c] sm:$0xf]
      %v461 = vld [vmem:[%s1 + $0x80] sm:$0xf]
      %v462 = vld [vmem:[%s1 + $0x84] sm:$0xf]
      %v463 = vld [vmem:[%s1 + $0x88] sm:$0xf]
      %v464 = vld [vmem:[%s1 + $0x8c] sm:$0xf]
      %v465 = vld [vmem:[%s1 + $0x90] sm:$0xf]
      %v466 = vld [vmem:[%s1 + $0x94] sm:$0xf]
      %v467 = vld [vmem:[%s1 + $0x98] sm:$0xf]
      %v468 = vld [vmem:[%s1 + $0x9c] sm:$0xf]
      %v469 = vld [vmem:[%s1 + $0xa0] sm:$0xf]
      %v470 = vld [vmem:[%s1 + $0xa4] sm:$0xf]
      %v471 = vld [vmem:[%s1 + $0xa8] sm:$0xf]
      %v472 = vld [vmem:[%s1 + $0xac] sm:$0xf]
      %v473 = vld [vmem:[%s1 + $0xb0] sm:$0xf]
      %v474 = vld [vmem:[%s1 + $0xb4] sm:$0x3]
      %v699 = vunpack.c.l.b16 %v205
      %v700 = vunpack.c.h.b16 %v205
      %v701 = vunpack.c.l.b16 %v206
      %v702 = vunpack.c.l.b16 %v207
      %v703 = vunpack.c.h.b16 %v207
      %v704 = vunpack.c.l.b16 %v208
      %v705 = vunpack.c.l.b16 %v209
      %v706 = vunpack.c.h.b16 %v209
      %v707 = vunpack.c.l.b16 %v210
      %v708 = vunpack.c.l.b16 %v211
      %v709 = vunpack.c.h.b16 %v211
      %v710 = vunpack.c.l.b16 %v212
      %v711 = vunpack.c.l.b16 %v213
      %v712 = vunpack.c.h.b16 %v213
      %v713 = vunpack.c.l.b16 %v214
      %v714 = vunpack.c.l.b16 %v215
      %v715 = vunpack.c.h.b16 %v215
      %v716 = vunpack.c.l.b16 %v216
      %v717 = vunpack.c.l.b16 %v217
      %v718 = vunpack.c.h.b16 %v217
      %v719 = vunpack.c.l.b16 %v218
      %v720 = vunpack.c.l.b16 %v219
      %v721 = vunpack.c.h.b16 %v219
      %v722 = vunpack.c.l.b16 %v220
      %v723 = vunpack.c.l.b16 %v221
      %v724 = vunpack.c.h.b16 %v221
      %v725 = vunpack.c.l.b16 %v222
      %v726 = vunpack.c.l.b16 %v223
      %v727 = vunpack.c.h.b16 %v223
      %v728 = vunpack.c.l.b16 %v224
      %v729 = vunpack.c.l.b16 %v225
      %v730 = vunpack.c.h.b16 %v225
      %v731 = vunpack.c.l.b16 %v226
      %v732 = vunpack.c.l.b16 %v227
      %v733 = vunpack.c.h.b16 %v227
      %v734 = vunpack.c.l.b16 %v228
      %v735 = vunpack.c.l.b16 %v229
      %v736 = vunpack.c.h.b16 %v229
      %v737 = vunpack.c.l.b16 %v230
      %v738 = vunpack.c.l.b16 %v231
      %v739 = vunpack.c.h.b16 %v231
      %v740 = vunpack.c.l.b16 %v232
      %v741 = vunpack.c.l.b16 %v233
      %v742 = vunpack.c.h.b16 %v233
      %v743 = vunpack.c.l.b16 %v234
      %v744 = vunpack.c.l.b16 %v235
      %v745 = vunpack.c.h.b16 %v235
      %v746 = vunpack.c.l.b16 %v236
      %v747 = vunpack.c.l.b16 %v237
      %v748 = vunpack.c.h.b16 %v237
      %v749 = vunpack.c.l.b16 %v238
      %v750 = vunpack.c.l.b16 %v239
      %v751 = vunpack.c.h.b16 %v239
      %v752 = vunpack.c.l.b16 %v240
      %v753 = vunpack.c.l.b16 %v241
      %v754 = vunpack.c.h.b16 %v241
      %v755 = vunpack.c.l.b16 %v242
      %v756 = vunpack.c.l.b16 %v243
      %v757 = vunpack.c.h.b16 %v243
      %v758 = vunpack.c.l.b16 %v244
      %v759 = vunpack.c.l.b16 %v245
      %v760 = vunpack.c.h.b16 %v245
      %v761 = vunpack.c.l.b16 %v246
      %v762 = vunpack.c.l.b16 %v247
      %v763 = vunpack.c.h.b16 %v247
      %v764 = vunpack.c.l.b16 %v248
      %v765 = vunpack.c.l.b16 %v249
      %v766 = vunpack.c.h.b16 %v249
      %v767 = vunpack.c.l.b16 %v250
      %v768 = vunpack.c.l.b16 %v251
      %v769 = vunpack.c.h.b16 %v251
      %v770 = vunpack.c.l.b16 %v252
      %v771 = vunpack.c.l.b16 %v253
      %v772 = vunpack.c.h.b16 %v253
      %v773 = vunpack.c.l.b16 %v254
      %v774 = vunpack.c.l.b16 %v255
      %v775 = vunpack.c.h.b16 %v255
      %v776 = vunpack.c.l.b16 %v256
      %v777 = vunpack.c.l.b16 %v257
      %v778 = vunpack.c.h.b16 %v257
      %v779 = vunpack.c.l.b16 %v258
      %v780 = vunpack.c.l.b16 %v259
      %v781 = vunpack.c.h.b16 %v259
      %v782 = vunpack.c.l.b16 %v260
      %v783 = vunpack.c.l.b16 %v261
      %v784 = vunpack.c.h.b16 %v261
      %v785 = vunpack.c.l.b16 %v262
      %v786 = vunpack.c.l.b16 %v263
      %v787 = vunpack.c.h.b16 %v263
      %v788 = vunpack.c.l.b16 %v264
      %v789 = vunpack.c.l.b16 %v265
      %v790 = vunpack.c.h.b16 %v265
      %v791 = vunpack.c.l.b16 %v266
      %v792 = vunpack.c.l.b16 %v267
      %v793 = vunpack.c.h.b16 %v267
      %v794 = vunpack.c.l.b16 %v268
      %v795 = vunpack.c.l.b16 %v269
      %v796 = vunpack.c.h.b16 %v269
      %v797 = vunpack.c.l.b16 %v270
      %v798 = vunpack.c.l.b16 %v271
      %v799 = vunpack.c.h.b16 %v271
      %v800 = vunpack.c.l.b16 %v272
      %v801 = vunpack.c.l.b16 %v273
      %v802 = vunpack.c.h.b16 %v273
      %v803 = vunpack.c.l.b16 %v274
      %v804 = vunpack.c.l.b16 %v275
      %v805 = vunpack.c.h.b16 %v275
      %v806 = vunpack.c.l.b16 %v276
      %v807 = vunpack.c.l.b16 %v277
      %v808 = vunpack.c.h.b16 %v277
      %v809 = vunpack.c.l.b16 %v278
      %v810 = vunpack.c.l.b16 %v279
      %v811 = vunpack.c.h.b16 %v279
      %v812 = vunpack.c.l.b16 %v280
      %v813 = vunpack.c.l.b16 %v281
      %v814 = vunpack.c.h.b16 %v281
      %v815 = vunpack.c.l.b16 %v282
      %v816 = vunpack.c.l.b16 %v283
      %v817 = vunpack.c.h.b16 %v283
      %v818 = vunpack.c.l.b16 %v284
      %v819 = vunpack.c.l.b16 %v285
      %v820 = vunpack.c.h.b16 %v285
      %v821 = vunpack.c.l.b16 %v286
      %v822 = vunpack.c.l.b16 %v287
      %v823 = vunpack.c.h.b16 %v287
      %v824 = vunpack.c.l.b16 %v288
      %v825 = vunpack.c.l.b16 %v289
      %v826 = vunpack.c.h.b16 %v289
      %v827 = vunpack.c.l.b16 %v290
      %v828 = vunpack.c.l.b16 %v291
      %v829 = vunpack.c.h.b16 %v291
      %v830 = vunpack.c.l.b16 %v292
      %v831 = vunpack.c.l.b16 %v293
      %v832 = vunpack.c.h.b16 %v293
      %v833 = vunpack.c.l.b16 %v294
      %v834 = vunpack.c.l.b16 %v295
      %v835 = vunpack.c.h.b16 %v295
      %v836 = vunpack.c.l.b16 %v296
      %v837 = vunpack.c.l.b16 %v297
      %v838 = vunpack.c.h.b16 %v297
      %v839 = vunpack.c.l.b16 %v298
      %v840 = vunpack.c.l.b16 %v299
      %v841 = vunpack.c.h.b16 %v299
      %v842 = vunpack.c.l.b16 %v300
      %v843 = vunpack.c.l.b16 %v301
      %v844 = vunpack.c.h.b16 %v301
      %v845 = vunpack.c.l.b16 %v302
      %v846 = vunpack.c.l.b16 %v303
      %v847 = vunpack.c.h.b16 %v303
      %v848 = vunpack.c.l.b16 %v304
      %v849 = vunpack.c.l.b16 %v305
      %v850 = vunpack.c.h.b16 %v305
      %v851 = vunpack.c.l.b16 %v306
      %v852 = vunpack.c.l.b16 %v307
      %v853 = vunpack.c.h.b16 %v307
      %v854 = vunpack.c.l.b16 %v308
      %v855 = vunpack.c.l.b16 %v309
      %v856 = vunpack.c.h.b16 %v309
      %v857 = vunpack.c.l.b16 %v310
      %v858 = vunpack.c.l.b16 %v311
      %v859 = vunpack.c.h.b16 %v311
      %v860 = vunpack.c.l.b16 %v312
      %v861 = vunpack.c.l.b16 %v313
      %v862 = vunpack.c.h.b16 %v313
      %v863 = vunpack.c.l.b16 %v314
      %v864 = vunpack.c.l.b16 %v315
      %v865 = vunpack.c.h.b16 %v315
      %v866 = vunpack.c.l.b16 %v316
      %v867 = vunpack.c.l.b16 %v317
      %v868 = vunpack.c.h.b16 %v317
      %v869 = vunpack.c.l.b16 %v318
      %v870 = vunpack.c.l.b16 %v319
      %v871 = vunpack.c.h.b16 %v319
      %v872 = vunpack.c.l.b16 %v320
      %v873 = vunpack.c.l.b16 %v321
      %v874 = vunpack.c.h.b16 %v321
      %v875 = vunpack.c.l.b16 %v322
      %v876 = vunpack.c.l.b16 %v323
      %v877 = vunpack.c.h.b16 %v323
      %v878 = vunpack.c.l.b16 %v324
      %v879 = vunpack.c.l.b16 %v325
      %v880 = vunpack.c.h.b16 %v325
      %v881 = vunpack.c.l.b16 %v326
      %v882 = vunpack.c.l.b16 %v327
      %v883 = vunpack.c.h.b16 %v327
      %v884 = vunpack.c.l.b16 %v328
      %v885 = vunpack.c.l.b16 %v329
      %v886 = vunpack.c.h.b16 %v329
      %v887 = vunpack.c.l.b16 %v330
      %v888 = vunpack.c.l.b16 %v331
      %v889 = vunpack.c.h.b16 %v331
      %v890 = vunpack.c.l.b16 %v332
      %v891 = vunpack.c.l.b16 %v333
      %v892 = vunpack.c.h.b16 %v333
      %v893 = vunpack.c.l.b16 %v334
      %v894 = vunpack.c.l.b16 %v335
      %v895 = vunpack.c.h.b16 %v335
      %v896 = vunpack.c.l.b16 %v336
      %v897 = vunpack.c.l.b16 %v337
      %v898 = vunpack.c.h.b16 %v337
      %v899 = vunpack.c.l.b16 %v338
      %v900 = vunpack.c.l.b16 %v339
      %v901 = vunpack.c.h.b16 %v339
      %v902 = vunpack.c.l.b16 %v340
      %v903 = vunpack.c.l.b16 %v341
      %v904 = vunpack.c.h.b16 %v341
      %v905 = vunpack.c.l.b16 %v342
      %v906 = vunpack.c.l.b16 %v343
      %v907 = vunpack.c.h.b16 %v343
      %v908 = vunpack.c.l.b16 %v344
      %v909 = vunpack.c.l.b16 %v345
      %v910 = vunpack.c.h.b16 %v345
      %v911 = vunpack.c.l.b16 %v346
      %v912 = vunpack.c.l.b16 %v347
      %v913 = vunpack.c.h.b16 %v347
      %v914 = vunpack.c.l.b16 %v348
      %v915 = vunpack.c.l.b16 %v349
      %v916 = vunpack.c.h.b16 %v349
      %v917 = vunpack.c.l.b16 %v350
      %v918 = vunpack.c.l.b16 %v351
      %v919 = vunpack.c.h.b16 %v351
      %v920 = vunpack.c.l.b16 %v352
      %v921 = vunpack.c.l.b16 %v353
      %v922 = vunpack.c.h.b16 %v353
      %v923 = vunpack.c.l.b16 %v354
      %v924 = vunpack.c.l.b16 %v355
      %v925 = vunpack.c.h.b16 %v355
      %v926 = vunpack.c.l.b16 %v356
      %v927 = vunpack.c.l.b16 %v357
      %v928 = vunpack.c.h.b16 %v357
      %v929 = vunpack.c.l.b16 %v358
      %v930 = vunpack.c.l.b16 %v359
      %v931 = vunpack.c.h.b16 %v359
      %v932 = vunpack.c.l.b16 %v360
      %v933 = vunpack.c.l.b16 %v361
      %v934 = vunpack.c.h.b16 %v361
      %v935 = vunpack.c.l.b16 %v362
      %v936 = vunpack.c.l.b16 %v363
      %v937 = vunpack.c.h.b16 %v363
      %v938 = vunpack.c.l.b16 %v364
      %v939 = vunpack.c.l.b16 %v365
      %v940 = vunpack.c.h.b16 %v365
      %v941 = vunpack.c.l.b16 %v366
      %v942 = vunpack.c.l.b16 %v367
      %v943 = vunpack.c.h.b16 %v367
      %v944 = vunpack.c.l.b16 %v368
      %v945 = vunpack.c.l.b16 %v369
      %v946 = vunpack.c.h.b16 %v369
      %v947 = vunpack.c.l.b16 %v370
      %v948 = vunpack.c.l.b16 %v371
      %v949 = vunpack.c.h.b16 %v371
      %v950 = vunpack.c.l.b16 %v372
      %v951 = vunpack.c.l.b16 %v373
      %v952 = vunpack.c.h.b16 %v373
      %v953 = vunpack.c.l.b16 %v374
      %v954 = vunpack.c.l.b16 %v375
      %v955 = vunpack.c.h.b16 %v375
      %v956 = vunpack.c.l.b16 %v376
      %v957 = vunpack.c.l.b16 %v377
      %v958 = vunpack.c.h.b16 %v377
      %v959 = vunpack.c.l.b16 %v378
      %v960 = vunpack.c.l.b16 %v379
      %v961 = vunpack.c.h.b16 %v379
      %v962 = vunpack.c.l.b16 %v380
      %v963 = vunpack.c.l.b16 %v381
      %v964 = vunpack.c.h.b16 %v381
      %v965 = vunpack.c.l.b16 %v382
      %v966 = vunpack.c.l.b16 %v383
      %v967 = vunpack.c.h.b16 %v383
      %v968 = vunpack.c.l.b16 %v384
      %v969 = vunpack.c.l.b16 %v385
      %v970 = vunpack.c.h.b16 %v385
      %v971 = vunpack.c.l.b16 %v386
      %v972 = vunpack.c.l.b16 %v387
      %v973 = vunpack.c.h.b16 %v387
      %v974 = vunpack.c.l.b16 %v388
      %v975 = vunpack.c.l.b16 %v389
      %v976 = vunpack.c.h.b16 %v389
      %v977 = vunpack.c.l.b16 %v390
      %v978 = vunpack.c.l.b16 %v391
      %v979 = vunpack.c.h.b16 %v391
      %v980 = vunpack.c.l.b16 %v392
      %v981 = vunpack.c.l.b16 %v393
      %v982 = vunpack.c.h.b16 %v393
      %v983 = vunpack.c.l.b16 %v394
      %v984 = vunpack.c.l.b16 %v395
      %v985 = vunpack.c.h.b16 %v395
      %v986 = vunpack.c.l.b16 %v396
      %v987 = vunpack.c.l.b16 %v397
      %v988 = vunpack.c.h.b16 %v397
      %v989 = vunpack.c.l.b16 %v398
      %v990 = vunpack.c.l.b16 %v399
      %v991 = vunpack.c.h.b16 %v399
      %v992 = vunpack.c.l.b16 %v400
      %v993 = vunpack.c.l.b16 %v401
      %v994 = vunpack.c.h.b16 %v401
      %v995 = vunpack.c.l.b16 %v402
      %v996 = vunpack.c.l.b16 %v403
      %v997 = vunpack.c.h.b16 %v403
      %v998 = vunpack.c.l.b16 %v404
      %v999 = vunpack.c.l.b16 %v405
      %v1000 = vunpack.c.h.b16 %v405
      %v1001 = vunpack.c.l.b16 %v406
      %v1002 = vunpack.c.l.b16 %v407
      %v1003 = vunpack.c.h.b16 %v407
      %v1004 = vunpack.c.l.b16 %v408
      %v1005 = vunpack.c.l.b16 %v409
      %v1006 = vunpack.c.h.b16 %v409
      %v1007 = vunpack.c.l.b16 %v410
      %v1008 = vunpack.c.l.b16 %v411
      %v1009 = vunpack.c.h.b16 %v411
      %v1010 = vunpack.c.l.b16 %v412
      %v1011 = vunpack.c.l.b16 %v413
      %v1012 = vunpack.c.h.b16 %v413
      %v1013 = vunpack.c.l.b16 %v414
      %v1014 = vunpack.c.l.b16 %v415
      %v1015 = vunpack.c.h.b16 %v415
      %v1016 = vunpack.c.l.b16 %v416
      %v1017 = vunpack.c.l.b16 %v417
      %v1018 = vunpack.c.h.b16 %v417
      %v1019 = vunpack.c.l.b16 %v418
      %v1020 = vunpack.c.l.b16 %v419
      %v1021 = vunpack.c.h.b16 %v419
      %v1022 = vunpack.c.l.b16 %v420
      %v1023 = vunpack.c.l.b16 %v421
      %v1024 = vunpack.c.h.b16 %v421
      %v1025 = vunpack.c.l.b16 %v422
      %v1026 = vunpack.c.l.b16 %v423
      %v1027 = vunpack.c.h.b16 %v423
      %v1028 = vunpack.c.l.b16 %v424
      %v1029 = vunpack.c.l.b16 %v425
      %v1030 = vunpack.c.h.b16 %v425
      %v1031 = vunpack.c.l.b16 %v426
      %v1032 = vunpack.c.l.b16 %v427
      %v1033 = vunpack.c.h.b16 %v427
      %v1034 = vunpack.c.l.b16 %v428
      %v1035 = vpack.c.b16 %v702, %v699
      %v1036 = vpack.c.b16 %v703, %v700
      %v1037 = vpack.c.b16 %v704, %v701
      %v1038 = vpack.c.b16 %v708, %v705
      %v1039 = vpack.c.b16 %v709, %v706
      %v1040 = vpack.c.b16 %v710, %v707
      %v1041 = vpack.c.b16 %v714, %v711
      %v1042 = vpack.c.b16 %v715, %v712
      %v1043 = vpack.c.b16 %v716, %v713
      %v1044 = vpack.c.b16 %v720, %v717
      %v1045 = vpack.c.b16 %v721, %v718
      %v1046 = vpack.c.b16 %v722, %v719
      %v1047 = vpack.c.b16 %v726, %v723
      %v1048 = vpack.c.b16 %v727, %v724
      %v1049 = vpack.c.b16 %v728, %v725
      %v1050 = vpack.c.b16 %v732, %v729
      %v1051 = vpack.c.b16 %v733, %v730
      %v1052 = vpack.c.b16 %v734, %v731
      %v1053 = vpack.c.b16 %v738, %v735
      %v1054 = vpack.c.b16 %v739, %v736
      %v1055 = vpack.c.b16 %v740, %v737
      %v1056 = vpack.c.b16 %v744, %v741
      %v1057 = vpack.c.b16 %v745, %v742
      %v1058 = vpack.c.b16 %v746, %v743
      %v1059 = vpack.c.b16 %v750, %v747
      %v1060 = vpack.c.b16 %v751, %v748
      %v1061 = vpack.c.b16 %v752, %v749
      %v1062 = vpack.c.b16 %v756, %v753
      %v1063 = vpack.c.b16 %v757, %v754
      %v1064 = vpack.c.b16 %v758, %v755
      %v1065 = vpack.c.b16 %v762, %v759
      %v1066 = vpack.c.b16 %v763, %v760
      %v1067 = vpack.c.b16 %v764, %v761
      %v1068 = vpack.c.b16 %v768, %v765
      %v1069 = vpack.c.b16 %v769, %v766
      %v1070 = vpack.c.b16 %v770, %v767
      %v1071 = vpack.c.b16 %v774, %v771
      %v1072 = vpack.c.b16 %v775, %v772
      %v1073 = vpack.c.b16 %v776, %v773
      %v1074 = vpack.c.b16 %v780, %v777
      %v1075 = vpack.c.b16 %v781, %v778
      %v1076 = vpack.c.b16 %v782, %v779
      %v1077 = vpack.c.b16 %v786, %v783
      %v1078 = vpack.c.b16 %v787, %v784
      %v1079 = vpack.c.b16 %v788, %v785
      %v1080 = vpack.c.b16 %v792, %v789
      %v1081 = vpack.c.b16 %v793, %v790
      %v1082 = vpack.c.b16 %v794, %v791
      %v1083 = vpack.c.b16 %v798, %v795
      %v1084 = vpack.c.b16 %v799, %v796
      %v1085 = vpack.c.b16 %v800, %v797
      %v1086 = vpack.c.b16 %v804, %v801
      %v1087 = vpack.c.b16 %v805, %v802
      %v1088 = vpack.c.b16 %v806, %v803
      %v1089 = vpack.c.b16 %v810, %v807
      %v1090 = vpack.c.b16 %v811, %v808
      %v1091 = vpack.c.b16 %v812, %v809
      %v1092 = vpack.c.b16 %v816, %v813
      %v1093 = vpack.c.b16 %v817, %v814
      %v1094 = vpack.c.b16 %v818, %v815
      %v1095 = vpack.c.b16 %v822, %v819
      %v1096 = vpack.c.b16 %v823, %v820
      %v1097 = vpack.c.b16 %v824, %v821
      %v1098 = vpack.c.b16 %v828, %v825
      %v1099 = vpack.c.b16 %v829, %v826
      %v1100 = vpack.c.b16 %v830, %v827
      %v1101 = vpack.c.b16 %v834, %v831
      %v1102 = vpack.c.b16 %v835, %v832
      %v1103 = vpack.c.b16 %v836, %v833
      %v1104 = vpack.c.b16 %v840, %v837
      %v1105 = vpack.c.b16 %v841, %v838
      %v1106 = vpack.c.b16 %v842, %v839
      %v1107 = vpack.c.b16 %v846, %v843
      %v1108 = vpack.c.b16 %v847, %v844
      %v1109 = vpack.c.b16 %v848, %v845
      %v1110 = vpack.c.b16 %v852, %v849
      %v1111 = vpack.c.b16 %v853, %v850
      %v1112 = vpack.c.b16 %v854, %v851
      %v1113 = vpack.c.b16 %v858, %v855
      %v1114 = vpack.c.b16 %v859, %v856
      %v1115 = vpack.c.b16 %v860, %v857
      %v1116 = vpack.c.b16 %v864, %v861
      %v1117 = vpack.c.b16 %v865, %v862
      %v1118 = vpack.c.b16 %v866, %v863
      %v1119 = vpack.c.b16 %v870, %v867
      %v1120 = vpack.c.b16 %v871, %v868
      %v1121 = vpack.c.b16 %v872, %v869
      %v1122 = vpack.c.b16 %v876, %v873
      %v1123 = vpack.c.b16 %v877, %v874
      %v1124 = vpack.c.b16 %v878, %v875
      %v1125 = vpack.c.b16 %v882, %v879
      %v1126 = vpack.c.b16 %v883, %v880
      %v1127 = vpack.c.b16 %v884, %v881
      %v1128 = vpack.c.b16 %v888, %v885
      %v1129 = vpack.c.b16 %v889, %v886
      %v1130 = vpack.c.b16 %v890, %v887
      %v1131 = vpack.c.b16 %v894, %v891
      %v1132 = vpack.c.b16 %v895, %v892
      %v1133 = vpack.c.b16 %v896, %v893
      %v1134 = vpack.c.b16 %v900, %v897
      %v1135 = vpack.c.b16 %v901, %v898
      %v1136 = vpack.c.b16 %v902, %v899
      %v1137 = vpack.c.b16 %v906, %v903
      %v1138 = vpack.c.b16 %v907, %v904
      %v1139 = vpack.c.b16 %v908, %v905
      %v1140 = vpack.c.b16 %v912, %v909
      %v1141 = vpack.c.b16 %v913, %v910
      %v1142 = vpack.c.b16 %v914, %v911
      %v1143 = vpack.c.b16 %v918, %v915
      %v1144 = vpack.c.b16 %v919, %v916
      %v1145 = vpack.c.b16 %v920, %v917
      %v1146 = vpack.c.b16 %v924, %v921
      %v1147 = vpack.c.b16 %v925, %v922
      %v1148 = vpack.c.b16 %v926, %v923
      %v1149 = vpack.c.b16 %v930, %v927
      %v1150 = vpack.c.b16 %v931, %v928
      %v1151 = vpack.c.b16 %v932, %v929
      %v1152 = vpack.c.b16 %v936, %v933
      %v1153 = vpack.c.b16 %v937, %v934
      %v1154 = vpack.c.b16 %v938, %v935
      %v1155 = vpack.c.b16 %v942, %v939
      %v1156 = vpack.c.b16 %v943, %v940
      %v1157 = vpack.c.b16 %v944, %v941
      %v1158 = vpack.c.b16 %v948, %v945
      %v1159 = vpack.c.b16 %v949, %v946
      %v1160 = vpack.c.b16 %v950, %v947
      %v1161 = vpack.c.b16 %v954, %v951
      %v1162 = vpack.c.b16 %v955, %v952
      %v1163 = vpack.c.b16 %v956, %v953
      %v1164 = vpack.c.b16 %v960, %v957
      %v1165 = vpack.c.b16 %v961, %v958
      %v1166 = vpack.c.b16 %v962, %v959
      %v1167 = vpack.c.b16 %v966, %v963
      %v1168 = vpack.c.b16 %v967, %v964
      %v1169 = vpack.c.b16 %v968, %v965
      %v1170 = vpack.c.b16 %v972, %v969
      %v1171 = vpack.c.b16 %v973, %v970
      %v1172 = vpack.c.b16 %v974, %v971
      %v1173 = vpack.c.b16 %v978, %v975
      %v1174 = vpack.c.b16 %v979, %v976
      %v1175 = vpack.c.b16 %v980, %v977
      %v1176 = vpack.c.b16 %v984, %v981
      %v1177 = vpack.c.b16 %v985, %v982
      %v1178 = vpack.c.b16 %v986, %v983
      %v1179 = vpack.c.b16 %v990, %v987
      %v1180 = vpack.c.b16 %v991, %v988
      %v1181 = vpack.c.b16 %v992, %v989
      %v1182 = vpack.c.b16 %v996, %v993
      %v1183 = vpack.c.b16 %v997, %v994
      %v1184 = vpack.c.b16 %v998, %v995
      %v1185 = vpack.c.b16 %v1002, %v999
      %v1186 = vpack.c.b16 %v1003, %v1000
      %v1187 = vpack.c.b16 %v1004, %v1001
      %v1188 = vpack.c.b16 %v1008, %v1005
      %v1189 = vpack.c.b16 %v1009, %v1006
      %v1190 = vpack.c.b16 %v1010, %v1007
      %v1191 = vpack.c.b16 %v1014, %v1011
      %v1192 = vpack.c.b16 %v1015, %v1012
      %v1193 = vpack.c.b16 %v1016, %v1013
      %v1194 = vpack.c.b16 %v1020, %v1017
      %v1195 = vpack.c.b16 %v1021, %v1018
      %v1196 = vpack.c.b16 %v1022, %v1019
      %v1197 = vpack.c.b16 %v1026, %v1023
      %v1198 = vpack.c.b16 %v1027, %v1024
      %v1199 = vpack.c.b16 %v1028, %v1025
      %v1200 = vpack.c.b16 %v1032, %v1029
      %v1201 = vpack.c.b16 %v1033, %v1030
      %v1202 = vpack.c.b16 %v1034, %v1031
      %v1361 = vunpack.c.l.b16 %v429
      %v1362 = vunpack.c.l.b16 %v430
      %v1363 = vunpack.c.l.b16 %v431
      %v1364 = vunpack.c.l.b16 %v432
      %v1365 = vunpack.c.l.b16 %v433
      %v1366 = vunpack.c.l.b16 %v434
      %v1367 = vunpack.c.l.b16 %v435
      %v1368 = vunpack.c.l.b16 %v436
      %v1369 = vunpack.c.l.b16 %v437
      %v1370 = vunpack.c.l.b16 %v438
      %v1371 = vunpack.c.l.b16 %v439
      %v1372 = vunpack.c.l.b16 %v440
      %v1373 = vunpack.c.l.b16 %v441
      %v1374 = vunpack.c.l.b16 %v442
      %v1375 = vunpack.c.l.b16 %v443
      %v1376 = vunpack.c.l.b16 %v444
      %v1377 = vunpack.c.l.b16 %v445
      %v1378 = vunpack.c.l.b16 %v446
      %v1379 = vunpack.c.l.b16 %v447
      %v1380 = vunpack.c.l.b16 %v448
      %v1381 = vunpack.c.l.b16 %v449
      %v1382 = vunpack.c.l.b16 %v450
      %v1383 = vunpack.c.l.b16 %v451
      %v1384 = vunpack.c.l.b16 %v452
      %v1385 = vunpack.c.l.b16 %v453
      %v1386 = vunpack.c.l.b16 %v454
      %v1387 = vunpack.c.l.b16 %v455
      %v1388 = vunpack.c.l.b16 %v456
      %v1389 = vunpack.c.l.b16 %v457
      %v1390 = vunpack.c.l.b16 %v458
      %v1391 = vunpack.c.l.b16 %v459
      %v1392 = vunpack.c.l.b16 %v460
      %v1393 = vunpack.c.l.b16 %v461
      %v1394 = vunpack.c.l.b16 %v462
      %v1395 = vunpack.c.l.b16 %v463
      %v1396 = vunpack.c.l.b16 %v464
      %v1397 = vunpack.c.l.b16 %v465
      %v1398 = vunpack.c.l.b16 %v466
      %v1399 = vunpack.c.l.b16 %v467
      %v1400 = vunpack.c.l.b16 %v468
      %v1401 = vunpack.c.l.b16 %v469
      %v1402 = vunpack.c.l.b16 %v470
      %v1403 = vunpack.c.l.b16 %v471
      %v1404 = vunpack.c.l.b16 %v472
      %v1405 = vunpack.c.l.b16 %v473
      %v1406 = vunpack.c.l.b16 %v474
      %v1407 = vpack.c.b16 %v1362, %v1361
      %v1408 = vpack.c.b16 %v1364, %v1363
      %v1409 = vpack.c.b16 %v1366, %v1365
      %v1410 = vpack.c.b16 %v1368, %v1367
      %v1411 = vpack.c.b16 %v1370, %v1369
      %v1412 = vpack.c.b16 %v1372, %v1371
      %v1413 = vpack.c.b16 %v1374, %v1373
      %v1414 = vpack.c.b16 %v1376, %v1375
      %v1415 = vpack.c.b16 %v1378, %v1377
      %v1416 = vpack.c.b16 %v1380, %v1379
      %v1417 = vpack.c.b16 %v1382, %v1381
      %v1418 = vpack.c.b16 %v1384, %v1383
      %v1419 = vpack.c.b16 %v1386, %v1385
      %v1420 = vpack.c.b16 %v1388, %v1387
      %v1421 = vpack.c.b16 %v1390, %v1389
      %v1422 = vpack.c.b16 %v1392, %v1391
      %v1423 = vpack.c.b16 %v1394, %v1393
      %v1424 = vpack.c.b16 %v1396, %v1395
      %v1425 = vpack.c.b16 %v1398, %v1397
      %v1426 = vpack.c.b16 %v1400, %v1399
      %v1427 = vpack.c.b16 %v1402, %v1401
      %v1428 = vpack.c.b16 %v1404, %v1403
      %v1429 = vpack.c.b16 %v1406, %v1405
      %vm1452 = vcmask 875520
      %v1454 = vsel %vm1452, %v1037, 0
      %v1457 = vsel %vm1452, %v1040, 0
      %v1460 = vsel %vm1452, %v1043, 0
      %v1463 = vsel %vm1452, %v1046, 0
      %v1466 = vsel %vm1452, %v1049, 0
      %v1469 = vsel %vm1452, %v1052, 0
      %v1472 = vsel %vm1452, %v1055, 0
      %v1475 = vsel %vm1452, %v1058, 0
      %v1478 = vsel %vm1452, %v1061, 0
      %v1481 = vsel %vm1452, %v1064, 0
      %v1484 = vsel %vm1452, %v1067, 0
      %v1487 = vsel %vm1452, %v1070, 0
      %v1490 = vsel %vm1452, %v1073, 0
      %v1493 = vsel %vm1452, %v1076, 0
      %v1496 = vsel %vm1452, %v1079, 0
      %v1499 = vsel %vm1452, %v1082, 0
      %v1502 = vsel %vm1452, %v1085, 0
      %v1505 = vsel %vm1452, %v1088, 0
      %v1508 = vsel %vm1452, %v1091, 0
      %v1511 = vsel %vm1452, %v1094, 0
      %v1514 = vsel %vm1452, %v1097, 0
      %v1517 = vsel %vm1452, %v1100, 0
      %v1520 = vsel %vm1452, %v1103, 0
      %v1523 = vsel %vm1452, %v1106, 0
      %v1526 = vsel %vm1452, %v1109, 0
      %v1529 = vsel %vm1452, %v1112, 0
      %v1532 = vsel %vm1452, %v1115, 0
      %v1535 = vsel %vm1452, %v1118, 0
      %v1538 = vsel %vm1452, %v1121, 0
      %v1541 = vsel %vm1452, %v1124, 0
      %v1544 = vsel %vm1452, %v1127, 0
      %v1547 = vsel %vm1452, %v1130, 0
      %v1550 = vsel %vm1452, %v1133, 0
      %v1553 = vsel %vm1452, %v1136, 0
      %v1556 = vsel %vm1452, %v1139, 0
      %v1559 = vsel %vm1452, %v1142, 0
      %v1562 = vsel %vm1452, %v1145, 0
      %v1565 = vsel %vm1452, %v1148, 0
      %v1568 = vsel %vm1452, %v1151, 0
      %v1571 = vsel %vm1452, %v1154, 0
      %v1574 = vsel %vm1452, %v1157, 0
      %v1577 = vsel %vm1452, %v1160, 0
      %v1580 = vsel %vm1452, %v1163, 0
      %v1583 = vsel %vm1452, %v1166, 0
      %v1586 = vsel %vm1452, %v1169, 0
      %v1589 = vsel %vm1452, %v1172, 0
      %v1592 = vsel %vm1452, %v1175, 0
      %v1595 = vsel %vm1452, %v1178, 0
      %v1598 = vsel %vm1452, %v1181, 0
      %v1601 = vsel %vm1452, %v1184, 0
      %v1604 = vsel %vm1452, %v1187, 0
      %v1607 = vsel %vm1452, %v1190, 0
      %v1610 = vsel %vm1452, %v1193, 0
      %v1613 = vsel %vm1452, %v1196, 0
      %v1616 = vsel %vm1452, %v1199, 0
      %v1619 = vsel %vm1452, %v1202, 0
      %vm1621 = vcmask 1044480
      %vm1622 = vcmask 1045504
      %v1623 = vsel %vm1621, 4294967295, 65535
      %v1624 = vsel %vm1622, %v1623, 0
      %v1626 = vand.u32 %v1429, %v1624
      %1628 = vmatprep.subr.bf16.mxu0 0
      %1629 = vmatpush1.bf16.msra.mxu0 %v1414
      %1630 = vmatprep.subr.bf16.mxu0 0
      %1631 = vmatpush1.bf16.msra.mxu0 %v1413
      %1632 = vmatprep.subr.bf16.mxu0 0
      %1633 = vmatpush1.bf16.msra.mxu0 %v1412
      %1634 = vmatprep.subr.bf16.mxu0 0
      %1635 = vmatpush1.bf16.msra.mxu0 %v1411
      %1636 = vmatprep.subr.bf16.mxu0 0
      %1637 = vmatpush1.bf16.msra.mxu0 %v1410
      %1638 = vmatprep.subr.bf16.mxu0 0
      %1639 = vmatpush1.bf16.msra.mxu0 %v1409
      %1640 = vmatprep.subr.bf16.mxu0 0
      %1641 = vmatpush1.bf16.msra.mxu0 %v1408
      %1642 = vmatprep.subr.bf16.mxu0 0
      %1643 = vmatpush1.bf16.msra.mxu0 %v1407
      %1644 = vmatprep.subr.bf16.mxu0 0
      %1645 = vmatpush2.bf16.msra.mxu0 %v1422
      %1646 = vmatprep.subr.bf16.mxu0 0
      %1647 = vmatpush2.bf16.msra.mxu0 %v1421
      %1648 = vmatprep.subr.bf16.mxu0 0
      %1649 = vmatpush2.bf16.msra.mxu0 %v1420
      %1650 = vmatprep.subr.bf16.mxu0 0
      %1651 = vmatpush2.bf16.msra.mxu0 %v1419
      %1652 = vmatprep.subr.bf16.mxu0 0
      %1653 = vmatpush2.bf16.msra.mxu0 %v1418
      %1654 = vmatprep.subr.bf16.mxu0 0
      %1655 = vmatpush2.bf16.msra.mxu0 %v1417
      %1656 = vmatprep.subr.bf16.mxu0 0
      %1657 = vmatpush2.bf16.msra.mxu0 %v1416
      %1658 = vmatprep.subr.bf16.mxu0 0
      %1659 = vmatpush2.bf16.msra.mxu0 %v1415
      %1660 = vmatprep.mubr.bf16.mxu0 %v1036
      %1661 = vmatmul.mubr.bf16.gmra.mxu0 %v1035
      %v1662 = vpop.f32.mrf.mxu0
      %v1663 = vadd.f32 0.0, %v1662
      %v1664 = vpop.f32.mrf.mxu0
      %v1665 = vpop.f32.mrf.mxu0
      %v1666 = vadd.f32 0.0, %v1665
      %v1667 = vpop.f32.mrf.mxu0
      %1668 = vmatprep.mubr.bf16.mxu0 %v1039
      %1669 = vmatmul.mubr.bf16.gmra.mxu0 %v1038
      %v1670 = vpop.f32.mrf.mxu0
      %v1671 = vadd.f32 0.0, %v1670
      %v1672 = vpop.f32.mrf.mxu0
      %v1673 = vpop.f32.mrf.mxu0
      %v1674 = vadd.f32 0.0, %v1673
      %v1675 = vpop.f32.mrf.mxu0
      %1676 = vmatprep.mubr.bf16.mxu0 %v1042
      %1677 = vmatmul.mubr.bf16.gmra.mxu0 %v1041
      %v1678 = vpop.f32.mrf.mxu0
      %v1679 = vadd.f32 0.0, %v1678
      %v1680 = vpop.f32.mrf.mxu0
      %v1681 = vpop.f32.mrf.mxu0
      %v1682 = vadd.f32 0.0, %v1681
      %v1683 = vpop.f32.mrf.mxu0
      %1684 = vmatprep.mubr.bf16.mxu0 %v1045
      %1685 = vmatmul.mubr.bf16.gmra.mxu0 %v1044
      %v1686 = vpop.f32.mrf.mxu0
      %v1687 = vadd.f32 0.0, %v1686
      %v1688 = vpop.f32.mrf.mxu0
      %v1689 = vpop.f32.mrf.mxu0
      %v1690 = vadd.f32 0.0, %v1689
      %v1691 = vpop.f32.mrf.mxu0
      %1692 = vmatprep.mubr.bf16.mxu0 %v1048
      %1693 = vmatmul.mubr.bf16.gmra.mxu0 %v1047
      %v1694 = vpop.f32.mrf.mxu0
      %v1695 = vadd.f32 0.0, %v1694
      %v1696 = vpop.f32.mrf.mxu0
      %v1697 = vpop.f32.mrf.mxu0
      %v1698 = vadd.f32 0.0, %v1697
      %v1699 = vpop.f32.mrf.mxu0
      %1700 = vmatprep.mubr.bf16.mxu0 %v1051
      %1701 = vmatmul.mubr.bf16.gmra.mxu0 %v1050
      %v1702 = vpop.f32.mrf.mxu0
      %v1703 = vadd.f32 0.0, %v1702
      %v1704 = vpop.f32.mrf.mxu0
      %v1705 = vpop.f32.mrf.mxu0
      %v1706 = vadd.f32 0.0, %v1705
      %v1707 = vpop.f32.mrf.mxu0
      %1708 = vmatprep.mubr.bf16.mxu0 %v1054
      %1709 = vmatmul.mubr.bf16.gmra.mxu0 %v1053
      %v1710 = vpop.f32.mrf.mxu0
      %v1711 = vadd.f32 0.0, %v1710
      %v1712 = vpop.f32.mrf.mxu0
      %v1713 = vpop.f32.mrf.mxu0
      %v1714 = vadd.f32 0.0, %v1713
      %v1715 = vpop.f32.mrf.mxu0
      %1716 = vmatprep.mubr.bf16.mxu0 %v1057
      %1717 = vmatmul.mubr.bf16.gmra.mxu0 %v1056
      %v1718 = vpop.f32.mrf.mxu0
      %v1719 = vadd.f32 0.0, %v1718
      %v1720 = vpop.f32.mrf.mxu0
      %v1721 = vpop.f32.mrf.mxu0
      %v1722 = vadd.f32 0.0, %v1721
      %v1723 = vpop.f32.mrf.mxu0
      %1724 = vmatprep.mubr.bf16.mxu0 %v1060
      %1725 = vmatmul.mubr.bf16.gmra.mxu0 %v1059
      %v1726 = vpop.f32.mrf.mxu0
      %v1727 = vadd.f32 0.0, %v1726
      %v1728 = vpop.f32.mrf.mxu0
      %v1729 = vpop.f32.mrf.mxu0
      %v1730 = vadd.f32 0.0, %v1729
      %v1731 = vpop.f32.mrf.mxu0
      %1732 = vmatprep.mubr.bf16.mxu0 %v1063
      %1733 = vmatmul.mubr.bf16.gmra.mxu0 %v1062
      %v1734 = vpop.f32.mrf.mxu0
      %v1735 = vadd.f32 0.0, %v1734
      %v1736 = vpop.f32.mrf.mxu0
      %v1737 = vpop.f32.mrf.mxu0
      %v1738 = vadd.f32 0.0, %v1737
      %v1739 = vpop.f32.mrf.mxu0
      %1740 = vmatprep.mubr.bf16.mxu0 %v1066
      %1741 = vmatmul.mubr.bf16.gmra.mxu0 %v1065
      %v1742 = vpop.f32.mrf.mxu0
      %v1743 = vadd.f32 0.0, %v1742
      %v1744 = vpop.f32.mrf.mxu0
      %v1745 = vpop.f32.mrf.mxu0
      %v1746 = vadd.f32 0.0, %v1745
      %v1747 = vpop.f32.mrf.mxu0
      %1748 = vmatprep.mubr.bf16.mxu0 %v1069
      %1749 = vmatmul.mubr.bf16.gmra.mxu0 %v1068
      %v1750 = vpop.f32.mrf.mxu0
      %v1751 = vadd.f32 0.0, %v1750
      %v1752 = vpop.f32.mrf.mxu0
      %v1753 = vpop.f32.mrf.mxu0
      %v1754 = vadd.f32 0.0, %v1753
      %v1755 = vpop.f32.mrf.mxu0
      %1756 = vmatprep.mubr.bf16.mxu0 %v1072
      %1757 = vmatmul.mubr.bf16.gmra.mxu0 %v1071
      %v1758 = vpop.f32.mrf.mxu0
      %v1759 = vadd.f32 0.0, %v1758
      %v1760 = vpop.f32.mrf.mxu0
      %v1761 = vpop.f32.mrf.mxu0
      %v1762 = vadd.f32 0.0, %v1761
      %v1763 = vpop.f32.mrf.mxu0
      %1764 = vmatprep.mubr.bf16.mxu0 %v1075
      %1765 = vmatmul.mubr.bf16.gmra.mxu0 %v1074
      %v1766 = vpop.f32.mrf.mxu0
      %v1767 = vadd.f32 0.0, %v1766
      %v1768 = vpop.f32.mrf.mxu0
      %v1769 = vpop.f32.mrf.mxu0
      %v1770 = vadd.f32 0.0, %v1769
      %v1771 = vpop.f32.mrf.mxu0
      %1772 = vmatprep.mubr.bf16.mxu0 %v1078
      %1773 = vmatmul.mubr.bf16.gmra.mxu0 %v1077
      %v1774 = vpop.f32.mrf.mxu0
      %v1775 = vadd.f32 0.0, %v1774
      %v1776 = vpop.f32.mrf.mxu0
      %v1777 = vpop.f32.mrf.mxu0
      %v1778 = vadd.f32 0.0, %v1777
      %v1779 = vpop.f32.mrf.mxu0
      %1780 = vmatprep.mubr.bf16.mxu0 %v1081
      %1781 = vmatmul.mubr.bf16.gmra.mxu0 %v1080
      %v1782 = vpop.f32.mrf.mxu0
      %v1783 = vadd.f32 0.0, %v1782
      %v1784 = vpop.f32.mrf.mxu0
      %v1785 = vpop.f32.mrf.mxu0
      %v1786 = vadd.f32 0.0, %v1785
      %v1787 = vpop.f32.mrf.mxu0
      %1788 = vmatprep.mubr.bf16.mxu0 %v1084
      %1789 = vmatmul.mubr.bf16.gmra.mxu0 %v1083
      %v1790 = vpop.f32.mrf.mxu0
      %v1791 = vadd.f32 0.0, %v1790
      %v1792 = vpop.f32.mrf.mxu0
      %v1793 = vpop.f32.mrf.mxu0
      %v1794 = vadd.f32 0.0, %v1793
      %v1795 = vpop.f32.mrf.mxu0
      %1796 = vmatprep.mubr.bf16.mxu0 %v1087
      %1797 = vmatmul.mubr.bf16.gmra.mxu0 %v1086
      %v1798 = vpop.f32.mrf.mxu0
      %v1799 = vadd.f32 0.0, %v1798
      %v1800 = vpop.f32.mrf.mxu0
      %v1801 = vpop.f32.mrf.mxu0
      %v1802 = vadd.f32 0.0, %v1801
      %v1803 = vpop.f32.mrf.mxu0
      %1804 = vmatprep.mubr.bf16.mxu0 %v1090
      %1805 = vmatmul.mubr.bf16.gmra.mxu0 %v1089
      %v1806 = vpop.f32.mrf.mxu0
      %v1807 = vadd.f32 0.0, %v1806
      %v1808 = vpop.f32.mrf.mxu0
      %v1809 = vpop.f32.mrf.mxu0
      %v1810 = vadd.f32 0.0, %v1809
      %v1811 = vpop.f32.mrf.mxu0
      %1812 = vmatprep.mubr.bf16.mxu0 %v1093
      %1813 = vmatmul.mubr.bf16.gmra.mxu0 %v1092
      %v1814 = vpop.f32.mrf.mxu0
      %v1815 = vadd.f32 0.0, %v1814
      %v1816 = vpop.f32.mrf.mxu0
      %v1817 = vpop.f32.mrf.mxu0
      %v1818 = vadd.f32 0.0, %v1817
      %v1819 = vpop.f32.mrf.mxu0
      %1820 = vmatprep.mubr.bf16.mxu0 %v1096
      %1821 = vmatmul.mubr.bf16.gmra.mxu0 %v1095
      %v1822 = vpop.f32.mrf.mxu0
      %v1823 = vadd.f32 0.0, %v1822
      %v1824 = vpop.f32.mrf.mxu0
      %v1825 = vpop.f32.mrf.mxu0
      %v1826 = vadd.f32 0.0, %v1825
      %v1827 = vpop.f32.mrf.mxu0
      %1828 = vmatprep.mubr.bf16.mxu0 %v1099
      %1829 = vmatmul.mubr.bf16.gmra.mxu0 %v1098
      %v1830 = vpop.f32.mrf.mxu0
      %v1831 = vadd.f32 0.0, %v1830
      %v1832 = vpop.f32.mrf.mxu0
      %v1833 = vpop.f32.mrf.mxu0
      %v1834 = vadd.f32 0.0, %v1833
      %v1835 = vpop.f32.mrf.mxu0
      %1836 = vmatprep.mubr.bf16.mxu0 %v1102
      %1837 = vmatmul.mubr.bf16.gmra.mxu0 %v1101
      %v1838 = vpop.f32.mrf.mxu0
      %v1839 = vadd.f32 0.0, %v1838
      %v1840 = vpop.f32.mrf.mxu0
      %v1841 = vpop.f32.mrf.mxu0
      %v1842 = vadd.f32 0.0, %v1841
      %v1843 = vpop.f32.mrf.mxu0
      %1844 = vmatprep.mubr.bf16.mxu0 %v1105
      %1845 = vmatmul.mubr.bf16.gmra.mxu0 %v1104
      %v1846 = vpop.f32.mrf.mxu0
      %v1847 = vadd.f32 0.0, %v1846
      %v1848 = vpop.f32.mrf.mxu0
      %v1849 = vpop.f32.mrf.mxu0
      %v1850 = vadd.f32 0.0, %v1849
      %v1851 = vpop.f32.mrf.mxu0
      %1852 = vmatprep.mubr.bf16.mxu0 %v1108
      %1853 = vmatmul.mubr.bf16.gmra.mxu0 %v1107
      %v1854 = vpop.f32.mrf.mxu0
      %v1855 = vadd.f32 0.0, %v1854
      %v1856 = vpop.f32.mrf.mxu0
      %v1857 = vpop.f32.mrf.mxu0
      %v1858 = vadd.f32 0.0, %v1857
      %v1859 = vpop.f32.mrf.mxu0
      %1860 = vmatprep.mubr.bf16.mxu0 %v1111
      %1861 = vmatmul.mubr.bf16.gmra.mxu0 %v1110
      %v1862 = vpop.f32.mrf.mxu0
      %v1863 = vadd.f32 0.0, %v1862
      %v1864 = vpop.f32.mrf.mxu0
      %v1865 = vpop.f32.mrf.mxu0
      %v1866 = vadd.f32 0.0, %v1865
      %v1867 = vpop.f32.mrf.mxu0
      %1868 = vmatprep.mubr.bf16.mxu0 %v1114
      %1869 = vmatmul.mubr.bf16.gmra.mxu0 %v1113
      %v1870 = vpop.f32.mrf.mxu0
      %v1871 = vadd.f32 0.0, %v1870
      %v1872 = vpop.f32.mrf.mxu0
      %v1873 = vpop.f32.mrf.mxu0
      %v1874 = vadd.f32 0.0, %v1873
      %v1875 = vpop.f32.mrf.mxu0
      %1876 = vmatprep.mubr.bf16.mxu0 %v1117
      %1877 = vmatmul.mubr.bf16.gmra.mxu0 %v1116
      %v1878 = vpop.f32.mrf.mxu0
      %v1879 = vadd.f32 0.0, %v1878
      %v1880 = vpop.f32.mrf.mxu0
      %v1881 = vpop.f32.mrf.mxu0
      %v1882 = vadd.f32 0.0, %v1881
      %v1883 = vpop.f32.mrf.mxu0
      %1884 = vmatprep.mubr.bf16.mxu0 %v1120
      %1885 = vmatmul.mubr.bf16.gmra.mxu0 %v1119
      %v1886 = vpop.f32.mrf.mxu0
      %v1887 = vadd.f32 0.0, %v1886
      %v1888 = vpop.f32.mrf.mxu0
      %v1889 = vpop.f32.mrf.mxu0
      %v1890 = vadd.f32 0.0, %v1889
      %v1891 = vpop.f32.mrf.mxu0
      %1892 = vmatprep.mubr.bf16.mxu0 %v1123
      %1893 = vmatmul.mubr.bf16.gmra.mxu0 %v1122
      %v1894 = vpop.f32.mrf.mxu0
      %v1895 = vadd.f32 0.0, %v1894
      %v1896 = vpop.f32.mrf.mxu0
      %v1897 = vpop.f32.mrf.mxu0
      %v1898 = vadd.f32 0.0, %v1897
      %v1899 = vpop.f32.mrf.mxu0
      %1900 = vmatprep.mubr.bf16.mxu0 %v1126
      %1901 = vmatmul.mubr.bf16.gmra.mxu0 %v1125
      %v1902 = vpop.f32.mrf.mxu0
      %v1903 = vadd.f32 0.0, %v1902
      %v1904 = vpop.f32.mrf.mxu0
      %v1905 = vpop.f32.mrf.mxu0
      %v1906 = vadd.f32 0.0, %v1905
      %v1907 = vpop.f32.mrf.mxu0
      %1908 = vmatprep.mubr.bf16.mxu0 %v1129
      %1909 = vmatmul.mubr.bf16.gmra.mxu0 %v1128
      %v1910 = vpop.f32.mrf.mxu0
      %v1911 = vadd.f32 0.0, %v1910
      %v1912 = vpop.f32.mrf.mxu0
      %v1913 = vpop.f32.mrf.mxu0
      %v1914 = vadd.f32 0.0, %v1913
      %v1915 = vpop.f32.mrf.mxu0
      %1916 = vmatprep.mubr.bf16.mxu0 %v1132
      %1917 = vmatmul.mubr.bf16.gmra.mxu0 %v1131
      %v1918 = vpop.f32.mrf.mxu0
      %v1919 = vadd.f32 0.0, %v1918
      %v1920 = vpop.f32.mrf.mxu0
      %v1921 = vpop.f32.mrf.mxu0
      %v1922 = vadd.f32 0.0, %v1921
      %v1923 = vpop.f32.mrf.mxu0
      %1924 = vmatprep.mubr.bf16.mxu0 %v1135
      %1925 = vmatmul.mubr.bf16.gmra.mxu0 %v1134
      %v1926 = vpop.f32.mrf.mxu0
      %v1927 = vadd.f32 0.0, %v1926
      %v1928 = vpop.f32.mrf.mxu0
      %v1929 = vpop.f32.mrf.mxu0
      %v1930 = vadd.f32 0.0, %v1929
      %v1931 = vpop.f32.mrf.mxu0
      %1932 = vmatprep.mubr.bf16.mxu0 %v1138
      %1933 = vmatmul.mubr.bf16.gmra.mxu0 %v1137
      %v1934 = vpop.f32.mrf.mxu0
      %v1935 = vadd.f32 0.0, %v1934
      %v1936 = vpop.f32.mrf.mxu0
      %v1937 = vpop.f32.mrf.mxu0
      %v1938 = vadd.f32 0.0, %v1937
      %v1939 = vpop.f32.mrf.mxu0
      %1940 = vmatprep.mubr.bf16.mxu0 %v1141
      %1941 = vmatmul.mubr.bf16.gmra.mxu0 %v1140
      %v1942 = vpop.f32.mrf.mxu0
      %v1943 = vadd.f32 0.0, %v1942
      %v1944 = vpop.f32.mrf.mxu0
      %v1945 = vpop.f32.mrf.mxu0
      %v1946 = vadd.f32 0.0, %v1945
      %v1947 = vpop.f32.mrf.mxu0
      %1948 = vmatprep.mubr.bf16.mxu0 %v1144
      %1949 = vmatmul.mubr.bf16.gmra.mxu0 %v1143
      %v1950 = vpop.f32.mrf.mxu0
      %v1951 = vadd.f32 0.0, %v1950
      %v1952 = vpop.f32.mrf.mxu0
      %v1953 = vpop.f32.mrf.mxu0
      %v1954 = vadd.f32 0.0, %v1953
      %v1955 = vpop.f32.mrf.mxu0
      %1956 = vmatprep.mubr.bf16.mxu0 %v1147
      %1957 = vmatmul.mubr.bf16.gmra.mxu0 %v1146
      %v1958 = vpop.f32.mrf.mxu0
      %v1959 = vadd.f32 0.0, %v1958
      %v1960 = vpop.f32.mrf.mxu0
      %v1961 = vpop.f32.mrf.mxu0
      %v1962 = vadd.f32 0.0, %v1961
      %v1963 = vpop.f32.mrf.mxu0
      %1964 = vmatprep.mubr.bf16.mxu0 %v1150
      %1965 = vmatmul.mubr.bf16.gmra.mxu0 %v1149
      %v1966 = vpop.f32.mrf.mxu0
      %v1967 = vadd.f32 0.0, %v1966
      %v1968 = vpop.f32.mrf.mxu0
      %v1969 = vpop.f32.mrf.mxu0
      %v1970 = vadd.f32 0.0, %v1969
      %v1971 = vpop.f32.mrf.mxu0
      %1972 = vmatprep.mubr.bf16.mxu0 %v1153
      %1973 = vmatmul.mubr.bf16.gmra.mxu0 %v1152
      %v1974 = vpop.f32.mrf.mxu0
      %v1975 = vadd.f32 0.0, %v1974
      %v1976 = vpop.f32.mrf.mxu0
      %v1977 = vpop.f32.mrf.mxu0
      %v1978 = vadd.f32 0.0, %v1977
      %v1979 = vpop.f32.mrf.mxu0
      %1980 = vmatprep.mubr.bf16.mxu0 %v1156
      %1981 = vmatmul.mubr.bf16.gmra.mxu0 %v1155
      %v1982 = vpop.f32.mrf.mxu0
      %v1983 = vadd.f32 0.0, %v1982
      %v1984 = vpop.f32.mrf.mxu0
      %v1985 = vpop.f32.mrf.mxu0
      %v1986 = vadd.f32 0.0, %v1985
      %v1987 = vpop.f32.mrf.mxu0
      %1988 = vmatprep.mubr.bf16.mxu0 %v1159
      %1989 = vmatmul.mubr.bf16.gmra.mxu0 %v1158
      %v1990 = vpop.f32.mrf.mxu0
      %v1991 = vadd.f32 0.0, %v1990
      %v1992 = vpop.f32.mrf.mxu0
      %v1993 = vpop.f32.mrf.mxu0
      %v1994 = vadd.f32 0.0, %v1993
      %v1995 = vpop.f32.mrf.mxu0
      %1996 = vmatprep.mubr.bf16.mxu0 %v1162
      %1997 = vmatmul.mubr.bf16.gmra.mxu0 %v1161
      %v1998 = vpop.f32.mrf.mxu0
      %v1999 = vadd.f32 0.0, %v1998
      %v2000 = vpop.f32.mrf.mxu0
      %v2001 = vpop.f32.mrf.mxu0
      %v2002 = vadd.f32 0.0, %v2001
      %v2003 = vpop.f32.mrf.mxu0
      %2004 = vmatprep.mubr.bf16.mxu0 %v1165
      %2005 = vmatmul.mubr.bf16.gmra.mxu0 %v1164
      %v2006 = vpop.f32.mrf.mxu0
      %v2007 = vadd.f32 0.0, %v2006
      %v2008 = vpop.f32.mrf.mxu0
      %v2009 = vpop.f32.mrf.mxu0
      %v2010 = vadd.f32 0.0, %v2009
      %v2011 = vpop.f32.mrf.mxu0
      %2012 = vmatprep.mubr.bf16.mxu0 %v1168
      %2013 = vmatmul.mubr.bf16.gmra.mxu0 %v1167
      %v2014 = vpop.f32.mrf.mxu0
      %v2015 = vadd.f32 0.0, %v2014
      %v2016 = vpop.f32.mrf.mxu0
      %v2017 = vpop.f32.mrf.mxu0
      %v2018 = vadd.f32 0.0, %v2017
      %v2019 = vpop.f32.mrf.mxu0
      %2020 = vmatprep.mubr.bf16.mxu0 %v1171
      %2021 = vmatmul.mubr.bf16.gmra.mxu0 %v1170
      %v2022 = vpop.f32.mrf.mxu0
      %v2023 = vadd.f32 0.0, %v2022
      %v2024 = vpop.f32.mrf.mxu0
      %v2025 = vpop.f32.mrf.mxu0
      %v2026 = vadd.f32 0.0, %v2025
      %v2027 = vpop.f32.mrf.mxu0
      %2028 = vmatprep.mubr.bf16.mxu0 %v1174
      %2029 = vmatmul.mubr.bf16.gmra.mxu0 %v1173
      %v2030 = vpop.f32.mrf.mxu0
      %v2031 = vadd.f32 0.0, %v2030
      %v2032 = vpop.f32.mrf.mxu0
      %v2033 = vpop.f32.mrf.mxu0
      %v2034 = vadd.f32 0.0, %v2033
      %v2035 = vpop.f32.mrf.mxu0
      %2036 = vmatprep.mubr.bf16.mxu0 %v1177
      %2037 = vmatmul.mubr.bf16.gmra.mxu0 %v1176
      %v2038 = vpop.f32.mrf.mxu0
      %v2039 = vadd.f32 0.0, %v2038
      %v2040 = vpop.f32.mrf.mxu0
      %v2041 = vpop.f32.mrf.mxu0
      %v2042 = vadd.f32 0.0, %v2041
      %v2043 = vpop.f32.mrf.mxu0
      %2044 = vmatprep.mubr.bf16.mxu0 %v1180
      %2045 = vmatmul.mubr.bf16.gmra.mxu0 %v1179
      %v2046 = vpop.f32.mrf.mxu0
      %v2047 = vadd.f32 0.0, %v2046
      %v2048 = vpop.f32.mrf.mxu0
      %v2049 = vpop.f32.mrf.mxu0
      %v2050 = vadd.f32 0.0, %v2049
      %v2051 = vpop.f32.mrf.mxu0
      %2052 = vmatprep.mubr.bf16.mxu0 %v1183
      %2053 = vmatmul.mubr.bf16.gmra.mxu0 %v1182
      %v2054 = vpop.f32.mrf.mxu0
      %v2055 = vadd.f32 0.0, %v2054
      %v2056 = vpop.f32.mrf.mxu0
      %v2057 = vpop.f32.mrf.mxu0
      %v2058 = vadd.f32 0.0, %v2057
      %v2059 = vpop.f32.mrf.mxu0
      %2060 = vmatprep.mubr.bf16.mxu0 %v1186
      %2061 = vmatmul.mubr.bf16.gmra.mxu0 %v1185
      %v2062 = vpop.f32.mrf.mxu0
      %v2063 = vadd.f32 0.0, %v2062
      %v2064 = vpop.f32.mrf.mxu0
      %v2065 = vpop.f32.mrf.mxu0
      %v2066 = vadd.f32 0.0, %v2065
      %v2067 = vpop.f32.mrf.mxu0
      %2068 = vmatprep.mubr.bf16.mxu0 %v1189
      %2069 = vmatmul.mubr.bf16.gmra.mxu0 %v1188
      %v2070 = vpop.f32.mrf.mxu0
      %v2071 = vadd.f32 0.0, %v2070
      %v2072 = vpop.f32.mrf.mxu0
      %v2073 = vpop.f32.mrf.mxu0
      %v2074 = vadd.f32 0.0, %v2073
      %v2075 = vpop.f32.mrf.mxu0
      %2076 = vmatprep.mubr.bf16.mxu0 %v1192
      %2077 = vmatmul.mubr.bf16.gmra.mxu0 %v1191
      %v2078 = vpop.f32.mrf.mxu0
      %v2079 = vadd.f32 0.0, %v2078
      %v2080 = vpop.f32.mrf.mxu0
      %v2081 = vpop.f32.mrf.mxu0
      %v2082 = vadd.f32 0.0, %v2081
      %v2083 = vpop.f32.mrf.mxu0
      %2084 = vmatprep.mubr.bf16.mxu0 %v1195
      %2085 = vmatmul.mubr.bf16.gmra.mxu0 %v1194
      %v2086 = vpop.f32.mrf.mxu0
      %v2087 = vadd.f32 0.0, %v2086
      %v2088 = vpop.f32.mrf.mxu0
      %v2089 = vpop.f32.mrf.mxu0
      %v2090 = vadd.f32 0.0, %v2089
      %v2091 = vpop.f32.mrf.mxu0
      %2092 = vmatprep.mubr.bf16.mxu0 %v1198
      %2093 = vmatmul.mubr.bf16.gmra.mxu0 %v1197
      %v2094 = vpop.f32.mrf.mxu0
      %v2095 = vadd.f32 0.0, %v2094
      %v2096 = vpop.f32.mrf.mxu0
      %v2097 = vpop.f32.mrf.mxu0
      %v2098 = vadd.f32 0.0, %v2097
      %v2099 = vpop.f32.mrf.mxu0
      %2100 = vmatprep.mubr.bf16.mxu0 %v1201
      %2101 = vmatmul.mubr.bf16.gmra.mxu0 %v1200
      %v2102 = vpop.f32.mrf.mxu0
      %v2103 = vadd.f32 0.0, %v2102
      %v2104 = vpop.f32.mrf.mxu0
      %v2105 = vpop.f32.mrf.mxu0
      %v2106 = vadd.f32 0.0, %v2105
      %v2107 = vpop.f32.mrf.mxu0
      %2108 = vdwg.mxu0
      %2109 = vmatprep.subr.bf16.mxu0 0
      %2110 = vmatpush1.bf16.msra.mxu0 0
      %2111 = vmatprep.subr.bf16.mxu0 0
      %2112 = vmatpush1.bf16.msra.mxu0 %v1626
      %2113 = vmatprep.subr.bf16.mxu0 0
      %2114 = vmatpush1.bf16.msra.mxu0 %v1428
      %2115 = vmatprep.subr.bf16.mxu0 0
      %2116 = vmatpush1.bf16.msra.mxu0 %v1427
      %2117 = vmatprep.subr.bf16.mxu0 0
      %2118 = vmatpush1.bf16.msra.mxu0 %v1426
      %2119 = vmatprep.subr.bf16.mxu0 0
      %2120 = vmatpush1.bf16.msra.mxu0 %v1425
      %2121 = vmatprep.subr.bf16.mxu0 0
      %2122 = vmatpush1.bf16.msra.mxu0 %v1424
      %2123 = vmatprep.subr.bf16.mxu0 0
      %2124 = vmatpush1.bf16.msra.mxu0 %v1423
      %2125 = vmatprep.subr.bf16.mxu0 0
      %2126 = vmatpush2.bf16.msra.mxu0 0
      %2127 = vmatprep.subr.bf16.mxu0 0
      %2128 = vmatpush2.bf16.msra.mxu0 0
      %2129 = vmatprep.subr.bf16.mxu0 0
      %2130 = vmatpush2.bf16.msra.mxu0 0
      %2131 = vmatprep.subr.bf16.mxu0 0
      %2132 = vmatpush2.bf16.msra.mxu0 0
      %2133 = vmatprep.subr.bf16.mxu0 0
      %2134 = vmatpush2.bf16.msra.mxu0 0
      %2135 = vmatprep.subr.bf16.mxu0 0
      %2136 = vmatpush2.bf16.msra.mxu0 0
      %2137 = vmatprep.subr.bf16.mxu0 0
      %2138 = vmatpush2.bf16.msra.mxu0 0
      %2139 = vmatprep.subr.bf16.mxu0 0
      %2140 = vmatpush2.bf16.msra.mxu0 0
      %2141 = vmatprep.mubr.bf16.mxu0 0
      %2142 = vmatmul.mubr.bf16.gmra.mxu0 %v1454
      %v2143 = vpop.f32.mrf.mxu0
      %v2144 = vadd.f32 %v1663, %v2143
      %v2145 = vpop.f32.mrf.mxu0
      %v2146 = vpop.f32.mrf.mxu0
      %v2147 = vadd.f32 %v1666, %v2146
      %v2148 = vpop.f32.mrf.mxu0
      %2149 = vmatprep.mubr.bf16.mxu0 0
      %2150 = vmatmul.mubr.bf16.gmra.mxu0 %v1457
      %v2151 = vpop.f32.mrf.mxu0
      %v2152 = vadd.f32 %v1671, %v2151
      %v2153 = vpop.f32.mrf.mxu0
      %v2154 = vpop.f32.mrf.mxu0
      %v2155 = vadd.f32 %v1674, %v2154
      %v2156 = vpop.f32.mrf.mxu0
      %2157 = vmatprep.mubr.bf16.mxu0 0
      %2158 = vmatmul.mubr.bf16.gmra.mxu0 %v1460
      %v2159 = vpop.f32.mrf.mxu0
      %v2160 = vadd.f32 %v1679, %v2159
      %v2161 = vpop.f32.mrf.mxu0
      %v2162 = vpop.f32.mrf.mxu0
      %v2163 = vadd.f32 %v1682, %v2162
      %v2164 = vpop.f32.mrf.mxu0
      %2165 = vmatprep.mubr.bf16.mxu0 0
      %2166 = vmatmul.mubr.bf16.gmra.mxu0 %v1463
      %v2167 = vpop.f32.mrf.mxu0
      %v2168 = vadd.f32 %v1687, %v2167
      %v2169 = vpop.f32.mrf.mxu0
      %v2170 = vpop.f32.mrf.mxu0
      %v2171 = vadd.f32 %v1690, %v2170
      %v2172 = vpop.f32.mrf.mxu0
      %2173 = vmatprep.mubr.bf16.mxu0 0
      %2174 = vmatmul.mubr.bf16.gmra.mxu0 %v1466
      %v2175 = vpop.f32.mrf.mxu0
      %v2176 = vadd.f32 %v1695, %v2175
      %v2177 = vpop.f32.mrf.mxu0
      %v2178 = vpop.f32.mrf.mxu0
      %v2179 = vadd.f32 %v1698, %v2178
      %v2180 = vpop.f32.mrf.mxu0
      %2181 = vmatprep.mubr.bf16.mxu0 0
      %2182 = vmatmul.mubr.bf16.gmra.mxu0 %v1469
      %v2183 = vpop.f32.mrf.mxu0
      %v2184 = vadd.f32 %v1703, %v2183
      %v2185 = vpop.f32.mrf.mxu0
      %v2186 = vpop.f32.mrf.mxu0
      %v2187 = vadd.f32 %v1706, %v2186
      %v2188 = vpop.f32.mrf.mxu0
      %2189 = vmatprep.mubr.bf16.mxu0 0
      %2190 = vmatmul.mubr.bf16.gmra.mxu0 %v1472
      %v2191 = vpop.f32.mrf.mxu0
      %v2192 = vadd.f32 %v1711, %v2191
      %v2193 = vpop.f32.mrf.mxu0
      %v2194 = vpop.f32.mrf.mxu0
      %v2195 = vadd.f32 %v1714, %v2194
      %v2196 = vpop.f32.mrf.mxu0
      %2197 = vmatprep.mubr.bf16.mxu0 0
      %2198 = vmatmul.mubr.bf16.gmra.mxu0 %v1475
      %v2199 = vpop.f32.mrf.mxu0
      %v2200 = vadd.f32 %v1719, %v2199
      %v2201 = vpop.f32.mrf.mxu0
      %v2202 = vpop.f32.mrf.mxu0
      %v2203 = vadd.f32 %v1722, %v2202
      %v2204 = vpop.f32.mrf.mxu0
      %2205 = vmatprep.mubr.bf16.mxu0 0
      %2206 = vmatmul.mubr.bf16.gmra.mxu0 %v1478
      %v2207 = vpop.f32.mrf.mxu0
      %v2208 = vadd.f32 %v1727, %v2207
      %v2209 = vpop.f32.mrf.mxu0
      %v2210 = vpop.f32.mrf.mxu0
      %v2211 = vadd.f32 %v1730, %v2210
      %v2212 = vpop.f32.mrf.mxu0
      %2213 = vmatprep.mubr.bf16.mxu0 0
      %2214 = vmatmul.mubr.bf16.gmra.mxu0 %v1481
      %v2215 = vpop.f32.mrf.mxu0
      %v2216 = vadd.f32 %v1735, %v2215
      %v2217 = vpop.f32.mrf.mxu0
      %v2218 = vpop.f32.mrf.mxu0
      %v2219 = vadd.f32 %v1738, %v2218
      %v2220 = vpop.f32.mrf.mxu0
      %2221 = vmatprep.mubr.bf16.mxu0 0
      %2222 = vmatmul.mubr.bf16.gmra.mxu0 %v1484
      %v2223 = vpop.f32.mrf.mxu0
      %v2224 = vadd.f32 %v1743, %v2223
      %v2225 = vpop.f32.mrf.mxu0
      %v2226 = vpop.f32.mrf.mxu0
      %v2227 = vadd.f32 %v1746, %v2226
      %v2228 = vpop.f32.mrf.mxu0
      %2229 = vmatprep.mubr.bf16.mxu0 0
      %2230 = vmatmul.mubr.bf16.gmra.mxu0 %v1487
      %v2231 = vpop.f32.mrf.mxu0
      %v2232 = vadd.f32 %v1751, %v2231
      %v2233 = vpop.f32.mrf.mxu0
      %v2234 = vpop.f32.mrf.mxu0
      %v2235 = vadd.f32 %v1754, %v2234
      %v2236 = vpop.f32.mrf.mxu0
      %2237 = vmatprep.mubr.bf16.mxu0 0
      %2238 = vmatmul.mubr.bf16.gmra.mxu0 %v1490
      %v2239 = vpop.f32.mrf.mxu0
      %v2240 = vadd.f32 %v1759, %v2239
      %v2241 = vpop.f32.mrf.mxu0
      %v2242 = vpop.f32.mrf.mxu0
      %v2243 = vadd.f32 %v1762, %v2242
      %v2244 = vpop.f32.mrf.mxu0
      %2245 = vmatprep.mubr.bf16.mxu0 0
      %2246 = vmatmul.mubr.bf16.gmra.mxu0 %v1493
      %v2247 = vpop.f32.mrf.mxu0
      %v2248 = vadd.f32 %v1767, %v2247
      %v2249 = vpop.f32.mrf.mxu0
      %v2250 = vpop.f32.mrf.mxu0
      %v2251 = vadd.f32 %v1770, %v2250
      %v2252 = vpop.f32.mrf.mxu0
      %2253 = vmatprep.mubr.bf16.mxu0 0
      %2254 = vmatmul.mubr.bf16.gmra.mxu0 %v1496
      %v2255 = vpop.f32.mrf.mxu0
      %v2256 = vadd.f32 %v1775, %v2255
      %v2257 = vpop.f32.mrf.mxu0
      %v2258 = vpop.f32.mrf.mxu0
      %v2259 = vadd.f32 %v1778, %v2258
      %v2260 = vpop.f32.mrf.mxu0
      %2261 = vmatprep.mubr.bf16.mxu0 0
      %2262 = vmatmul.mubr.bf16.gmra.mxu0 %v1499
      %v2263 = vpop.f32.mrf.mxu0
      %v2264 = vadd.f32 %v1783, %v2263
      %v2265 = vpop.f32.mrf.mxu0
      %v2266 = vpop.f32.mrf.mxu0
      %v2267 = vadd.f32 %v1786, %v2266
      %v2268 = vpop.f32.mrf.mxu0
      %2269 = vmatprep.mubr.bf16.mxu0 0
      %2270 = vmatmul.mubr.bf16.gmra.mxu0 %v1502
      %v2271 = vpop.f32.mrf.mxu0
      %v2272 = vadd.f32 %v1791, %v2271
      %v2273 = vpop.f32.mrf.mxu0
      %v2274 = vpop.f32.mrf.mxu0
      %v2275 = vadd.f32 %v1794, %v2274
      %v2276 = vpop.f32.mrf.mxu0
      %2277 = vmatprep.mubr.bf16.mxu0 0
      %2278 = vmatmul.mubr.bf16.gmra.mxu0 %v1505
      %v2279 = vpop.f32.mrf.mxu0
      %v2280 = vadd.f32 %v1799, %v2279
      %v2281 = vpop.f32.mrf.mxu0
      %v2282 = vpop.f32.mrf.mxu0
      %v2283 = vadd.f32 %v1802, %v2282
      %v2284 = vpop.f32.mrf.mxu0
      %2285 = vmatprep.mubr.bf16.mxu0 0
      %2286 = vmatmul.mubr.bf16.gmra.mxu0 %v1508
      %v2287 = vpop.f32.mrf.mxu0
      %v2288 = vadd.f32 %v1807, %v2287
      %v2289 = vpop.f32.mrf.mxu0
      %v2290 = vpop.f32.mrf.mxu0
      %v2291 = vadd.f32 %v1810, %v2290
      %v2292 = vpop.f32.mrf.mxu0
      %2293 = vmatprep.mubr.bf16.mxu0 0
      %2294 = vmatmul.mubr.bf16.gmra.mxu0 %v1511
      %v2295 = vpop.f32.mrf.mxu0
      %v2296 = vadd.f32 %v1815, %v2295
      %v2297 = vpop.f32.mrf.mxu0
      %v2298 = vpop.f32.mrf.mxu0
      %v2299 = vadd.f32 %v1818, %v2298
      %v2300 = vpop.f32.mrf.mxu0
      %2301 = vmatprep.mubr.bf16.mxu0 0
      %2302 = vmatmul.mubr.bf16.gmra.mxu0 %v1514
      %v2303 = vpop.f32.mrf.mxu0
      %v2304 = vadd.f32 %v1823, %v2303
      %v2305 = vpop.f32.mrf.mxu0
      %v2306 = vpop.f32.mrf.mxu0
      %v2307 = vadd.f32 %v1826, %v2306
      %v2308 = vpop.f32.mrf.mxu0
      %2309 = vmatprep.mubr.bf16.mxu0 0
      %2310 = vmatmul.mubr.bf16.gmra.mxu0 %v1517
      %v2311 = vpop.f32.mrf.mxu0
      %v2312 = vadd.f32 %v1831, %v2311
      %v2313 = vpop.f32.mrf.mxu0
      %v2314 = vpop.f32.mrf.mxu0
      %v2315 = vadd.f32 %v1834, %v2314
      %v2316 = vpop.f32.mrf.mxu0
      %2317 = vmatprep.mubr.bf16.mxu0 0
      %2318 = vmatmul.mubr.bf16.gmra.mxu0 %v1520
      %v2319 = vpop.f32.mrf.mxu0
      %v2320 = vadd.f32 %v1839, %v2319
      %v2321 = vpop.f32.mrf.mxu0
      %v2322 = vpop.f32.mrf.mxu0
      %v2323 = vadd.f32 %v1842, %v2322
      %v2324 = vpop.f32.mrf.mxu0
      %2325 = vmatprep.mubr.bf16.mxu0 0
      %2326 = vmatmul.mubr.bf16.gmra.mxu0 %v1523
      %v2327 = vpop.f32.mrf.mxu0
      %v2328 = vadd.f32 %v1847, %v2327
      %v2329 = vpop.f32.mrf.mxu0
      %v2330 = vpop.f32.mrf.mxu0
      %v2331 = vadd.f32 %v1850, %v2330
      %v2332 = vpop.f32.mrf.mxu0
      %2333 = vmatprep.mubr.bf16.mxu0 0
      %2334 = vmatmul.mubr.bf16.gmra.mxu0 %v1526
      %v2335 = vpop.f32.mrf.mxu0
      %v2336 = vadd.f32 %v1855, %v2335
      %v2337 = vpop.f32.mrf.mxu0
      %v2338 = vpop.f32.mrf.mxu0
      %v2339 = vadd.f32 %v1858, %v2338
      %v2340 = vpop.f32.mrf.mxu0
      %2341 = vmatprep.mubr.bf16.mxu0 0
      %2342 = vmatmul.mubr.bf16.gmra.mxu0 %v1529
      %v2343 = vpop.f32.mrf.mxu0
      %v2344 = vadd.f32 %v1863, %v2343
      %v2345 = vpop.f32.mrf.mxu0
      %v2346 = vpop.f32.mrf.mxu0
      %v2347 = vadd.f32 %v1866, %v2346
      %v2348 = vpop.f32.mrf.mxu0
      %2349 = vmatprep.mubr.bf16.mxu0 0
      %2350 = vmatmul.mubr.bf16.gmra.mxu0 %v1532
      %v2351 = vpop.f32.mrf.mxu0
      %v2352 = vadd.f32 %v1871, %v2351
      %v2353 = vpop.f32.mrf.mxu0
      %v2354 = vpop.f32.mrf.mxu0
      %v2355 = vadd.f32 %v1874, %v2354
      %v2356 = vpop.f32.mrf.mxu0
      %2357 = vmatprep.mubr.bf16.mxu0 0
      %2358 = vmatmul.mubr.bf16.gmra.mxu0 %v1535
      %v2359 = vpop.f32.mrf.mxu0
      %v2360 = vadd.f32 %v1879, %v2359
      %v2361 = vpop.f32.mrf.mxu0
      %v2362 = vpop.f32.mrf.mxu0
      %v2363 = vadd.f32 %v1882, %v2362
      %v2364 = vpop.f32.mrf.mxu0
      %2365 = vmatprep.mubr.bf16.mxu0 0
      %2366 = vmatmul.mubr.bf16.gmra.mxu0 %v1538
      %v2367 = vpop.f32.mrf.mxu0
      %v2368 = vadd.f32 %v1887, %v2367
      %v2369 = vpop.f32.mrf.mxu0
      %v2370 = vpop.f32.mrf.mxu0
      %v2371 = vadd.f32 %v1890, %v2370
      %v2372 = vpop.f32.mrf.mxu0
      %2373 = vmatprep.mubr.bf16.mxu0 0
      %2374 = vmatmul.mubr.bf16.gmra.mxu0 %v1541
      %v2375 = vpop.f32.mrf.mxu0
      %v2376 = vadd.f32 %v1895, %v2375
      %v2377 = vpop.f32.mrf.mxu0
      %v2378 = vpop.f32.mrf.mxu0
      %v2379 = vadd.f32 %v1898, %v2378
      %v2380 = vpop.f32.mrf.mxu0
      %2381 = vmatprep.mubr.bf16.mxu0 0
      %2382 = vmatmul.mubr.bf16.gmra.mxu0 %v1544
      %v2383 = vpop.f32.mrf.mxu0
      %v2384 = vadd.f32 %v1903, %v2383
      %v2385 = vpop.f32.mrf.mxu0
      %v2386 = vpop.f32.mrf.mxu0
      %v2387 = vadd.f32 %v1906, %v2386
      %v2388 = vpop.f32.mrf.mxu0
      %2389 = vmatprep.mubr.bf16.mxu0 0
      %2390 = vmatmul.mubr.bf16.gmra.mxu0 %v1547
      %v2391 = vpop.f32.mrf.mxu0
      %v2392 = vadd.f32 %v1911, %v2391
      %v2393 = vpop.f32.mrf.mxu0
      %v2394 = vpop.f32.mrf.mxu0
      %v2395 = vadd.f32 %v1914, %v2394
      %v2396 = vpop.f32.mrf.mxu0
      %2397 = vmatprep.mubr.bf16.mxu0 0
      %2398 = vmatmul.mubr.bf16.gmra.mxu0 %v1550
      %v2399 = vpop.f32.mrf.mxu0
      %v2400 = vadd.f32 %v1919, %v2399
      %v2401 = vpop.f32.mrf.mxu0
      %v2402 = vpop.f32.mrf.mxu0
      %v2403 = vadd.f32 %v1922, %v2402
      %v2404 = vpop.f32.mrf.mxu0
      %2405 = vmatprep.mubr.bf16.mxu0 0
      %2406 = vmatmul.mubr.bf16.gmra.mxu0 %v1553
      %v2407 = vpop.f32.mrf.mxu0
      %v2408 = vadd.f32 %v1927, %v2407
      %v2409 = vpop.f32.mrf.mxu0
      %v2410 = vpop.f32.mrf.mxu0
      %v2411 = vadd.f32 %v1930, %v2410
      %v2412 = vpop.f32.mrf.mxu0
      %2413 = vmatprep.mubr.bf16.mxu0 0
      %2414 = vmatmul.mubr.bf16.gmra.mxu0 %v1556
      %v2415 = vpop.f32.mrf.mxu0
      %v2416 = vadd.f32 %v1935, %v2415
      %v2417 = vpop.f32.mrf.mxu0
      %v2418 = vpop.f32.mrf.mxu0
      %v2419 = vadd.f32 %v1938, %v2418
      %v2420 = vpop.f32.mrf.mxu0
      %2421 = vmatprep.mubr.bf16.mxu0 0
      %2422 = vmatmul.mubr.bf16.gmra.mxu0 %v1559
      %v2423 = vpop.f32.mrf.mxu0
      %v2424 = vadd.f32 %v1943, %v2423
      %v2425 = vpop.f32.mrf.mxu0
      %v2426 = vpop.f32.mrf.mxu0
      %v2427 = vadd.f32 %v1946, %v2426
      %v2428 = vpop.f32.mrf.mxu0
      %2429 = vmatprep.mubr.bf16.mxu0 0
      %2430 = vmatmul.mubr.bf16.gmra.mxu0 %v1562
      %v2431 = vpop.f32.mrf.mxu0
      %v2432 = vadd.f32 %v1951, %v2431
      %v2433 = vpop.f32.mrf.mxu0
      %v2434 = vpop.f32.mrf.mxu0
      %v2435 = vadd.f32 %v1954, %v2434
      %v2436 = vpop.f32.mrf.mxu0
      %2437 = vmatprep.mubr.bf16.mxu0 0
      %2438 = vmatmul.mubr.bf16.gmra.mxu0 %v1565
      %v2439 = vpop.f32.mrf.mxu0
      %v2440 = vadd.f32 %v1959, %v2439
      %v2441 = vpop.f32.mrf.mxu0
      %v2442 = vpop.f32.mrf.mxu0
      %v2443 = vadd.f32 %v1962, %v2442
      %v2444 = vpop.f32.mrf.mxu0
      %2445 = vmatprep.mubr.bf16.mxu0 0
      %2446 = vmatmul.mubr.bf16.gmra.mxu0 %v1568
      %v2447 = vpop.f32.mrf.mxu0
      %v2448 = vadd.f32 %v1967, %v2447
      %v2449 = vpop.f32.mrf.mxu0
      %v2450 = vpop.f32.mrf.mxu0
      %v2451 = vadd.f32 %v1970, %v2450
      %v2452 = vpop.f32.mrf.mxu0
      %2453 = vmatprep.mubr.bf16.mxu0 0
      %2454 = vmatmul.mubr.bf16.gmra.mxu0 %v1571
      %v2455 = vpop.f32.mrf.mxu0
      %v2456 = vadd.f32 %v1975, %v2455
      %v2457 = vpop.f32.mrf.mxu0
      %v2458 = vpop.f32.mrf.mxu0
      %v2459 = vadd.f32 %v1978, %v2458
      %v2460 = vpop.f32.mrf.mxu0
      %2461 = vmatprep.mubr.bf16.mxu0 0
      %2462 = vmatmul.mubr.bf16.gmra.mxu0 %v1574
      %v2463 = vpop.f32.mrf.mxu0
      %v2464 = vadd.f32 %v1983, %v2463
      %v2465 = vpop.f32.mrf.mxu0
      %v2466 = vpop.f32.mrf.mxu0
      %v2467 = vadd.f32 %v1986, %v2466
      %v2468 = vpop.f32.mrf.mxu0
      %2469 = vmatprep.mubr.bf16.mxu0 0
      %2470 = vmatmul.mubr.bf16.gmra.mxu0 %v1577
      %v2471 = vpop.f32.mrf.mxu0
      %v2472 = vadd.f32 %v1991, %v2471
      %v2473 = vpop.f32.mrf.mxu0
      %v2474 = vpop.f32.mrf.mxu0
      %v2475 = vadd.f32 %v1994, %v2474
      %v2476 = vpop.f32.mrf.mxu0
      %2477 = vmatprep.mubr.bf16.mxu0 0
      %2478 = vmatmul.mubr.bf16.gmra.mxu0 %v1580
      %v2479 = vpop.f32.mrf.mxu0
      %v2480 = vadd.f32 %v1999, %v2479
      %v2481 = vpop.f32.mrf.mxu0
      %v2482 = vpop.f32.mrf.mxu0
      %v2483 = vadd.f32 %v2002, %v2482
      %v2484 = vpop.f32.mrf.mxu0
      %2485 = vmatprep.mubr.bf16.mxu0 0
      %2486 = vmatmul.mubr.bf16.gmra.mxu0 %v1583
      %v2487 = vpop.f32.mrf.mxu0
      %v2488 = vadd.f32 %v2007, %v2487
      %v2489 = vpop.f32.mrf.mxu0
      %v2490 = vpop.f32.mrf.mxu0
      %v2491 = vadd.f32 %v2010, %v2490
      %v2492 = vpop.f32.mrf.mxu0
      %2493 = vmatprep.mubr.bf16.mxu0 0
      %2494 = vmatmul.mubr.bf16.gmra.mxu0 %v1586
      %v2495 = vpop.f32.mrf.mxu0
      %v2496 = vadd.f32 %v2015, %v2495
      %v2497 = vpop.f32.mrf.mxu0
      %v2498 = vpop.f32.mrf.mxu0
      %v2499 = vadd.f32 %v2018, %v2498
      %v2500 = vpop.f32.mrf.mxu0
      %2501 = vmatprep.mubr.bf16.mxu0 0
      %2502 = vmatmul.mubr.bf16.gmra.mxu0 %v1589
      %v2503 = vpop.f32.mrf.mxu0
      %v2504 = vadd.f32 %v2023, %v2503
      %v2505 = vpop.f32.mrf.mxu0
      %v2506 = vpop.f32.mrf.mxu0
      %v2507 = vadd.f32 %v2026, %v2506
      %v2508 = vpop.f32.mrf.mxu0
      %2509 = vmatprep.mubr.bf16.mxu0 0
      %2510 = vmatmul.mubr.bf16.gmra.mxu0 %v1592
      %v2511 = vpop.f32.mrf.mxu0
      %v2512 = vadd.f32 %v2031, %v2511
      %v2513 = vpop.f32.mrf.mxu0
      %v2514 = vpop.f32.mrf.mxu0
      %v2515 = vadd.f32 %v2034, %v2514
      %v2516 = vpop.f32.mrf.mxu0
      %2517 = vmatprep.mubr.bf16.mxu0 0
      %2518 = vmatmul.mubr.bf16.gmra.mxu0 %v1595
      %v2519 = vpop.f32.mrf.mxu0
      %v2520 = vadd.f32 %v2039, %v2519
      %v2521 = vpop.f32.mrf.mxu0
      %v2522 = vpop.f32.mrf.mxu0
      %v2523 = vadd.f32 %v2042, %v2522
      %v2524 = vpop.f32.mrf.mxu0
      %2525 = vmatprep.mubr.bf16.mxu0 0
      %2526 = vmatmul.mubr.bf16.gmra.mxu0 %v1598
      %v2527 = vpop.f32.mrf.mxu0
      %v2528 = vadd.f32 %v2047, %v2527
      %v2529 = vpop.f32.mrf.mxu0
      %v2530 = vpop.f32.mrf.mxu0
      %v2531 = vadd.f32 %v2050, %v2530
      %v2532 = vpop.f32.mrf.mxu0
      %2533 = vmatprep.mubr.bf16.mxu0 0
      %2534 = vmatmul.mubr.bf16.gmra.mxu0 %v1601
      %v2535 = vpop.f32.mrf.mxu0
      %v2536 = vadd.f32 %v2055, %v2535
      %v2537 = vpop.f32.mrf.mxu0
      %v2538 = vpop.f32.mrf.mxu0
      %v2539 = vadd.f32 %v2058, %v2538
      %v2540 = vpop.f32.mrf.mxu0
      %2541 = vmatprep.mubr.bf16.mxu0 0
      %2542 = vmatmul.mubr.bf16.gmra.mxu0 %v1604
      %v2543 = vpop.f32.mrf.mxu0
      %v2544 = vadd.f32 %v2063, %v2543
      %v2545 = vpop.f32.mrf.mxu0
      %v2546 = vpop.f32.mrf.mxu0
      %v2547 = vadd.f32 %v2066, %v2546
      %v2548 = vpop.f32.mrf.mxu0
      %2549 = vmatprep.mubr.bf16.mxu0 0
      %2550 = vmatmul.mubr.bf16.gmra.mxu0 %v1607
      %v2551 = vpop.f32.mrf.mxu0
      %v2552 = vadd.f32 %v2071, %v2551
      %v2553 = vpop.f32.mrf.mxu0
      %v2554 = vpop.f32.mrf.mxu0
      %v2555 = vadd.f32 %v2074, %v2554
      %v2556 = vpop.f32.mrf.mxu0
      %2557 = vmatprep.mubr.bf16.mxu0 0
      %2558 = vmatmul.mubr.bf16.gmra.mxu0 %v1610
      %v2559 = vpop.f32.mrf.mxu0
      %v2560 = vadd.f32 %v2079, %v2559
      %v2561 = vpop.f32.mrf.mxu0
      %v2562 = vpop.f32.mrf.mxu0
      %v2563 = vadd.f32 %v2082, %v2562
      %v2564 = vpop.f32.mrf.mxu0
      %2565 = vmatprep.mubr.bf16.mxu0 0
      %2566 = vmatmul.mubr.bf16.gmra.mxu0 %v1613
      %v2567 = vpop.f32.mrf.mxu0
      %v2568 = vadd.f32 %v2087, %v2567
      %v2569 = vpop.f32.mrf.mxu0
      %v2570 = vpop.f32.mrf.mxu0
      %v2571 = vadd.f32 %v2090, %v2570
      %v2572 = vpop.f32.mrf.mxu0
      %2573 = vmatprep.mubr.bf16.mxu0 0
      %2574 = vmatmul.mubr.bf16.gmra.mxu0 %v1616
      %v2575 = vpop.f32.mrf.mxu0
      %v2576 = vadd.f32 %v2095, %v2575
      %v2577 = vpop.f32.mrf.mxu0
      %v2578 = vpop.f32.mrf.mxu0
      %v2579 = vadd.f32 %v2098, %v2578
      %v2580 = vpop.f32.mrf.mxu0
      %2581 = vmatprep.mubr.bf16.mxu0 0
      %2582 = vmatmul.mubr.bf16.gmra.mxu0 %v1619
      %v2583 = vpop.f32.mrf.mxu0
      %v2584 = vadd.f32 %v2103, %v2583
      %v2585 = vpop.f32.mrf.mxu0
      %v2586 = vpop.f32.mrf.mxu0
      %v2587 = vadd.f32 %v2106, %v2586
      %v2588 = vpop.f32.mrf.mxu0
      %2589 = vdwg.mxu0
      %v2590 = vld [vmem:[%s2] sm:$0x1]
      %v2592 = vlaneseq
      %v2593 = vshrl.u32 %v2592, 7
      %v2594 = vsub.s32 0, %v2593
      %v2595 = vrot.slane %v2590, %v2594
      %v2597 = vmul.f32 %v2144, %v2595
      %v2598 = vmul.f32 %v2147, %v2595
      %v2599 = vmul.f32 %v2152, %v2595
      %v2600 = vmul.f32 %v2155, %v2595
      %v2601 = vmul.f32 %v2160, %v2595
      %v2602 = vmul.f32 %v2163, %v2595
      %v2603 = vmul.f32 %v2168, %v2595
      %v2604 = vmul.f32 %v2171, %v2595
      %v2605 = vmul.f32 %v2176, %v2595
      %v2606 = vmul.f32 %v2179, %v2595
      %v2607 = vmul.f32 %v2184, %v2595
      %v2608 = vmul.f32 %v2187, %v2595
      %v2609 = vmul.f32 %v2192, %v2595
      %v2610 = vmul.f32 %v2195, %v2595
      %v2611 = vmul.f32 %v2200, %v2595
      %v2612 = vmul.f32 %v2203, %v2595
      %v2613 = vmul.f32 %v2208, %v2595
      %v2614 = vmul.f32 %v2211, %v2595
      %v2615 = vmul.f32 %v2216, %v2595
      %v2616 = vmul.f32 %v2219, %v2595
      %v2617 = vmul.f32 %v2224, %v2595
      %v2618 = vmul.f32 %v2227, %v2595
      %v2619 = vmul.f32 %v2232, %v2595
      %v2620 = vmul.f32 %v2235, %v2595
      %v2621 = vmul.f32 %v2240, %v2595
      %v2622 = vmul.f32 %v2243, %v2595
      %v2623 = vmul.f32 %v2248, %v2595
      %v2624 = vmul.f32 %v2251, %v2595
      %v2625 = vmul.f32 %v2256, %v2595
      %v2626 = vmul.f32 %v2259, %v2595
      %v2627 = vmul.f32 %v2264, %v2595
      %v2628 = vmul.f32 %v2267, %v2595
      %v2629 = vmul.f32 %v2272, %v2595
      %v2630 = vmul.f32 %v2275, %v2595
      %v2631 = vmul.f32 %v2280, %v2595
      %v2632 = vmul.f32 %v2283, %v2595
      %v2633 = vmul.f32 %v2288, %v2595
      %v2634 = vmul.f32 %v2291, %v2595
      %v2635 = vmul.f32 %v2296, %v2595
      %v2636 = vmul.f32 %v2299, %v2595
      %v2637 = vmul.f32 %v2304, %v2595
      %v2638 = vmul.f32 %v2307, %v2595
      %v2639 = vmul.f32 %v2312, %v2595
      %v2640 = vmul.f32 %v2315, %v2595
      %v2641 = vmul.f32 %v2320, %v2595
      %v2642 = vmul.f32 %v2323, %v2595
      %v2643 = vmul.f32 %v2328, %v2595
      %v2644 = vmul.f32 %v2331, %v2595
      %v2645 = vmul.f32 %v2336, %v2595
      %v2646 = vmul.f32 %v2339, %v2595
      %v2647 = vmul.f32 %v2344, %v2595
      %v2648 = vmul.f32 %v2347, %v2595
      %v2649 = vmul.f32 %v2352, %v2595
      %v2650 = vmul.f32 %v2355, %v2595
      %v2651 = vmul.f32 %v2360, %v2595
      %v2652 = vmul.f32 %v2363, %v2595
      %v2653 = vmul.f32 %v2368, %v2595
      %v2654 = vmul.f32 %v2371, %v2595
      %v2655 = vmul.f32 %v2376, %v2595
      %v2656 = vmul.f32 %v2379, %v2595
      %v2657 = vmul.f32 %v2384, %v2595
      %v2658 = vmul.f32 %v2387, %v2595
      %v2659 = vmul.f32 %v2392, %v2595
      %v2660 = vmul.f32 %v2395, %v2595
      %v2661 = vmul.f32 %v2400, %v2595
      %v2662 = vmul.f32 %v2403, %v2595
      %v2663 = vmul.f32 %v2408, %v2595
      %v2664 = vmul.f32 %v2411, %v2595
      %v2665 = vmul.f32 %v2416, %v2595
      %v2666 = vmul.f32 %v2419, %v2595
      %v2667 = vmul.f32 %v2424, %v2595
      %v2668 = vmul.f32 %v2427, %v2595
      %v2669 = vmul.f32 %v2432, %v2595
      %v2670 = vmul.f32 %v2435, %v2595
      %v2671 = vmul.f32 %v2440, %v2595
      %v2672 = vmul.f32 %v2443, %v2595
      %v2673 = vmul.f32 %v2448, %v2595
      %v2674 = vmul.f32 %v2451, %v2595
      %v2675 = vmul.f32 %v2456, %v2595
      %v2676 = vmul.f32 %v2459, %v2595
      %v2677 = vmul.f32 %v2464, %v2595
      %v2678 = vmul.f32 %v2467, %v2595
      %v2679 = vmul.f32 %v2472, %v2595
      %v2680 = vmul.f32 %v2475, %v2595
      %v2681 = vmul.f32 %v2480, %v2595
      %v2682 = vmul.f32 %v2483, %v2595
      %v2683 = vmul.f32 %v2488, %v2595
      %v2684 = vmul.f32 %v2491, %v2595
      %v2685 = vmul.f32 %v2496, %v2595
      %v2686 = vmul.f32 %v2499, %v2595
      %v2687 = vmul.f32 %v2504, %v2595
      %v2688 = vmul.f32 %v2507, %v2595
      %v2689 = vmul.f32 %v2512, %v2595
      %v2690 = vmul.f32 %v2515, %v2595
      %v2691 = vmul.f32 %v2520, %v2595
      %v2692 = vmul.f32 %v2523, %v2595
      %v2693 = vmul.f32 %v2528, %v2595
      %v2694 = vmul.f32 %v2531, %v2595
      %v2695 = vmul.f32 %v2536, %v2595
      %v2696 = vmul.f32 %v2539, %v2595
      %v2697 = vmul.f32 %v2544, %v2595
      %v2698 = vmul.f32 %v2547, %v2595
      %v2699 = vmul.f32 %v2552, %v2595
      %v2700 = vmul.f32 %v2555, %v2595
      %v2701 = vmul.f32 %v2560, %v2595
      %v2702 = vmul.f32 %v2563, %v2595
      %v2703 = vmul.f32 %v2568, %v2595
      %v2704 = vmul.f32 %v2571, %v2595
      %v2705 = vmul.f32 %v2576, %v2595
      %v2706 = vmul.f32 %v2579, %v2595
      %v2707 = vmul.f32 %v2584, %v2595
      %v2708 = vmul.f32 %v2587, %v2595
      %v2709 = vld [vmem:[%s3] sm:$0x1]
      %v2711 = vlaneseq
      %v2712 = vshrl.u32 %v2711, 7
      %v2713 = vsub.s32 0, %v2712
      %v2714 = vrot.slane %v2709, %v2713
      %v2716 = vadd.f32 %v2597, %v2714
      %v2717 = vadd.f32 %v2598, %v2714
      %v2718 = vadd.f32 %v2599, %v2714
      %v2719 = vadd.f32 %v2600, %v2714
      %v2720 = vadd.f32 %v2601, %v2714
      %v2721 = vadd.f32 %v2602, %v2714
      %v2722 = vadd.f32 %v2603, %v2714
      %v2723 = vadd.f32 %v2604, %v2714
      %v2724 = vadd.f32 %v2605, %v2714
      %v2725 = vadd.f32 %v2606, %v2714
      %v2726 = vadd.f32 %v2607, %v2714
      %v2727 = vadd.f32 %v2608, %v2714
      %v2728 = vadd.f32 %v2609, %v2714
      %v2729 = vadd.f32 %v2610, %v2714
      %v2730 = vadd.f32 %v2611, %v2714
      %v2731 = vadd.f32 %v2612, %v2714
      %v2732 = vadd.f32 %v2613, %v2714
      %v2733 = vadd.f32 %v2614, %v2714
      %v2734 = vadd.f32 %v2615, %v2714
      %v2735 = vadd.f32 %v2616, %v2714
      %v2736 = vadd.f32 %v2617, %v2714
      %v2737 = vadd.f32 %v2618, %v2714
      %v2738 = vadd.f32 %v2619, %v2714
      %v2739 = vadd.f32 %v2620, %v2714
      %v2740 = vadd.f32 %v2621, %v2714
      %v2741 = vadd.f32 %v2622, %v2714
      %v2742 = vadd.f32 %v2623, %v2714
      %v2743 = vadd.f32 %v2624, %v2714
      %v2744 = vadd.f32 %v2625, %v2714
      %v2745 = vadd.f32 %v2626, %v2714
      %v2746 = vadd.f32 %v2627, %v2714
      %v2747 = vadd.f32 %v2628, %v2714
      %v2748 = vadd.f32 %v2629, %v2714
      %v2749 = vadd.f32 %v2630, %v2714
      %v2750 = vadd.f32 %v2631, %v2714
      %v2751 = vadd.f32 %v2632, %v2714
      %v2752 = vadd.f32 %v2633, %v2714
      %v2753 = vadd.f32 %v2634, %v2714
      %v2754 = vadd.f32 %v2635, %v2714
      %v2755 = vadd.f32 %v2636, %v2714
      %v2756 = vadd.f32 %v2637, %v2714
      %v2757 = vadd.f32 %v2638, %v2714
      %v2758 = vadd.f32 %v2639, %v2714
      %v2759 = vadd.f32 %v2640, %v2714
      %v2760 = vadd.f32 %v2641, %v2714
      %v2761 = vadd.f32 %v2642, %v2714
      %v2762 = vadd.f32 %v2643, %v2714
      %v2763 = vadd.f32 %v2644, %v2714
      %v2764 = vadd.f32 %v2645, %v2714
      %v2765 = vadd.f32 %v2646, %v2714
      %v2766 = vadd.f32 %v2647, %v2714
      %v2767 = vadd.f32 %v2648, %v2714
      %v2768 = vadd.f32 %v2649, %v2714
      %v2769 = vadd.f32 %v2650, %v2714
      %v2770 = vadd.f32 %v2651, %v2714
      %v2771 = vadd.f32 %v2652, %v2714
      %v2772 = vadd.f32 %v2653, %v2714
      %v2773 = vadd.f32 %v2654, %v2714
      %v2774 = vadd.f32 %v2655, %v2714
      %v2775 = vadd.f32 %v2656, %v2714
      %v2776 = vadd.f32 %v2657, %v2714
      %v2777 = vadd.f32 %v2658, %v2714
      %v2778 = vadd.f32 %v2659, %v2714
      %v2779 = vadd.f32 %v2660, %v2714
      %v2780 = vadd.f32 %v2661, %v2714
      %v2781 = vadd.f32 %v2662, %v2714
      %v2782 = vadd.f32 %v2663, %v2714
      %v2783 = vadd.f32 %v2664, %v2714
      %v2784 = vadd.f32 %v2665, %v2714
      %v2785 = vadd.f32 %v2666, %v2714
      %v2786 = vadd.f32 %v2667, %v2714
      %v2787 = vadd.f32 %v2668, %v2714
      %v2788 = vadd.f32 %v2669, %v2714
      %v2789 = vadd.f32 %v2670, %v2714
      %v2790 = vadd.f32 %v2671, %v2714
      %v2791 = vadd.f32 %v2672, %v2714
      %v2792 = vadd.f32 %v2673, %v2714
      %v2793 = vadd.f32 %v2674, %v2714
      %v2794 = vadd.f32 %v2675, %v2714
      %v2795 = vadd.f32 %v2676, %v2714
      %v2796 = vadd.f32 %v2677, %v2714
      %v2797 = vadd.f32 %v2678, %v2714
      %v2798 = vadd.f32 %v2679, %v2714
      %v2799 = vadd.f32 %v2680, %v2714
      %v2800 = vadd.f32 %v2681, %v2714
      %v2801 = vadd.f32 %v2682, %v2714
      %v2802 = vadd.f32 %v2683, %v2714
      %v2803 = vadd.f32 %v2684, %v2714
      %v2804 = vadd.f32 %v2685, %v2714
      %v2805 = vadd.f32 %v2686, %v2714
      %v2806 = vadd.f32 %v2687, %v2714
      %v2807 = vadd.f32 %v2688, %v2714
      %v2808 = vadd.f32 %v2689, %v2714
      %v2809 = vadd.f32 %v2690, %v2714
      %v2810 = vadd.f32 %v2691, %v2714
      %v2811 = vadd.f32 %v2692, %v2714
      %v2812 = vadd.f32 %v2693, %v2714
      %v2813 = vadd.f32 %v2694, %v2714
      %v2814 = vadd.f32 %v2695, %v2714
      %v2815 = vadd.f32 %v2696, %v2714
      %v2816 = vadd.f32 %v2697, %v2714
      %v2817 = vadd.f32 %v2698, %v2714
      %v2818 = vadd.f32 %v2699, %v2714
      %v2819 = vadd.f32 %v2700, %v2714
      %v2820 = vadd.f32 %v2701, %v2714
      %v2821 = vadd.f32 %v2702, %v2714
      %v2822 = vadd.f32 %v2703, %v2714
      %v2823 = vadd.f32 %v2704, %v2714
      %v2824 = vadd.f32 %v2705, %v2714
      %v2825 = vadd.f32 %v2706, %v2714
      %v2826 = vadd.f32 %v2707, %v2714
      %v2827 = vadd.f32 %v2708, %v2714
      %v2828 = vmax.f32 %v2716, 0.0
      %v2829 = vmax.f32 %v2717, 0.0
      %v2830 = vmax.f32 %v2718, 0.0
      %v2831 = vmax.f32 %v2719, 0.0
      %v2832 = vmax.f32 %v2720, 0.0
      %v2833 = vmax.f32 %v2721, 0.0
      %v2834 = vmax.f32 %v2722, 0.0
      %v2835 = vmax.f32 %v2723, 0.0
      %v2836 = vmax.f32 %v2724, 0.0
      %v2837 = vmax.f32 %v2725, 0.0
      %v2838 = vmax.f32 %v2726, 0.0
      %v2839 = vmax.f32 %v2727, 0.0
      %v2840 = vmax.f32 %v2728, 0.0
      %v2841 = vmax.f32 %v2729, 0.0
      %v2842 = vmax.f32 %v2730, 0.0
      %v2843 = vmax.f32 %v2731, 0.0
      %v2844 = vmax.f32 %v2732, 0.0
      %v2845 = vmax.f32 %v2733, 0.0
      %v2846 = vmax.f32 %v2734, 0.0
      %v2847 = vmax.f32 %v2735, 0.0
      %v2848 = vmax.f32 %v2736, 0.0
      %v2849 = vmax.f32 %v2737, 0.0
      %v2850 = vmax.f32 %v2738, 0.0
      %v2851 = vmax.f32 %v2739, 0.0
      %v2852 = vmax.f32 %v2740, 0.0
      %v2853 = vmax.f32 %v2741, 0.0
      %v2854 = vmax.f32 %v2742, 0.0
      %v2855 = vmax.f32 %v2743, 0.0
      %v2856 = vmax.f32 %v2744, 0.0
      %v2857 = vmax.f32 %v2745, 0.0
      %v2858 = vmax.f32 %v2746, 0.0
      %v2859 = vmax.f32 %v2747, 0.0
      %v2860 = vmax.f32 %v2748, 0.0
      %v2861 = vmax.f32 %v2749, 0.0
      %v2862 = vmax.f32 %v2750, 0.0
      %v2863 = vmax.f32 %v2751, 0.0
      %v2864 = vmax.f32 %v2752, 0.0
      %v2865 = vmax.f32 %v2753, 0.0
      %v2866 = vmax.f32 %v2754, 0.0
      %v2867 = vmax.f32 %v2755, 0.0
      %v2868 = vmax.f32 %v2756, 0.0
      %v2869 = vmax.f32 %v2757, 0.0
      %v2870 = vmax.f32 %v2758, 0.0
      %v2871 = vmax.f32 %v2759, 0.0
      %v2872 = vmax.f32 %v2760, 0.0
      %v2873 = vmax.f32 %v2761, 0.0
      %v2874 = vmax.f32 %v2762, 0.0
      %v2875 = vmax.f32 %v2763, 0.0
      %v2876 = vmax.f32 %v2764, 0.0
      %v2877 = vmax.f32 %v2765, 0.0
      %v2878 = vmax.f32 %v2766, 0.0
      %v2879 = vmax.f32 %v2767, 0.0
      %v2880 = vmax.f32 %v2768, 0.0
      %v2881 = vmax.f32 %v2769, 0.0
      %v2882 = vmax.f32 %v2770, 0.0
      %v2883 = vmax.f32 %v2771, 0.0
      %v2884 = vmax.f32 %v2772, 0.0
      %v2885 = vmax.f32 %v2773, 0.0
      %v2886 = vmax.f32 %v2774, 0.0
      %v2887 = vmax.f32 %v2775, 0.0
      %v2888 = vmax.f32 %v2776, 0.0
      %v2889 = vmax.f32 %v2777, 0.0
      %v2890 = vmax.f32 %v2778, 0.0
      %v2891 = vmax.f32 %v2779, 0.0
      %v2892 = vmax.f32 %v2780, 0.0
      %v2893 = vmax.f32 %v2781, 0.0
      %v2894 = vmax.f32 %v2782, 0.0
      %v2895 = vmax.f32 %v2783, 0.0
      %v2896 = vmax.f32 %v2784, 0.0
      %v2897 = vmax.f32 %v2785, 0.0
      %v2898 = vmax.f32 %v2786, 0.0
      %v2899 = vmax.f32 %v2787, 0.0
      %v2900 = vmax.f32 %v2788, 0.0
      %v2901 = vmax.f32 %v2789, 0.0
      %v2902 = vmax.f32 %v2790, 0.0
      %v2903 = vmax.f32 %v2791, 0.0
      %v2904 = vmax.f32 %v2792, 0.0
      %v2905 = vmax.f32 %v2793, 0.0
      %v2906 = vmax.f32 %v2794, 0.0
      %v2907 = vmax.f32 %v2795, 0.0
      %v2908 = vmax.f32 %v2796, 0.0
      %v2909 = vmax.f32 %v2797, 0.0
      %v2910 = vmax.f32 %v2798, 0.0
      %v2911 = vmax.f32 %v2799, 0.0
      %v2912 = vmax.f32 %v2800, 0.0
      %v2913 = vmax.f32 %v2801, 0.0
      %v2914 = vmax.f32 %v2802, 0.0
      %v2915 = vmax.f32 %v2803, 0.0
      %v2916 = vmax.f32 %v2804, 0.0
      %v2917 = vmax.f32 %v2805, 0.0
      %v2918 = vmax.f32 %v2806, 0.0
      %v2919 = vmax.f32 %v2807, 0.0
      %v2920 = vmax.f32 %v2808, 0.0
      %v2921 = vmax.f32 %v2809, 0.0
      %v2922 = vmax.f32 %v2810, 0.0
      %v2923 = vmax.f32 %v2811, 0.0
      %v2924 = vmax.f32 %v2812, 0.0
      %v2925 = vmax.f32 %v2813, 0.0
      %v2926 = vmax.f32 %v2814, 0.0
      %v2927 = vmax.f32 %v2815, 0.0
      %v2928 = vmax.f32 %v2816, 0.0
      %v2929 = vmax.f32 %v2817, 0.0
      %v2930 = vmax.f32 %v2818, 0.0
      %v2931 = vmax.f32 %v2819, 0.0
      %v2932 = vmax.f32 %v2820, 0.0
      %v2933 = vmax.f32 %v2821, 0.0
      %v2934 = vmax.f32 %v2822, 0.0
      %v2935 = vmax.f32 %v2823, 0.0
      %v2936 = vmax.f32 %v2824, 0.0
      %v2937 = vmax.f32 %v2825, 0.0
      %v2938 = vmax.f32 %v2826, 0.0
      %v2939 = vmax.f32 %v2827, 0.0
      %v2940 = vpack.c.bf16 %v2829, %v2828
      %v2941 = vpack.c.bf16 %v2831, %v2830
      %v2942 = vpack.c.bf16 %v2833, %v2832
      %v2943 = vpack.c.bf16 %v2835, %v2834
      %v2944 = vpack.c.bf16 %v2837, %v2836
      %v2945 = vpack.c.bf16 %v2839, %v2838
      %v2946 = vpack.c.bf16 %v2841, %v2840
      %v2947 = vpack.c.bf16 %v2843, %v2842
      %v2948 = vpack.c.bf16 %v2845, %v2844
      %v2949 = vpack.c.bf16 %v2847, %v2846
      %v2950 = vpack.c.bf16 %v2849, %v2848
      %v2951 = vpack.c.bf16 %v2851, %v2850
      %v2952 = vpack.c.bf16 %v2853, %v2852
      %v2953 = vpack.c.bf16 %v2855, %v2854
      %v2954 = vpack.c.bf16 %v2857, %v2856
      %v2955 = vpack.c.bf16 %v2859, %v2858
      %v2956 = vpack.c.bf16 %v2861, %v2860
      %v2957 = vpack.c.bf16 %v2863, %v2862
      %v2958 = vpack.c.bf16 %v2865, %v2864
      %v2959 = vpack.c.bf16 %v2867, %v2866
      %v2960 = vpack.c.bf16 %v2869, %v2868
      %v2961 = vpack.c.bf16 %v2871, %v2870
      %v2962 = vpack.c.bf16 %v2873, %v2872
      %v2963 = vpack.c.bf16 %v2875, %v2874
      %v2964 = vpack.c.bf16 %v2877, %v2876
      %v2965 = vpack.c.bf16 %v2879, %v2878
      %v2966 = vpack.c.bf16 %v2881, %v2880
      %v2967 = vpack.c.bf16 %v2883, %v2882
      %v2968 = vpack.c.bf16 %v2885, %v2884
      %v2969 = vpack.c.bf16 %v2887, %v2886
      %v2970 = vpack.c.bf16 %v2889, %v2888
      %v2971 = vpack.c.bf16 %v2891, %v2890
      %v2972 = vpack.c.bf16 %v2893, %v2892
      %v2973 = vpack.c.bf16 %v2895, %v2894
      %v2974 = vpack.c.bf16 %v2897, %v2896
      %v2975 = vpack.c.bf16 %v2899, %v2898
      %v2976 = vpack.c.bf16 %v2901, %v2900
      %v2977 = vpack.c.bf16 %v2903, %v2902
      %v2978 = vpack.c.bf16 %v2905, %v2904
      %v2979 = vpack.c.bf16 %v2907, %v2906
      %v2980 = vpack.c.bf16 %v2909, %v2908
      %v2981 = vpack.c.bf16 %v2911, %v2910
      %v2982 = vpack.c.bf16 %v2913, %v2912
      %v2983 = vpack.c.bf16 %v2915, %v2914
      %v2984 = vpack.c.bf16 %v2917, %v2916
      %v2985 = vpack.c.bf16 %v2919, %v2918
      %v2986 = vpack.c.bf16 %v2921, %v2920
      %v2987 = vpack.c.bf16 %v2923, %v2922
      %v2988 = vpack.c.bf16 %v2925, %v2924
      %v2989 = vpack.c.bf16 %v2927, %v2926
      %v2990 = vpack.c.bf16 %v2929, %v2928
      %v2991 = vpack.c.bf16 %v2931, %v2930
      %v2992 = vpack.c.bf16 %v2933, %v2932
      %v2993 = vpack.c.bf16 %v2935, %v2934
      %v2994 = vpack.c.bf16 %v2937, %v2936
      %v2995 = vpack.c.bf16 %v2939, %v2938
      %v3052 = vunpack.c.l.b16 %v2940
      %v3053 = vunpack.c.h.b16 %v2940
      %v3054 = vunpack.c.l.b16 %v2941
      %v3055 = vunpack.c.h.b16 %v2941
      %v3056 = vunpack.c.l.b16 %v2942
      %v3057 = vunpack.c.h.b16 %v2942
      %v3058 = vunpack.c.l.b16 %v2943
      %v3059 = vunpack.c.h.b16 %v2943
      %v3060 = vunpack.c.l.b16 %v2944
      %v3061 = vunpack.c.h.b16 %v2944
      %v3062 = vunpack.c.l.b16 %v2945
      %v3063 = vunpack.c.h.b16 %v2945
      %v3064 = vunpack.c.l.b16 %v2946
      %v3065 = vunpack.c.h.b16 %v2946
      %v3066 = vunpack.c.l.b16 %v2947
      %v3067 = vunpack.c.h.b16 %v2947
      %v3068 = vunpack.c.l.b16 %v2948
      %v3069 = vunpack.c.h.b16 %v2948
      %v3070 = vunpack.c.l.b16 %v2949
      %v3071 = vunpack.c.h.b16 %v2949
      %v3072 = vunpack.c.l.b16 %v2950
      %v3073 = vunpack.c.h.b16 %v2950
      %v3074 = vunpack.c.l.b16 %v2951
      %v3075 = vunpack.c.h.b16 %v2951
      %v3076 = vunpack.c.l.b16 %v2952
      %v3077 = vunpack.c.h.b16 %v2952
      %v3078 = vunpack.c.l.b16 %v2953
      %v3079 = vunpack.c.h.b16 %v2953
      %v3080 = vunpack.c.l.b16 %v2954
      %v3081 = vunpack.c.h.b16 %v2954
      %v3082 = vunpack.c.l.b16 %v2955
      %v3083 = vunpack.c.h.b16 %v2955
      %v3084 = vunpack.c.l.b16 %v2956
      %v3085 = vunpack.c.h.b16 %v2956
      %v3086 = vunpack.c.l.b16 %v2957
      %v3087 = vunpack.c.h.b16 %v2957
      %v3088 = vunpack.c.l.b16 %v2958
      %v3089 = vunpack.c.h.b16 %v2958
      %v3090 = vunpack.c.l.b16 %v2959
      %v3091 = vunpack.c.h.b16 %v2959
      %v3092 = vunpack.c.l.b16 %v2960
      %v3093 = vunpack.c.h.b16 %v2960
      %v3094 = vunpack.c.l.b16 %v2961
      %v3095 = vunpack.c.h.b16 %v2961
      %v3096 = vunpack.c.l.b16 %v2962
      %v3097 = vunpack.c.h.b16 %v2962
      %v3098 = vunpack.c.l.b16 %v2963
      %v3099 = vunpack.c.h.b16 %v2963
      %v3100 = vunpack.c.l.b16 %v2964
      %v3101 = vunpack.c.h.b16 %v2964
      %v3102 = vunpack.c.l.b16 %v2965
      %v3103 = vunpack.c.h.b16 %v2965
      %v3104 = vunpack.c.l.b16 %v2966
      %v3105 = vunpack.c.h.b16 %v2966
      %v3106 = vunpack.c.l.b16 %v2967
      %v3107 = vunpack.c.h.b16 %v2967
      %v3108 = vunpack.c.l.b16 %v2968
      %v3109 = vunpack.c.h.b16 %v2968
      %v3110 = vunpack.c.l.b16 %v2969
      %v3111 = vunpack.c.h.b16 %v2969
      %v3112 = vunpack.c.l.b16 %v2970
      %v3113 = vunpack.c.h.b16 %v2970
      %v3114 = vunpack.c.l.b16 %v2971
      %v3115 = vunpack.c.h.b16 %v2971
      %v3116 = vunpack.c.l.b16 %v2972
      %v3117 = vunpack.c.h.b16 %v2972
      %v3118 = vunpack.c.l.b16 %v2973
      %v3119 = vunpack.c.h.b16 %v2973
      %v3120 = vunpack.c.l.b16 %v2974
      %v3121 = vunpack.c.h.b16 %v2974
      %v3122 = vunpack.c.l.b16 %v2975
      %v3123 = vunpack.c.h.b16 %v2975
      %v3124 = vunpack.c.l.b16 %v2976
      %v3125 = vunpack.c.h.b16 %v2976
      %v3126 = vunpack.c.l.b16 %v2977
      %v3127 = vunpack.c.h.b16 %v2977
      %v3128 = vunpack.c.l.b16 %v2978
      %v3129 = vunpack.c.h.b16 %v2978
      %v3130 = vunpack.c.l.b16 %v2979
      %v3131 = vunpack.c.h.b16 %v2979
      %v3132 = vunpack.c.l.b16 %v2980
      %v3133 = vunpack.c.h.b16 %v2980
      %v3134 = vunpack.c.l.b16 %v2981
      %v3135 = vunpack.c.h.b16 %v2981
      %v3136 = vunpack.c.l.b16 %v2982
      %v3137 = vunpack.c.h.b16 %v2982
      %v3138 = vunpack.c.l.b16 %v2983
      %v3139 = vunpack.c.h.b16 %v2983
      %v3140 = vunpack.c.l.b16 %v2984
      %v3141 = vunpack.c.h.b16 %v2984
      %v3142 = vunpack.c.l.b16 %v2985
      %v3143 = vunpack.c.h.b16 %v2985
      %v3144 = vunpack.c.l.b16 %v2986
      %v3145 = vunpack.c.h.b16 %v2986
      %v3146 = vunpack.c.l.b16 %v2987
      %v3147 = vunpack.c.h.b16 %v2987
      %v3148 = vunpack.c.l.b16 %v2988
      %v3149 = vunpack.c.h.b16 %v2988
      %v3150 = vunpack.c.l.b16 %v2989
      %v3151 = vunpack.c.h.b16 %v2989
      %v3152 = vunpack.c.l.b16 %v2990
      %v3153 = vunpack.c.h.b16 %v2990
      %v3154 = vunpack.c.l.b16 %v2991
      %v3155 = vunpack.c.h.b16 %v2991
      %v3156 = vunpack.c.l.b16 %v2992
      %v3157 = vunpack.c.h.b16 %v2992
      %v3158 = vunpack.c.l.b16 %v2993
      %v3159 = vunpack.c.h.b16 %v2993
      %v3160 = vunpack.c.l.b16 %v2994
      %v3161 = vunpack.c.h.b16 %v2994
      %v3162 = vunpack.c.l.b16 %v2995
      %v3163 = vunpack.c.h.b16 %v2995
      %v3164 = vpack.c.b16 %v3052, %v3052
      %v3165 = vpack.c.b16 %v3053, %v3053
      %v3166 = vpack.c.b16 %v3054, %v3054
      %v3167 = vpack.c.b16 %v3055, %v3055
      %v3168 = vpack.c.b16 %v3056, %v3056
      %v3169 = vpack.c.b16 %v3057, %v3057
      %v3170 = vpack.c.b16 %v3058, %v3058
      %v3171 = vpack.c.b16 %v3059, %v3059
      %v3172 = vpack.c.b16 %v3060, %v3060
      %v3173 = vpack.c.b16 %v3061, %v3061
      %v3174 = vpack.c.b16 %v3062, %v3062
      %v3175 = vpack.c.b16 %v3063, %v3063
      %v3176 = vpack.c.b16 %v3064, %v3064
      %v3177 = vpack.c.b16 %v3065, %v3065
      %v3178 = vpack.c.b16 %v3066, %v3066
      %v3179 = vpack.c.b16 %v3067, %v3067
      %v3180 = vpack.c.b16 %v3068, %v3068
      %v3181 = vpack.c.b16 %v3069, %v3069
      %v3182 = vpack.c.b16 %v3070, %v3070
      %v3183 = vpack.c.b16 %v3071, %v3071
      %v3184 = vpack.c.b16 %v3072, %v3072
      %v3185 = vpack.c.b16 %v3073, %v3073
      %v3186 = vpack.c.b16 %v3074, %v3074
      %v3187 = vpack.c.b16 %v3075, %v3075
      %v3188 = vpack.c.b16 %v3076, %v3076
      %v3189 = vpack.c.b16 %v3077, %v3077
      %v3190 = vpack.c.b16 %v3078, %v3078
      %v3191 = vpack.c.b16 %v3079, %v3079
      %v3192 = vpack.c.b16 %v3080, %v3080
      %v3193 = vpack.c.b16 %v3081, %v3081
      %v3194 = vpack.c.b16 %v3082, %v3082
      %v3195 = vpack.c.b16 %v3083, %v3083
      %v3196 = vpack.c.b16 %v3084, %v3084
      %v3197 = vpack.c.b16 %v3085, %v3085
      %v3198 = vpack.c.b16 %v3086, %v3086
      %v3199 = vpack.c.b16 %v3087, %v3087
      %v3200 = vpack.c.b16 %v3088, %v3088
      %v3201 = vpack.c.b16 %v3089, %v3089
      %v3202 = vpack.c.b16 %v3090, %v3090
      %v3203 = vpack.c.b16 %v3091, %v3091
      %v3204 = vpack.c.b16 %v3092, %v3092
      %v3205 = vpack.c.b16 %v3093, %v3093
      %v3206 = vpack.c.b16 %v3094, %v3094
      %v3207 = vpack.c.b16 %v3095, %v3095
      %v3208 = vpack.c.b16 %v3096, %v3096
      %v3209 = vpack.c.b16 %v3097, %v3097
      %v3210 = vpack.c.b16 %v3098, %v3098
      %v3211 = vpack.c.b16 %v3099, %v3099
      %v3212 = vpack.c.b16 %v3100, %v3100
      %v3213 = vpack.c.b16 %v3101, %v3101
      %v3214 = vpack.c.b16 %v3102, %v3102
      %v3215 = vpack.c.b16 %v3103, %v3103
      %v3216 = vpack.c.b16 %v3104, %v3104
      %v3217 = vpack.c.b16 %v3105, %v3105
      %v3218 = vpack.c.b16 %v3106, %v3106
      %v3219 = vpack.c.b16 %v3107, %v3107
      %v3220 = vpack.c.b16 %v3108, %v3108
      %v3221 = vpack.c.b16 %v3109, %v3109
      %v3222 = vpack.c.b16 %v3110, %v3110
      %v3223 = vpack.c.b16 %v3111, %v3111
      %v3224 = vpack.c.b16 %v3112, %v3112
      %v3225 = vpack.c.b16 %v3113, %v3113
      %v3226 = vpack.c.b16 %v3114, %v3114
      %v3227 = vpack.c.b16 %v3115, %v3115
      %v3228 = vpack.c.b16 %v3116, %v3116
      %v3229 = vpack.c.b16 %v3117, %v3117
      %v3230 = vpack.c.b16 %v3118, %v3118
      %v3231 = vpack.c.b16 %v3119, %v3119
      %v3232 = vpack.c.b16 %v3120, %v3120
      %v3233 = vpack.c.b16 %v3121, %v3121
      %v3234 = vpack.c.b16 %v3122, %v3122
      %v3235 = vpack.c.b16 %v3123, %v3123
      %v3236 = vpack.c.b16 %v3124, %v3124
      %v3237 = vpack.c.b16 %v3125, %v3125
      %v3238 = vpack.c.b16 %v3126, %v3126
      %v3239 = vpack.c.b16 %v3127, %v3127
      %v3240 = vpack.c.b16 %v3128, %v3128
      %v3241 = vpack.c.b16 %v3129, %v3129
      %v3242 = vpack.c.b16 %v3130, %v3130
      %v3243 = vpack.c.b16 %v3131, %v3131
      %v3244 = vpack.c.b16 %v3132, %v3132
      %v3245 = vpack.c.b16 %v3133, %v3133
      %v3246 = vpack.c.b16 %v3134, %v3134
      %v3247 = vpack.c.b16 %v3135, %v3135
      %v3248 = vpack.c.b16 %v3136, %v3136
      %v3249 = vpack.c.b16 %v3137, %v3137
      %v3250 = vpack.c.b16 %v3138, %v3138
      %v3251 = vpack.c.b16 %v3139, %v3139
      %v3252 = vpack.c.b16 %v3140, %v3140
      %v3253 = vpack.c.b16 %v3141, %v3141
      %v3254 = vpack.c.b16 %v3142, %v3142
      %v3255 = vpack.c.b16 %v3143, %v3143
      %v3256 = vpack.c.b16 %v3144, %v3144
      %v3257 = vpack.c.b16 %v3145, %v3145
      %v3258 = vpack.c.b16 %v3146, %v3146
      %v3259 = vpack.c.b16 %v3147, %v3147
      %v3260 = vpack.c.b16 %v3148, %v3148
      %v3261 = vpack.c.b16 %v3149, %v3149
      %v3262 = vpack.c.b16 %v3150, %v3150
      %v3263 = vpack.c.b16 %v3151, %v3151
      %v3264 = vpack.c.b16 %v3152, %v3152
      %v3265 = vpack.c.b16 %v3153, %v3153
      %v3266 = vpack.c.b16 %v3154, %v3154
      %v3267 = vpack.c.b16 %v3155, %v3155
      %v3268 = vpack.c.b16 %v3156, %v3156
      %v3269 = vpack.c.b16 %v3157, %v3157
      %v3270 = vpack.c.b16 %v3158, %v3158
      %v3271 = vpack.c.b16 %v3159, %v3159
      %v3272 = vpack.c.b16 %v3160, %v3160
      %v3273 = vpack.c.b16 %v3161, %v3161
      %v3274 = vpack.c.b16 %v3162, %v3162
      %v3275 = vpack.c.b16 %v3163, %v3163
      %vm3388 = vcmask 519168
      %3389 = vst.msk [vmem:[%s202] sm:$0xf] %vm3388, %v3164
      %3390 = vst.msk [vmem:[%s202 + $0x4] sm:$0xf] %vm3388, %v3165
      %3391 = vst.msk [vmem:[%s202 + $0x8] sm:$0xf] %vm3388, %v3166
      %3392 = vst.msk [vmem:[%s202 + $0xc] sm:$0xf] %vm3388, %v3167
      %3393 = vst.msk [vmem:[%s202 + $0x10] sm:$0xf] %vm3388, %v3168
      %3394 = vst.msk [vmem:[%s202 + $0x14] sm:$0xf] %vm3388, %v3169
      %3395 = vst.msk [vmem:[%s202 + $0x18] sm:$0xf] %vm3388, %v3170
      %3396 = vst.msk [vmem:[%s202 + $0x1c] sm:$0xf] %vm3388, %v3171
      %3397 = vst.msk [vmem:[%s202 + $0x20] sm:$0xf] %vm3388, %v3172
      %3398 = vst.msk [vmem:[%s202 + $0x24] sm:$0xf] %vm3388, %v3173
      %3399 = vst.msk [vmem:[%s202 + $0x28] sm:$0xf] %vm3388, %v3174
      %3400 = vst.msk [vmem:[%s202 + $0x2c] sm:$0xf] %vm3388, %v3175
      %3401 = vst.msk [vmem:[%s202 + $0x30] sm:$0xf] %vm3388, %v3176
      %3402 = vst.msk [vmem:[%s202 + $0x34] sm:$0xf] %vm3388, %v3177
      %3403 = vst.msk [vmem:[%s202 + $0x38] sm:$0xf] %vm3388, %v3178
      %3404 = vst.msk [vmem:[%s202 + $0x3c] sm:$0xf] %vm3388, %v3179
      %3405 = vst.msk [vmem:[%s202 + $0x40] sm:$0xf] %vm3388, %v3180
      %3406 = vst.msk [vmem:[%s202 + $0x44] sm:$0xf] %vm3388, %v3181
      %3407 = vst.msk [vmem:[%s202 + $0x48] sm:$0xf] %vm3388, %v3182
      %3408 = vst.msk [vmem:[%s202 + $0x4c] sm:$0xf] %vm3388, %v3183
      %3409 = vst.msk [vmem:[%s202 + $0x50] sm:$0xf] %vm3388, %v3184
      %3410 = vst.msk [vmem:[%s202 + $0x54] sm:$0xf] %vm3388, %v3185
      %3411 = vst.msk [vmem:[%s202 + $0x58] sm:$0xf] %vm3388, %v3186
      %3412 = vst.msk [vmem:[%s202 + $0x5c] sm:$0xf] %vm3388, %v3187
      %3413 = vst.msk [vmem:[%s202 + $0x60] sm:$0xf] %vm3388, %v3188
      %3414 = vst.msk [vmem:[%s202 + $0x64] sm:$0xf] %vm3388, %v3189
      %3415 = vst.msk [vmem:[%s202 + $0x68] sm:$0xf] %vm3388, %v3190
      %3416 = vst.msk [vmem:[%s202 + $0x6c] sm:$0xf] %vm3388, %v3191
      %3417 = vst.msk [vmem:[%s202 + $0x70] sm:$0xf] %vm3388, %v3192
      %3418 = vst.msk [vmem:[%s202 + $0x74] sm:$0xf] %vm3388, %v3193
      %3419 = vst.msk [vmem:[%s202 + $0x78] sm:$0xf] %vm3388, %v3194
      %3420 = vst.msk [vmem:[%s202 + $0x7c] sm:$0xf] %vm3388, %v3195
      %3421 = vst.msk [vmem:[%s202 + $0x80] sm:$0xf] %vm3388, %v3196
      %3422 = vst.msk [vmem:[%s202 + $0x84] sm:$0xf] %vm3388, %v3197
      %3423 = vst.msk [vmem:[%s202 + $0x88] sm:$0xf] %vm3388, %v3198
      %3424 = vst.msk [vmem:[%s202 + $0x8c] sm:$0xf] %vm3388, %v3199
      %3425 = vst.msk [vmem:[%s202 + $0x90] sm:$0xf] %vm3388, %v3200
      %3426 = vst.msk [vmem:[%s202 + $0x94] sm:$0xf] %vm3388, %v3201
      %3427 = vst.msk [vmem:[%s202 + $0x98] sm:$0xf] %vm3388, %v3202
      %3428 = vst.msk [vmem:[%s202 + $0x9c] sm:$0xf] %vm3388, %v3203
      %3429 = vst.msk [vmem:[%s202 + $0xa0] sm:$0xf] %vm3388, %v3204
      %3430 = vst.msk [vmem:[%s202 + $0xa4] sm:$0xf] %vm3388, %v3205
      %3431 = vst.msk [vmem:[%s202 + $0xa8] sm:$0xf] %vm3388, %v3206
      %3432 = vst.msk [vmem:[%s202 + $0xac] sm:$0xf] %vm3388, %v3207
      %3433 = vst.msk [vmem:[%s202 + $0xb0] sm:$0xf] %vm3388, %v3208
      %3434 = vst.msk [vmem:[%s202 + $0xb4] sm:$0xf] %vm3388, %v3209
      %3435 = vst.msk [vmem:[%s202 + $0xb8] sm:$0xf] %vm3388, %v3210
      %3436 = vst.msk [vmem:[%s202 + $0xbc] sm:$0xf] %vm3388, %v3211
      %3437 = vst.msk [vmem:[%s202 + $0xc0] sm:$0xf] %vm3388, %v3212
      %3438 = vst.msk [vmem:[%s202 + $0xc4] sm:$0xf] %vm3388, %v3213
      %3439 = vst.msk [vmem:[%s202 + $0xc8] sm:$0xf] %vm3388, %v3214
      %3440 = vst.msk [vmem:[%s202 + $0xcc] sm:$0xf] %vm3388, %v3215
      %3441 = vst.msk [vmem:[%s202 + $0xd0] sm:$0xf] %vm3388, %v3216
      %3442 = vst.msk [vmem:[%s202 + $0xd4] sm:$0xf] %vm3388, %v3217
      %3443 = vst.msk [vmem:[%s202 + $0xd8] sm:$0xf] %vm3388, %v3218
      %3444 = vst.msk [vmem:[%s202 + $0xdc] sm:$0xf] %vm3388, %v3219
      %3445 = vst.msk [vmem:[%s202 + $0xe0] sm:$0xf] %vm3388, %v3220
      %3446 = vst.msk [vmem:[%s202 + $0xe4] sm:$0xf] %vm3388, %v3221
      %3447 = vst.msk [vmem:[%s202 + $0xe8] sm:$0xf] %vm3388, %v3222
      %3448 = vst.msk [vmem:[%s202 + $0xec] sm:$0xf] %vm3388, %v3223
      %3449 = vst.msk [vmem:[%s202 + $0xf0] sm:$0xf] %vm3388, %v3224
      %3450 = vst.msk [vmem:[%s202 + $0xf4] sm:$0xf] %vm3388, %v3225
      %3451 = vst.msk [vmem:[%s202 + $0xf8] sm:$0xf] %vm3388, %v3226
      %3452 = vst.msk [vmem:[%s202 + $0xfc] sm:$0xf] %vm3388, %v3227
      %3453 = vst.msk [vmem:[%s202 + $0x100] sm:$0xf] %vm3388, %v3228
      %3454 = vst.msk [vmem:[%s202 + $0x104] sm:$0xf] %vm3388, %v3229
      %3455 = vst.msk [vmem:[%s202 + $0x108] sm:$0xf] %vm3388, %v3230
      %3456 = vst.msk [vmem:[%s202 + $0x10c] sm:$0xf] %vm3388, %v3231
      %3457 = vst.msk [vmem:[%s202 + $0x110] sm:$0xf] %vm3388, %v3232
      %3458 = vst.msk [vmem:[%s202 + $0x114] sm:$0xf] %vm3388, %v3233
      %3459 = vst.msk [vmem:[%s202 + $0x118] sm:$0xf] %vm3388, %v3234
      %3460 = vst.msk [vmem:[%s202 + $0x11c] sm:$0xf] %vm3388, %v3235
      %3461 = vst.msk [vmem:[%s202 + $0x120] sm:$0xf] %vm3388, %v3236
      %3462 = vst.msk [vmem:[%s202 + $0x124] sm:$0xf] %vm3388, %v3237
      %3463 = vst.msk [vmem:[%s202 + $0x128] sm:$0xf] %vm3388, %v3238
      %3464 = vst.msk [vmem:[%s202 + $0x12c] sm:$0xf] %vm3388, %v3239
      %3465 = vst.msk [vmem:[%s202 + $0x130] sm:$0xf] %vm3388, %v3240
      %3466 = vst.msk [vmem:[%s202 + $0x134] sm:$0xf] %vm3388, %v3241
      %3467 = vst.msk [vmem:[%s202 + $0x138] sm:$0xf] %vm3388, %v3242
      %3468 = vst.msk [vmem:[%s202 + $0x13c] sm:$0xf] %vm3388, %v3243
      %3469 = vst.msk [vmem:[%s202 + $0x140] sm:$0xf] %vm3388, %v3244
      %3470 = vst.msk [vmem:[%s202 + $0x144] sm:$0xf] %vm3388, %v3245
      %3471 = vst.msk [vmem:[%s202 + $0x148] sm:$0xf] %vm3388, %v3246
      %3472 = vst.msk [vmem:[%s202 + $0x14c] sm:$0xf] %vm3388, %v3247
      %3473 = vst.msk [vmem:[%s202 + $0x150] sm:$0xf] %vm3388, %v3248
      %3474 = vst.msk [vmem:[%s202 + $0x154] sm:$0xf] %vm3388, %v3249
      %3475 = vst.msk [vmem:[%s202 + $0x158] sm:$0xf] %vm3388, %v3250
      %3476 = vst.msk [vmem:[%s202 + $0x15c] sm:$0xf] %vm3388, %v3251
      %3477 = vst.msk [vmem:[%s202 + $0x160] sm:$0xf] %vm3388, %v3252
      %3478 = vst.msk [vmem:[%s202 + $0x164] sm:$0xf] %vm3388, %v3253
      %3479 = vst.msk [vmem:[%s202 + $0x168] sm:$0xf] %vm3388, %v3254
      %3480 = vst.msk [vmem:[%s202 + $0x16c] sm:$0xf] %vm3388, %v3255
      %3481 = vst.msk [vmem:[%s202 + $0x170] sm:$0xf] %vm3388, %v3256
      %3482 = vst.msk [vmem:[%s202 + $0x174] sm:$0xf] %vm3388, %v3257
      %3483 = vst.msk [vmem:[%s202 + $0x178] sm:$0xf] %vm3388, %v3258
      %3484 = vst.msk [vmem:[%s202 + $0x17c] sm:$0xf] %vm3388, %v3259
      %3485 = vst.msk [vmem:[%s202 + $0x180] sm:$0xf] %vm3388, %v3260
      %3486 = vst.msk [vmem:[%s202 + $0x184] sm:$0xf] %vm3388, %v3261
      %3487 = vst.msk [vmem:[%s202 + $0x188] sm:$0xf] %vm3388, %v3262
      %3488 = vst.msk [vmem:[%s202 + $0x18c] sm:$0xf] %vm3388, %v3263
      %3489 = vst.msk [vmem:[%s202 + $0x190] sm:$0xf] %vm3388, %v3264
      %3490 = vst.msk [vmem:[%s202 + $0x194] sm:$0xf] %vm3388, %v3265
      %3491 = vst.msk [vmem:[%s202 + $0x198] sm:$0xf] %vm3388, %v3266
      %3492 = vst.msk [vmem:[%s202 + $0x19c] sm:$0xf] %vm3388, %v3267
      %3493 = vst.msk [vmem:[%s202 + $0x1a0] sm:$0xf] %vm3388, %v3268
      %3494 = vst.msk [vmem:[%s202 + $0x1a4] sm:$0xf] %vm3388, %v3269
      %3495 = vst.msk [vmem:[%s202 + $0x1a8] sm:$0xf] %vm3388, %v3270
      %3496 = vst.msk [vmem:[%s202 + $0x1ac] sm:$0xf] %vm3388, %v3271
      %3497 = vst.msk [vmem:[%s202 + $0x1b0] sm:$0xf] %vm3388, %v3272
      %3498 = vst.msk [vmem:[%s202 + $0x1b4] sm:$0xf] %vm3388, %v3273
      %3499 = vst.msk [vmem:[%s202 + $0x1b8] sm:$0xf] %vm3388, %v3274
      %3500 = vst.msk [vmem:[%s202 + $0x1bc] sm:$0xf] %vm3388, %v3275
      %s3501 = smul.u32 112, %s15
      %p3502 = scmp.lt.s32.totalorder %s3501, 783
      %s3503 = scalar_select %p3502, %s3501, 783
      %s3504 = smul.addr %s3503, 4
      %s3505 = scalar_lea.vmem %s4, %s3504
      // Predicated region
      $region37: #{forward.2} parent=35 // pred_check
        %p3506 = pneg %p122
      $region38: #{forward.2} parent=35 // pred_check_branch
        %3508 = sbr.rel (%p3506) target = $region40
      $region39: #{forward.2} parent=35 // pred_region
        %s3509 = smul.u32 112, %s15
      $region40: #{forward.2} parent=35 // pred_fallthru
        _
    $region36: #{forward.2} parent=5 // pred_fallthru
      _
    %p3510 = scmp.le.s32.totalorder 2, %s10
    // Predicated region
    $region41: #{forward.2} parent=5 // pred_check
      %p3511 = pneg %p3510
    $region42: #{forward.2} parent=5 // pred_check_branch
      %3513 = sbr.rel (%p3511) target = $region44
    $region43: #{forward.2} parent=5 // pred_region
      %s3514 = ssub.s32 %s10, 2
      // Predicated region
      $region45: #{forward.2} parent=43 // pred_check
        %p3515 = pneg %p128
      $region46: #{forward.2} parent=43 // pred_check_branch
        %3517 = sbr.rel (%p3515) target = $region48
      $region47: #{forward.2} parent=43 // pred_region
        %s3518 = smul.u32 112, %s16
        %p3519 = scmp.lt.s32.totalorder %s3518, 783
        %s3520 = scalar_select %p3519, %s3518, 783
        %s3521 = smul.addr %s3520, 4
        %s3522 = scalar_lea.vmem %s4, %s3521
      $region48: #{forward.2} parent=43 // pred_fallthru
        _
    $region44: #{forward.2} parent=5 // pred_fallthru
      _
  $region6: #{forward.2} parent=0 // loop_footer
    %s14 = sadd.s32 1, %s10
  $region7: #{forward.2} parent=0 // loop_footer_branch
    %9 = sbr.rel target = $region3
  $region8: #{forward.2} parent=0 // loop_exit
    _

// kernel: forward.3
$region0: #{forward.3}
  #allocation0 [shape = 'u32[]', space=smem, size = 0x4, offset = 0x4, fixed_abs, tag = 'smem constant byte address 0x4 - core index']
  #allocation1 [shape = 'u32[144,128]{1,0:T(1,128)}', space=vmem, size = 0x12000, scoped, tag = 'internal scratch']
  %s0 = inlined_call_operand.vmem [shape: bf16[6272,64], index: 0, kind: input, shape index: {}]
  %s1 = inlined_call_operand.vmem [shape: bf16[64,363], index: 1, kind: input, shape index: {}]
  %s2 = inlined_call_operand.vmem [shape: f32[1,363], index: 2, kind: input, shape index: {}]
  %s3 = inlined_call_operand.vmem [shape: f32[1,363], index: 3, kind: input, shape index: {}]
  %s4 = inlined_call_operand.vmem [shape: bf16[6272,363], index: 4, kind: output, shape index: {}]
  %s5 = sld [smem:[#allocation0]]
  $region49: #{forward.3} parent=0
    _
  %s7 = ssub.s32 1, %s5
  %s8 = scalar_select 0, %s7, %s5
  loop: start=0, step=1, limit=9
  $region2: #{forward.3} parent=0 // loop_pre_header
    _
  $region3: #{forward.3} parent=0 // loop_header
    %s10 = sphi 0, %s14
    %p11 = scmp.ge.s32.totalorder %s10, 9
    %s20 = sphi 0, %s22
    %s23 = sphi 0, %s20
    %s24 = sphi 0, %s23
    %s40 = sphi 0, %s24
    %s44 = sphi 0, %s44
    %s46 = sphi 0, %s44
    %s47 = sphi 0, %s46
    %s61 = sphi 0, %s47
    %s65 = sphi 0, %s65
    %s67 = sphi 0, %s65
    %s68 = sphi 0, %s67
    %s82 = sphi 0, %s68
    %s86 = sphi 0, %s86
    %s88 = sphi 0, %s86
    %s89 = sphi 0, %s88
    %s103 = sphi 0, %s89
    %s109 = sphi 0, %s111
    %s112 = sphi 0, %s109
    %s113 = sphi 0, %s112
    %s129 = sphi 0, %s113
  $region4: #{forward.3} parent=0 // loop_header_branch
    %13 = sbr.rel (%p11) target = $region8
  $region5: #{forward.3} parent=0 // loop_body
    %s15 = ssub.s32 %s10, 1
    %s16 = ssub.s32 %s10, 2
    %s17 = sadd.s32 %s10, 1
    %s18 = ssub.s32 %s10, %s17
    %p19 = scmp.eq.s32.totalorder %s18, 0
    %s21 = sadd.s32 %s20, 1
    %s22 = scalar_select %p19, %s20, %s21
    %p25 = pneg %p19
    %p26 = scmp.eq.s32.totalorder %s10, 6
    %p27 = por %p25, %p26
    %p28 = scmp.ne.s32.totalorder %s20, %s23
    %p29 = scmp.eq.s32.totalorder %s10, 0
    %p30 = por %p28, %p29
    %p31 = scmp.ne.s32.totalorder %s20, %s23
    %p32 = scmp.eq.s32.totalorder %s15, 6
    %p33 = por %p31, %p32
    %p34 = scmp.ne.s32.totalorder %s23, %s24
    %p35 = scmp.eq.s32.totalorder %s15, 0
    %p36 = por %p34, %p35
    %p37 = scmp.ne.s32.totalorder %s23, %s24
    %p38 = scmp.eq.s32.totalorder %s16, 6
    %p39 = por %p37, %p38
    %p41 = scmp.ne.s32.totalorder %s24, %s40
    %p42 = scmp.eq.s32.totalorder %s16, 0
    %p43 = por %p41, %p42
    %s45 = sadd.s32 %s44, 1
    %p48 = scmp.eq.s32.totalorder %s10, 6
    %p49 = scmp.ne.s32.totalorder %s44, %s46
    %p50 = scmp.eq.s32.totalorder %s10, 0
    %p51 = por %p49, %p50
    %p52 = scmp.ne.s32.totalorder %s44, %s46
    %p53 = scmp.eq.s32.totalorder %s15, 6
    %p54 = por %p52, %p53
    %p55 = scmp.ne.s32.totalorder %s46, %s47
    %p56 = scmp.eq.s32.totalorder %s15, 0
    %p57 = por %p55, %p56
    %p58 = scmp.ne.s32.totalorder %s46, %s47
    %p59 = scmp.eq.s32.totalorder %s16, 6
    %p60 = por %p58, %p59
    %p62 = scmp.ne.s32.totalorder %s47, %s61
    %p63 = scmp.eq.s32.totalorder %s16, 0
    %p64 = por %p62, %p63
    %s66 = sadd.s32 %s65, 1
    %p69 = scmp.eq.s32.totalorder %s10, 6
    %p70 = scmp.ne.s32.totalorder %s65, %s67
    %p71 = scmp.eq.s32.totalorder %s10, 0
    %p72 = por %p70, %p71
    %p73 = scmp.ne.s32.totalorder %s65, %s67
    %p74 = scmp.eq.s32.totalorder %s15, 6
    %p75 = por %p73, %p74
    %p76 = scmp.ne.s32.totalorder %s67, %s68
    %p77 = scmp.eq.s32.totalorder %s15, 0
    %p78 = por %p76, %p77
    %p79 = scmp.ne.s32.totalorder %s67, %s68
    %p80 = scmp.eq.s32.totalorder %s16, 6
    %p81 = por %p79, %p80
    %p83 = scmp.ne.s32.totalorder %s68, %s82
    %p84 = scmp.eq.s32.totalorder %s16, 0
    %p85 = por %p83, %p84
    %s87 = sadd.s32 %s86, 1
    %p90 = scmp.eq.s32.totalorder %s10, 6
    %p91 = scmp.ne.s32.totalorder %s86, %s88
    %p92 = scmp.eq.s32.totalorder %s10, 0
    %p93 = por %p91, %p92
    %p94 = scmp.ne.s32.totalorder %s86, %s88
    %p95 = scmp.eq.s32.totalorder %s15, 6
    %p96 = por %p94, %p95
    %p97 = scmp.ne.s32.totalorder %s88, %s89
    %p98 = scmp.eq.s32.totalorder %s15, 0
    %p99 = por %p97, %p98
    %p100 = scmp.ne.s32.totalorder %s88, %s89
    %p101 = scmp.eq.s32.totalorder %s16, 6
    %p102 = por %p100, %p101
    %p104 = scmp.ne.s32.totalorder %s89, %s103
    %p105 = scmp.eq.s32.totalorder %s16, 0
    %p106 = por %p104, %p105
    %s107 = ssub.s32 %s10, %s17
    %p108 = scmp.eq.s32.totalorder %s107, 0
    %s110 = sadd.s32 %s109, 1
    %s111 = scalar_select %p108, %s109, %s110
    %p114 = pneg %p108
    %p115 = scmp.eq.s32.totalorder %s10, 6
    %p116 = por %p114, %p115
    %p117 = scmp.ne.s32.totalorder %s109, %s112
    %p118 = scmp.eq.s32.totalorder %s10, 0
    %p119 = por %p117, %p118
    %p120 = scmp.ne.s32.totalorder %s109, %s112
    %p121 = scmp.eq.s32.totalorder %s15, 6
    %p122 = por %p120, %p121
    %p123 = scmp.ne.s32.totalorder %s112, %s113
    %p124 = scmp.eq.s32.totalorder %s15, 0
    %p125 = por %p123, %p124
    %p126 = scmp.ne.s32.totalorder %s112, %s113
    %p127 = scmp.eq.s32.totalorder %s16, 6
    %p128 = por %p126, %p127
    %p130 = scmp.ne.s32.totalorder %s113, %s129
    %p131 = scmp.eq.s32.totalorder %s16, 0
    %p132 = por %p130, %p131
    %p133 = scmp.le.s32.totalorder 1, %s10
    %p134 = scmp.lt.s32.totalorder %s10, 8
    %p135 = pnand %p133, %p134
    %p136 = pneg %p135
    // Predicated region
    $region9: #{forward.3} parent=5 // pred_check
      _
    $region10: #{forward.3} parent=5 // pred_check_branch
      %138 = sbr.rel (%p135) target = $region12
    $region11: #{forward.3} parent=5 // pred_region
      %s139 = ssub.s32 %s10, 1
      // Predicated region
      $region13: #{forward.3} parent=11 // pred_check
        %p140 = pneg %p57
      $region14: #{forward.3} parent=11 // pred_check_branch
        %142 = sbr.rel (%p140) target = $region16
      $region15: #{forward.3} parent=11 // pred_region
        _
      $region16: #{forward.3} parent=11 // pred_fallthru
        _
      // Predicated region
      $region17: #{forward.3} parent=11 // pred_check
        %p143 = pneg %p78
      $region18: #{forward.3} parent=11 // pred_check_branch
        %145 = sbr.rel (%p143) target = $region20
      $region19: #{forward.3} parent=11 // pred_region
        _
      $region20: #{forward.3} parent=11 // pred_fallthru
        _
      // Predicated region
      $region21: #{forward.3} parent=11 // pred_check
        %p146 = pneg %p99
      $region22: #{forward.3} parent=11 // pred_check_branch
        %148 = sbr.rel (%p146) target = $region24
      $region23: #{forward.3} parent=11 // pred_region
        _
      $region24: #{forward.3} parent=11 // pred_fallthru
        _
    $region12: #{forward.3} parent=5 // pred_fallthru
      _
    %p149 = scmp.lt.s32.totalorder %s10, 7
    // Predicated region
    $region25: #{forward.3} parent=5 // pred_check
      %p150 = pneg %p149
    $region26: #{forward.3} parent=5 // pred_check_branch
      %152 = sbr.rel (%p150) target = $region28
    $region27: #{forward.3} parent=5 // pred_region
      // Predicated region
      $region29: #{forward.3} parent=27 // pred_check
        %p153 = pneg %p30
      $region30: #{forward.3} parent=27 // pred_check_branch
        %155 = sbr.rel (%p153) target = $region32
      $region31: #{forward.3} parent=27 // pred_region
        %s156 = smul.u32 112, %s10
        %p157 = scmp.lt.s32.totalorder %s156, 783
        %s158 = scalar_select %p157, %s156, 783
        %s159 = smul.addr %s158, 4
        %s160 = scalar_lea.vmem %s0, %s159
        %s161 = smul.u32 112, %s10
      $region32: #{forward.3} parent=27 // pred_fallthru
        _
    $region28: #{forward.3} parent=5 // pred_fallthru
      _
    %p162 = scmp.le.s32.totalorder 1, %s10
    %p163 = scmp.lt.s32.totalorder %s10, 8
    %p164 = pnand %p162, %p163
    %p165 = pneg %p164
    // Predicated region
    $region33: #{forward.3} parent=5 // pred_check
      _
    $region34: #{forward.3} parent=5 // pred_check_branch
      %167 = sbr.rel (%p164) target = $region36
    $region35: #{forward.3} parent=5 // pred_region
      %s168 = ssub.s32 %s10, 1
      %s169 = smul.u32 112, %s15
      %p170 = scmp.lt.s32.totalorder %s169, 783
      %s171 = scalar_select %p170, %s169, 783
      %s172 = smul.addr %s171, 4
      %s173 = scalar_lea.vmem %s0, %s172
      %p174 = pneg %p36
      %p175 = pneg %p33
      %p176 = pneg %p57
      %p177 = pneg %p54
      %p178 = pneg %p78
      %p179 = pneg %p75
      %p180 = pneg %p99
      %p181 = pneg %p96
      %p182 = pneg %p125
      %p183 = pneg %p122
      %s184 = smul.u32 112, %s15
      %p185 = scmp.lt.s32.totalorder %s184, 783
      %s186 = scalar_select %p185, %s184, 783
      %s187 = smul.addr %s186, 3
      %s188 = smul.addr %s187, 4
      %s189 = scalar_lea.vmem %s4, %s188
      %s190 = smul.u32 112, %s15
      %p191 = scmp.lt.s32.totalorder %s190, 783
      %s192 = scalar_select %p191, %s190, 783
      %s193 = smul.addr %s192, 4
      %s194 = scalar_lea.vmem %s0, %s193
      %s195 = smul.u32 112, %s15
      %s196 = smul.u32 112, %s15
      %p197 = scmp.lt.s32.totalorder %s196, 783
      %s198 = scalar_select %p197, %s196, 783
      %s199 = smul.addr %s198, 3
      %s200 = smul.addr %s199, 4
      %s201 = scalar_lea.vmem %s4, %s200
      %s202 = smul.u32 112, %s15
      %v204 = vld [vmem:[%s194] sm:$0xf]
      %v205 = vld [vmem:[%s194 + $0x4] sm:$0xf]
      %v206 = vld [vmem:[%s194 + $0x8] sm:$0xf]
      %v207 = vld [vmem:[%s194 + $0xc] sm:$0xf]
      %v208 = vld [vmem:[%s194 + $0x10] sm:$0xf]
      %v209 = vld [vmem:[%s194 + $0x14] sm:$0xf]
      %v210 = vld [vmem:[%s194 + $0x18] sm:$0xf]
      %v211 = vld [vmem:[%s194 + $0x1c] sm:$0xf]
      %v212 = vld [vmem:[%s194 + $0x20] sm:$0xf]
      %v213 = vld [vmem:[%s194 + $0x24] sm:$0xf]
      %v214 = vld [vmem:[%s194 + $0x28] sm:$0xf]
      %v215 = vld [vmem:[%s194 + $0x2c] sm:$0xf]
      %v216 = vld [vmem:[%s194 + $0x30] sm:$0xf]
      %v217 = vld [vmem:[%s194 + $0x34] sm:$0xf]
      %v218 = vld [vmem:[%s194 + $0x38] sm:$0xf]
      %v219 = vld [vmem:[%s194 + $0x3c] sm:$0xf]
      %v220 = vld [vmem:[%s194 + $0x40] sm:$0xf]
      %v221 = vld [vmem:[%s194 + $0x44] sm:$0xf]
      %v222 = vld [vmem:[%s194 + $0x48] sm:$0xf]
      %v223 = vld [vmem:[%s194 + $0x4c] sm:$0xf]
      %v224 = vld [vmem:[%s194 + $0x50] sm:$0xf]
      %v225 = vld [vmem:[%s194 + $0x54] sm:$0xf]
      %v226 = vld [vmem:[%s194 + $0x58] sm:$0xf]
      %v227 = vld [vmem:[%s194 + $0x5c] sm:$0xf]
      %v228 = vld [vmem:[%s194 + $0x60] sm:$0xf]
      %v229 = vld [vmem:[%s194 + $0x64] sm:$0xf]
      %v230 = vld [vmem:[%s194 + $0x68] sm:$0xf]
      %v231 = vld [vmem:[%s194 + $0x6c] sm:$0xf]
      %v232 = vld [vmem:[%s194 + $0x70] sm:$0xf]
      %v233 = vld [vmem:[%s194 + $0x74] sm:$0xf]
      %v234 = vld [vmem:[%s194 + $0x78] sm:$0xf]
      %v235 = vld [vmem:[%s194 + $0x7c] sm:$0xf]
      %v236 = vld [vmem:[%s194 + $0x80] sm:$0xf]
      %v237 = vld [vmem:[%s194 + $0x84] sm:$0xf]
      %v238 = vld [vmem:[%s194 + $0x88] sm:$0xf]
      %v239 = vld [vmem:[%s194 + $0x8c] sm:$0xf]
      %v240 = vld [vmem:[%s194 + $0x90] sm:$0xf]
      %v241 = vld [vmem:[%s194 + $0x94] sm:$0xf]
      %v242 = vld [vmem:[%s194 + $0x98] sm:$0xf]
      %v243 = vld [vmem:[%s194 + $0x9c] sm:$0xf]
      %v244 = vld [vmem:[%s194 + $0xa0] sm:$0xf]
      %v245 = vld [vmem:[%s194 + $0xa4] sm:$0xf]
      %v246 = vld [vmem:[%s194 + $0xa8] sm:$0xf]
      %v247 = vld [vmem:[%s194 + $0xac] sm:$0xf]
      %v248 = vld [vmem:[%s194 + $0xb0] sm:$0xf]
      %v249 = vld [vmem:[%s194 + $0xb4] sm:$0xf]
      %v250 = vld [vmem:[%s194 + $0xb8] sm:$0xf]
      %v251 = vld [vmem:[%s194 + $0xbc] sm:$0xf]
      %v252 = vld [vmem:[%s194 + $0xc0] sm:$0xf]
      %v253 = vld [vmem:[%s194 + $0xc4] sm:$0xf]
      %v254 = vld [vmem:[%s194 + $0xc8] sm:$0xf]
      %v255 = vld [vmem:[%s194 + $0xcc] sm:$0xf]
      %v256 = vld [vmem:[%s194 + $0xd0] sm:$0xf]
      %v257 = vld [vmem:[%s194 + $0xd4] sm:$0xf]
      %v258 = vld [vmem:[%s194 + $0xd8] sm:$0xf]
      %v259 = vld [vmem:[%s194 + $0xdc] sm:$0xf]
      %v260 = vld [vmem:[%s194 + $0xe0] sm:$0xf]
      %v261 = vld [vmem:[%s194 + $0xe4] sm:$0xf]
      %v262 = vld [vmem:[%s194 + $0xe8] sm:$0xf]
      %v263 = vld [vmem:[%s194 + $0xec] sm:$0xf]
      %v264 = vld [vmem:[%s194 + $0xf0] sm:$0xf]
      %v265 = vld [vmem:[%s194 + $0xf4] sm:$0xf]
      %v266 = vld [vmem:[%s194 + $0xf8] sm:$0xf]
      %v267 = vld [vmem:[%s194 + $0xfc] sm:$0xf]
      %v268 = vld [vmem:[%s194 + $0x100] sm:$0xf]
      %v269 = vld [vmem:[%s194 + $0x104] sm:$0xf]
      %v270 = vld [vmem:[%s194 + $0x108] sm:$0xf]
      %v271 = vld [vmem:[%s194 + $0x10c] sm:$0xf]
      %v272 = vld [vmem:[%s194 + $0x110] sm:$0xf]
      %v273 = vld [vmem:[%s194 + $0x114] sm:$0xf]
      %v274 = vld [vmem:[%s194 + $0x118] sm:$0xf]
      %v275 = vld [vmem:[%s194 + $0x11c] sm:$0xf]
      %v276 = vld [vmem:[%s194 + $0x120] sm:$0xf]
      %v277 = vld [vmem:[%s194 + $0x124] sm:$0xf]
      %v278 = vld [vmem:[%s194 + $0x128] sm:$0xf]
      %v279 = vld [vmem:[%s194 + $0x12c] sm:$0xf]
      %v280 = vld [vmem:[%s194 + $0x130] sm:$0xf]
      %v281 = vld [vmem:[%s194 + $0x134] sm:$0xf]
      %v282 = vld [vmem:[%s194 + $0x138] sm:$0xf]
      %v283 = vld [vmem:[%s194 + $0x13c] sm:$0xf]
      %v284 = vld [vmem:[%s194 + $0x140] sm:$0xf]
      %v285 = vld [vmem:[%s194 + $0x144] sm:$0xf]
      %v286 = vld [vmem:[%s194 + $0x148] sm:$0xf]
      %v287 = vld [vmem:[%s194 + $0x14c] sm:$0xf]
      %v288 = vld [vmem:[%s194 + $0x150] sm:$0xf]
      %v289 = vld [vmem:[%s194 + $0x154] sm:$0xf]
      %v290 = vld [vmem:[%s194 + $0x158] sm:$0xf]
      %v291 = vld [vmem:[%s194 + $0x15c] sm:$0xf]
      %v292 = vld [vmem:[%s194 + $0x160] sm:$0xf]
      %v293 = vld [vmem:[%s194 + $0x164] sm:$0xf]
      %v294 = vld [vmem:[%s194 + $0x168] sm:$0xf]
      %v295 = vld [vmem:[%s194 + $0x16c] sm:$0xf]
      %v296 = vld [vmem:[%s194 + $0x170] sm:$0xf]
      %v297 = vld [vmem:[%s194 + $0x174] sm:$0xf]
      %v298 = vld [vmem:[%s194 + $0x178] sm:$0xf]
      %v299 = vld [vmem:[%s194 + $0x17c] sm:$0xf]
      %v300 = vld [vmem:[%s194 + $0x180] sm:$0xf]
      %v301 = vld [vmem:[%s194 + $0x184] sm:$0xf]
      %v302 = vld [vmem:[%s194 + $0x188] sm:$0xf]
      %v303 = vld [vmem:[%s194 + $0x18c] sm:$0xf]
      %v304 = vld [vmem:[%s194 + $0x190] sm:$0xf]
      %v305 = vld [vmem:[%s194 + $0x194] sm:$0xf]
      %v306 = vld [vmem:[%s194 + $0x198] sm:$0xf]
      %v307 = vld [vmem:[%s194 + $0x19c] sm:$0xf]
      %v308 = vld [vmem:[%s194 + $0x1a0] sm:$0xf]
      %v309 = vld [vmem:[%s194 + $0x1a4] sm:$0xf]
      %v310 = vld [vmem:[%s194 + $0x1a8] sm:$0xf]
      %v311 = vld [vmem:[%s194 + $0x1ac] sm:$0xf]
      %v312 = vld [vmem:[%s194 + $0x1b0] sm:$0xf]
      %v313 = vld [vmem:[%s194 + $0x1b4] sm:$0xf]
      %v314 = vld [vmem:[%s194 + $0x1b8] sm:$0xf]
      %v315 = vld [vmem:[%s194 + $0x1bc] sm:$0xf]
      %v316 = vld [vmem:[%s1] sm:$0xff]
      %v317 = vld [vmem:[%s1 + $0x8] sm:$0xf]
      %v318 = vld [vmem:[%s1 + $0xc] sm:$0xff]
      %v319 = vld [vmem:[%s1 + $0x14] sm:$0xf]
      %v320 = vld [vmem:[%s1 + $0x18] sm:$0xff]
      %v321 = vld [vmem:[%s1 + $0x20] sm:$0xf]
      %v322 = vld [vmem:[%s1 + $0x24] sm:$0xff]
      %v323 = vld [vmem:[%s1 + $0x2c] sm:$0xf]
      %v324 = vld [vmem:[%s1 + $0x30] sm:$0xff]
      %v325 = vld [vmem:[%s1 + $0x38] sm:$0xf]
      %v326 = vld [vmem:[%s1 + $0x3c] sm:$0xff]
      %v327 = vld [vmem:[%s1 + $0x44] sm:$0xf]
      %v328 = vld [vmem:[%s1 + $0x48] sm:$0xff]
      %v329 = vld [vmem:[%s1 + $0x50] sm:$0xf]
      %v330 = vld [vmem:[%s1 + $0x54] sm:$0xff]
      %v331 = vld [vmem:[%s1 + $0x5c] sm:$0xf]
      %v444 = vunpack.c.l.b16 %v204
      %v445 = vunpack.c.l.b16 %v205
      %v446 = vunpack.c.l.b16 %v206
      %v447 = vunpack.c.l.b16 %v207
      %v448 = vunpack.c.l.b16 %v208
      %v449 = vunpack.c.l.b16 %v209
      %v450 = vunpack.c.l.b16 %v210
      %v451 = vunpack.c.l.b16 %v211
      %v452 = vunpack.c.l.b16 %v212
      %v453 = vunpack.c.l.b16 %v213
      %v454 = vunpack.c.l.b16 %v214
      %v455 = vunpack.c.l.b16 %v215
      %v456 = vunpack.c.l.b16 %v216
      %v457 = vunpack.c.l.b16 %v217
      %v458 = vunpack.c.l.b16 %v218
      %v459 = vunpack.c.l.b16 %v219
      %v460 = vunpack.c.l.b16 %v220
      %v461 = vunpack.c.l.b16 %v221
      %v462 = vunpack.c.l.b16 %v222
      %v463 = vunpack.c.l.b16 %v223
      %v464 = vunpack.c.l.b16 %v224
      %v465 = vunpack.c.l.b16 %v225
      %v466 = vunpack.c.l.b16 %v226
      %v467 = vunpack.c.l.b16 %v227
      %v468 = vunpack.c.l.b16 %v228
      %v469 = vunpack.c.l.b16 %v229
      %v470 = vunpack.c.l.b16 %v230
      %v471 = vunpack.c.l.b16 %v231
      %v472 = vunpack.c.l.b16 %v232
      %v473 = vunpack.c.l.b16 %v233
      %v474 = vunpack.c.l.b16 %v234
      %v475 = vunpack.c.l.b16 %v235
      %v476 = vunpack.c.l.b16 %v236
      %v477 = vunpack.c.l.b16 %v237
      %v478 = vunpack.c.l.b16 %v238
      %v479 = vunpack.c.l.b16 %v239
      %v480 = vunpack.c.l.b16 %v240
      %v481 = vunpack.c.l.b16 %v241
      %v482 = vunpack.c.l.b16 %v242
      %v483 = vunpack.c.l.b16 %v243
      %v484 = vunpack.c.l.b16 %v244
      %v485 = vunpack.c.l.b16 %v245
      %v486 = vunpack.c.l.b16 %v246
      %v487 = vunpack.c.l.b16 %v247
      %v488 = vunpack.c.l.b16 %v248
      %v489 = vunpack.c.l.b16 %v249
      %v490 = vunpack.c.l.b16 %v250
      %v491 = vunpack.c.l.b16 %v251
      %v492 = vunpack.c.l.b16 %v252
      %v493 = vunpack.c.l.b16 %v253
      %v494 = vunpack.c.l.b16 %v254
      %v495 = vunpack.c.l.b16 %v255
      %v496 = vunpack.c.l.b16 %v256
      %v497 = vunpack.c.l.b16 %v257
      %v498 = vunpack.c.l.b16 %v258
      %v499 = vunpack.c.l.b16 %v259
      %v500 = vunpack.c.l.b16 %v260
      %v501 = vunpack.c.l.b16 %v261
      %v502 = vunpack.c.l.b16 %v262
      %v503 = vunpack.c.l.b16 %v263
      %v504 = vunpack.c.l.b16 %v264
      %v505 = vunpack.c.l.b16 %v265
      %v506 = vunpack.c.l.b16 %v266
      %v507 = vunpack.c.l.b16 %v267
      %v508 = vunpack.c.l.b16 %v268
      %v509 = vunpack.c.l.b16 %v269
      %v510 = vunpack.c.l.b16 %v270
      %v511 = vunpack.c.l.b16 %v271
      %v512 = vunpack.c.l.b16 %v272
      %v513 = vunpack.c.l.b16 %v273
      %v514 = vunpack.c.l.b16 %v274
      %v515 = vunpack.c.l.b16 %v275
      %v516 = vunpack.c.l.b16 %v276
      %v517 = vunpack.c.l.b16 %v277
      %v518 = vunpack.c.l.b16 %v278
      %v519 = vunpack.c.l.b16 %v279
      %v520 = vunpack.c.l.b16 %v280
      %v521 = vunpack.c.l.b16 %v281
      %v522 = vunpack.c.l.b16 %v282
      %v523 = vunpack.c.l.b16 %v283
      %v524 = vunpack.c.l.b16 %v284
      %v525 = vunpack.c.l.b16 %v285
      %v526 = vunpack.c.l.b16 %v286
      %v527 = vunpack.c.l.b16 %v287
      %v528 = vunpack.c.l.b16 %v288
      %v529 = vunpack.c.l.b16 %v289
      %v530 = vunpack.c.l.b16 %v290
      %v531 = vunpack.c.l.b16 %v291
      %v532 = vunpack.c.l.b16 %v292
      %v533 = vunpack.c.l.b16 %v293
      %v534 = vunpack.c.l.b16 %v294
      %v535 = vunpack.c.l.b16 %v295
      %v536 = vunpack.c.l.b16 %v296
      %v537 = vunpack.c.l.b16 %v297
      %v538 = vunpack.c.l.b16 %v298
      %v539 = vunpack.c.l.b16 %v299
      %v540 = vunpack.c.l.b16 %v300
      %v541 = vunpack.c.l.b16 %v301
      %v542 = vunpack.c.l.b16 %v302
      %v543 = vunpack.c.l.b16 %v303
      %v544 = vunpack.c.l.b16 %v304
      %v545 = vunpack.c.l.b16 %v305
      %v546 = vunpack.c.l.b16 %v306
      %v547 = vunpack.c.l.b16 %v307
      %v548 = vunpack.c.l.b16 %v308
      %v549 = vunpack.c.l.b16 %v309
      %v550 = vunpack.c.l.b16 %v310
      %v551 = vunpack.c.l.b16 %v311
      %v552 = vunpack.c.l.b16 %v312
      %v553 = vunpack.c.l.b16 %v313
      %v554 = vunpack.c.l.b16 %v314
      %v555 = vunpack.c.l.b16 %v315
      %v556 = vpack.c.b16 %v445, %v444
      %v557 = vpack.c.b16 %v447, %v446
      %v558 = vpack.c.b16 %v449, %v448
      %v559 = vpack.c.b16 %v451, %v450
      %v560 = vpack.c.b16 %v453, %v452
      %v561 = vpack.c.b16 %v455, %v454
      %v562 = vpack.c.b16 %v457, %v456
      %v563 = vpack.c.b16 %v459, %v458
      %v564 = vpack.c.b16 %v461, %v460
      %v565 = vpack.c.b16 %v463, %v462
      %v566 = vpack.c.b16 %v465, %v464
      %v567 = vpack.c.b16 %v467, %v466
      %v568 = vpack.c.b16 %v469, %v468
      %v569 = vpack.c.b16 %v471, %v470
      %v570 = vpack.c.b16 %v473, %v472
      %v571 = vpack.c.b16 %v475, %v474
      %v572 = vpack.c.b16 %v477, %v476
      %v573 = vpack.c.b16 %v479, %v478
      %v574 = vpack.c.b16 %v481, %v480
      %v575 = vpack.c.b16 %v483, %v482
      %v576 = vpack.c.b16 %v485, %v484
      %v577 = vpack.c.b16 %v487, %v486
      %v578 = vpack.c.b16 %v489, %v488
      %v579 = vpack.c.b16 %v491, %v490
      %v580 = vpack.c.b16 %v493, %v492
      %v581 = vpack.c.b16 %v495, %v494
      %v582 = vpack.c.b16 %v497, %v496
      %v583 = vpack.c.b16 %v499, %v498
      %v584 = vpack.c.b16 %v501, %v500
      %v585 = vpack.c.b16 %v503, %v502
      %v586 = vpack.c.b16 %v505, %v504
      %v587 = vpack.c.b16 %v507, %v506
      %v588 = vpack.c.b16 %v509, %v508
      %v589 = vpack.c.b16 %v511, %v510
      %v590 = vpack.c.b16 %v513, %v512
      %v591 = vpack.c.b16 %v515, %v514
      %v592 = vpack.c.b16 %v517, %v516
      %v593 = vpack.c.b16 %v519, %v518
      %v594 = vpack.c.b16 %v521, %v520
      %v595 = vpack.c.b16 %v523, %v522
      %v596 = vpack.c.b16 %v525, %v524
      %v597 = vpack.c.b16 %v527, %v526
      %v598 = vpack.c.b16 %v529, %v528
      %v599 = vpack.c.b16 %v531, %v530
      %v600 = vpack.c.b16 %v533, %v532
      %v601 = vpack.c.b16 %v535, %v534
      %v602 = vpack.c.b16 %v537, %v536
      %v603 = vpack.c.b16 %v539, %v538
      %v604 = vpack.c.b16 %v541, %v540
      %v605 = vpack.c.b16 %v543, %v542
      %v606 = vpack.c.b16 %v545, %v544
      %v607 = vpack.c.b16 %v547, %v546
      %v608 = vpack.c.b16 %v549, %v548
      %v609 = vpack.c.b16 %v551, %v550
      %v610 = vpack.c.b16 %v553, %v552
      %v611 = vpack.c.b16 %v555, %v554
      %v628 = vunpack.c.l.b16 %v316
      %v629 = vunpack.c.h.b16 %v316
      %v630 = vunpack.c.l.b16 %v317
      %v631 = vunpack.c.l.b16 %v318
      %v632 = vunpack.c.h.b16 %v318
      %v633 = vunpack.c.l.b16 %v319
      %v634 = vunpack.c.l.b16 %v320
      %v635 = vunpack.c.h.b16 %v320
      %v636 = vunpack.c.l.b16 %v321
      %v637 = vunpack.c.l.b16 %v322
      %v638 = vunpack.c.h.b16 %v322
      %v639 = vunpack.c.l.b16 %v323
      %v640 = vunpack.c.l.b16 %v324
      %v641 = vunpack.c.h.b16 %v324
      %v642 = vunpack.c.l.b16 %v325
      %v643 = vunpack.c.l.b16 %v326
      %v644 = vunpack.c.h.b16 %v326
      %v645 = vunpack.c.l.b16 %v327
      %v646 = vunpack.c.l.b16 %v328
      %v647 = vunpack.c.h.b16 %v328
      %v648 = vunpack.c.l.b16 %v329
      %v649 = vunpack.c.l.b16 %v330
      %v650 = vunpack.c.h.b16 %v330
      %v651 = vunpack.c.l.b16 %v331
      %v652 = vpack.c.b16 %v631, %v628
      %v653 = vpack.c.b16 %v632, %v629
      %v654 = vpack.c.b16 %v633, %v630
      %v655 = vpack.c.b16 %v637, %v634
      %v656 = vpack.c.b16 %v638, %v635
      %v657 = vpack.c.b16 %v639, %v636
      %v658 = vpack.c.b16 %v643, %v640
      %v659 = vpack.c.b16 %v644, %v641
      %v660 = vpack.c.b16 %v645, %v642
      %v661 = vpack.c.b16 %v649, %v646
      %v662 = vpack.c.b16 %v650, %v647
      %v663 = vpack.c.b16 %v651, %v648
      %vm676 = vcmask 523264
      %v678 = vsel %vm676, %v556, 0
      %v681 = vsel %vm676, %v557, 0
      %v684 = vsel %vm676, %v558, 0
      %v687 = vsel %vm676, %v559, 0
      %v690 = vsel %vm676, %v560, 0
      %v693 = vsel %vm676, %v561, 0
      %v696 = vsel %vm676, %v562, 0
      %v699 = vsel %vm676, %v563, 0
      %v702 = vsel %vm676, %v564, 0
      %v705 = vsel %vm676, %v565, 0
      %v708 = vsel %vm676, %v566, 0
      %v711 = vsel %vm676, %v567, 0
      %v714 = vsel %vm676, %v568, 0
      %v717 = vsel %vm676, %v569, 0
      %v720 = vsel %vm676, %v570, 0
      %v723 = vsel %vm676, %v571, 0
      %v726 = vsel %vm676, %v572, 0
      %v729 = vsel %vm676, %v573, 0
      %v732 = vsel %vm676, %v574, 0
      %v735 = vsel %vm676, %v575, 0
      %v738 = vsel %vm676, %v576, 0
      %v741 = vsel %vm676, %v577, 0
      %v744 = vsel %vm676, %v578, 0
      %v747 = vsel %vm676, %v579, 0
      %v750 = vsel %vm676, %v580, 0
      %v753 = vsel %vm676, %v581, 0
      %v756 = vsel %vm676, %v582, 0
      %v759 = vsel %vm676, %v583, 0
      %v762 = vsel %vm676, %v584, 0
      %v765 = vsel %vm676, %v585, 0
      %v768 = vsel %vm676, %v586, 0
      %v771 = vsel %vm676, %v587, 0
      %v774 = vsel %vm676, %v588, 0
      %v777 = vsel %vm676, %v589, 0
      %v780 = vsel %vm676, %v590, 0
      %v783 = vsel %vm676, %v591, 0
      %v786 = vsel %vm676, %v592, 0
      %v789 = vsel %vm676, %v593, 0
      %v792 = vsel %vm676, %v594, 0
      %v795 = vsel %vm676, %v595, 0
      %v798 = vsel %vm676, %v596, 0
      %v801 = vsel %vm676, %v597, 0
      %v804 = vsel %vm676, %v598, 0
      %v807 = vsel %vm676, %v599, 0
      %v810 = vsel %vm676, %v600, 0
      %v813 = vsel %vm676, %v601, 0
      %v816 = vsel %vm676, %v602, 0
      %v819 = vsel %vm676, %v603, 0
      %v822 = vsel %vm676, %v604, 0
      %v825 = vsel %vm676, %v605, 0
      %v828 = vsel %vm676, %v606, 0
      %v831 = vsel %vm676, %v607, 0
      %v834 = vsel %vm676, %v608, 0
      %v837 = vsel %vm676, %v609, 0
      %v840 = vsel %vm676, %v610, 0
      %v843 = vsel %vm676, %v611, 0
      %845 = vmatprep.subr.bf16.mxu0 0
      %846 = vmatpush1.bf16.msra.mxu0 0
      %847 = vmatprep.subr.bf16.mxu0 0
      %848 = vmatpush1.bf16.msra.mxu0 0
      %849 = vmatprep.subr.bf16.mxu0 0
      %850 = vmatpush1.bf16.msra.mxu0 0
      %851 = vmatprep.subr.bf16.mxu0 0
      %852 = vmatpush1.bf16.msra.mxu0 0
      %853 = vmatprep.subr.bf16.mxu0 %v662
      %854 = vmatpush1.bf16.msra.mxu0 %v661
      %855 = vmatprep.subr.bf16.mxu0 %v659
      %856 = vmatpush1.bf16.msra.mxu0 %v658
      %857 = vmatprep.subr.bf16.mxu0 %v656
      %858 = vmatpush1.bf16.msra.mxu0 %v655
      %859 = vmatprep.subr.bf16.mxu0 %v653
      %860 = vmatpush1.bf16.msra.mxu0 %v652
      %861 = vmatprep.subr.bf16.mxu0 0
      %862 = vmatpush2.bf16.msra.mxu0 0
      %863 = vmatprep.subr.bf16.mxu0 0
      %864 = vmatpush2.bf16.msra.mxu0 0
      %865 = vmatprep.subr.bf16.mxu0 0
      %866 = vmatpush2.bf16.msra.mxu0 0
      %867 = vmatprep.subr.bf16.mxu0 0
      %868 = vmatpush2.bf16.msra.mxu0 0
      %869 = vmatprep.subr.bf16.mxu0 0
      %870 = vmatpush2.bf16.msra.mxu0 0
      %871 = vmatprep.subr.bf16.mxu0 0
      %872 = vmatpush2.bf16.msra.mxu0 0
      %873 = vmatprep.subr.bf16.mxu0 0
      %874 = vmatpush2.bf16.msra.mxu0 0
      %875 = vmatprep.subr.bf16.mxu0 0
      %876 = vmatpush2.bf16.msra.mxu0 0
      %877 = vmatprep.mubr.bf16.mxu0 0
      %878 = vmatmul.mubr.bf16.gmra.mxu0 %v678
      %v879 = vpop.f32.mrf.mxu0
      %v880 = vadd.f32 0.0, %v879
      %v881 = vpop.f32.mrf.mxu0
      %v882 = vadd.f32 0.0, %v881
      %v883 = vpop.f32.mrf.mxu0
      %v884 = vadd.f32 0.0, %v883
      %v885 = vpop.f32.mrf.mxu0
      %v886 = vadd.f32 0.0, %v885
      %887 = vmatprep.mubr.bf16.mxu0 0
      %888 = vmatmul.mubr.bf16.gmra.mxu0 %v681
      %v889 = vpop.f32.mrf.mxu0
      %v890 = vadd.f32 0.0, %v889
      %v891 = vpop.f32.mrf.mxu0
      %v892 = vadd.f32 0.0, %v891
      %v893 = vpop.f32.mrf.mxu0
      %v894 = vadd.f32 0.0, %v893
      %v895 = vpop.f32.mrf.mxu0
      %v896 = vadd.f32 0.0, %v895
      %897 = vmatprep.mubr.bf16.mxu0 0
      %898 = vmatmul.mubr.bf16.gmra.mxu0 %v684
      %v899 = vpop.f32.mrf.mxu0
      %v900 = vadd.f32 0.0, %v899
      %v901 = vpop.f32.mrf.mxu0
      %v902 = vadd.f32 0.0, %v901
      %v903 = vpop.f32.mrf.mxu0
      %v904 = vadd.f32 0.0, %v903
      %v905 = vpop.f32.mrf.mxu0
      %v906 = vadd.f32 0.0, %v905
      %907 = vmatprep.mubr.bf16.mxu0 0
      %908 = vmatmul.mubr.bf16.gmra.mxu0 %v687
      %v909 = vpop.f32.mrf.mxu0
      %v910 = vadd.f32 0.0, %v909
      %v911 = vpop.f32.mrf.mxu0
      %v912 = vadd.f32 0.0, %v911
      %v913 = vpop.f32.mrf.mxu0
      %v914 = vadd.f32 0.0, %v913
      %v915 = vpop.f32.mrf.mxu0
      %v916 = vadd.f32 0.0, %v915
      %917 = vmatprep.mubr.bf16.mxu0 0
      %918 = vmatmul.mubr.bf16.gmra.mxu0 %v690
      %v919 = vpop.f32.mrf.mxu0
      %v920 = vadd.f32 0.0, %v919
      %v921 = vpop.f32.mrf.mxu0
      %v922 = vadd.f32 0.0, %v921
      %v923 = vpop.f32.mrf.mxu0
      %v924 = vadd.f32 0.0, %v923
      %v925 = vpop.f32.mrf.mxu0
      %v926 = vadd.f32 0.0, %v925
      %927 = vmatprep.mubr.bf16.mxu0 0
      %928 = vmatmul.mubr.bf16.gmra.mxu0 %v693
      %v929 = vpop.f32.mrf.mxu0
      %v930 = vadd.f32 0.0, %v929
      %v931 = vpop.f32.mrf.mxu0
      %v932 = vadd.f32 0.0, %v931
      %v933 = vpop.f32.mrf.mxu0
      %v934 = vadd.f32 0.0, %v933
      %v935 = vpop.f32.mrf.mxu0
      %v936 = vadd.f32 0.0, %v935
      %937 = vmatprep.mubr.bf16.mxu0 0
      %938 = vmatmul.mubr.bf16.gmra.mxu0 %v696
      %v939 = vpop.f32.mrf.mxu0
      %v940 = vadd.f32 0.0, %v939
      %v941 = vpop.f32.mrf.mxu0
      %v942 = vadd.f32 0.0, %v941
      %v943 = vpop.f32.mrf.mxu0
      %v944 = vadd.f32 0.0, %v943
      %v945 = vpop.f32.mrf.mxu0
      %v946 = vadd.f32 0.0, %v945
      %947 = vmatprep.mubr.bf16.mxu0 0
      %948 = vmatmul.mubr.bf16.gmra.mxu0 %v699
      %v949 = vpop.f32.mrf.mxu0
      %v950 = vadd.f32 0.0, %v949
      %v951 = vpop.f32.mrf.mxu0
      %v952 = vadd.f32 0.0, %v951
      %v953 = vpop.f32.mrf.mxu0
      %v954 = vadd.f32 0.0, %v953
      %v955 = vpop.f32.mrf.mxu0
      %v956 = vadd.f32 0.0, %v955
      %957 = vmatprep.mubr.bf16.mxu0 0
      %958 = vmatmul.mubr.bf16.gmra.mxu0 %v702
      %v959 = vpop.f32.mrf.mxu0
      %v960 = vadd.f32 0.0, %v959
      %v961 = vpop.f32.mrf.mxu0
      %v962 = vadd.f32 0.0, %v961
      %v963 = vpop.f32.mrf.mxu0
      %v964 = vadd.f32 0.0, %v963
      %v965 = vpop.f32.mrf.mxu0
      %v966 = vadd.f32 0.0, %v965
      %967 = vmatprep.mubr.bf16.mxu0 0
      %968 = vmatmul.mubr.bf16.gmra.mxu0 %v705
      %v969 = vpop.f32.mrf.mxu0
      %v970 = vadd.f32 0.0, %v969
      %v971 = vpop.f32.mrf.mxu0
      %v972 = vadd.f32 0.0, %v971
      %v973 = vpop.f32.mrf.mxu0
      %v974 = vadd.f32 0.0, %v973
      %v975 = vpop.f32.mrf.mxu0
      %v976 = vadd.f32 0.0, %v975
      %977 = vmatprep.mubr.bf16.mxu0 0
      %978 = vmatmul.mubr.bf16.gmra.mxu0 %v708
      %v979 = vpop.f32.mrf.mxu0
      %v980 = vadd.f32 0.0, %v979
      %v981 = vpop.f32.mrf.mxu0
      %v982 = vadd.f32 0.0, %v981
      %v983 = vpop.f32.mrf.mxu0
      %v984 = vadd.f32 0.0, %v983
      %v985 = vpop.f32.mrf.mxu0
      %v986 = vadd.f32 0.0, %v985
      %987 = vmatprep.mubr.bf16.mxu0 0
      %988 = vmatmul.mubr.bf16.gmra.mxu0 %v711
      %v989 = vpop.f32.mrf.mxu0
      %v990 = vadd.f32 0.0, %v989
      %v991 = vpop.f32.mrf.mxu0
      %v992 = vadd.f32 0.0, %v991
      %v993 = vpop.f32.mrf.mxu0
      %v994 = vadd.f32 0.0, %v993
      %v995 = vpop.f32.mrf.mxu0
      %v996 = vadd.f32 0.0, %v995
      %997 = vmatprep.mubr.bf16.mxu0 0
      %998 = vmatmul.mubr.bf16.gmra.mxu0 %v714
      %v999 = vpop.f32.mrf.mxu0
      %v1000 = vadd.f32 0.0, %v999
      %v1001 = vpop.f32.mrf.mxu0
      %v1002 = vadd.f32 0.0, %v1001
      %v1003 = vpop.f32.mrf.mxu0
      %v1004 = vadd.f32 0.0, %v1003
      %v1005 = vpop.f32.mrf.mxu0
      %v1006 = vadd.f32 0.0, %v1005
      %1007 = vmatprep.mubr.bf16.mxu0 0
      %1008 = vmatmul.mubr.bf16.gmra.mxu0 %v717
      %v1009 = vpop.f32.mrf.mxu0
      %v1010 = vadd.f32 0.0, %v1009
      %v1011 = vpop.f32.mrf.mxu0
      %v1012 = vadd.f32 0.0, %v1011
      %v1013 = vpop.f32.mrf.mxu0
      %v1014 = vadd.f32 0.0, %v1013
      %v1015 = vpop.f32.mrf.mxu0
      %v1016 = vadd.f32 0.0, %v1015
      %1017 = vmatprep.mubr.bf16.mxu0 0
      %1018 = vmatmul.mubr.bf16.gmra.mxu0 %v720
      %v1019 = vpop.f32.mrf.mxu0
      %v1020 = vadd.f32 0.0, %v1019
      %v1021 = vpop.f32.mrf.mxu0
      %v1022 = vadd.f32 0.0, %v1021
      %v1023 = vpop.f32.mrf.mxu0
      %v1024 = vadd.f32 0.0, %v1023
      %v1025 = vpop.f32.mrf.mxu0
      %v1026 = vadd.f32 0.0, %v1025
      %1027 = vmatprep.mubr.bf16.mxu0 0
      %1028 = vmatmul.mubr.bf16.gmra.mxu0 %v723
      %v1029 = vpop.f32.mrf.mxu0
      %v1030 = vadd.f32 0.0, %v1029
      %v1031 = vpop.f32.mrf.mxu0
      %v1032 = vadd.f32 0.0, %v1031
      %v1033 = vpop.f32.mrf.mxu0
      %v1034 = vadd.f32 0.0, %v1033
      %v1035 = vpop.f32.mrf.mxu0
      %v1036 = vadd.f32 0.0, %v1035
      %1037 = vmatprep.mubr.bf16.mxu0 0
      %1038 = vmatmul.mubr.bf16.gmra.mxu0 %v726
      %v1039 = vpop.f32.mrf.mxu0
      %v1040 = vadd.f32 0.0, %v1039
      %v1041 = vpop.f32.mrf.mxu0
      %v1042 = vadd.f32 0.0, %v1041
      %v1043 = vpop.f32.mrf.mxu0
      %v1044 = vadd.f32 0.0, %v1043
      %v1045 = vpop.f32.mrf.mxu0
      %v1046 = vadd.f32 0.0, %v1045
      %1047 = vmatprep.mubr.bf16.mxu0 0
      %1048 = vmatmul.mubr.bf16.gmra.mxu0 %v729
      %v1049 = vpop.f32.mrf.mxu0
      %v1050 = vadd.f32 0.0, %v1049
      %v1051 = vpop.f32.mrf.mxu0
      %v1052 = vadd.f32 0.0, %v1051
      %v1053 = vpop.f32.mrf.mxu0
      %v1054 = vadd.f32 0.0, %v1053
      %v1055 = vpop.f32.mrf.mxu0
      %v1056 = vadd.f32 0.0, %v1055
      %1057 = vmatprep.mubr.bf16.mxu0 0
      %1058 = vmatmul.mubr.bf16.gmra.mxu0 %v732
      %v1059 = vpop.f32.mrf.mxu0
      %v1060 = vadd.f32 0.0, %v1059
      %v1061 = vpop.f32.mrf.mxu0
      %v1062 = vadd.f32 0.0, %v1061
      %v1063 = vpop.f32.mrf.mxu0
      %v1064 = vadd.f32 0.0, %v1063
      %v1065 = vpop.f32.mrf.mxu0
      %v1066 = vadd.f32 0.0, %v1065
      %1067 = vmatprep.mubr.bf16.mxu0 0
      %1068 = vmatmul.mubr.bf16.gmra.mxu0 %v735
      %v1069 = vpop.f32.mrf.mxu0
      %v1070 = vadd.f32 0.0, %v1069
      %v1071 = vpop.f32.mrf.mxu0
      %v1072 = vadd.f32 0.0, %v1071
      %v1073 = vpop.f32.mrf.mxu0
      %v1074 = vadd.f32 0.0, %v1073
      %v1075 = vpop.f32.mrf.mxu0
      %v1076 = vadd.f32 0.0, %v1075
      %1077 = vmatprep.mubr.bf16.mxu0 0
      %1078 = vmatmul.mubr.bf16.gmra.mxu0 %v738
      %v1079 = vpop.f32.mrf.mxu0
      %v1080 = vadd.f32 0.0, %v1079
      %v1081 = vpop.f32.mrf.mxu0
      %v1082 = vadd.f32 0.0, %v1081
      %v1083 = vpop.f32.mrf.mxu0
      %v1084 = vadd.f32 0.0, %v1083
      %v1085 = vpop.f32.mrf.mxu0
      %v1086 = vadd.f32 0.0, %v1085
      %1087 = vmatprep.mubr.bf16.mxu0 0
      %1088 = vmatmul.mubr.bf16.gmra.mxu0 %v741
      %v1089 = vpop.f32.mrf.mxu0
      %v1090 = vadd.f32 0.0, %v1089
      %v1091 = vpop.f32.mrf.mxu0
      %v1092 = vadd.f32 0.0, %v1091
      %v1093 = vpop.f32.mrf.mxu0
      %v1094 = vadd.f32 0.0, %v1093
      %v1095 = vpop.f32.mrf.mxu0
      %v1096 = vadd.f32 0.0, %v1095
      %1097 = vmatprep.mubr.bf16.mxu0 0
      %1098 = vmatmul.mubr.bf16.gmra.mxu0 %v744
      %v1099 = vpop.f32.mrf.mxu0
      %v1100 = vadd.f32 0.0, %v1099
      %v1101 = vpop.f32.mrf.mxu0
      %v1102 = vadd.f32 0.0, %v1101
      %v1103 = vpop.f32.mrf.mxu0
      %v1104 = vadd.f32 0.0, %v1103
      %v1105 = vpop.f32.mrf.mxu0
      %v1106 = vadd.f32 0.0, %v1105
      %1107 = vmatprep.mubr.bf16.mxu0 0
      %1108 = vmatmul.mubr.bf16.gmra.mxu0 %v747
      %v1109 = vpop.f32.mrf.mxu0
      %v1110 = vadd.f32 0.0, %v1109
      %v1111 = vpop.f32.mrf.mxu0
      %v1112 = vadd.f32 0.0, %v1111
      %v1113 = vpop.f32.mrf.mxu0
      %v1114 = vadd.f32 0.0, %v1113
      %v1115 = vpop.f32.mrf.mxu0
      %v1116 = vadd.f32 0.0, %v1115
      %1117 = vmatprep.mubr.bf16.mxu0 0
      %1118 = vmatmul.mubr.bf16.gmra.mxu0 %v750
      %v1119 = vpop.f32.mrf.mxu0
      %v1120 = vadd.f32 0.0, %v1119
      %v1121 = vpop.f32.mrf.mxu0
      %v1122 = vadd.f32 0.0, %v1121
      %v1123 = vpop.f32.mrf.mxu0
      %v1124 = vadd.f32 0.0, %v1123
      %v1125 = vpop.f32.mrf.mxu0
      %v1126 = vadd.f32 0.0, %v1125
      %1127 = vmatprep.mubr.bf16.mxu0 0
      %1128 = vmatmul.mubr.bf16.gmra.mxu0 %v753
      %v1129 = vpop.f32.mrf.mxu0
      %v1130 = vadd.f32 0.0, %v1129
      %v1131 = vpop.f32.mrf.mxu0
      %v1132 = vadd.f32 0.0, %v1131
      %v1133 = vpop.f32.mrf.mxu0
      %v1134 = vadd.f32 0.0, %v1133
      %v1135 = vpop.f32.mrf.mxu0
      %v1136 = vadd.f32 0.0, %v1135
      %1137 = vmatprep.mubr.bf16.mxu0 0
      %1138 = vmatmul.mubr.bf16.gmra.mxu0 %v756
      %v1139 = vpop.f32.mrf.mxu0
      %v1140 = vadd.f32 0.0, %v1139
      %v1141 = vpop.f32.mrf.mxu0
      %v1142 = vadd.f32 0.0, %v1141
      %v1143 = vpop.f32.mrf.mxu0
      %v1144 = vadd.f32 0.0, %v1143
      %v1145 = vpop.f32.mrf.mxu0
      %v1146 = vadd.f32 0.0, %v1145
      %1147 = vmatprep.mubr.bf16.mxu0 0
      %1148 = vmatmul.mubr.bf16.gmra.mxu0 %v759
      %v1149 = vpop.f32.mrf.mxu0
      %v1150 = vadd.f32 0.0, %v1149
      %v1151 = vpop.f32.mrf.mxu0
      %v1152 = vadd.f32 0.0, %v1151
      %v1153 = vpop.f32.mrf.mxu0
      %v1154 = vadd.f32 0.0, %v1153
      %v1155 = vpop.f32.mrf.mxu0
      %v1156 = vadd.f32 0.0, %v1155
      %1157 = vmatprep.mubr.bf16.mxu0 0
      %1158 = vmatmul.mubr.bf16.gmra.mxu0 %v762
      %v1159 = vpop.f32.mrf.mxu0
      %v1160 = vadd.f32 0.0, %v1159
      %v1161 = vpop.f32.mrf.mxu0
      %v1162 = vadd.f32 0.0, %v1161
      %v1163 = vpop.f32.mrf.mxu0
      %v1164 = vadd.f32 0.0, %v1163
      %v1165 = vpop.f32.mrf.mxu0
      %v1166 = vadd.f32 0.0, %v1165
      %1167 = vmatprep.mubr.bf16.mxu0 0
      %1168 = vmatmul.mubr.bf16.gmra.mxu0 %v765
      %v1169 = vpop.f32.mrf.mxu0
      %v1170 = vadd.f32 0.0, %v1169
      %v1171 = vpop.f32.mrf.mxu0
      %v1172 = vadd.f32 0.0, %v1171
      %v1173 = vpop.f32.mrf.mxu0
      %v1174 = vadd.f32 0.0, %v1173
      %v1175 = vpop.f32.mrf.mxu0
      %v1176 = vadd.f32 0.0, %v1175
      %1177 = vmatprep.mubr.bf16.mxu0 0
      %1178 = vmatmul.mubr.bf16.gmra.mxu0 %v768
      %v1179 = vpop.f32.mrf.mxu0
      %v1180 = vadd.f32 0.0, %v1179
      %v1181 = vpop.f32.mrf.mxu0
      %v1182 = vadd.f32 0.0, %v1181
      %v1183 = vpop.f32.mrf.mxu0
      %v1184 = vadd.f32 0.0, %v1183
      %v1185 = vpop.f32.mrf.mxu0
      %v1186 = vadd.f32 0.0, %v1185
      %1187 = vmatprep.mubr.bf16.mxu0 0
      %1188 = vmatmul.mubr.bf16.gmra.mxu0 %v771
      %v1189 = vpop.f32.mrf.mxu0
      %v1190 = vadd.f32 0.0, %v1189
      %v1191 = vpop.f32.mrf.mxu0
      %v1192 = vadd.f32 0.0, %v1191
      %v1193 = vpop.f32.mrf.mxu0
      %v1194 = vadd.f32 0.0, %v1193
      %v1195 = vpop.f32.mrf.mxu0
      %v1196 = vadd.f32 0.0, %v1195
      %1197 = vmatprep.mubr.bf16.mxu0 0
      %1198 = vmatmul.mubr.bf16.gmra.mxu0 %v774
      %v1199 = vpop.f32.mrf.mxu0
      %v1200 = vadd.f32 0.0, %v1199
      %v1201 = vpop.f32.mrf.mxu0
      %v1202 = vadd.f32 0.0, %v1201
      %v1203 = vpop.f32.mrf.mxu0
      %v1204 = vadd.f32 0.0, %v1203
      %v1205 = vpop.f32.mrf.mxu0
      %v1206 = vadd.f32 0.0, %v1205
      %1207 = vmatprep.mubr.bf16.mxu0 0
      %1208 = vmatmul.mubr.bf16.gmra.mxu0 %v777
      %v1209 = vpop.f32.mrf.mxu0
      %v1210 = vadd.f32 0.0, %v1209
      %v1211 = vpop.f32.mrf.mxu0
      %v1212 = vadd.f32 0.0, %v1211
      %v1213 = vpop.f32.mrf.mxu0
      %v1214 = vadd.f32 0.0, %v1213
      %v1215 = vpop.f32.mrf.mxu0
      %v1216 = vadd.f32 0.0, %v1215
      %1217 = vmatprep.mubr.bf16.mxu0 0
      %1218 = vmatmul.mubr.bf16.gmra.mxu0 %v780
      %v1219 = vpop.f32.mrf.mxu0
      %v1220 = vadd.f32 0.0, %v1219
      %v1221 = vpop.f32.mrf.mxu0
      %v1222 = vadd.f32 0.0, %v1221
      %v1223 = vpop.f32.mrf.mxu0
      %v1224 = vadd.f32 0.0, %v1223
      %v1225 = vpop.f32.mrf.mxu0
      %v1226 = vadd.f32 0.0, %v1225
      %1227 = vmatprep.mubr.bf16.mxu0 0
      %1228 = vmatmul.mubr.bf16.gmra.mxu0 %v783
      %v1229 = vpop.f32.mrf.mxu0
      %v1230 = vadd.f32 0.0, %v1229
      %v1231 = vpop.f32.mrf.mxu0
      %v1232 = vadd.f32 0.0, %v1231
      %v1233 = vpop.f32.mrf.mxu0
      %v1234 = vadd.f32 0.0, %v1233
      %v1235 = vpop.f32.mrf.mxu0
      %v1236 = vadd.f32 0.0, %v1235
      %1237 = vmatprep.mubr.bf16.mxu0 0
      %1238 = vmatmul.mubr.bf16.gmra.mxu0 %v786
      %v1239 = vpop.f32.mrf.mxu0
      %v1240 = vadd.f32 0.0, %v1239
      %v1241 = vpop.f32.mrf.mxu0
      %v1242 = vadd.f32 0.0, %v1241
      %v1243 = vpop.f32.mrf.mxu0
      %v1244 = vadd.f32 0.0, %v1243
      %v1245 = vpop.f32.mrf.mxu0
      %v1246 = vadd.f32 0.0, %v1245
      %1247 = vmatprep.mubr.bf16.mxu0 0
      %1248 = vmatmul.mubr.bf16.gmra.mxu0 %v789
      %v1249 = vpop.f32.mrf.mxu0
      %v1250 = vadd.f32 0.0, %v1249
      %v1251 = vpop.f32.mrf.mxu0
      %v1252 = vadd.f32 0.0, %v1251
      %v1253 = vpop.f32.mrf.mxu0
      %v1254 = vadd.f32 0.0, %v1253
      %v1255 = vpop.f32.mrf.mxu0
      %v1256 = vadd.f32 0.0, %v1255
      %1257 = vmatprep.mubr.bf16.mxu0 0
      %1258 = vmatmul.mubr.bf16.gmra.mxu0 %v792
      %v1259 = vpop.f32.mrf.mxu0
      %v1260 = vadd.f32 0.0, %v1259
      %v1261 = vpop.f32.mrf.mxu0
      %v1262 = vadd.f32 0.0, %v1261
      %v1263 = vpop.f32.mrf.mxu0
      %v1264 = vadd.f32 0.0, %v1263
      %v1265 = vpop.f32.mrf.mxu0
      %v1266 = vadd.f32 0.0, %v1265
      %1267 = vmatprep.mubr.bf16.mxu0 0
      %1268 = vmatmul.mubr.bf16.gmra.mxu0 %v795
      %v1269 = vpop.f32.mrf.mxu0
      %v1270 = vadd.f32 0.0, %v1269
      %v1271 = vpop.f32.mrf.mxu0
      %v1272 = vadd.f32 0.0, %v1271
      %v1273 = vpop.f32.mrf.mxu0
      %v1274 = vadd.f32 0.0, %v1273
      %v1275 = vpop.f32.mrf.mxu0
      %v1276 = vadd.f32 0.0, %v1275
      %1277 = vmatprep.mubr.bf16.mxu0 0
      %1278 = vmatmul.mubr.bf16.gmra.mxu0 %v798
      %v1279 = vpop.f32.mrf.mxu0
      %v1280 = vadd.f32 0.0, %v1279
      %v1281 = vpop.f32.mrf.mxu0
      %v1282 = vadd.f32 0.0, %v1281
      %v1283 = vpop.f32.mrf.mxu0
      %v1284 = vadd.f32 0.0, %v1283
      %v1285 = vpop.f32.mrf.mxu0
      %v1286 = vadd.f32 0.0, %v1285
      %1287 = vmatprep.mubr.bf16.mxu0 0
      %1288 = vmatmul.mubr.bf16.gmra.mxu0 %v801
      %v1289 = vpop.f32.mrf.mxu0
      %v1290 = vadd.f32 0.0, %v1289
      %v1291 = vpop.f32.mrf.mxu0
      %v1292 = vadd.f32 0.0, %v1291
      %v1293 = vpop.f32.mrf.mxu0
      %v1294 = vadd.f32 0.0, %v1293
      %v1295 = vpop.f32.mrf.mxu0
      %v1296 = vadd.f32 0.0, %v1295
      %1297 = vmatprep.mubr.bf16.mxu0 0
      %1298 = vmatmul.mubr.bf16.gmra.mxu0 %v804
      %v1299 = vpop.f32.mrf.mxu0
      %v1300 = vadd.f32 0.0, %v1299
      %v1301 = vpop.f32.mrf.mxu0
      %v1302 = vadd.f32 0.0, %v1301
      %v1303 = vpop.f32.mrf.mxu0
      %v1304 = vadd.f32 0.0, %v1303
      %v1305 = vpop.f32.mrf.mxu0
      %v1306 = vadd.f32 0.0, %v1305
      %1307 = vmatprep.mubr.bf16.mxu0 0
      %1308 = vmatmul.mubr.bf16.gmra.mxu0 %v807
      %v1309 = vpop.f32.mrf.mxu0
      %v1310 = vadd.f32 0.0, %v1309
      %v1311 = vpop.f32.mrf.mxu0
      %v1312 = vadd.f32 0.0, %v1311
      %v1313 = vpop.f32.mrf.mxu0
      %v1314 = vadd.f32 0.0, %v1313
      %v1315 = vpop.f32.mrf.mxu0
      %v1316 = vadd.f32 0.0, %v1315
      %1317 = vmatprep.mubr.bf16.mxu0 0
      %1318 = vmatmul.mubr.bf16.gmra.mxu0 %v810
      %v1319 = vpop.f32.mrf.mxu0
      %v1320 = vadd.f32 0.0, %v1319
      %v1321 = vpop.f32.mrf.mxu0
      %v1322 = vadd.f32 0.0, %v1321
      %v1323 = vpop.f32.mrf.mxu0
      %v1324 = vadd.f32 0.0, %v1323
      %v1325 = vpop.f32.mrf.mxu0
      %v1326 = vadd.f32 0.0, %v1325
      %1327 = vmatprep.mubr.bf16.mxu0 0
      %1328 = vmatmul.mubr.bf16.gmra.mxu0 %v813
      %v1329 = vpop.f32.mrf.mxu0
      %v1330 = vadd.f32 0.0, %v1329
      %v1331 = vpop.f32.mrf.mxu0
      %v1332 = vadd.f32 0.0, %v1331
      %v1333 = vpop.f32.mrf.mxu0
      %v1334 = vadd.f32 0.0, %v1333
      %v1335 = vpop.f32.mrf.mxu0
      %v1336 = vadd.f32 0.0, %v1335
      %1337 = vmatprep.mubr.bf16.mxu0 0
      %1338 = vmatmul.mubr.bf16.gmra.mxu0 %v816
      %v1339 = vpop.f32.mrf.mxu0
      %v1340 = vadd.f32 0.0, %v1339
      %v1341 = vpop.f32.mrf.mxu0
      %v1342 = vadd.f32 0.0, %v1341
      %v1343 = vpop.f32.mrf.mxu0
      %v1344 = vadd.f32 0.0, %v1343
      %v1345 = vpop.f32.mrf.mxu0
      %v1346 = vadd.f32 0.0, %v1345
      %1347 = vmatprep.mubr.bf16.mxu0 0
      %1348 = vmatmul.mubr.bf16.gmra.mxu0 %v819
      %v1349 = vpop.f32.mrf.mxu0
      %v1350 = vadd.f32 0.0, %v1349
      %v1351 = vpop.f32.mrf.mxu0
      %v1352 = vadd.f32 0.0, %v1351
      %v1353 = vpop.f32.mrf.mxu0
      %v1354 = vadd.f32 0.0, %v1353
      %v1355 = vpop.f32.mrf.mxu0
      %v1356 = vadd.f32 0.0, %v1355
      %1357 = vmatprep.mubr.bf16.mxu0 0
      %1358 = vmatmul.mubr.bf16.gmra.mxu0 %v822
      %v1359 = vpop.f32.mrf.mxu0
      %v1360 = vadd.f32 0.0, %v1359
      %v1361 = vpop.f32.mrf.mxu0
      %v1362 = vadd.f32 0.0, %v1361
      %v1363 = vpop.f32.mrf.mxu0
      %v1364 = vadd.f32 0.0, %v1363
      %v1365 = vpop.f32.mrf.mxu0
      %v1366 = vadd.f32 0.0, %v1365
      %1367 = vmatprep.mubr.bf16.mxu0 0
      %1368 = vmatmul.mubr.bf16.gmra.mxu0 %v825
      %v1369 = vpop.f32.mrf.mxu0
      %v1370 = vadd.f32 0.0, %v1369
      %v1371 = vpop.f32.mrf.mxu0
      %v1372 = vadd.f32 0.0, %v1371
      %v1373 = vpop.f32.mrf.mxu0
      %v1374 = vadd.f32 0.0, %v1373
      %v1375 = vpop.f32.mrf.mxu0
      %v1376 = vadd.f32 0.0, %v1375
      %1377 = vmatprep.mubr.bf16.mxu0 0
      %1378 = vmatmul.mubr.bf16.gmra.mxu0 %v828
      %v1379 = vpop.f32.mrf.mxu0
      %v1380 = vadd.f32 0.0, %v1379
      %v1381 = vpop.f32.mrf.mxu0
      %v1382 = vadd.f32 0.0, %v1381
      %v1383 = vpop.f32.mrf.mxu0
      %v1384 = vadd.f32 0.0, %v1383
      %v1385 = vpop.f32.mrf.mxu0
      %v1386 = vadd.f32 0.0, %v1385
      %1387 = vmatprep.mubr.bf16.mxu0 0
      %1388 = vmatmul.mubr.bf16.gmra.mxu0 %v831
      %v1389 = vpop.f32.mrf.mxu0
      %v1390 = vadd.f32 0.0, %v1389
      %v1391 = vpop.f32.mrf.mxu0
      %v1392 = vadd.f32 0.0, %v1391
      %v1393 = vpop.f32.mrf.mxu0
      %v1394 = vadd.f32 0.0, %v1393
      %v1395 = vpop.f32.mrf.mxu0
      %v1396 = vadd.f32 0.0, %v1395
      %1397 = vmatprep.mubr.bf16.mxu0 0
      %1398 = vmatmul.mubr.bf16.gmra.mxu0 %v834
      %v1399 = vpop.f32.mrf.mxu0
      %v1400 = vadd.f32 0.0, %v1399
      %v1401 = vpop.f32.mrf.mxu0
      %v1402 = vadd.f32 0.0, %v1401
      %v1403 = vpop.f32.mrf.mxu0
      %v1404 = vadd.f32 0.0, %v1403
      %v1405 = vpop.f32.mrf.mxu0
      %v1406 = vadd.f32 0.0, %v1405
      %1407 = vmatprep.mubr.bf16.mxu0 0
      %1408 = vmatmul.mubr.bf16.gmra.mxu0 %v837
      %v1409 = vpop.f32.mrf.mxu0
      %v1410 = vadd.f32 0.0, %v1409
      %v1411 = vpop.f32.mrf.mxu0
      %v1412 = vadd.f32 0.0, %v1411
      %v1413 = vpop.f32.mrf.mxu0
      %v1414 = vadd.f32 0.0, %v1413
      %v1415 = vpop.f32.mrf.mxu0
      %v1416 = vadd.f32 0.0, %v1415
      %1417 = vmatprep.mubr.bf16.mxu0 0
      %1418 = vmatmul.mubr.bf16.gmra.mxu0 %v840
      %v1419 = vpop.f32.mrf.mxu0
      %v1420 = vadd.f32 0.0, %v1419
      %v1421 = vpop.f32.mrf.mxu0
      %v1422 = vadd.f32 0.0, %v1421
      %v1423 = vpop.f32.mrf.mxu0
      %v1424 = vadd.f32 0.0, %v1423
      %v1425 = vpop.f32.mrf.mxu0
      %v1426 = vadd.f32 0.0, %v1425
      %1427 = vmatprep.mubr.bf16.mxu0 0
      %1428 = vmatmul.mubr.bf16.gmra.mxu0 %v843
      %v1429 = vpop.f32.mrf.mxu0
      %v1430 = vadd.f32 0.0, %v1429
      %v1431 = vpop.f32.mrf.mxu0
      %v1432 = vadd.f32 0.0, %v1431
      %v1433 = vpop.f32.mrf.mxu0
      %v1434 = vadd.f32 0.0, %v1433
      %v1435 = vpop.f32.mrf.mxu0
      %v1436 = vadd.f32 0.0, %v1435
      %1437 = vdwg.mxu0
      %1438 = vmatprep.subr.bf16.mxu0 0
      %1439 = vmatpush1.bf16.msra.mxu0 0
      %1440 = vmatprep.subr.bf16.mxu0 0
      %1441 = vmatpush1.bf16.msra.mxu0 0
      %1442 = vmatprep.subr.bf16.mxu0 0
      %1443 = vmatpush1.bf16.msra.mxu0 0
      %1444 = vmatprep.subr.bf16.mxu0 0
      %1445 = vmatpush1.bf16.msra.mxu0 0
      %1446 = vmatprep.subr.bf16.mxu0 0
      %1447 = vmatpush1.bf16.msra.mxu0 %v663
      %1448 = vmatprep.subr.bf16.mxu0 0
      %1449 = vmatpush1.bf16.msra.mxu0 %v660
      %1450 = vmatprep.subr.bf16.mxu0 0
      %1451 = vmatpush1.bf16.msra.mxu0 %v657
      %1452 = vmatprep.subr.bf16.mxu0 0
      %1453 = vmatpush1.bf16.msra.mxu0 %v654
      %1454 = vmatprep.subr.bf16.mxu0 0
      %1455 = vmatpush2.bf16.msra.mxu0 0
      %1456 = vmatprep.subr.bf16.mxu0 0
      %1457 = vmatpush2.bf16.msra.mxu0 0
      %1458 = vmatprep.subr.bf16.mxu0 0
      %1459 = vmatpush2.bf16.msra.mxu0 0
      %1460 = vmatprep.subr.bf16.mxu0 0
      %1461 = vmatpush2.bf16.msra.mxu0 0
      %1462 = vmatprep.subr.bf16.mxu0 0
      %1463 = vmatpush2.bf16.msra.mxu0 0
      %1464 = vmatprep.subr.bf16.mxu0 0
      %1465 = vmatpush2.bf16.msra.mxu0 0
      %1466 = vmatprep.subr.bf16.mxu0 0
      %1467 = vmatpush2.bf16.msra.mxu0 0
      %1468 = vmatprep.subr.bf16.mxu0 0
      %1469 = vmatpush2.bf16.msra.mxu0 0
      %1470 = vmatprep.mubr.bf16.mxu0 0
      %1471 = vmatmul.mubr.bf16.gmra.mxu0 %v678
      %v1472 = vpop.f32.mrf.mxu0
      %v1473 = vadd.f32 0.0, %v1472
      %v1474 = vpop.f32.mrf.mxu0
      %v1475 = vpop.f32.mrf.mxu0
      %v1476 = vadd.f32 0.0, %v1475
      %v1477 = vpop.f32.mrf.mxu0
      %1478 = vmatprep.mubr.bf16.mxu0 0
      %1479 = vmatmul.mubr.bf16.gmra.mxu0 %v681
      %v1480 = vpop.f32.mrf.mxu0
      %v1481 = vadd.f32 0.0, %v1480
      %v1482 = vpop.f32.mrf.mxu0
      %v1483 = vpop.f32.mrf.mxu0
      %v1484 = vadd.f32 0.0, %v1483
      %v1485 = vpop.f32.mrf.mxu0
      %1486 = vmatprep.mubr.bf16.mxu0 0
      %1487 = vmatmul.mubr.bf16.gmra.mxu0 %v684
      %v1488 = vpop.f32.mrf.mxu0
      %v1489 = vadd.f32 0.0, %v1488
      %v1490 = vpop.f32.mrf.mxu0
      %v1491 = vpop.f32.mrf.mxu0
      %v1492 = vadd.f32 0.0, %v1491
      %v1493 = vpop.f32.mrf.mxu0
      %1494 = vmatprep.mubr.bf16.mxu0 0
      %1495 = vmatmul.mubr.bf16.gmra.mxu0 %v687
      %v1496 = vpop.f32.mrf.mxu0
      %v1497 = vadd.f32 0.0, %v1496
      %v1498 = vpop.f32.mrf.mxu0
      %v1499 = vpop.f32.mrf.mxu0
      %v1500 = vadd.f32 0.0, %v1499
      %v1501 = vpop.f32.mrf.mxu0
      %1502 = vmatprep.mubr.bf16.mxu0 0
      %1503 = vmatmul.mubr.bf16.gmra.mxu0 %v690
      %v1504 = vpop.f32.mrf.mxu0
      %v1505 = vadd.f32 0.0, %v1504
      %v1506 = vpop.f32.mrf.mxu0
      %v1507 = vpop.f32.mrf.mxu0
      %v1508 = vadd.f32 0.0, %v1507
      %v1509 = vpop.f32.mrf.mxu0
      %1510 = vmatprep.mubr.bf16.mxu0 0
      %1511 = vmatmul.mubr.bf16.gmra.mxu0 %v693
      %v1512 = vpop.f32.mrf.mxu0
      %v1513 = vadd.f32 0.0, %v1512
      %v1514 = vpop.f32.mrf.mxu0
      %v1515 = vpop.f32.mrf.mxu0
      %v1516 = vadd.f32 0.0, %v1515
      %v1517 = vpop.f32.mrf.mxu0
      %1518 = vmatprep.mubr.bf16.mxu0 0
      %1519 = vmatmul.mubr.bf16.gmra.mxu0 %v696
      %v1520 = vpop.f32.mrf.mxu0
      %v1521 = vadd.f32 0.0, %v1520
      %v1522 = vpop.f32.mrf.mxu0
      %v1523 = vpop.f32.mrf.mxu0
      %v1524 = vadd.f32 0.0, %v1523
      %v1525 = vpop.f32.mrf.mxu0
      %1526 = vmatprep.mubr.bf16.mxu0 0
      %1527 = vmatmul.mubr.bf16.gmra.mxu0 %v699
      %v1528 = vpop.f32.mrf.mxu0
      %v1529 = vadd.f32 0.0, %v1528
      %v1530 = vpop.f32.mrf.mxu0
      %v1531 = vpop.f32.mrf.mxu0
      %v1532 = vadd.f32 0.0, %v1531
      %v1533 = vpop.f32.mrf.mxu0
      %1534 = vmatprep.mubr.bf16.mxu0 0
      %1535 = vmatmul.mubr.bf16.gmra.mxu0 %v702
      %v1536 = vpop.f32.mrf.mxu0
      %v1537 = vadd.f32 0.0, %v1536
      %v1538 = vpop.f32.mrf.mxu0
      %v1539 = vpop.f32.mrf.mxu0
      %v1540 = vadd.f32 0.0, %v1539
      %v1541 = vpop.f32.mrf.mxu0
      %1542 = vmatprep.mubr.bf16.mxu0 0
      %1543 = vmatmul.mubr.bf16.gmra.mxu0 %v705
      %v1544 = vpop.f32.mrf.mxu0
      %v1545 = vadd.f32 0.0, %v1544
      %v1546 = vpop.f32.mrf.mxu0
      %v1547 = vpop.f32.mrf.mxu0
      %v1548 = vadd.f32 0.0, %v1547
      %v1549 = vpop.f32.mrf.mxu0
      %1550 = vmatprep.mubr.bf16.mxu0 0
      %1551 = vmatmul.mubr.bf16.gmra.mxu0 %v708
      %v1552 = vpop.f32.mrf.mxu0
      %v1553 = vadd.f32 0.0, %v1552
      %v1554 = vpop.f32.mrf.mxu0
      %v1555 = vpop.f32.mrf.mxu0
      %v1556 = vadd.f32 0.0, %v1555
      %v1557 = vpop.f32.mrf.mxu0
      %1558 = vmatprep.mubr.bf16.mxu0 0
      %1559 = vmatmul.mubr.bf16.gmra.mxu0 %v711
      %v1560 = vpop.f32.mrf.mxu0
      %v1561 = vadd.f32 0.0, %v1560
      %v1562 = vpop.f32.mrf.mxu0
      %v1563 = vpop.f32.mrf.mxu0
      %v1564 = vadd.f32 0.0, %v1563
      %v1565 = vpop.f32.mrf.mxu0
      %1566 = vmatprep.mubr.bf16.mxu0 0
      %1567 = vmatmul.mubr.bf16.gmra.mxu0 %v714
      %v1568 = vpop.f32.mrf.mxu0
      %v1569 = vadd.f32 0.0, %v1568
      %v1570 = vpop.f32.mrf.mxu0
      %v1571 = vpop.f32.mrf.mxu0
      %v1572 = vadd.f32 0.0, %v1571
      %v1573 = vpop.f32.mrf.mxu0
      %1574 = vmatprep.mubr.bf16.mxu0 0
      %1575 = vmatmul.mubr.bf16.gmra.mxu0 %v717
      %v1576 = vpop.f32.mrf.mxu0
      %v1577 = vadd.f32 0.0, %v1576
      %v1578 = vpop.f32.mrf.mxu0
      %v1579 = vpop.f32.mrf.mxu0
      %v1580 = vadd.f32 0.0, %v1579
      %v1581 = vpop.f32.mrf.mxu0
      %1582 = vmatprep.mubr.bf16.mxu0 0
      %1583 = vmatmul.mubr.bf16.gmra.mxu0 %v720
      %v1584 = vpop.f32.mrf.mxu0
      %v1585 = vadd.f32 0.0, %v1584
      %v1586 = vpop.f32.mrf.mxu0
      %v1587 = vpop.f32.mrf.mxu0
      %v1588 = vadd.f32 0.0, %v1587
      %v1589 = vpop.f32.mrf.mxu0
      %1590 = vmatprep.mubr.bf16.mxu0 0
      %1591 = vmatmul.mubr.bf16.gmra.mxu0 %v723
      %v1592 = vpop.f32.mrf.mxu0
      %v1593 = vadd.f32 0.0, %v1592
      %v1594 = vpop.f32.mrf.mxu0
      %v1595 = vpop.f32.mrf.mxu0
      %v1596 = vadd.f32 0.0, %v1595
      %v1597 = vpop.f32.mrf.mxu0
      %1598 = vmatprep.mubr.bf16.mxu0 0
      %1599 = vmatmul.mubr.bf16.gmra.mxu0 %v726
      %v1600 = vpop.f32.mrf.mxu0
      %v1601 = vadd.f32 0.0, %v1600
      %v1602 = vpop.f32.mrf.mxu0
      %v1603 = vpop.f32.mrf.mxu0
      %v1604 = vadd.f32 0.0, %v1603
      %v1605 = vpop.f32.mrf.mxu0
      %1606 = vmatprep.mubr.bf16.mxu0 0
      %1607 = vmatmul.mubr.bf16.gmra.mxu0 %v729
      %v1608 = vpop.f32.mrf.mxu0
      %v1609 = vadd.f32 0.0, %v1608
      %v1610 = vpop.f32.mrf.mxu0
      %v1611 = vpop.f32.mrf.mxu0
      %v1612 = vadd.f32 0.0, %v1611
      %v1613 = vpop.f32.mrf.mxu0
      %1614 = vmatprep.mubr.bf16.mxu0 0
      %1615 = vmatmul.mubr.bf16.gmra.mxu0 %v732
      %v1616 = vpop.f32.mrf.mxu0
      %v1617 = vadd.f32 0.0, %v1616
      %v1618 = vpop.f32.mrf.mxu0
      %v1619 = vpop.f32.mrf.mxu0
      %v1620 = vadd.f32 0.0, %v1619
      %v1621 = vpop.f32.mrf.mxu0
      %1622 = vmatprep.mubr.bf16.mxu0 0
      %1623 = vmatmul.mubr.bf16.gmra.mxu0 %v735
      %v1624 = vpop.f32.mrf.mxu0
      %v1625 = vadd.f32 0.0, %v1624
      %v1626 = vpop.f32.mrf.mxu0
      %v1627 = vpop.f32.mrf.mxu0
      %v1628 = vadd.f32 0.0, %v1627
      %v1629 = vpop.f32.mrf.mxu0
      %1630 = vmatprep.mubr.bf16.mxu0 0
      %1631 = vmatmul.mubr.bf16.gmra.mxu0 %v738
      %v1632 = vpop.f32.mrf.mxu0
      %v1633 = vadd.f32 0.0, %v1632
      %v1634 = vpop.f32.mrf.mxu0
      %v1635 = vpop.f32.mrf.mxu0
      %v1636 = vadd.f32 0.0, %v1635
      %v1637 = vpop.f32.mrf.mxu0
      %1638 = vmatprep.mubr.bf16.mxu0 0
      %1639 = vmatmul.mubr.bf16.gmra.mxu0 %v741
      %v1640 = vpop.f32.mrf.mxu0
      %v1641 = vadd.f32 0.0, %v1640
      %v1642 = vpop.f32.mrf.mxu0
      %v1643 = vpop.f32.mrf.mxu0
      %v1644 = vadd.f32 0.0, %v1643
      %v1645 = vpop.f32.mrf.mxu0
      %1646 = vmatprep.mubr.bf16.mxu0 0
      %1647 = vmatmul.mubr.bf16.gmra.mxu0 %v744
      %v1648 = vpop.f32.mrf.mxu0
      %v1649 = vadd.f32 0.0, %v1648
      %v1650 = vpop.f32.mrf.mxu0
      %v1651 = vpop.f32.mrf.mxu0
      %v1652 = vadd.f32 0.0, %v1651
      %v1653 = vpop.f32.mrf.mxu0
      %1654 = vmatprep.mubr.bf16.mxu0 0
      %1655 = vmatmul.mubr.bf16.gmra.mxu0 %v747
      %v1656 = vpop.f32.mrf.mxu0
      %v1657 = vadd.f32 0.0, %v1656
      %v1658 = vpop.f32.mrf.mxu0
      %v1659 = vpop.f32.mrf.mxu0
      %v1660 = vadd.f32 0.0, %v1659
      %v1661 = vpop.f32.mrf.mxu0
      %1662 = vmatprep.mubr.bf16.mxu0 0
      %1663 = vmatmul.mubr.bf16.gmra.mxu0 %v750
      %v1664 = vpop.f32.mrf.mxu0
      %v1665 = vadd.f32 0.0, %v1664
      %v1666 = vpop.f32.mrf.mxu0
      %v1667 = vpop.f32.mrf.mxu0
      %v1668 = vadd.f32 0.0, %v1667
      %v1669 = vpop.f32.mrf.mxu0
      %1670 = vmatprep.mubr.bf16.mxu0 0
      %1671 = vmatmul.mubr.bf16.gmra.mxu0 %v753
      %v1672 = vpop.f32.mrf.mxu0
      %v1673 = vadd.f32 0.0, %v1672
      %v1674 = vpop.f32.mrf.mxu0
      %v1675 = vpop.f32.mrf.mxu0
      %v1676 = vadd.f32 0.0, %v1675
      %v1677 = vpop.f32.mrf.mxu0
      %1678 = vmatprep.mubr.bf16.mxu0 0
      %1679 = vmatmul.mubr.bf16.gmra.mxu0 %v756
      %v1680 = vpop.f32.mrf.mxu0
      %v1681 = vadd.f32 0.0, %v1680
      %v1682 = vpop.f32.mrf.mxu0
      %v1683 = vpop.f32.mrf.mxu0
      %v1684 = vadd.f32 0.0, %v1683
      %v1685 = vpop.f32.mrf.mxu0
      %1686 = vmatprep.mubr.bf16.mxu0 0
      %1687 = vmatmul.mubr.bf16.gmra.mxu0 %v759
      %v1688 = vpop.f32.mrf.mxu0
      %v1689 = vadd.f32 0.0, %v1688
      %v1690 = vpop.f32.mrf.mxu0
      %v1691 = vpop.f32.mrf.mxu0
      %v1692 = vadd.f32 0.0, %v1691
      %v1693 = vpop.f32.mrf.mxu0
      %1694 = vmatprep.mubr.bf16.mxu0 0
      %1695 = vmatmul.mubr.bf16.gmra.mxu0 %v762
      %v1696 = vpop.f32.mrf.mxu0
      %v1697 = vadd.f32 0.0, %v1696
      %v1698 = vpop.f32.mrf.mxu0
      %v1699 = vpop.f32.mrf.mxu0
      %v1700 = vadd.f32 0.0, %v1699
      %v1701 = vpop.f32.mrf.mxu0
      %1702 = vmatprep.mubr.bf16.mxu0 0
      %1703 = vmatmul.mubr.bf16.gmra.mxu0 %v765
      %v1704 = vpop.f32.mrf.mxu0
      %v1705 = vadd.f32 0.0, %v1704
      %v1706 = vpop.f32.mrf.mxu0
      %v1707 = vpop.f32.mrf.mxu0
      %v1708 = vadd.f32 0.0, %v1707
      %v1709 = vpop.f32.mrf.mxu0
      %1710 = vmatprep.mubr.bf16.mxu0 0
      %1711 = vmatmul.mubr.bf16.gmra.mxu0 %v768
      %v1712 = vpop.f32.mrf.mxu0
      %v1713 = vadd.f32 0.0, %v1712
      %v1714 = vpop.f32.mrf.mxu0
      %v1715 = vpop.f32.mrf.mxu0
      %v1716 = vadd.f32 0.0, %v1715
      %v1717 = vpop.f32.mrf.mxu0
      %1718 = vmatprep.mubr.bf16.mxu0 0
      %1719 = vmatmul.mubr.bf16.gmra.mxu0 %v771
      %v1720 = vpop.f32.mrf.mxu0
      %v1721 = vadd.f32 0.0, %v1720
      %v1722 = vpop.f32.mrf.mxu0
      %v1723 = vpop.f32.mrf.mxu0
      %v1724 = vadd.f32 0.0, %v1723
      %v1725 = vpop.f32.mrf.mxu0
      %1726 = vmatprep.mubr.bf16.mxu0 0
      %1727 = vmatmul.mubr.bf16.gmra.mxu0 %v774
      %v1728 = vpop.f32.mrf.mxu0
      %v1729 = vadd.f32 0.0, %v1728
      %v1730 = vpop.f32.mrf.mxu0
      %v1731 = vpop.f32.mrf.mxu0
      %v1732 = vadd.f32 0.0, %v1731
      %v1733 = vpop.f32.mrf.mxu0
      %1734 = vmatprep.mubr.bf16.mxu0 0
      %1735 = vmatmul.mubr.bf16.gmra.mxu0 %v777
      %v1736 = vpop.f32.mrf.mxu0
      %v1737 = vadd.f32 0.0, %v1736
      %v1738 = vpop.f32.mrf.mxu0
      %v1739 = vpop.f32.mrf.mxu0
      %v1740 = vadd.f32 0.0, %v1739
      %v1741 = vpop.f32.mrf.mxu0
      %1742 = vmatprep.mubr.bf16.mxu0 0
      %1743 = vmatmul.mubr.bf16.gmra.mxu0 %v780
      %v1744 = vpop.f32.mrf.mxu0
      %v1745 = vadd.f32 0.0, %v1744
      %v1746 = vpop.f32.mrf.mxu0
      %v1747 = vpop.f32.mrf.mxu0
      %v1748 = vadd.f32 0.0, %v1747
      %v1749 = vpop.f32.mrf.mxu0
      %1750 = vmatprep.mubr.bf16.mxu0 0
      %1751 = vmatmul.mubr.bf16.gmra.mxu0 %v783
      %v1752 = vpop.f32.mrf.mxu0
      %v1753 = vadd.f32 0.0, %v1752
      %v1754 = vpop.f32.mrf.mxu0
      %v1755 = vpop.f32.mrf.mxu0
      %v1756 = vadd.f32 0.0, %v1755
      %v1757 = vpop.f32.mrf.mxu0
      %1758 = vmatprep.mubr.bf16.mxu0 0
      %1759 = vmatmul.mubr.bf16.gmra.mxu0 %v786
      %v1760 = vpop.f32.mrf.mxu0
      %v1761 = vadd.f32 0.0, %v1760
      %v1762 = vpop.f32.mrf.mxu0
      %v1763 = vpop.f32.mrf.mxu0
      %v1764 = vadd.f32 0.0, %v1763
      %v1765 = vpop.f32.mrf.mxu0
      %1766 = vmatprep.mubr.bf16.mxu0 0
      %1767 = vmatmul.mubr.bf16.gmra.mxu0 %v789
      %v1768 = vpop.f32.mrf.mxu0
      %v1769 = vadd.f32 0.0, %v1768
      %v1770 = vpop.f32.mrf.mxu0
      %v1771 = vpop.f32.mrf.mxu0
      %v1772 = vadd.f32 0.0, %v1771
      %v1773 = vpop.f32.mrf.mxu0
      %1774 = vmatprep.mubr.bf16.mxu0 0
      %1775 = vmatmul.mubr.bf16.gmra.mxu0 %v792
      %v1776 = vpop.f32.mrf.mxu0
      %v1777 = vadd.f32 0.0, %v1776
      %v1778 = vpop.f32.mrf.mxu0
      %v1779 = vpop.f32.mrf.mxu0
      %v1780 = vadd.f32 0.0, %v1779
      %v1781 = vpop.f32.mrf.mxu0
      %1782 = vmatprep.mubr.bf16.mxu0 0
      %1783 = vmatmul.mubr.bf16.gmra.mxu0 %v795
      %v1784 = vpop.f32.mrf.mxu0
      %v1785 = vadd.f32 0.0, %v1784
      %v1786 = vpop.f32.mrf.mxu0
      %v1787 = vpop.f32.mrf.mxu0
      %v1788 = vadd.f32 0.0, %v1787
      %v1789 = vpop.f32.mrf.mxu0
      %1790 = vmatprep.mubr.bf16.mxu0 0
      %1791 = vmatmul.mubr.bf16.gmra.mxu0 %v798
      %v1792 = vpop.f32.mrf.mxu0
      %v1793 = vadd.f32 0.0, %v1792
      %v1794 = vpop.f32.mrf.mxu0
      %v1795 = vpop.f32.mrf.mxu0
      %v1796 = vadd.f32 0.0, %v1795
      %v1797 = vpop.f32.mrf.mxu0
      %1798 = vmatprep.mubr.bf16.mxu0 0
      %1799 = vmatmul.mubr.bf16.gmra.mxu0 %v801
      %v1800 = vpop.f32.mrf.mxu0
      %v1801 = vadd.f32 0.0, %v1800
      %v1802 = vpop.f32.mrf.mxu0
      %v1803 = vpop.f32.mrf.mxu0
      %v1804 = vadd.f32 0.0, %v1803
      %v1805 = vpop.f32.mrf.mxu0
      %1806 = vmatprep.mubr.bf16.mxu0 0
      %1807 = vmatmul.mubr.bf16.gmra.mxu0 %v804
      %v1808 = vpop.f32.mrf.mxu0
      %v1809 = vadd.f32 0.0, %v1808
      %v1810 = vpop.f32.mrf.mxu0
      %v1811 = vpop.f32.mrf.mxu0
      %v1812 = vadd.f32 0.0, %v1811
      %v1813 = vpop.f32.mrf.mxu0
      %1814 = vmatprep.mubr.bf16.mxu0 0
      %1815 = vmatmul.mubr.bf16.gmra.mxu0 %v807
      %v1816 = vpop.f32.mrf.mxu0
      %v1817 = vadd.f32 0.0, %v1816
      %v1818 = vpop.f32.mrf.mxu0
      %v1819 = vpop.f32.mrf.mxu0
      %v1820 = vadd.f32 0.0, %v1819
      %v1821 = vpop.f32.mrf.mxu0
      %1822 = vmatprep.mubr.bf16.mxu0 0
      %1823 = vmatmul.mubr.bf16.gmra.mxu0 %v810
      %v1824 = vpop.f32.mrf.mxu0
      %v1825 = vadd.f32 0.0, %v1824
      %v1826 = vpop.f32.mrf.mxu0
      %v1827 = vpop.f32.mrf.mxu0
      %v1828 = vadd.f32 0.0, %v1827
      %v1829 = vpop.f32.mrf.mxu0
      %1830 = vmatprep.mubr.bf16.mxu0 0
      %1831 = vmatmul.mubr.bf16.gmra.mxu0 %v813
      %v1832 = vpop.f32.mrf.mxu0
      %v1833 = vadd.f32 0.0, %v1832
      %v1834 = vpop.f32.mrf.mxu0
      %v1835 = vpop.f32.mrf.mxu0
      %v1836 = vadd.f32 0.0, %v1835
      %v1837 = vpop.f32.mrf.mxu0
      %1838 = vmatprep.mubr.bf16.mxu0 0
      %1839 = vmatmul.mubr.bf16.gmra.mxu0 %v816
      %v1840 = vpop.f32.mrf.mxu0
      %v1841 = vadd.f32 0.0, %v1840
      %v1842 = vpop.f32.mrf.mxu0
      %v1843 = vpop.f32.mrf.mxu0
      %v1844 = vadd.f32 0.0, %v1843
      %v1845 = vpop.f32.mrf.mxu0
      %1846 = vmatprep.mubr.bf16.mxu0 0
      %1847 = vmatmul.mubr.bf16.gmra.mxu0 %v819
      %v1848 = vpop.f32.mrf.mxu0
      %v1849 = vadd.f32 0.0, %v1848
      %v1850 = vpop.f32.mrf.mxu0
      %v1851 = vpop.f32.mrf.mxu0
      %v1852 = vadd.f32 0.0, %v1851
      %v1853 = vpop.f32.mrf.mxu0
      %1854 = vmatprep.mubr.bf16.mxu0 0
      %1855 = vmatmul.mubr.bf16.gmra.mxu0 %v822
      %v1856 = vpop.f32.mrf.mxu0
      %v1857 = vadd.f32 0.0, %v1856
      %v1858 = vpop.f32.mrf.mxu0
      %v1859 = vpop.f32.mrf.mxu0
      %v1860 = vadd.f32 0.0, %v1859
      %v1861 = vpop.f32.mrf.mxu0
      %1862 = vmatprep.mubr.bf16.mxu0 0
      %1863 = vmatmul.mubr.bf16.gmra.mxu0 %v825
      %v1864 = vpop.f32.mrf.mxu0
      %v1865 = vadd.f32 0.0, %v1864
      %v1866 = vpop.f32.mrf.mxu0
      %v1867 = vpop.f32.mrf.mxu0
      %v1868 = vadd.f32 0.0, %v1867
      %v1869 = vpop.f32.mrf.mxu0
      %1870 = vmatprep.mubr.bf16.mxu0 0
      %1871 = vmatmul.mubr.bf16.gmra.mxu0 %v828
      %v1872 = vpop.f32.mrf.mxu0
      %v1873 = vadd.f32 0.0, %v1872
      %v1874 = vpop.f32.mrf.mxu0
      %v1875 = vpop.f32.mrf.mxu0
      %v1876 = vadd.f32 0.0, %v1875
      %v1877 = vpop.f32.mrf.mxu0
      %1878 = vmatprep.mubr.bf16.mxu0 0
      %1879 = vmatmul.mubr.bf16.gmra.mxu0 %v831
      %v1880 = vpop.f32.mrf.mxu0
      %v1881 = vadd.f32 0.0, %v1880
      %v1882 = vpop.f32.mrf.mxu0
      %v1883 = vpop.f32.mrf.mxu0
      %v1884 = vadd.f32 0.0, %v1883
      %v1885 = vpop.f32.mrf.mxu0
      %1886 = vmatprep.mubr.bf16.mxu0 0
      %1887 = vmatmul.mubr.bf16.gmra.mxu0 %v834
      %v1888 = vpop.f32.mrf.mxu0
      %v1889 = vadd.f32 0.0, %v1888
      %v1890 = vpop.f32.mrf.mxu0
      %v1891 = vpop.f32.mrf.mxu0
      %v1892 = vadd.f32 0.0, %v1891
      %v1893 = vpop.f32.mrf.mxu0
      %1894 = vmatprep.mubr.bf16.mxu0 0
      %1895 = vmatmul.mubr.bf16.gmra.mxu0 %v837
      %v1896 = vpop.f32.mrf.mxu0
      %v1897 = vadd.f32 0.0, %v1896
      %v1898 = vpop.f32.mrf.mxu0
      %v1899 = vpop.f32.mrf.mxu0
      %v1900 = vadd.f32 0.0, %v1899
      %v1901 = vpop.f32.mrf.mxu0
      %1902 = vmatprep.mubr.bf16.mxu0 0
      %1903 = vmatmul.mubr.bf16.gmra.mxu0 %v840
      %v1904 = vpop.f32.mrf.mxu0
      %v1905 = vadd.f32 0.0, %v1904
      %v1906 = vpop.f32.mrf.mxu0
      %v1907 = vpop.f32.mrf.mxu0
      %v1908 = vadd.f32 0.0, %v1907
      %v1909 = vpop.f32.mrf.mxu0
      %1910 = vmatprep.mubr.bf16.mxu0 0
      %1911 = vmatmul.mubr.bf16.gmra.mxu0 %v843
      %v1912 = vpop.f32.mrf.mxu0
      %v1913 = vadd.f32 0.0, %v1912
      %v1914 = vpop.f32.mrf.mxu0
      %v1915 = vpop.f32.mrf.mxu0
      %v1916 = vadd.f32 0.0, %v1915
      %v1917 = vpop.f32.mrf.mxu0
      %1918 = vdwg.mxu0
      %v1919 = vld [vmem:[%s2] sm:$0x7]
      %v1921 = vlaneseq
      %v1922 = vshrl.u32 %v1921, 7
      %v1923 = vsub.s32 0, %v1922
      %v1924 = vrot.slane %v1919, %v1923
      %v1925 = vlaneseq
      %v1926 = vshrl.u32 %v1925, 7
      %v1927 = vsub.s32 1, %v1926
      %v1928 = vrot.slane %v1919, %v1927
      %v1929 = vlaneseq
      %v1930 = vshrl.u32 %v1929, 7
      %v1931 = vsub.s32 2, %v1930
      %v1932 = vrot.slane %v1919, %v1931
      %v1936 = vmul.f32 %v880, %v1924
      %v1937 = vmul.f32 %v882, %v1928
      %v1938 = vmul.f32 %v1473, %v1932
      %v1939 = vmul.f32 %v884, %v1924
      %v1940 = vmul.f32 %v886, %v1928
      %v1941 = vmul.f32 %v1476, %v1932
      %v1942 = vmul.f32 %v890, %v1924
      %v1943 = vmul.f32 %v892, %v1928
      %v1944 = vmul.f32 %v1481, %v1932
      %v1945 = vmul.f32 %v894, %v1924
      %v1946 = vmul.f32 %v896, %v1928
      %v1947 = vmul.f32 %v1484, %v1932
      %v1948 = vmul.f32 %v900, %v1924
      %v1949 = vmul.f32 %v902, %v1928
      %v1950 = vmul.f32 %v1489, %v1932
      %v1951 = vmul.f32 %v904, %v1924
      %v1952 = vmul.f32 %v906, %v1928
      %v1953 = vmul.f32 %v1492, %v1932
      %v1954 = vmul.f32 %v910, %v1924
      %v1955 = vmul.f32 %v912, %v1928
      %v1956 = vmul.f32 %v1497, %v1932
      %v1957 = vmul.f32 %v914, %v1924
      %v1958 = vmul.f32 %v916, %v1928
      %v1959 = vmul.f32 %v1500, %v1932
      %v1960 = vmul.f32 %v920, %v1924
      %v1961 = vmul.f32 %v922, %v1928
      %v1962 = vmul.f32 %v1505, %v1932
      %v1963 = vmul.f32 %v924, %v1924
      %v1964 = vmul.f32 %v926, %v1928
      %v1965 = vmul.f32 %v1508, %v1932
      %v1966 = vmul.f32 %v930, %v1924
      %v1967 = vmul.f32 %v932, %v1928
      %v1968 = vmul.f32 %v1513, %v1932
      %v1969 = vmul.f32 %v934, %v1924
      %v1970 = vmul.f32 %v936, %v1928
      %v1971 = vmul.f32 %v1516, %v1932
      %v1972 = vmul.f32 %v940, %v1924
      %v1973 = vmul.f32 %v942, %v1928
      %v1974 = vmul.f32 %v1521, %v1932
      %v1975 = vmul.f32 %v944, %v1924
      %v1976 = vmul.f32 %v946, %v1928
      %v1977 = vmul.f32 %v1524, %v1932
      %v1978 = vmul.f32 %v950, %v1924
      %v1979 = vmul.f32 %v952, %v1928
      %v1980 = vmul.f32 %v1529, %v1932
      %v1981 = vmul.f32 %v954, %v1924
      %v1982 = vmul.f32 %v956, %v1928
      %v1983 = vmul.f32 %v1532, %v1932
      %v1984 = vmul.f32 %v960, %v1924
      %v1985 = vmul.f32 %v962, %v1928
      %v1986 = vmul.f32 %v1537, %v1932
      %v1987 = vmul.f32 %v964, %v1924
      %v1988 = vmul.f32 %v966, %v1928
      %v1989 = vmul.f32 %v1540, %v1932
      %v1990 = vmul.f32 %v970, %v1924
      %v1991 = vmul.f32 %v972, %v1928
      %v1992 = vmul.f32 %v1545, %v1932
      %v1993 = vmul.f32 %v974, %v1924
      %v1994 = vmul.f32 %v976, %v1928
      %v1995 = vmul.f32 %v1548, %v1932
      %v1996 = vmul.f32 %v980, %v1924
      %v1997 = vmul.f32 %v982, %v1928
      %v1998 = vmul.f32 %v1553, %v1932
      %v1999 = vmul.f32 %v984, %v1924
      %v2000 = vmul.f32 %v986, %v1928
      %v2001 = vmul.f32 %v1556, %v1932
      %v2002 = vmul.f32 %v990, %v1924
      %v2003 = vmul.f32 %v992, %v1928
      %v2004 = vmul.f32 %v1561, %v1932
      %v2005 = vmul.f32 %v994, %v1924
      %v2006 = vmul.f32 %v996, %v1928
      %v2007 = vmul.f32 %v1564, %v1932
      %v2008 = vmul.f32 %v1000, %v1924
      %v2009 = vmul.f32 %v1002, %v1928
      %v2010 = vmul.f32 %v1569, %v1932
      %v2011 = vmul.f32 %v1004, %v1924
      %v2012 = vmul.f32 %v1006, %v1928
      %v2013 = vmul.f32 %v1572, %v1932
      %v2014 = vmul.f32 %v1010, %v1924
      %v2015 = vmul.f32 %v1012, %v1928
      %v2016 = vmul.f32 %v1577, %v1932
      %v2017 = vmul.f32 %v1014, %v1924
      %v2018 = vmul.f32 %v1016, %v1928
      %v2019 = vmul.f32 %v1580, %v1932
      %v2020 = vmul.f32 %v1020, %v1924
      %v2021 = vmul.f32 %v1022, %v1928
      %v2022 = vmul.f32 %v1585, %v1932
      %v2023 = vmul.f32 %v1024, %v1924
      %v2024 = vmul.f32 %v1026, %v1928
      %v2025 = vmul.f32 %v1588, %v1932
      %v2026 = vmul.f32 %v1030, %v1924
      %v2027 = vmul.f32 %v1032, %v1928
      %v2028 = vmul.f32 %v1593, %v1932
      %v2029 = vmul.f32 %v1034, %v1924
      %v2030 = vmul.f32 %v1036, %v1928
      %v2031 = vmul.f32 %v1596, %v1932
      %v2032 = vmul.f32 %v1040, %v1924
      %v2033 = vmul.f32 %v1042, %v1928
      %v2034 = vmul.f32 %v1601, %v1932
      %v2035 = vmul.f32 %v1044, %v1924
      %v2036 = vmul.f32 %v1046, %v1928
      %v2037 = vmul.f32 %v1604, %v1932
      %v2038 = vmul.f32 %v1050, %v1924
      %v2039 = vmul.f32 %v1052, %v1928
      %v2040 = vmul.f32 %v1609, %v1932
      %v2041 = vmul.f32 %v1054, %v1924
      %v2042 = vmul.f32 %v1056, %v1928
      %v2043 = vmul.f32 %v1612, %v1932
      %v2044 = vmul.f32 %v1060, %v1924
      %v2045 = vmul.f32 %v1062, %v1928
      %v2046 = vmul.f32 %v1617, %v1932
      %v2047 = vmul.f32 %v1064, %v1924
      %v2048 = vmul.f32 %v1066, %v1928
      %v2049 = vmul.f32 %v1620, %v1932
      %v2050 = vmul.f32 %v1070, %v1924
      %v2051 = vmul.f32 %v1072, %v1928
      %v2052 = vmul.f32 %v1625, %v1932
      %v2053 = vmul.f32 %v1074, %v1924
      %v2054 = vmul.f32 %v1076, %v1928
      %v2055 = vmul.f32 %v1628, %v1932
      %v2056 = vmul.f32 %v1080, %v1924
      %v2057 = vmul.f32 %v1082, %v1928
      %v2058 = vmul.f32 %v1633, %v1932
      %v2059 = vmul.f32 %v1084, %v1924
      %v2060 = vmul.f32 %v1086, %v1928
      %v2061 = vmul.f32 %v1636, %v1932
      %v2062 = vmul.f32 %v1090, %v1924
      %v2063 = vmul.f32 %v1092, %v1928
      %v2064 = vmul.f32 %v1641, %v1932
      %v2065 = vmul.f32 %v1094, %v1924
      %v2066 = vmul.f32 %v1096, %v1928
      %v2067 = vmul.f32 %v1644, %v1932
      %v2068 = vmul.f32 %v1100, %v1924
      %v2069 = vmul.f32 %v1102, %v1928
      %v2070 = vmul.f32 %v1649, %v1932
      %v2071 = vmul.f32 %v1104, %v1924
      %v2072 = vmul.f32 %v1106, %v1928
      %v2073 = vmul.f32 %v1652, %v1932
      %v2074 = vmul.f32 %v1110, %v1924
      %v2075 = vmul.f32 %v1112, %v1928
      %v2076 = vmul.f32 %v1657, %v1932
      %v2077 = vmul.f32 %v1114, %v1924
      %v2078 = vmul.f32 %v1116, %v1928
      %v2079 = vmul.f32 %v1660, %v1932
      %v2080 = vmul.f32 %v1120, %v1924
      %v2081 = vmul.f32 %v1122, %v1928
      %v2082 = vmul.f32 %v1665, %v1932
      %v2083 = vmul.f32 %v1124, %v1924
      %v2084 = vmul.f32 %v1126, %v1928
      %v2085 = vmul.f32 %v1668, %v1932
      %v2086 = vmul.f32 %v1130, %v1924
      %v2087 = vmul.f32 %v1132, %v1928
      %v2088 = vmul.f32 %v1673, %v1932
      %v2089 = vmul.f32 %v1134, %v1924
      %v2090 = vmul.f32 %v1136, %v1928
      %v2091 = vmul.f32 %v1676, %v1932
      %v2092 = vmul.f32 %v1140, %v1924
      %v2093 = vmul.f32 %v1142, %v1928
      %v2094 = vmul.f32 %v1681, %v1932
      %v2095 = vmul.f32 %v1144, %v1924
      %v2096 = vmul.f32 %v1146, %v1928
      %v2097 = vmul.f32 %v1684, %v1932
      %v2098 = vmul.f32 %v1150, %v1924
      %v2099 = vmul.f32 %v1152, %v1928
      %v2100 = vmul.f32 %v1689, %v1932
      %v2101 = vmul.f32 %v1154, %v1924
      %v2102 = vmul.f32 %v1156, %v1928
      %v2103 = vmul.f32 %v1692, %v1932
      %v2104 = vmul.f32 %v1160, %v1924
      %v2105 = vmul.f32 %v1162, %v1928
      %v2106 = vmul.f32 %v1697, %v1932
      %v2107 = vmul.f32 %v1164, %v1924
      %v2108 = vmul.f32 %v1166, %v1928
      %v2109 = vmul.f32 %v1700, %v1932
      %v2110 = vmul.f32 %v1170, %v1924
      %v2111 = vmul.f32 %v1172, %v1928
      %v2112 = vmul.f32 %v1705, %v1932
      %v2113 = vmul.f32 %v1174, %v1924
      %v2114 = vmul.f32 %v1176, %v1928
      %v2115 = vmul.f32 %v1708, %v1932
      %v2116 = vmul.f32 %v1180, %v1924
      %v2117 = vmul.f32 %v1182, %v1928
      %v2118 = vmul.f32 %v1713, %v1932
      %v2119 = vmul.f32 %v1184, %v1924
      %v2120 = vmul.f32 %v1186, %v1928
      %v2121 = vmul.f32 %v1716, %v1932
      %v2122 = vmul.f32 %v1190, %v1924
      %v2123 = vmul.f32 %v1192, %v1928
      %v2124 = vmul.f32 %v1721, %v1932
      %v2125 = vmul.f32 %v1194, %v1924
      %v2126 = vmul.f32 %v1196, %v1928
      %v2127 = vmul.f32 %v1724, %v1932
      %v2128 = vmul.f32 %v1200, %v1924
      %v2129 = vmul.f32 %v1202, %v1928
      %v2130 = vmul.f32 %v1729, %v1932
      %v2131 = vmul.f32 %v1204, %v1924
      %v2132 = vmul.f32 %v1206, %v1928
      %v2133 = vmul.f32 %v1732, %v1932
      %v2134 = vmul.f32 %v1210, %v1924
      %v2135 = vmul.f32 %v1212, %v1928
      %v2136 = vmul.f32 %v1737, %v1932
      %v2137 = vmul.f32 %v1214, %v1924
      %v2138 = vmul.f32 %v1216, %v1928
      %v2139 = vmul.f32 %v1740, %v1932
      %v2140 = vmul.f32 %v1220, %v1924
      %v2141 = vmul.f32 %v1222, %v1928
      %v2142 = vmul.f32 %v1745, %v1932
      %v2143 = vmul.f32 %v1224, %v1924
      %v2144 = vmul.f32 %v1226, %v1928
      %v2145 = vmul.f32 %v1748, %v1932
      %v2146 = vmul.f32 %v1230, %v1924
      %v2147 = vmul.f32 %v1232, %v1928
      %v2148 = vmul.f32 %v1753, %v1932
      %v2149 = vmul.f32 %v1234, %v1924
      %v2150 = vmul.f32 %v1236, %v1928
      %v2151 = vmul.f32 %v1756, %v1932
      %v2152 = vmul.f32 %v1240, %v1924
      %v2153 = vmul.f32 %v1242, %v1928
      %v2154 = vmul.f32 %v1761, %v1932
      %v2155 = vmul.f32 %v1244, %v1924
      %v2156 = vmul.f32 %v1246, %v1928
      %v2157 = vmul.f32 %v1764, %v1932
      %v2158 = vmul.f32 %v1250, %v1924
      %v2159 = vmul.f32 %v1252, %v1928
      %v2160 = vmul.f32 %v1769, %v1932
      %v2161 = vmul.f32 %v1254, %v1924
      %v2162 = vmul.f32 %v1256, %v1928
      %v2163 = vmul.f32 %v1772, %v1932
      %v2164 = vmul.f32 %v1260, %v1924
      %v2165 = vmul.f32 %v1262, %v1928
      %v2166 = vmul.f32 %v1777, %v1932
      %v2167 = vmul.f32 %v1264, %v1924
      %v2168 = vmul.f32 %v1266, %v1928
      %v2169 = vmul.f32 %v1780, %v1932
      %v2170 = vmul.f32 %v1270, %v1924
      %v2171 = vmul.f32 %v1272, %v1928
      %v2172 = vmul.f32 %v1785, %v1932
      %v2173 = vmul.f32 %v1274, %v1924
      %v2174 = vmul.f32 %v1276, %v1928
      %v2175 = vmul.f32 %v1788, %v1932
      %v2176 = vmul.f32 %v1280, %v1924
      %v2177 = vmul.f32 %v1282, %v1928
      %v2178 = vmul.f32 %v1793, %v1932
      %v2179 = vmul.f32 %v1284, %v1924
      %v2180 = vmul.f32 %v1286, %v1928
      %v2181 = vmul.f32 %v1796, %v1932
      %v2182 = vmul.f32 %v1290, %v1924
      %v2183 = vmul.f32 %v1292, %v1928
      %v2184 = vmul.f32 %v1801, %v1932
      %v2185 = vmul.f32 %v1294, %v1924
      %v2186 = vmul.f32 %v1296, %v1928
      %v2187 = vmul.f32 %v1804, %v1932
      %v2188 = vmul.f32 %v1300, %v1924
      %v2189 = vmul.f32 %v1302, %v1928
      %v2190 = vmul.f32 %v1809, %v1932
      %v2191 = vmul.f32 %v1304, %v1924
      %v2192 = vmul.f32 %v1306, %v1928
      %v2193 = vmul.f32 %v1812, %v1932
      %v2194 = vmul.f32 %v1310, %v1924
      %v2195 = vmul.f32 %v1312, %v1928
      %v2196 = vmul.f32 %v1817, %v1932
      %v2197 = vmul.f32 %v1314, %v1924
      %v2198 = vmul.f32 %v1316, %v1928
      %v2199 = vmul.f32 %v1820, %v1932
      %v2200 = vmul.f32 %v1320, %v1924
      %v2201 = vmul.f32 %v1322, %v1928
      %v2202 = vmul.f32 %v1825, %v1932
      %v2203 = vmul.f32 %v1324, %v1924
      %v2204 = vmul.f32 %v1326, %v1928
      %v2205 = vmul.f32 %v1828, %v1932
      %v2206 = vmul.f32 %v1330, %v1924
      %v2207 = vmul.f32 %v1332, %v1928
      %v2208 = vmul.f32 %v1833, %v1932
      %v2209 = vmul.f32 %v1334, %v1924
      %v2210 = vmul.f32 %v1336, %v1928
      %v2211 = vmul.f32 %v1836, %v1932
      %v2212 = vmul.f32 %v1340, %v1924
      %v2213 = vmul.f32 %v1342, %v1928
      %v2214 = vmul.f32 %v1841, %v1932
      %v2215 = vmul.f32 %v1344, %v1924
      %v2216 = vmul.f32 %v1346, %v1928
      %v2217 = vmul.f32 %v1844, %v1932
      %v2218 = vmul.f32 %v1350, %v1924
      %v2219 = vmul.f32 %v1352, %v1928
      %v2220 = vmul.f32 %v1849, %v1932
      %v2221 = vmul.f32 %v1354, %v1924
      %v2222 = vmul.f32 %v1356, %v1928
      %v2223 = vmul.f32 %v1852, %v1932
      %v2224 = vmul.f32 %v1360, %v1924
      %v2225 = vmul.f32 %v1362, %v1928
      %v2226 = vmul.f32 %v1857, %v1932
      %v2227 = vmul.f32 %v1364, %v1924
      %v2228 = vmul.f32 %v1366, %v1928
      %v2229 = vmul.f32 %v1860, %v1932
      %v2230 = vmul.f32 %v1370, %v1924
      %v2231 = vmul.f32 %v1372, %v1928
      %v2232 = vmul.f32 %v1865, %v1932
      %v2233 = vmul.f32 %v1374, %v1924
      %v2234 = vmul.f32 %v1376, %v1928
      %v2235 = vmul.f32 %v1868, %v1932
      %v2236 = vmul.f32 %v1380, %v1924
      %v2237 = vmul.f32 %v1382, %v1928
      %v2238 = vmul.f32 %v1873, %v1932
      %v2239 = vmul.f32 %v1384, %v1924
      %v2240 = vmul.f32 %v1386, %v1928
      %v2241 = vmul.f32 %v1876, %v1932
      %v2242 = vmul.f32 %v1390, %v1924
      %v2243 = vmul.f32 %v1392, %v1928
      %v2244 = vmul.f32 %v1881, %v1932
      %v2245 = vmul.f32 %v1394, %v1924
      %v2246 = vmul.f32 %v1396, %v1928
      %v2247 = vmul.f32 %v1884, %v1932
      %v2248 = vmul.f32 %v1400, %v1924
      %v2249 = vmul.f32 %v1402, %v1928
      %v2250 = vmul.f32 %v1889, %v1932
      %v2251 = vmul.f32 %v1404, %v1924
      %v2252 = vmul.f32 %v1406, %v1928
      %v2253 = vmul.f32 %v1892, %v1932
      %v2254 = vmul.f32 %v1410, %v1924
      %v2255 = vmul.f32 %v1412, %v1928
      %v2256 = vmul.f32 %v1897, %v1932
      %v2257 = vmul.f32 %v1414, %v1924
      %v2258 = vmul.f32 %v1416, %v1928
      %v2259 = vmul.f32 %v1900, %v1932
      %v2260 = vmul.f32 %v1420, %v1924
      %v2261 = vmul.f32 %v1422, %v1928
      %v2262 = vmul.f32 %v1905, %v1932
      %v2263 = vmul.f32 %v1424, %v1924
      %v2264 = vmul.f32 %v1426, %v1928
      %v2265 = vmul.f32 %v1908, %v1932
      %v2266 = vmul.f32 %v1430, %v1924
      %v2267 = vmul.f32 %v1432, %v1928
      %v2268 = vmul.f32 %v1913, %v1932
      %v2269 = vmul.f32 %v1434, %v1924
      %v2270 = vmul.f32 %v1436, %v1928
      %v2271 = vmul.f32 %v1916, %v1932
      %v2272 = vld [vmem:[%s3] sm:$0x7]
      %v2274 = vlaneseq
      %v2275 = vshrl.u32 %v2274, 7
      %v2276 = vsub.s32 0, %v2275
      %v2277 = vrot.slane %v2272, %v2276
      %v2278 = vlaneseq
      %v2279 = vshrl.u32 %v2278, 7
      %v2280 = vsub.s32 1, %v2279
      %v2281 = vrot.slane %v2272, %v2280
      %v2282 = vlaneseq
      %v2283 = vshrl.u32 %v2282, 7
      %v2284 = vsub.s32 2, %v2283
      %v2285 = vrot.slane %v2272, %v2284
      %v2289 = vadd.f32 %v1936, %v2277
      %v2290 = vadd.f32 %v1937, %v2281
      %v2291 = vadd.f32 %v1938, %v2285
      %v2292 = vadd.f32 %v1939, %v2277
      %v2293 = vadd.f32 %v1940, %v2281
      %v2294 = vadd.f32 %v1941, %v2285
      %v2295 = vadd.f32 %v1942, %v2277
      %v2296 = vadd.f32 %v1943, %v2281
      %v2297 = vadd.f32 %v1944, %v2285
      %v2298 = vadd.f32 %v1945, %v2277
      %v2299 = vadd.f32 %v1946, %v2281
      %v2300 = vadd.f32 %v1947, %v2285
      %v2301 = vadd.f32 %v1948, %v2277
      %v2302 = vadd.f32 %v1949, %v2281
      %v2303 = vadd.f32 %v1950, %v2285
      %v2304 = vadd.f32 %v1951, %v2277
      %v2305 = vadd.f32 %v1952, %v2281
      %v2306 = vadd.f32 %v1953, %v2285
      %v2307 = vadd.f32 %v1954, %v2277
      %v2308 = vadd.f32 %v1955, %v2281
      %v2309 = vadd.f32 %v1956, %v2285
      %v2310 = vadd.f32 %v1957, %v2277
      %v2311 = vadd.f32 %v1958, %v2281
      %v2312 = vadd.f32 %v1959, %v2285
      %v2313 = vadd.f32 %v1960, %v2277
      %v2314 = vadd.f32 %v1961, %v2281
      %v2315 = vadd.f32 %v1962, %v2285
      %v2316 = vadd.f32 %v1963, %v2277
      %v2317 = vadd.f32 %v1964, %v2281
      %v2318 = vadd.f32 %v1965, %v2285
      %v2319 = vadd.f32 %v1966, %v2277
      %v2320 = vadd.f32 %v1967, %v2281
      %v2321 = vadd.f32 %v1968, %v2285
      %v2322 = vadd.f32 %v1969, %v2277
      %v2323 = vadd.f32 %v1970, %v2281
      %v2324 = vadd.f32 %v1971, %v2285
      %v2325 = vadd.f32 %v1972, %v2277
      %v2326 = vadd.f32 %v1973, %v2281
      %v2327 = vadd.f32 %v1974, %v2285
      %v2328 = vadd.f32 %v1975, %v2277
      %v2329 = vadd.f32 %v1976, %v2281
      %v2330 = vadd.f32 %v1977, %v2285
      %v2331 = vadd.f32 %v1978, %v2277
      %v2332 = vadd.f32 %v1979, %v2281
      %v2333 = vadd.f32 %v1980, %v2285
      %v2334 = vadd.f32 %v1981, %v2277
      %v2335 = vadd.f32 %v1982, %v2281
      %v2336 = vadd.f32 %v1983, %v2285
      %v2337 = vadd.f32 %v1984, %v2277
      %v2338 = vadd.f32 %v1985, %v2281
      %v2339 = vadd.f32 %v1986, %v2285
      %v2340 = vadd.f32 %v1987, %v2277
      %v2341 = vadd.f32 %v1988, %v2281
      %v2342 = vadd.f32 %v1989, %v2285
      %v2343 = vadd.f32 %v1990, %v2277
      %v2344 = vadd.f32 %v1991, %v2281
      %v2345 = vadd.f32 %v1992, %v2285
      %v2346 = vadd.f32 %v1993, %v2277
      %v2347 = vadd.f32 %v1994, %v2281
      %v2348 = vadd.f32 %v1995, %v2285
      %v2349 = vadd.f32 %v1996, %v2277
      %v2350 = vadd.f32 %v1997, %v2281
      %v2351 = vadd.f32 %v1998, %v2285
      %v2352 = vadd.f32 %v1999, %v2277
      %v2353 = vadd.f32 %v2000, %v2281
      %v2354 = vadd.f32 %v2001, %v2285
      %v2355 = vadd.f32 %v2002, %v2277
      %v2356 = vadd.f32 %v2003, %v2281
      %v2357 = vadd.f32 %v2004, %v2285
      %v2358 = vadd.f32 %v2005, %v2277
      %v2359 = vadd.f32 %v2006, %v2281
      %v2360 = vadd.f32 %v2007, %v2285
      %v2361 = vadd.f32 %v2008, %v2277
      %v2362 = vadd.f32 %v2009, %v2281
      %v2363 = vadd.f32 %v2010, %v2285
      %v2364 = vadd.f32 %v2011, %v2277
      %v2365 = vadd.f32 %v2012, %v2281
      %v2366 = vadd.f32 %v2013, %v2285
      %v2367 = vadd.f32 %v2014, %v2277
      %v2368 = vadd.f32 %v2015, %v2281
      %v2369 = vadd.f32 %v2016, %v2285
      %v2370 = vadd.f32 %v2017, %v2277
      %v2371 = vadd.f32 %v2018, %v2281
      %v2372 = vadd.f32 %v2019, %v2285
      %v2373 = vadd.f32 %v2020, %v2277
      %v2374 = vadd.f32 %v2021, %v2281
      %v2375 = vadd.f32 %v2022, %v2285
      %v2376 = vadd.f32 %v2023, %v2277
      %v2377 = vadd.f32 %v2024, %v2281
      %v2378 = vadd.f32 %v2025, %v2285
      %v2379 = vadd.f32 %v2026, %v2277
      %v2380 = vadd.f32 %v2027, %v2281
      %v2381 = vadd.f32 %v2028, %v2285
      %v2382 = vadd.f32 %v2029, %v2277
      %v2383 = vadd.f32 %v2030, %v2281
      %v2384 = vadd.f32 %v2031, %v2285
      %v2385 = vadd.f32 %v2032, %v2277
      %v2386 = vadd.f32 %v2033, %v2281
      %v2387 = vadd.f32 %v2034, %v2285
      %v2388 = vadd.f32 %v2035, %v2277
      %v2389 = vadd.f32 %v2036, %v2281
      %v2390 = vadd.f32 %v2037, %v2285
      %v2391 = vadd.f32 %v2038, %v2277
      %v2392 = vadd.f32 %v2039, %v2281
      %v2393 = vadd.f32 %v2040, %v2285
      %v2394 = vadd.f32 %v2041, %v2277
      %v2395 = vadd.f32 %v2042, %v2281
      %v2396 = vadd.f32 %v2043, %v2285
      %v2397 = vadd.f32 %v2044, %v2277
      %v2398 = vadd.f32 %v2045, %v2281
      %v2399 = vadd.f32 %v2046, %v2285
      %v2400 = vadd.f32 %v2047, %v2277
      %v2401 = vadd.f32 %v2048, %v2281
      %v2402 = vadd.f32 %v2049, %v2285
      %v2403 = vadd.f32 %v2050, %v2277
      %v2404 = vadd.f32 %v2051, %v2281
      %v2405 = vadd.f32 %v2052, %v2285
      %v2406 = vadd.f32 %v2053, %v2277
      %v2407 = vadd.f32 %v2054, %v2281
      %v2408 = vadd.f32 %v2055, %v2285
      %v2409 = vadd.f32 %v2056, %v2277
      %v2410 = vadd.f32 %v2057, %v2281
      %v2411 = vadd.f32 %v2058, %v2285
      %v2412 = vadd.f32 %v2059, %v2277
      %v2413 = vadd.f32 %v2060, %v2281
      %v2414 = vadd.f32 %v2061, %v2285
      %v2415 = vadd.f32 %v2062, %v2277
      %v2416 = vadd.f32 %v2063, %v2281
      %v2417 = vadd.f32 %v2064, %v2285
      %v2418 = vadd.f32 %v2065, %v2277
      %v2419 = vadd.f32 %v2066, %v2281
      %v2420 = vadd.f32 %v2067, %v2285
      %v2421 = vadd.f32 %v2068, %v2277
      %v2422 = vadd.f32 %v2069, %v2281
      %v2423 = vadd.f32 %v2070, %v2285
      %v2424 = vadd.f32 %v2071, %v2277
      %v2425 = vadd.f32 %v2072, %v2281
      %v2426 = vadd.f32 %v2073, %v2285
      %v2427 = vadd.f32 %v2074, %v2277
      %v2428 = vadd.f32 %v2075, %v2281
      %v2429 = vadd.f32 %v2076, %v2285
      %v2430 = vadd.f32 %v2077, %v2277
      %v2431 = vadd.f32 %v2078, %v2281
      %v2432 = vadd.f32 %v2079, %v2285
      %v2433 = vadd.f32 %v2080, %v2277
      %v2434 = vadd.f32 %v2081, %v2281
      %v2435 = vadd.f32 %v2082, %v2285
      %v2436 = vadd.f32 %v2083, %v2277
      %v2437 = vadd.f32 %v2084, %v2281
      %v2438 = vadd.f32 %v2085, %v2285
      %v2439 = vadd.f32 %v2086, %v2277
      %v2440 = vadd.f32 %v2087, %v2281
      %v2441 = vadd.f32 %v2088, %v2285
      %v2442 = vadd.f32 %v2089, %v2277
      %v2443 = vadd.f32 %v2090, %v2281
      %v2444 = vadd.f32 %v2091, %v2285
      %v2445 = vadd.f32 %v2092, %v2277
      %v2446 = vadd.f32 %v2093, %v2281
      %v2447 = vadd.f32 %v2094, %v2285
      %v2448 = vadd.f32 %v2095, %v2277
      %v2449 = vadd.f32 %v2096, %v2281
      %v2450 = vadd.f32 %v2097, %v2285
      %v2451 = vadd.f32 %v2098, %v2277
      %v2452 = vadd.f32 %v2099, %v2281
      %v2453 = vadd.f32 %v2100, %v2285
      %v2454 = vadd.f32 %v2101, %v2277
      %v2455 = vadd.f32 %v2102, %v2281
      %v2456 = vadd.f32 %v2103, %v2285
      %v2457 = vadd.f32 %v2104, %v2277
      %v2458 = vadd.f32 %v2105, %v2281
      %v2459 = vadd.f32 %v2106, %v2285
      %v2460 = vadd.f32 %v2107, %v2277
      %v2461 = vadd.f32 %v2108, %v2281
      %v2462 = vadd.f32 %v2109, %v2285
      %v2463 = vadd.f32 %v2110, %v2277
      %v2464 = vadd.f32 %v2111, %v2281
      %v2465 = vadd.f32 %v2112, %v2285
      %v2466 = vadd.f32 %v2113, %v2277
      %v2467 = vadd.f32 %v2114, %v2281
      %v2468 = vadd.f32 %v2115, %v2285
      %v2469 = vadd.f32 %v2116, %v2277
      %v2470 = vadd.f32 %v2117, %v2281
      %v2471 = vadd.f32 %v2118, %v2285
      %v2472 = vadd.f32 %v2119, %v2277
      %v2473 = vadd.f32 %v2120, %v2281
      %v2474 = vadd.f32 %v2121, %v2285
      %v2475 = vadd.f32 %v2122, %v2277
      %v2476 = vadd.f32 %v2123, %v2281
      %v2477 = vadd.f32 %v2124, %v2285
      %v2478 = vadd.f32 %v2125, %v2277
      %v2479 = vadd.f32 %v2126, %v2281
      %v2480 = vadd.f32 %v2127, %v2285
      %v2481 = vadd.f32 %v2128, %v2277
      %v2482 = vadd.f32 %v2129, %v2281
      %v2483 = vadd.f32 %v2130, %v2285
      %v2484 = vadd.f32 %v2131, %v2277
      %v2485 = vadd.f32 %v2132, %v2281
      %v2486 = vadd.f32 %v2133, %v2285
      %v2487 = vadd.f32 %v2134, %v2277
      %v2488 = vadd.f32 %v2135, %v2281
      %v2489 = vadd.f32 %v2136, %v2285
      %v2490 = vadd.f32 %v2137, %v2277
      %v2491 = vadd.f32 %v2138, %v2281
      %v2492 = vadd.f32 %v2139, %v2285
      %v2493 = vadd.f32 %v2140, %v2277
      %v2494 = vadd.f32 %v2141, %v2281
      %v2495 = vadd.f32 %v2142, %v2285
      %v2496 = vadd.f32 %v2143, %v2277
      %v2497 = vadd.f32 %v2144, %v2281
      %v2498 = vadd.f32 %v2145, %v2285
      %v2499 = vadd.f32 %v2146, %v2277
      %v2500 = vadd.f32 %v2147, %v2281
      %v2501 = vadd.f32 %v2148, %v2285
      %v2502 = vadd.f32 %v2149, %v2277
      %v2503 = vadd.f32 %v2150, %v2281
      %v2504 = vadd.f32 %v2151, %v2285
      %v2505 = vadd.f32 %v2152, %v2277
      %v2506 = vadd.f32 %v2153, %v2281
      %v2507 = vadd.f32 %v2154, %v2285
      %v2508 = vadd.f32 %v2155, %v2277
      %v2509 = vadd.f32 %v2156, %v2281
      %v2510 = vadd.f32 %v2157, %v2285
      %v2511 = vadd.f32 %v2158, %v2277
      %v2512 = vadd.f32 %v2159, %v2281
      %v2513 = vadd.f32 %v2160, %v2285
      %v2514 = vadd.f32 %v2161, %v2277
      %v2515 = vadd.f32 %v2162, %v2281
      %v2516 = vadd.f32 %v2163, %v2285
      %v2517 = vadd.f32 %v2164, %v2277
      %v2518 = vadd.f32 %v2165, %v2281
      %v2519 = vadd.f32 %v2166, %v2285
      %v2520 = vadd.f32 %v2167, %v2277
      %v2521 = vadd.f32 %v2168, %v2281
      %v2522 = vadd.f32 %v2169, %v2285
      %v2523 = vadd.f32 %v2170, %v2277
      %v2524 = vadd.f32 %v2171, %v2281
      %v2525 = vadd.f32 %v2172, %v2285
      %v2526 = vadd.f32 %v2173, %v2277
      %v2527 = vadd.f32 %v2174, %v2281
      %v2528 = vadd.f32 %v2175, %v2285
      %v2529 = vadd.f32 %v2176, %v2277
      %v2530 = vadd.f32 %v2177, %v2281
      %v2531 = vadd.f32 %v2178, %v2285
      %v2532 = vadd.f32 %v2179, %v2277
      %v2533 = vadd.f32 %v2180, %v2281
      %v2534 = vadd.f32 %v2181, %v2285
      %v2535 = vadd.f32 %v2182, %v2277
      %v2536 = vadd.f32 %v2183, %v2281
      %v2537 = vadd.f32 %v2184, %v2285
      %v2538 = vadd.f32 %v2185, %v2277
      %v2539 = vadd.f32 %v2186, %v2281
      %v2540 = vadd.f32 %v2187, %v2285
      %v2541 = vadd.f32 %v2188, %v2277
      %v2542 = vadd.f32 %v2189, %v2281
      %v2543 = vadd.f32 %v2190, %v2285
      %v2544 = vadd.f32 %v2191, %v2277
      %v2545 = vadd.f32 %v2192, %v2281
      %v2546 = vadd.f32 %v2193, %v2285
      %v2547 = vadd.f32 %v2194, %v2277
      %v2548 = vadd.f32 %v2195, %v2281
      %v2549 = vadd.f32 %v2196, %v2285
      %v2550 = vadd.f32 %v2197, %v2277
      %v2551 = vadd.f32 %v2198, %v2281
      %v2552 = vadd.f32 %v2199, %v2285
      %v2553 = vadd.f32 %v2200, %v2277
      %v2554 = vadd.f32 %v2201, %v2281
      %v2555 = vadd.f32 %v2202, %v2285
      %v2556 = vadd.f32 %v2203, %v2277
      %v2557 = vadd.f32 %v2204, %v2281
      %v2558 = vadd.f32 %v2205, %v2285
      %v2559 = vadd.f32 %v2206, %v2277
      %v2560 = vadd.f32 %v2207, %v2281
      %v2561 = vadd.f32 %v2208, %v2285
      %v2562 = vadd.f32 %v2209, %v2277
      %v2563 = vadd.f32 %v2210, %v2281
      %v2564 = vadd.f32 %v2211, %v2285
      %v2565 = vadd.f32 %v2212, %v2277
      %v2566 = vadd.f32 %v2213, %v2281
      %v2567 = vadd.f32 %v2214, %v2285
      %v2568 = vadd.f32 %v2215, %v2277
      %v2569 = vadd.f32 %v2216, %v2281
      %v2570 = vadd.f32 %v2217, %v2285
      %v2571 = vadd.f32 %v2218, %v2277
      %v2572 = vadd.f32 %v2219, %v2281
      %v2573 = vadd.f32 %v2220, %v2285
      %v2574 = vadd.f32 %v2221, %v2277
      %v2575 = vadd.f32 %v2222, %v2281
      %v2576 = vadd.f32 %v2223, %v2285
      %v2577 = vadd.f32 %v2224, %v2277
      %v2578 = vadd.f32 %v2225, %v2281
      %v2579 = vadd.f32 %v2226, %v2285
      %v2580 = vadd.f32 %v2227, %v2277
      %v2581 = vadd.f32 %v2228, %v2281
      %v2582 = vadd.f32 %v2229, %v2285
      %v2583 = vadd.f32 %v2230, %v2277
      %v2584 = vadd.f32 %v2231, %v2281
      %v2585 = vadd.f32 %v2232, %v2285
      %v2586 = vadd.f32 %v2233, %v2277
      %v2587 = vadd.f32 %v2234, %v2281
      %v2588 = vadd.f32 %v2235, %v2285
      %v2589 = vadd.f32 %v2236, %v2277
      %v2590 = vadd.f32 %v2237, %v2281
      %v2591 = vadd.f32 %v2238, %v2285
      %v2592 = vadd.f32 %v2239, %v2277
      %v2593 = vadd.f32 %v2240, %v2281
      %v2594 = vadd.f32 %v2241, %v2285
      %v2595 = vadd.f32 %v2242, %v2277
      %v2596 = vadd.f32 %v2243, %v2281
      %v2597 = vadd.f32 %v2244, %v2285
      %v2598 = vadd.f32 %v2245, %v2277
      %v2599 = vadd.f32 %v2246, %v2281
      %v2600 = vadd.f32 %v2247, %v2285
      %v2601 = vadd.f32 %v2248, %v2277
      %v2602 = vadd.f32 %v2249, %v2281
      %v2603 = vadd.f32 %v2250, %v2285
      %v2604 = vadd.f32 %v2251, %v2277
      %v2605 = vadd.f32 %v2252, %v2281
      %v2606 = vadd.f32 %v2253, %v2285
      %v2607 = vadd.f32 %v2254, %v2277
      %v2608 = vadd.f32 %v2255, %v2281
      %v2609 = vadd.f32 %v2256, %v2285
      %v2610 = vadd.f32 %v2257, %v2277
      %v2611 = vadd.f32 %v2258, %v2281
      %v2612 = vadd.f32 %v2259, %v2285
      %v2613 = vadd.f32 %v2260, %v2277
      %v2614 = vadd.f32 %v2261, %v2281
      %v2615 = vadd.f32 %v2262, %v2285
      %v2616 = vadd.f32 %v2263, %v2277
      %v2617 = vadd.f32 %v2264, %v2281
      %v2618 = vadd.f32 %v2265, %v2285
      %v2619 = vadd.f32 %v2266, %v2277
      %v2620 = vadd.f32 %v2267, %v2281
      %v2621 = vadd.f32 %v2268, %v2285
      %v2622 = vadd.f32 %v2269, %v2277
      %v2623 = vadd.f32 %v2270, %v2281
      %v2624 = vadd.f32 %v2271, %v2285
      %v2625 = vpack.c.bf16 %v2292, %v2289
      %v2626 = vpack.c.bf16 %v2293, %v2290
      %v2627 = vpack.c.bf16 %v2294, %v2291
      %v2628 = vpack.c.bf16 %v2298, %v2295
      %v2629 = vpack.c.bf16 %v2299, %v2296
      %v2630 = vpack.c.bf16 %v2300, %v2297
      %v2631 = vpack.c.bf16 %v2304, %v2301
      %v2632 = vpack.c.bf16 %v2305, %v2302
      %v2633 = vpack.c.bf16 %v2306, %v2303
      %v2634 = vpack.c.bf16 %v2310, %v2307
      %v2635 = vpack.c.bf16 %v2311, %v2308
      %v2636 = vpack.c.bf16 %v2312, %v2309
      %v2637 = vpack.c.bf16 %v2316, %v2313
      %v2638 = vpack.c.bf16 %v2317, %v2314
      %v2639 = vpack.c.bf16 %v2318, %v2315
      %v2640 = vpack.c.bf16 %v2322, %v2319
      %v2641 = vpack.c.bf16 %v2323, %v2320
      %v2642 = vpack.c.bf16 %v2324, %v2321
      %v2643 = vpack.c.bf16 %v2328, %v2325
      %v2644 = vpack.c.bf16 %v2329, %v2326
      %v2645 = vpack.c.bf16 %v2330, %v2327
      %v2646 = vpack.c.bf16 %v2334, %v2331
      %v2647 = vpack.c.bf16 %v2335, %v2332
      %v2648 = vpack.c.bf16 %v2336, %v2333
      %v2649 = vpack.c.bf16 %v2340, %v2337
      %v2650 = vpack.c.bf16 %v2341, %v2338
      %v2651 = vpack.c.bf16 %v2342, %v2339
      %v2652 = vpack.c.bf16 %v2346, %v2343
      %v2653 = vpack.c.bf16 %v2347, %v2344
      %v2654 = vpack.c.bf16 %v2348, %v2345
      %v2655 = vpack.c.bf16 %v2352, %v2349
      %v2656 = vpack.c.bf16 %v2353, %v2350
      %v2657 = vpack.c.bf16 %v2354, %v2351
      %v2658 = vpack.c.bf16 %v2358, %v2355
      %v2659 = vpack.c.bf16 %v2359, %v2356
      %v2660 = vpack.c.bf16 %v2360, %v2357
      %v2661 = vpack.c.bf16 %v2364, %v2361
      %v2662 = vpack.c.bf16 %v2365, %v2362
      %v2663 = vpack.c.bf16 %v2366, %v2363
      %v2664 = vpack.c.bf16 %v2370, %v2367
      %v2665 = vpack.c.bf16 %v2371, %v2368
      %v2666 = vpack.c.bf16 %v2372, %v2369
      %v2667 = vpack.c.bf16 %v2376, %v2373
      %v2668 = vpack.c.bf16 %v2377, %v2374
      %v2669 = vpack.c.bf16 %v2378, %v2375
      %v2670 = vpack.c.bf16 %v2382, %v2379
      %v2671 = vpack.c.bf16 %v2383, %v2380
      %v2672 = vpack.c.bf16 %v2384, %v2381
      %v2673 = vpack.c.bf16 %v2388, %v2385
      %v2674 = vpack.c.bf16 %v2389, %v2386
      %v2675 = vpack.c.bf16 %v2390, %v2387
      %v2676 = vpack.c.bf16 %v2394, %v2391
      %v2677 = vpack.c.bf16 %v2395, %v2392
      %v2678 = vpack.c.bf16 %v2396, %v2393
      %v2679 = vpack.c.bf16 %v2400, %v2397
      %v2680 = vpack.c.bf16 %v2401, %v2398
      %v2681 = vpack.c.bf16 %v2402, %v2399
      %v2682 = vpack.c.bf16 %v2406, %v2403
      %v2683 = vpack.c.bf16 %v2407, %v2404
      %v2684 = vpack.c.bf16 %v2408, %v2405
      %v2685 = vpack.c.bf16 %v2412, %v2409
      %v2686 = vpack.c.bf16 %v2413, %v2410
      %v2687 = vpack.c.bf16 %v2414, %v2411
      %v2688 = vpack.c.bf16 %v2418, %v2415
      %v2689 = vpack.c.bf16 %v2419, %v2416
      %v2690 = vpack.c.bf16 %v2420, %v2417
      %v2691 = vpack.c.bf16 %v2424, %v2421
      %v2692 = vpack.c.bf16 %v2425, %v2422
      %v2693 = vpack.c.bf16 %v2426, %v2423
      %v2694 = vpack.c.bf16 %v2430, %v2427
      %v2695 = vpack.c.bf16 %v2431, %v2428
      %v2696 = vpack.c.bf16 %v2432, %v2429
      %v2697 = vpack.c.bf16 %v2436, %v2433
      %v2698 = vpack.c.bf16 %v2437, %v2434
      %v2699 = vpack.c.bf16 %v2438, %v2435
      %v2700 = vpack.c.bf16 %v2442, %v2439
      %v2701 = vpack.c.bf16 %v2443, %v2440
      %v2702 = vpack.c.bf16 %v2444, %v2441
      %v2703 = vpack.c.bf16 %v2448, %v2445
      %v2704 = vpack.c.bf16 %v2449, %v2446
      %v2705 = vpack.c.bf16 %v2450, %v2447
      %v2706 = vpack.c.bf16 %v2454, %v2451
      %v2707 = vpack.c.bf16 %v2455, %v2452
      %v2708 = vpack.c.bf16 %v2456, %v2453
      %v2709 = vpack.c.bf16 %v2460, %v2457
      %v2710 = vpack.c.bf16 %v2461, %v2458
      %v2711 = vpack.c.bf16 %v2462, %v2459
      %v2712 = vpack.c.bf16 %v2466, %v2463
      %v2713 = vpack.c.bf16 %v2467, %v2464
      %v2714 = vpack.c.bf16 %v2468, %v2465
      %v2715 = vpack.c.bf16 %v2472, %v2469
      %v2716 = vpack.c.bf16 %v2473, %v2470
      %v2717 = vpack.c.bf16 %v2474, %v2471
      %v2718 = vpack.c.bf16 %v2478, %v2475
      %v2719 = vpack.c.bf16 %v2479, %v2476
      %v2720 = vpack.c.bf16 %v2480, %v2477
      %v2721 = vpack.c.bf16 %v2484, %v2481
      %v2722 = vpack.c.bf16 %v2485, %v2482
      %v2723 = vpack.c.bf16 %v2486, %v2483
      %v2724 = vpack.c.bf16 %v2490, %v2487
      %v2725 = vpack.c.bf16 %v2491, %v2488
      %v2726 = vpack.c.bf16 %v2492, %v2489
      %v2727 = vpack.c.bf16 %v2496, %v2493
      %v2728 = vpack.c.bf16 %v2497, %v2494
      %v2729 = vpack.c.bf16 %v2498, %v2495
      %v2730 = vpack.c.bf16 %v2502, %v2499
      %v2731 = vpack.c.bf16 %v2503, %v2500
      %v2732 = vpack.c.bf16 %v2504, %v2501
      %v2733 = vpack.c.bf16 %v2508, %v2505
      %v2734 = vpack.c.bf16 %v2509, %v2506
      %v2735 = vpack.c.bf16 %v2510, %v2507
      %v2736 = vpack.c.bf16 %v2514, %v2511
      %v2737 = vpack.c.bf16 %v2515, %v2512
      %v2738 = vpack.c.bf16 %v2516, %v2513
      %v2739 = vpack.c.bf16 %v2520, %v2517
      %v2740 = vpack.c.bf16 %v2521, %v2518
      %v2741 = vpack.c.bf16 %v2522, %v2519
      %v2742 = vpack.c.bf16 %v2526, %v2523
      %v2743 = vpack.c.bf16 %v2527, %v2524
      %v2744 = vpack.c.bf16 %v2528, %v2525
      %v2745 = vpack.c.bf16 %v2532, %v2529
      %v2746 = vpack.c.bf16 %v2533, %v2530
      %v2747 = vpack.c.bf16 %v2534, %v2531
      %v2748 = vpack.c.bf16 %v2538, %v2535
      %v2749 = vpack.c.bf16 %v2539, %v2536
      %v2750 = vpack.c.bf16 %v2540, %v2537
      %v2751 = vpack.c.bf16 %v2544, %v2541
      %v2752 = vpack.c.bf16 %v2545, %v2542
      %v2753 = vpack.c.bf16 %v2546, %v2543
      %v2754 = vpack.c.bf16 %v2550, %v2547
      %v2755 = vpack.c.bf16 %v2551, %v2548
      %v2756 = vpack.c.bf16 %v2552, %v2549
      %v2757 = vpack.c.bf16 %v2556, %v2553
      %v2758 = vpack.c.bf16 %v2557, %v2554
      %v2759 = vpack.c.bf16 %v2558, %v2555
      %v2760 = vpack.c.bf16 %v2562, %v2559
      %v2761 = vpack.c.bf16 %v2563, %v2560
      %v2762 = vpack.c.bf16 %v2564, %v2561
      %v2763 = vpack.c.bf16 %v2568, %v2565
      %v2764 = vpack.c.bf16 %v2569, %v2566
      %v2765 = vpack.c.bf16 %v2570, %v2567
      %v2766 = vpack.c.bf16 %v2574, %v2571
      %v2767 = vpack.c.bf16 %v2575, %v2572
      %v2768 = vpack.c.bf16 %v2576, %v2573
      %v2769 = vpack.c.bf16 %v2580, %v2577
      %v2770 = vpack.c.bf16 %v2581, %v2578
      %v2771 = vpack.c.bf16 %v2582, %v2579
      %v2772 = vpack.c.bf16 %v2586, %v2583
      %v2773 = vpack.c.bf16 %v2587, %v2584
      %v2774 = vpack.c.bf16 %v2588, %v2585
      %v2775 = vpack.c.bf16 %v2592, %v2589
      %v2776 = vpack.c.bf16 %v2593, %v2590
      %v2777 = vpack.c.bf16 %v2594, %v2591
      %v2778 = vpack.c.bf16 %v2598, %v2595
      %v2779 = vpack.c.bf16 %v2599, %v2596
      %v2780 = vpack.c.bf16 %v2600, %v2597
      %v2781 = vpack.c.bf16 %v2604, %v2601
      %v2782 = vpack.c.bf16 %v2605, %v2602
      %v2783 = vpack.c.bf16 %v2606, %v2603
      %v2784 = vpack.c.bf16 %v2610, %v2607
      %v2785 = vpack.c.bf16 %v2611, %v2608
      %v2786 = vpack.c.bf16 %v2612, %v2609
      %v2787 = vpack.c.bf16 %v2616, %v2613
      %v2788 = vpack.c.bf16 %v2617, %v2614
      %v2789 = vpack.c.bf16 %v2618, %v2615
      %v2790 = vpack.c.bf16 %v2622, %v2619
      %v2791 = vpack.c.bf16 %v2623, %v2620
      %v2792 = vpack.c.bf16 %v2624, %v2621
      %v2961 = vunpack.c.l.b16 %v2625
      %v2962 = vunpack.c.l.b16 %v2626
      %v2963 = vunpack.c.l.b16 %v2627
      %v2964 = vunpack.c.h.b16 %v2625
      %v2965 = vunpack.c.h.b16 %v2626
      %v2966 = vunpack.c.h.b16 %v2627
      %v2967 = vunpack.c.l.b16 %v2628
      %v2968 = vunpack.c.l.b16 %v2629
      %v2969 = vunpack.c.l.b16 %v2630
      %v2970 = vunpack.c.h.b16 %v2628
      %v2971 = vunpack.c.h.b16 %v2629
      %v2972 = vunpack.c.h.b16 %v2630
      %v2973 = vunpack.c.l.b16 %v2631
      %v2974 = vunpack.c.l.b16 %v2632
      %v2975 = vunpack.c.l.b16 %v2633
      %v2976 = vunpack.c.h.b16 %v2631
      %v2977 = vunpack.c.h.b16 %v2632
      %v2978 = vunpack.c.h.b16 %v2633
      %v2979 = vunpack.c.l.b16 %v2634
      %v2980 = vunpack.c.l.b16 %v2635
      %v2981 = vunpack.c.l.b16 %v2636
      %v2982 = vunpack.c.h.b16 %v2634
      %v2983 = vunpack.c.h.b16 %v2635
      %v2984 = vunpack.c.h.b16 %v2636
      %v2985 = vunpack.c.l.b16 %v2637
      %v2986 = vunpack.c.l.b16 %v2638
      %v2987 = vunpack.c.l.b16 %v2639
      %v2988 = vunpack.c.h.b16 %v2637
      %v2989 = vunpack.c.h.b16 %v2638
      %v2990 = vunpack.c.h.b16 %v2639
      %v2991 = vunpack.c.l.b16 %v2640
      %v2992 = vunpack.c.l.b16 %v2641
      %v2993 = vunpack.c.l.b16 %v2642
      %v2994 = vunpack.c.h.b16 %v2640
      %v2995 = vunpack.c.h.b16 %v2641
      %v2996 = vunpack.c.h.b16 %v2642
      %v2997 = vunpack.c.l.b16 %v2643
      %v2998 = vunpack.c.l.b16 %v2644
      %v2999 = vunpack.c.l.b16 %v2645
      %v3000 = vunpack.c.h.b16 %v2643
      %v3001 = vunpack.c.h.b16 %v2644
      %v3002 = vunpack.c.h.b16 %v2645
      %v3003 = vunpack.c.l.b16 %v2646
      %v3004 = vunpack.c.l.b16 %v2647
      %v3005 = vunpack.c.l.b16 %v2648
      %v3006 = vunpack.c.h.b16 %v2646
      %v3007 = vunpack.c.h.b16 %v2647
      %v3008 = vunpack.c.h.b16 %v2648
      %v3009 = vunpack.c.l.b16 %v2649
      %v3010 = vunpack.c.l.b16 %v2650
      %v3011 = vunpack.c.l.b16 %v2651
      %v3012 = vunpack.c.h.b16 %v2649
      %v3013 = vunpack.c.h.b16 %v2650
      %v3014 = vunpack.c.h.b16 %v2651
      %v3015 = vunpack.c.l.b16 %v2652
      %v3016 = vunpack.c.l.b16 %v2653
      %v3017 = vunpack.c.l.b16 %v2654
      %v3018 = vunpack.c.h.b16 %v2652
      %v3019 = vunpack.c.h.b16 %v2653
      %v3020 = vunpack.c.h.b16 %v2654
      %v3021 = vunpack.c.l.b16 %v2655
      %v3022 = vunpack.c.l.b16 %v2656
      %v3023 = vunpack.c.l.b16 %v2657
      %v3024 = vunpack.c.h.b16 %v2655
      %v3025 = vunpack.c.h.b16 %v2656
      %v3026 = vunpack.c.h.b16 %v2657
      %v3027 = vunpack.c.l.b16 %v2658
      %v3028 = vunpack.c.l.b16 %v2659
      %v3029 = vunpack.c.l.b16 %v2660
      %v3030 = vunpack.c.h.b16 %v2658
      %v3031 = vunpack.c.h.b16 %v2659
      %v3032 = vunpack.c.h.b16 %v2660
      %v3033 = vunpack.c.l.b16 %v2661
      %v3034 = vunpack.c.l.b16 %v2662
      %v3035 = vunpack.c.l.b16 %v2663
      %v3036 = vunpack.c.h.b16 %v2661
      %v3037 = vunpack.c.h.b16 %v2662
      %v3038 = vunpack.c.h.b16 %v2663
      %v3039 = vunpack.c.l.b16 %v2664
      %v3040 = vunpack.c.l.b16 %v2665
      %v3041 = vunpack.c.l.b16 %v2666
      %v3042 = vunpack.c.h.b16 %v2664
      %v3043 = vunpack.c.h.b16 %v2665
      %v3044 = vunpack.c.h.b16 %v2666
      %v3045 = vunpack.c.l.b16 %v2667
      %v3046 = vunpack.c.l.b16 %v2668
      %v3047 = vunpack.c.l.b16 %v2669
      %v3048 = vunpack.c.h.b16 %v2667
      %v3049 = vunpack.c.h.b16 %v2668
      %v3050 = vunpack.c.h.b16 %v2669
      %v3051 = vunpack.c.l.b16 %v2670
      %v3052 = vunpack.c.l.b16 %v2671
      %v3053 = vunpack.c.l.b16 %v2672
      %v3054 = vunpack.c.h.b16 %v2670
      %v3055 = vunpack.c.h.b16 %v2671
      %v3056 = vunpack.c.h.b16 %v2672
      %v3057 = vunpack.c.l.b16 %v2673
      %v3058 = vunpack.c.l.b16 %v2674
      %v3059 = vunpack.c.l.b16 %v2675
      %v3060 = vunpack.c.h.b16 %v2673
      %v3061 = vunpack.c.h.b16 %v2674
      %v3062 = vunpack.c.h.b16 %v2675
      %v3063 = vunpack.c.l.b16 %v2676
      %v3064 = vunpack.c.l.b16 %v2677
      %v3065 = vunpack.c.l.b16 %v2678
      %v3066 = vunpack.c.h.b16 %v2676
      %v3067 = vunpack.c.h.b16 %v2677
      %v3068 = vunpack.c.h.b16 %v2678
      %v3069 = vunpack.c.l.b16 %v2679
      %v3070 = vunpack.c.l.b16 %v2680
      %v3071 = vunpack.c.l.b16 %v2681
      %v3072 = vunpack.c.h.b16 %v2679
      %v3073 = vunpack.c.h.b16 %v2680
      %v3074 = vunpack.c.h.b16 %v2681
      %v3075 = vunpack.c.l.b16 %v2682
      %v3076 = vunpack.c.l.b16 %v2683
      %v3077 = vunpack.c.l.b16 %v2684
      %v3078 = vunpack.c.h.b16 %v2682
      %v3079 = vunpack.c.h.b16 %v2683
      %v3080 = vunpack.c.h.b16 %v2684
      %v3081 = vunpack.c.l.b16 %v2685
      %v3082 = vunpack.c.l.b16 %v2686
      %v3083 = vunpack.c.l.b16 %v2687
      %v3084 = vunpack.c.h.b16 %v2685
      %v3085 = vunpack.c.h.b16 %v2686
      %v3086 = vunpack.c.h.b16 %v2687
      %v3087 = vunpack.c.l.b16 %v2688
      %v3088 = vunpack.c.l.b16 %v2689
      %v3089 = vunpack.c.l.b16 %v2690
      %v3090 = vunpack.c.h.b16 %v2688
      %v3091 = vunpack.c.h.b16 %v2689
      %v3092 = vunpack.c.h.b16 %v2690
      %v3093 = vunpack.c.l.b16 %v2691
      %v3094 = vunpack.c.l.b16 %v2692
      %v3095 = vunpack.c.l.b16 %v2693
      %v3096 = vunpack.c.h.b16 %v2691
      %v3097 = vunpack.c.h.b16 %v2692
      %v3098 = vunpack.c.h.b16 %v2693
      %v3099 = vunpack.c.l.b16 %v2694
      %v3100 = vunpack.c.l.b16 %v2695
      %v3101 = vunpack.c.l.b16 %v2696
      %v3102 = vunpack.c.h.b16 %v2694
      %v3103 = vunpack.c.h.b16 %v2695
      %v3104 = vunpack.c.h.b16 %v2696
      %v3105 = vunpack.c.l.b16 %v2697
      %v3106 = vunpack.c.l.b16 %v2698
      %v3107 = vunpack.c.l.b16 %v2699
      %v3108 = vunpack.c.h.b16 %v2697
      %v3109 = vunpack.c.h.b16 %v2698
      %v3110 = vunpack.c.h.b16 %v2699
      %v3111 = vunpack.c.l.b16 %v2700
      %v3112 = vunpack.c.l.b16 %v2701
      %v3113 = vunpack.c.l.b16 %v2702
      %v3114 = vunpack.c.h.b16 %v2700
      %v3115 = vunpack.c.h.b16 %v2701
      %v3116 = vunpack.c.h.b16 %v2702
      %v3117 = vunpack.c.l.b16 %v2703
      %v3118 = vunpack.c.l.b16 %v2704
      %v3119 = vunpack.c.l.b16 %v2705
      %v3120 = vunpack.c.h.b16 %v2703
      %v3121 = vunpack.c.h.b16 %v2704
      %v3122 = vunpack.c.h.b16 %v2705
      %v3123 = vunpack.c.l.b16 %v2706
      %v3124 = vunpack.c.l.b16 %v2707
      %v3125 = vunpack.c.l.b16 %v2708
      %v3126 = vunpack.c.h.b16 %v2706
      %v3127 = vunpack.c.h.b16 %v2707
      %v3128 = vunpack.c.h.b16 %v2708
      %v3129 = vunpack.c.l.b16 %v2709
      %v3130 = vunpack.c.l.b16 %v2710
      %v3131 = vunpack.c.l.b16 %v2711
      %v3132 = vunpack.c.h.b16 %v2709
      %v3133 = vunpack.c.h.b16 %v2710
      %v3134 = vunpack.c.h.b16 %v2711
      %v3135 = vunpack.c.l.b16 %v2712
      %v3136 = vunpack.c.l.b16 %v2713
      %v3137 = vunpack.c.l.b16 %v2714
      %v3138 = vunpack.c.h.b16 %v2712
      %v3139 = vunpack.c.h.b16 %v2713
      %v3140 = vunpack.c.h.b16 %v2714
      %v3141 = vunpack.c.l.b16 %v2715
      %v3142 = vunpack.c.l.b16 %v2716
      %v3143 = vunpack.c.l.b16 %v2717
      %v3144 = vunpack.c.h.b16 %v2715
      %v3145 = vunpack.c.h.b16 %v2716
      %v3146 = vunpack.c.h.b16 %v2717
      %v3147 = vunpack.c.l.b16 %v2718
      %v3148 = vunpack.c.l.b16 %v2719
      %v3149 = vunpack.c.l.b16 %v2720
      %v3150 = vunpack.c.h.b16 %v2718
      %v3151 = vunpack.c.h.b16 %v2719
      %v3152 = vunpack.c.h.b16 %v2720
      %v3153 = vunpack.c.l.b16 %v2721
      %v3154 = vunpack.c.l.b16 %v2722
      %v3155 = vunpack.c.l.b16 %v2723
      %v3156 = vunpack.c.h.b16 %v2721
      %v3157 = vunpack.c.h.b16 %v2722
      %v3158 = vunpack.c.h.b16 %v2723
      %v3159 = vunpack.c.l.b16 %v2724
      %v3160 = vunpack.c.l.b16 %v2725
      %v3161 = vunpack.c.l.b16 %v2726
      %v3162 = vunpack.c.h.b16 %v2724
      %v3163 = vunpack.c.h.b16 %v2725
      %v3164 = vunpack.c.h.b16 %v2726
      %v3165 = vunpack.c.l.b16 %v2727
      %v3166 = vunpack.c.l.b16 %v2728
      %v3167 = vunpack.c.l.b16 %v2729
      %v3168 = vunpack.c.h.b16 %v2727
      %v3169 = vunpack.c.h.b16 %v2728
      %v3170 = vunpack.c.h.b16 %v2729
      %v3171 = vunpack.c.l.b16 %v2730
      %v3172 = vunpack.c.l.b16 %v2731
      %v3173 = vunpack.c.l.b16 %v2732
      %v3174 = vunpack.c.h.b16 %v2730
      %v3175 = vunpack.c.h.b16 %v2731
      %v3176 = vunpack.c.h.b16 %v2732
      %v3177 = vunpack.c.l.b16 %v2733
      %v3178 = vunpack.c.l.b16 %v2734
      %v3179 = vunpack.c.l.b16 %v2735
      %v3180 = vunpack.c.h.b16 %v2733
      %v3181 = vunpack.c.h.b16 %v2734
      %v3182 = vunpack.c.h.b16 %v2735
      %v3183 = vunpack.c.l.b16 %v2736
      %v3184 = vunpack.c.l.b16 %v2737
      %v3185 = vunpack.c.l.b16 %v2738
      %v3186 = vunpack.c.h.b16 %v2736
      %v3187 = vunpack.c.h.b16 %v2737
      %v3188 = vunpack.c.h.b16 %v2738
      %v3189 = vunpack.c.l.b16 %v2739
      %v3190 = vunpack.c.l.b16 %v2740
      %v3191 = vunpack.c.l.b16 %v2741
      %v3192 = vunpack.c.h.b16 %v2739
      %v3193 = vunpack.c.h.b16 %v2740
      %v3194 = vunpack.c.h.b16 %v2741
      %v3195 = vunpack.c.l.b16 %v2742
      %v3196 = vunpack.c.l.b16 %v2743
      %v3197 = vunpack.c.l.b16 %v2744
      %v3198 = vunpack.c.h.b16 %v2742
      %v3199 = vunpack.c.h.b16 %v2743
      %v3200 = vunpack.c.h.b16 %v2744
      %v3201 = vunpack.c.l.b16 %v2745
      %v3202 = vunpack.c.l.b16 %v2746
      %v3203 = vunpack.c.l.b16 %v2747
      %v3204 = vunpack.c.h.b16 %v2745
      %v3205 = vunpack.c.h.b16 %v2746
      %v3206 = vunpack.c.h.b16 %v2747
      %v3207 = vunpack.c.l.b16 %v2748
      %v3208 = vunpack.c.l.b16 %v2749
      %v3209 = vunpack.c.l.b16 %v2750
      %v3210 = vunpack.c.h.b16 %v2748
      %v3211 = vunpack.c.h.b16 %v2749
      %v3212 = vunpack.c.h.b16 %v2750
      %v3213 = vunpack.c.l.b16 %v2751
      %v3214 = vunpack.c.l.b16 %v2752
      %v3215 = vunpack.c.l.b16 %v2753
      %v3216 = vunpack.c.h.b16 %v2751
      %v3217 = vunpack.c.h.b16 %v2752
      %v3218 = vunpack.c.h.b16 %v2753
      %v3219 = vunpack.c.l.b16 %v2754
      %v3220 = vunpack.c.l.b16 %v2755
      %v3221 = vunpack.c.l.b16 %v2756
      %v3222 = vunpack.c.h.b16 %v2754
      %v3223 = vunpack.c.h.b16 %v2755
      %v3224 = vunpack.c.h.b16 %v2756
      %v3225 = vunpack.c.l.b16 %v2757
      %v3226 = vunpack.c.l.b16 %v2758
      %v3227 = vunpack.c.l.b16 %v2759
      %v3228 = vunpack.c.h.b16 %v2757
      %v3229 = vunpack.c.h.b16 %v2758
      %v3230 = vunpack.c.h.b16 %v2759
      %v3231 = vunpack.c.l.b16 %v2760
      %v3232 = vunpack.c.l.b16 %v2761
      %v3233 = vunpack.c.l.b16 %v2762
      %v3234 = vunpack.c.h.b16 %v2760
      %v3235 = vunpack.c.h.b16 %v2761
      %v3236 = vunpack.c.h.b16 %v2762
      %v3237 = vunpack.c.l.b16 %v2763
      %v3238 = vunpack.c.l.b16 %v2764
      %v3239 = vunpack.c.l.b16 %v2765
      %v3240 = vunpack.c.h.b16 %v2763
      %v3241 = vunpack.c.h.b16 %v2764
      %v3242 = vunpack.c.h.b16 %v2765
      %v3243 = vunpack.c.l.b16 %v2766
      %v3244 = vunpack.c.l.b16 %v2767
      %v3245 = vunpack.c.l.b16 %v2768
      %v3246 = vunpack.c.h.b16 %v2766
      %v3247 = vunpack.c.h.b16 %v2767
      %v3248 = vunpack.c.h.b16 %v2768
      %v3249 = vunpack.c.l.b16 %v2769
      %v3250 = vunpack.c.l.b16 %v2770
      %v3251 = vunpack.c.l.b16 %v2771
      %v3252 = vunpack.c.h.b16 %v2769
      %v3253 = vunpack.c.h.b16 %v2770
      %v3254 = vunpack.c.h.b16 %v2771
      %v3255 = vunpack.c.l.b16 %v2772
      %v3256 = vunpack.c.l.b16 %v2773
      %v3257 = vunpack.c.l.b16 %v2774
      %v3258 = vunpack.c.h.b16 %v2772
      %v3259 = vunpack.c.h.b16 %v2773
      %v3260 = vunpack.c.h.b16 %v2774
      %v3261 = vunpack.c.l.b16 %v2775
      %v3262 = vunpack.c.l.b16 %v2776
      %v3263 = vunpack.c.l.b16 %v2777
      %v3264 = vunpack.c.h.b16 %v2775
      %v3265 = vunpack.c.h.b16 %v2776
      %v3266 = vunpack.c.h.b16 %v2777
      %v3267 = vunpack.c.l.b16 %v2778
      %v3268 = vunpack.c.l.b16 %v2779
      %v3269 = vunpack.c.l.b16 %v2780
      %v3270 = vunpack.c.h.b16 %v2778
      %v3271 = vunpack.c.h.b16 %v2779
      %v3272 = vunpack.c.h.b16 %v2780
      %v3273 = vunpack.c.l.b16 %v2781
      %v3274 = vunpack.c.l.b16 %v2782
      %v3275 = vunpack.c.l.b16 %v2783
      %v3276 = vunpack.c.h.b16 %v2781
      %v3277 = vunpack.c.h.b16 %v2782
      %v3278 = vunpack.c.h.b16 %v2783
      %v3279 = vunpack.c.l.b16 %v2784
      %v3280 = vunpack.c.l.b16 %v2785
      %v3281 = vunpack.c.l.b16 %v2786
      %v3282 = vunpack.c.h.b16 %v2784
      %v3283 = vunpack.c.h.b16 %v2785
      %v3284 = vunpack.c.h.b16 %v2786
      %v3285 = vunpack.c.l.b16 %v2787
      %v3286 = vunpack.c.l.b16 %v2788
      %v3287 = vunpack.c.l.b16 %v2789
      %v3288 = vunpack.c.h.b16 %v2787
      %v3289 = vunpack.c.h.b16 %v2788
      %v3290 = vunpack.c.h.b16 %v2789
      %v3291 = vunpack.c.l.b16 %v2790
      %v3292 = vunpack.c.l.b16 %v2791
      %v3293 = vunpack.c.l.b16 %v2792
      %v3294 = vunpack.c.h.b16 %v2790
      %v3295 = vunpack.c.h.b16 %v2791
      %v3296 = vunpack.c.h.b16 %v2792
      %v3297 = vpack.c.b16 %v2962, %v2961
      %v3298 = vpack.c.b16 %v2963, %v2963
      %v3299 = vpack.c.b16 %v2965, %v2964
      %v3300 = vpack.c.b16 %v2966, %v2966
      %v3301 = vpack.c.b16 %v2968, %v2967
      %v3302 = vpack.c.b16 %v2969, %v2969
      %v3303 = vpack.c.b16 %v2971, %v2970
      %v3304 = vpack.c.b16 %v2972, %v2972
      %v3305 = vpack.c.b16 %v2974, %v2973
      %v3306 = vpack.c.b16 %v2975, %v2975
      %v3307 = vpack.c.b16 %v2977, %v2976
      %v3308 = vpack.c.b16 %v2978, %v2978
      %v3309 = vpack.c.b16 %v2980, %v2979
      %v3310 = vpack.c.b16 %v2981, %v2981
      %v3311 = vpack.c.b16 %v2983, %v2982
      %v3312 = vpack.c.b16 %v2984, %v2984
      %v3313 = vpack.c.b16 %v2986, %v2985
      %v3314 = vpack.c.b16 %v2987, %v2987
      %v3315 = vpack.c.b16 %v2989, %v2988
      %v3316 = vpack.c.b16 %v2990, %v2990
      %v3317 = vpack.c.b16 %v2992, %v2991
      %v3318 = vpack.c.b16 %v2993, %v2993
      %v3319 = vpack.c.b16 %v2995, %v2994
      %v3320 = vpack.c.b16 %v2996, %v2996
      %v3321 = vpack.c.b16 %v2998, %v2997
      %v3322 = vpack.c.b16 %v2999, %v2999
      %v3323 = vpack.c.b16 %v3001, %v3000
      %v3324 = vpack.c.b16 %v3002, %v3002
      %v3325 = vpack.c.b16 %v3004, %v3003
      %v3326 = vpack.c.b16 %v3005, %v3005
      %v3327 = vpack.c.b16 %v3007, %v3006
      %v3328 = vpack.c.b16 %v3008, %v3008
      %v3329 = vpack.c.b16 %v3010, %v3009
      %v3330 = vpack.c.b16 %v3011, %v3011
      %v3331 = vpack.c.b16 %v3013, %v3012
      %v3332 = vpack.c.b16 %v3014, %v3014
      %v3333 = vpack.c.b16 %v3016, %v3015
      %v3334 = vpack.c.b16 %v3017, %v3017
      %v3335 = vpack.c.b16 %v3019, %v3018
      %v3336 = vpack.c.b16 %v3020, %v3020
      %v3337 = vpack.c.b16 %v3022, %v3021
      %v3338 = vpack.c.b16 %v3023, %v3023
      %v3339 = vpack.c.b16 %v3025, %v3024
      %v3340 = vpack.c.b16 %v3026, %v3026
      %v3341 = vpack.c.b16 %v3028, %v3027
      %v3342 = vpack.c.b16 %v3029, %v3029
      %v3343 = vpack.c.b16 %v3031, %v3030
      %v3344 = vpack.c.b16 %v3032, %v3032
      %v3345 = vpack.c.b16 %v3034, %v3033
      %v3346 = vpack.c.b16 %v3035, %v3035
      %v3347 = vpack.c.b16 %v3037, %v3036
      %v3348 = vpack.c.b16 %v3038, %v3038
      %v3349 = vpack.c.b16 %v3040, %v3039
      %v3350 = vpack.c.b16 %v3041, %v3041
      %v3351 = vpack.c.b16 %v3043, %v3042
      %v3352 = vpack.c.b16 %v3044, %v3044
      %v3353 = vpack.c.b16 %v3046, %v3045
      %v3354 = vpack.c.b16 %v3047, %v3047
      %v3355 = vpack.c.b16 %v3049, %v3048
      %v3356 = vpack.c.b16 %v3050, %v3050
      %v3357 = vpack.c.b16 %v3052, %v3051
      %v3358 = vpack.c.b16 %v3053, %v3053
      %v3359 = vpack.c.b16 %v3055, %v3054
      %v3360 = vpack.c.b16 %v3056, %v3056
      %v3361 = vpack.c.b16 %v3058, %v3057
      %v3362 = vpack.c.b16 %v3059, %v3059
      %v3363 = vpack.c.b16 %v3061, %v3060
      %v3364 = vpack.c.b16 %v3062, %v3062
      %v3365 = vpack.c.b16 %v3064, %v3063
      %v3366 = vpack.c.b16 %v3065, %v3065
      %v3367 = vpack.c.b16 %v3067, %v3066
      %v3368 = vpack.c.b16 %v3068, %v3068
      %v3369 = vpack.c.b16 %v3070, %v3069
      %v3370 = vpack.c.b16 %v3071, %v3071
      %v3371 = vpack.c.b16 %v3073, %v3072
      %v3372 = vpack.c.b16 %v3074, %v3074
      %v3373 = vpack.c.b16 %v3076, %v3075
      %v3374 = vpack.c.b16 %v3077, %v3077
      %v3375 = vpack.c.b16 %v3079, %v3078
      %v3376 = vpack.c.b16 %v3080, %v3080
      %v3377 = vpack.c.b16 %v3082, %v3081
      %v3378 = vpack.c.b16 %v3083, %v3083
      %v3379 = vpack.c.b16 %v3085, %v3084
      %v3380 = vpack.c.b16 %v3086, %v3086
      %v3381 = vpack.c.b16 %v3088, %v3087
      %v3382 = vpack.c.b16 %v3089, %v3089
      %v3383 = vpack.c.b16 %v3091, %v3090
      %v3384 = vpack.c.b16 %v3092, %v3092
      %v3385 = vpack.c.b16 %v3094, %v3093
      %v3386 = vpack.c.b16 %v3095, %v3095
      %v3387 = vpack.c.b16 %v3097, %v3096
      %v3388 = vpack.c.b16 %v3098, %v3098
      %v3389 = vpack.c.b16 %v3100, %v3099
      %v3390 = vpack.c.b16 %v3101, %v3101
      %v3391 = vpack.c.b16 %v3103, %v3102
      %v3392 = vpack.c.b16 %v3104, %v3104
      %v3393 = vpack.c.b16 %v3106, %v3105
      %v3394 = vpack.c.b16 %v3107, %v3107
      %v3395 = vpack.c.b16 %v3109, %v3108
      %v3396 = vpack.c.b16 %v3110, %v3110
      %v3397 = vpack.c.b16 %v3112, %v3111
      %v3398 = vpack.c.b16 %v3113, %v3113
      %v3399 = vpack.c.b16 %v3115, %v3114
      %v3400 = vpack.c.b16 %v3116, %v3116
      %v3401 = vpack.c.b16 %v3118, %v3117
      %v3402 = vpack.c.b16 %v3119, %v3119
      %v3403 = vpack.c.b16 %v3121, %v3120
      %v3404 = vpack.c.b16 %v3122, %v3122
      %v3405 = vpack.c.b16 %v3124, %v3123
      %v3406 = vpack.c.b16 %v3125, %v3125
      %v3407 = vpack.c.b16 %v3127, %v3126
      %v3408 = vpack.c.b16 %v3128, %v3128
      %v3409 = vpack.c.b16 %v3130, %v3129
      %v3410 = vpack.c.b16 %v3131, %v3131
      %v3411 = vpack.c.b16 %v3133, %v3132
      %v3412 = vpack.c.b16 %v3134, %v3134
      %v3413 = vpack.c.b16 %v3136, %v3135
      %v3414 = vpack.c.b16 %v3137, %v3137
      %v3415 = vpack.c.b16 %v3139, %v3138
      %v3416 = vpack.c.b16 %v3140, %v3140
      %v3417 = vpack.c.b16 %v3142, %v3141
      %v3418 = vpack.c.b16 %v3143, %v3143
      %v3419 = vpack.c.b16 %v3145, %v3144
      %v3420 = vpack.c.b16 %v3146, %v3146
      %v3421 = vpack.c.b16 %v3148, %v3147
      %v3422 = vpack.c.b16 %v3149, %v3149
      %v3423 = vpack.c.b16 %v3151, %v3150
      %v3424 = vpack.c.b16 %v3152, %v3152
      %v3425 = vpack.c.b16 %v3154, %v3153
      %v3426 = vpack.c.b16 %v3155, %v3155
      %v3427 = vpack.c.b16 %v3157, %v3156
      %v3428 = vpack.c.b16 %v3158, %v3158
      %v3429 = vpack.c.b16 %v3160, %v3159
      %v3430 = vpack.c.b16 %v3161, %v3161
      %v3431 = vpack.c.b16 %v3163, %v3162
      %v3432 = vpack.c.b16 %v3164, %v3164
      %v3433 = vpack.c.b16 %v3166, %v3165
      %v3434 = vpack.c.b16 %v3167, %v3167
      %v3435 = vpack.c.b16 %v3169, %v3168
      %v3436 = vpack.c.b16 %v3170, %v3170
      %v3437 = vpack.c.b16 %v3172, %v3171
      %v3438 = vpack.c.b16 %v3173, %v3173
      %v3439 = vpack.c.b16 %v3175, %v3174
      %v3440 = vpack.c.b16 %v3176, %v3176
      %v3441 = vpack.c.b16 %v3178, %v3177
      %v3442 = vpack.c.b16 %v3179, %v3179
      %v3443 = vpack.c.b16 %v3181, %v3180
      %v3444 = vpack.c.b16 %v3182, %v3182
      %v3445 = vpack.c.b16 %v3184, %v3183
      %v3446 = vpack.c.b16 %v3185, %v3185
      %v3447 = vpack.c.b16 %v3187, %v3186
      %v3448 = vpack.c.b16 %v3188, %v3188
      %v3449 = vpack.c.b16 %v3190, %v3189
      %v3450 = vpack.c.b16 %v3191, %v3191
      %v3451 = vpack.c.b16 %v3193, %v3192
      %v3452 = vpack.c.b16 %v3194, %v3194
      %v3453 = vpack.c.b16 %v3196, %v3195
      %v3454 = vpack.c.b16 %v3197, %v3197
      %v3455 = vpack.c.b16 %v3199, %v3198
      %v3456 = vpack.c.b16 %v3200, %v3200
      %v3457 = vpack.c.b16 %v3202, %v3201
      %v3458 = vpack.c.b16 %v3203, %v3203
      %v3459 = vpack.c.b16 %v3205, %v3204
      %v3460 = vpack.c.b16 %v3206, %v3206
      %v3461 = vpack.c.b16 %v3208, %v3207
      %v3462 = vpack.c.b16 %v3209, %v3209
      %v3463 = vpack.c.b16 %v3211, %v3210
      %v3464 = vpack.c.b16 %v3212, %v3212
      %v3465 = vpack.c.b16 %v3214, %v3213
      %v3466 = vpack.c.b16 %v3215, %v3215
      %v3467 = vpack.c.b16 %v3217, %v3216
      %v3468 = vpack.c.b16 %v3218, %v3218
      %v3469 = vpack.c.b16 %v3220, %v3219
      %v3470 = vpack.c.b16 %v3221, %v3221
      %v3471 = vpack.c.b16 %v3223, %v3222
      %v3472 = vpack.c.b16 %v3224, %v3224
      %v3473 = vpack.c.b16 %v3226, %v3225
      %v3474 = vpack.c.b16 %v3227, %v3227
      %v3475 = vpack.c.b16 %v3229, %v3228
      %v3476 = vpack.c.b16 %v3230, %v3230
      %v3477 = vpack.c.b16 %v3232, %v3231
      %v3478 = vpack.c.b16 %v3233, %v3233
      %v3479 = vpack.c.b16 %v3235, %v3234
      %v3480 = vpack.c.b16 %v3236, %v3236
      %v3481 = vpack.c.b16 %v3238, %v3237
      %v3482 = vpack.c.b16 %v3239, %v3239
      %v3483 = vpack.c.b16 %v3241, %v3240
      %v3484 = vpack.c.b16 %v3242, %v3242
      %v3485 = vpack.c.b16 %v3244, %v3243
      %v3486 = vpack.c.b16 %v3245, %v3245
      %v3487 = vpack.c.b16 %v3247, %v3246
      %v3488 = vpack.c.b16 %v3248, %v3248
      %v3489 = vpack.c.b16 %v3250, %v3249
      %v3490 = vpack.c.b16 %v3251, %v3251
      %v3491 = vpack.c.b16 %v3253, %v3252
      %v3492 = vpack.c.b16 %v3254, %v3254
      %v3493 = vpack.c.b16 %v3256, %v3255
      %v3494 = vpack.c.b16 %v3257, %v3257
      %v3495 = vpack.c.b16 %v3259, %v3258
      %v3496 = vpack.c.b16 %v3260, %v3260
      %v3497 = vpack.c.b16 %v3262, %v3261
      %v3498 = vpack.c.b16 %v3263, %v3263
      %v3499 = vpack.c.b16 %v3265, %v3264
      %v3500 = vpack.c.b16 %v3266, %v3266
      %v3501 = vpack.c.b16 %v3268, %v3267
      %v3502 = vpack.c.b16 %v3269, %v3269
      %v3503 = vpack.c.b16 %v3271, %v3270
      %v3504 = vpack.c.b16 %v3272, %v3272
      %v3505 = vpack.c.b16 %v3274, %v3273
      %v3506 = vpack.c.b16 %v3275, %v3275
      %v3507 = vpack.c.b16 %v3277, %v3276
      %v3508 = vpack.c.b16 %v3278, %v3278
      %v3509 = vpack.c.b16 %v3280, %v3279
      %v3510 = vpack.c.b16 %v3281, %v3281
      %v3511 = vpack.c.b16 %v3283, %v3282
      %v3512 = vpack.c.b16 %v3284, %v3284
      %v3513 = vpack.c.b16 %v3286, %v3285
      %v3514 = vpack.c.b16 %v3287, %v3287
      %v3515 = vpack.c.b16 %v3289, %v3288
      %v3516 = vpack.c.b16 %v3290, %v3290
      %v3517 = vpack.c.b16 %v3292, %v3291
      %v3518 = vpack.c.b16 %v3293, %v3293
      %v3519 = vpack.c.b16 %v3295, %v3294
      %v3520 = vpack.c.b16 %v3296, %v3296
      %3745 = vst [vmem:[%s201] sm:$0xff] %v3297
      %vm3746 = vcmask 871424
      %3747 = vst.msk [vmem:[%s201 + $0x8] sm:$0xf] %vm3746, %v3298
      %3748 = vst [vmem:[%s201 + $0xc] sm:$0xff] %v3299
      %3749 = vst.msk [vmem:[%s201 + $0x14] sm:$0xf] %vm3746, %v3300
      %3750 = vst [vmem:[%s201 + $0x18] sm:$0xff] %v3301
      %3751 = vst.msk [vmem:[%s201 + $0x20] sm:$0xf] %vm3746, %v3302
      %3752 = vst [vmem:[%s201 + $0x24] sm:$0xff] %v3303
      %3753 = vst.msk [vmem:[%s201 + $0x2c] sm:$0xf] %vm3746, %v3304
      %3754 = vst [vmem:[%s201 + $0x30] sm:$0xff] %v3305
      %3755 = vst.msk [vmem:[%s201 + $0x38] sm:$0xf] %vm3746, %v3306
      %3756 = vst [vmem:[%s201 + $0x3c] sm:$0xff] %v3307
      %3757 = vst.msk [vmem:[%s201 + $0x44] sm:$0xf] %vm3746, %v3308
      %3758 = vst [vmem:[%s201 + $0x48] sm:$0xff] %v3309
      %3759 = vst.msk [vmem:[%s201 + $0x50] sm:$0xf] %vm3746, %v3310
      %3760 = vst [vmem:[%s201 + $0x54] sm:$0xff] %v3311
      %3761 = vst.msk [vmem:[%s201 + $0x5c] sm:$0xf] %vm3746, %v3312
      %3762 = vst [vmem:[%s201 + $0x60] sm:$0xff] %v3313
      %3763 = vst.msk [vmem:[%s201 + $0x68] sm:$0xf] %vm3746, %v3314
      %3764 = vst [vmem:[%s201 + $0x6c] sm:$0xff] %v3315
      %3765 = vst.msk [vmem:[%s201 + $0x74] sm:$0xf] %vm3746, %v3316
      %3766 = vst [vmem:[%s201 + $0x78] sm:$0xff] %v3317
      %3767 = vst.msk [vmem:[%s201 + $0x80] sm:$0xf] %vm3746, %v3318
      %3768 = vst [vmem:[%s201 + $0x84] sm:$0xff] %v3319
      %3769 = vst.msk [vmem:[%s201 + $0x8c] sm:$0xf] %vm3746, %v3320
      %3770 = vst [vmem:[%s201 + $0x90] sm:$0xff] %v3321
      %3771 = vst.msk [vmem:[%s201 + $0x98] sm:$0xf] %vm3746, %v3322
      %3772 = vst [vmem:[%s201 + $0x9c] sm:$0xff] %v3323
      %3773 = vst.msk [vmem:[%s201 + $0xa4] sm:$0xf] %vm3746, %v3324
      %3774 = vst [vmem:[%s201 + $0xa8] sm:$0xff] %v3325
      %3775 = vst.msk [vmem:[%s201 + $0xb0] sm:$0xf] %vm3746, %v3326
      %3776 = vst [vmem:[%s201 + $0xb4] sm:$0xff] %v3327
      %3777 = vst.msk [vmem:[%s201 + $0xbc] sm:$0xf] %vm3746, %v3328
      %3778 = vst [vmem:[%s201 + $0xc0] sm:$0xff] %v3329
      %3779 = vst.msk [vmem:[%s201 + $0xc8] sm:$0xf] %vm3746, %v3330
      %3780 = vst [vmem:[%s201 + $0xcc] sm:$0xff] %v3331
      %3781 = vst.msk [vmem:[%s201 + $0xd4] sm:$0xf] %vm3746, %v3332
      %3782 = vst [vmem:[%s201 + $0xd8] sm:$0xff] %v3333
      %3783 = vst.msk [vmem:[%s201 + $0xe0] sm:$0xf] %vm3746, %v3334
      %3784 = vst [vmem:[%s201 + $0xe4] sm:$0xff] %v3335
      %3785 = vst.msk [vmem:[%s201 + $0xec] sm:$0xf] %vm3746, %v3336
      %3786 = vst [vmem:[%s201 + $0xf0] sm:$0xff] %v3337
      %3787 = vst.msk [vmem:[%s201 + $0xf8] sm:$0xf] %vm3746, %v3338
      %3788 = vst [vmem:[%s201 + $0xfc] sm:$0xff] %v3339
      %3789 = vst.msk [vmem:[%s201 + $0x104] sm:$0xf] %vm3746, %v3340
      %3790 = vst [vmem:[%s201 + $0x108] sm:$0xff] %v3341
      %3791 = vst.msk [vmem:[%s201 + $0x110] sm:$0xf] %vm3746, %v3342
      %3792 = vst [vmem:[%s201 + $0x114] sm:$0xff] %v3343
      %3793 = vst.msk [vmem:[%s201 + $0x11c] sm:$0xf] %vm3746, %v3344
      %3794 = vst [vmem:[%s201 + $0x120] sm:$0xff] %v3345
      %3795 = vst.msk [vmem:[%s201 + $0x128] sm:$0xf] %vm3746, %v3346
      %3796 = vst [vmem:[%s201 + $0x12c] sm:$0xff] %v3347
      %3797 = vst.msk [vmem:[%s201 + $0x134] sm:$0xf] %vm3746, %v3348
      %3798 = vst [vmem:[%s201 + $0x138] sm:$0xff] %v3349
      %3799 = vst.msk [vmem:[%s201 + $0x140] sm:$0xf] %vm3746, %v3350
      %3800 = vst [vmem:[%s201 + $0x144] sm:$0xff] %v3351
      %3801 = vst.msk [vmem:[%s201 + $0x14c] sm:$0xf] %vm3746, %v3352
      %3802 = vst [vmem:[%s201 + $0x150] sm:$0xff] %v3353
      %3803 = vst.msk [vmem:[%s201 + $0x158] sm:$0xf] %vm3746, %v3354
      %3804 = vst [vmem:[%s201 + $0x15c] sm:$0xff] %v3355
      %3805 = vst.msk [vmem:[%s201 + $0x164] sm:$0xf] %vm3746, %v3356
      %3806 = vst [vmem:[%s201 + $0x168] sm:$0xff] %v3357
      %3807 = vst.msk [vmem:[%s201 + $0x170] sm:$0xf] %vm3746, %v3358
      %3808 = vst [vmem:[%s201 + $0x174] sm:$0xff] %v3359
      %3809 = vst.msk [vmem:[%s201 + $0x17c] sm:$0xf] %vm3746, %v3360
      %3810 = vst [vmem:[%s201 + $0x180] sm:$0xff] %v3361
      %3811 = vst.msk [vmem:[%s201 + $0x188] sm:$0xf] %vm3746, %v3362
      %3812 = vst [vmem:[%s201 + $0x18c] sm:$0xff] %v3363
      %3813 = vst.msk [vmem:[%s201 + $0x194] sm:$0xf] %vm3746, %v3364
      %3814 = vst [vmem:[%s201 + $0x198] sm:$0xff] %v3365
      %3815 = vst.msk [vmem:[%s201 + $0x1a0] sm:$0xf] %vm3746, %v3366
      %3816 = vst [vmem:[%s201 + $0x1a4] sm:$0xff] %v3367
      %3817 = vst.msk [vmem:[%s201 + $0x1ac] sm:$0xf] %vm3746, %v3368
      %3818 = vst [vmem:[%s201 + $0x1b0] sm:$0xff] %v3369
      %3819 = vst.msk [vmem:[%s201 + $0x1b8] sm:$0xf] %vm3746, %v3370
      %3820 = vst [vmem:[%s201 + $0x1bc] sm:$0xff] %v3371
      %3821 = vst.msk [vmem:[%s201 + $0x1c4] sm:$0xf] %vm3746, %v3372
      %3822 = vst [vmem:[%s201 + $0x1c8] sm:$0xff] %v3373
      %3823 = vst.msk [vmem:[%s201 + $0x1d0] sm:$0xf] %vm3746, %v3374
      %3824 = vst [vmem:[%s201 + $0x1d4] sm:$0xff] %v3375
      %3825 = vst.msk [vmem:[%s201 + $0x1dc] sm:$0xf] %vm3746, %v3376
      %3826 = vst [vmem:[%s201 + $0x1e0] sm:$0xff] %v3377
      %3827 = vst.msk [vmem:[%s201 + $0x1e8] sm:$0xf] %vm3746, %v3378
      %3828 = vst [vmem:[%s201 + $0x1ec] sm:$0xff] %v3379
      %3829 = vst.msk [vmem:[%s201 + $0x1f4] sm:$0xf] %vm3746, %v3380
      %3830 = vst [vmem:[%s201 + $0x1f8] sm:$0xff] %v3381
      %3831 = vst.msk [vmem:[%s201 + $0x200] sm:$0xf] %vm3746, %v3382
      %3832 = vst [vmem:[%s201 + $0x204] sm:$0xff] %v3383
      %3833 = vst.msk [vmem:[%s201 + $0x20c] sm:$0xf] %vm3746, %v3384
      %3834 = vst [vmem:[%s201 + $0x210] sm:$0xff] %v3385
      %3835 = vst.msk [vmem:[%s201 + $0x218] sm:$0xf] %vm3746, %v3386
      %3836 = vst [vmem:[%s201 + $0x21c] sm:$0xff] %v3387
      %3837 = vst.msk [vmem:[%s201 + $0x224] sm:$0xf] %vm3746, %v3388
      %3838 = vst [vmem:[%s201 + $0x228] sm:$0xff] %v3389
      %3839 = vst.msk [vmem:[%s201 + $0x230] sm:$0xf] %vm3746, %v3390
      %3840 = vst [vmem:[%s201 + $0x234] sm:$0xff] %v3391
      %3841 = vst.msk [vmem:[%s201 + $0x23c] sm:$0xf] %vm3746, %v3392
      %3842 = vst [vmem:[%s201 + $0x240] sm:$0xff] %v3393
      %3843 = vst.msk [vmem:[%s201 + $0x248] sm:$0xf] %vm3746, %v3394
      %3844 = vst [vmem:[%s201 + $0x24c] sm:$0xff] %v3395
      %3845 = vst.msk [vmem:[%s201 + $0x254] sm:$0xf] %vm3746, %v3396
      %3846 = vst [vmem:[%s201 + $0x258] sm:$0xff] %v3397
      %3847 = vst.msk [vmem:[%s201 + $0x260] sm:$0xf] %vm3746, %v3398
      %3848 = vst [vmem:[%s201 + $0x264] sm:$0xff] %v3399
      %3849 = vst.msk [vmem:[%s201 + $0x26c] sm:$0xf] %vm3746, %v3400
      %3850 = vst [vmem:[%s201 + $0x270] sm:$0xff] %v3401
      %3851 = vst.msk [vmem:[%s201 + $0x278] sm:$0xf] %vm3746, %v3402
      %3852 = vst [vmem:[%s201 + $0x27c] sm:$0xff] %v3403
      %3853 = vst.msk [vmem:[%s201 + $0x284] sm:$0xf] %vm3746, %v3404
      %3854 = vst [vmem:[%s201 + $0x288] sm:$0xff] %v3405
      %3855 = vst.msk [vmem:[%s201 + $0x290] sm:$0xf] %vm3746, %v3406
      %3856 = vst [vmem:[%s201 + $0x294] sm:$0xff] %v3407
      %3857 = vst.msk [vmem:[%s201 + $0x29c] sm:$0xf] %vm3746, %v3408
      %3858 = vst [vmem:[%s201 + $0x2a0] sm:$0xff] %v3409
      %3859 = vst.msk [vmem:[%s201 + $0x2a8] sm:$0xf] %vm3746, %v3410
      %3860 = vst [vmem:[%s201 + $0x2ac] sm:$0xff] %v3411
      %3861 = vst.msk [vmem:[%s201 + $0x2b4] sm:$0xf] %vm3746, %v3412
      %3862 = vst [vmem:[%s201 + $0x2b8] sm:$0xff] %v3413
      %3863 = vst.msk [vmem:[%s201 + $0x2c0] sm:$0xf] %vm3746, %v3414
      %3864 = vst [vmem:[%s201 + $0x2c4] sm:$0xff] %v3415
      %3865 = vst.msk [vmem:[%s201 + $0x2cc] sm:$0xf] %vm3746, %v3416
      %3866 = vst [vmem:[%s201 + $0x2d0] sm:$0xff] %v3417
      %3867 = vst.msk [vmem:[%s201 + $0x2d8] sm:$0xf] %vm3746, %v3418
      %3868 = vst [vmem:[%s201 + $0x2dc] sm:$0xff] %v3419
      %3869 = vst.msk [vmem:[%s201 + $0x2e4] sm:$0xf] %vm3746, %v3420
      %3870 = vst [vmem:[%s201 + $0x2e8] sm:$0xff] %v3421
      %3871 = vst.msk [vmem:[%s201 + $0x2f0] sm:$0xf] %vm3746, %v3422
      %3872 = vst [vmem:[%s201 + $0x2f4] sm:$0xff] %v3423
      %3873 = vst.msk [vmem:[%s201 + $0x2fc] sm:$0xf] %vm3746, %v3424
      %3874 = vst [vmem:[%s201 + $0x300] sm:$0xff] %v3425
      %3875 = vst.msk [vmem:[%s201 + $0x308] sm:$0xf] %vm3746, %v3426
      %3876 = vst [vmem:[%s201 + $0x30c] sm:$0xff] %v3427
      %3877 = vst.msk [vmem:[%s201 + $0x314] sm:$0xf] %vm3746, %v3428
      %3878 = vst [vmem:[%s201 + $0x318] sm:$0xff] %v3429
      %3879 = vst.msk [vmem:[%s201 + $0x320] sm:$0xf] %vm3746, %v3430
      %3880 = vst [vmem:[%s201 + $0x324] sm:$0xff] %v3431
      %3881 = vst.msk [vmem:[%s201 + $0x32c] sm:$0xf] %vm3746, %v3432
      %3882 = vst [vmem:[%s201 + $0x330] sm:$0xff] %v3433
      %3883 = vst.msk [vmem:[%s201 + $0x338] sm:$0xf] %vm3746, %v3434
      %3884 = vst [vmem:[%s201 + $0x33c] sm:$0xff] %v3435
      %3885 = vst.msk [vmem:[%s201 + $0x344] sm:$0xf] %vm3746, %v3436
      %3886 = vst [vmem:[%s201 + $0x348] sm:$0xff] %v3437
      %3887 = vst.msk [vmem:[%s201 + $0x350] sm:$0xf] %vm3746, %v3438
      %3888 = vst [vmem:[%s201 + $0x354] sm:$0xff] %v3439
      %3889 = vst.msk [vmem:[%s201 + $0x35c] sm:$0xf] %vm3746, %v3440
      %3890 = vst [vmem:[%s201 + $0x360] sm:$0xff] %v3441
      %3891 = vst.msk [vmem:[%s201 + $0x368] sm:$0xf] %vm3746, %v3442
      %3892 = vst [vmem:[%s201 + $0x36c] sm:$0xff] %v3443
      %3893 = vst.msk [vmem:[%s201 + $0x374] sm:$0xf] %vm3746, %v3444
      %3894 = vst [vmem:[%s201 + $0x378] sm:$0xff] %v3445
      %3895 = vst.msk [vmem:[%s201 + $0x380] sm:$0xf] %vm3746, %v3446
      %3896 = vst [vmem:[%s201 + $0x384] sm:$0xff] %v3447
      %3897 = vst.msk [vmem:[%s201 + $0x38c] sm:$0xf] %vm3746, %v3448
      %3898 = vst [vmem:[%s201 + $0x390] sm:$0xff] %v3449
      %3899 = vst.msk [vmem:[%s201 + $0x398] sm:$0xf] %vm3746, %v3450
      %3900 = vst [vmem:[%s201 + $0x39c] sm:$0xff] %v3451
      %3901 = vst.msk [vmem:[%s201 + $0x3a4] sm:$0xf] %vm3746, %v3452
      %3902 = vst [vmem:[%s201 + $0x3a8] sm:$0xff] %v3453
      %3903 = vst.msk [vmem:[%s201 + $0x3b0] sm:$0xf] %vm3746, %v3454
      %3904 = vst [vmem:[%s201 + $0x3b4] sm:$0xff] %v3455
      %3905 = vst.msk [vmem:[%s201 + $0x3bc] sm:$0xf] %vm3746, %v3456
      %3906 = vst [vmem:[%s201 + $0x3c0] sm:$0xff] %v3457
      %3907 = vst.msk [vmem:[%s201 + $0x3c8] sm:$0xf] %vm3746, %v3458
      %3908 = vst [vmem:[%s201 + $0x3cc] sm:$0xff] %v3459
      %3909 = vst.msk [vmem:[%s201 + $0x3d4] sm:$0xf] %vm3746, %v3460
      %3910 = vst [vmem:[%s201 + $0x3d8] sm:$0xff] %v3461
      %3911 = vst.msk [vmem:[%s201 + $0x3e0] sm:$0xf] %vm3746, %v3462
      %3912 = vst [vmem:[%s201 + $0x3e4] sm:$0xff] %v3463
      %3913 = vst.msk [vmem:[%s201 + $0x3ec] sm:$0xf] %vm3746, %v3464
      %3914 = vst [vmem:[%s201 + $0x3f0] sm:$0xff] %v3465
      %3915 = vst.msk [vmem:[%s201 + $0x3f8] sm:$0xf] %vm3746, %v3466
      %3916 = vst [vmem:[%s201 + $0x3fc] sm:$0xff] %v3467
      %3917 = vst.msk [vmem:[%s201 + $0x404] sm:$0xf] %vm3746, %v3468
      %3918 = vst [vmem:[%s201 + $0x408] sm:$0xff] %v3469
      %3919 = vst.msk [vmem:[%s201 + $0x410] sm:$0xf] %vm3746, %v3470
      %3920 = vst [vmem:[%s201 + $0x414] sm:$0xff] %v3471
      %3921 = vst.msk [vmem:[%s201 + $0x41c] sm:$0xf] %vm3746, %v3472
      %3922 = vst [vmem:[%s201 + $0x420] sm:$0xff] %v3473
      %3923 = vst.msk [vmem:[%s201 + $0x428] sm:$0xf] %vm3746, %v3474
      %3924 = vst [vmem:[%s201 + $0x42c] sm:$0xff] %v3475
      %3925 = vst.msk [vmem:[%s201 + $0x434] sm:$0xf] %vm3746, %v3476
      %3926 = vst [vmem:[%s201 + $0x438] sm:$0xff] %v3477
      %3927 = vst.msk [vmem:[%s201 + $0x440] sm:$0xf] %vm3746, %v3478
      %3928 = vst [vmem:[%s201 + $0x444] sm:$0xff] %v3479
      %3929 = vst.msk [vmem:[%s201 + $0x44c] sm:$0xf] %vm3746, %v3480
      %3930 = vst [vmem:[%s201 + $0x450] sm:$0xff] %v3481
      %3931 = vst.msk [vmem:[%s201 + $0x458] sm:$0xf] %vm3746, %v3482
      %3932 = vst [vmem:[%s201 + $0x45c] sm:$0xff] %v3483
      %3933 = vst.msk [vmem:[%s201 + $0x464] sm:$0xf] %vm3746, %v3484
      %3934 = vst [vmem:[%s201 + $0x468] sm:$0xff] %v3485
      %3935 = vst.msk [vmem:[%s201 + $0x470] sm:$0xf] %vm3746, %v3486
      %3936 = vst [vmem:[%s201 + $0x474] sm:$0xff] %v3487
      %3937 = vst.msk [vmem:[%s201 + $0x47c] sm:$0xf] %vm3746, %v3488
      %3938 = vst [vmem:[%s201 + $0x480] sm:$0xff] %v3489
      %3939 = vst.msk [vmem:[%s201 + $0x488] sm:$0xf] %vm3746, %v3490
      %3940 = vst [vmem:[%s201 + $0x48c] sm:$0xff] %v3491
      %3941 = vst.msk [vmem:[%s201 + $0x494] sm:$0xf] %vm3746, %v3492
      %3942 = vst [vmem:[%s201 + $0x498] sm:$0xff] %v3493
      %3943 = vst.msk [vmem:[%s201 + $0x4a0] sm:$0xf] %vm3746, %v3494
      %3944 = vst [vmem:[%s201 + $0x4a4] sm:$0xff] %v3495
      %3945 = vst.msk [vmem:[%s201 + $0x4ac] sm:$0xf] %vm3746, %v3496
      %3946 = vst [vmem:[%s201 + $0x4b0] sm:$0xff] %v3497
      %3947 = vst.msk [vmem:[%s201 + $0x4b8] sm:$0xf] %vm3746, %v3498
      %3948 = vst [vmem:[%s201 + $0x4bc] sm:$0xff] %v3499
      %3949 = vst.msk [vmem:[%s201 + $0x4c4] sm:$0xf] %vm3746, %v3500
      %3950 = vst [vmem:[%s201 + $0x4c8] sm:$0xff] %v3501
      %3951 = vst.msk [vmem:[%s201 + $0x4d0] sm:$0xf] %vm3746, %v3502
      %3952 = vst [vmem:[%s201 + $0x4d4] sm:$0xff] %v3503
      %3953 = vst.msk [vmem:[%s201 + $0x4dc] sm:$0xf] %vm3746, %v3504
      %3954 = vst [vmem:[%s201 + $0x4e0] sm:$0xff] %v3505
      %3955 = vst.msk [vmem:[%s201 + $0x4e8] sm:$0xf] %vm3746, %v3506
      %3956 = vst [vmem:[%s201 + $0x4ec] sm:$0xff] %v3507
      %3957 = vst.msk [vmem:[%s201 + $0x4f4] sm:$0xf] %vm3746, %v3508
      %3958 = vst [vmem:[%s201 + $0x4f8] sm:$0xff] %v3509
      %3959 = vst.msk [vmem:[%s201 + $0x500] sm:$0xf] %vm3746, %v3510
      %3960 = vst [vmem:[%s201 + $0x504] sm:$0xff] %v3511
      %3961 = vst.msk [vmem:[%s201 + $0x50c] sm:$0xf] %vm3746, %v3512
      %3962 = vst [vmem:[%s201 + $0x510] sm:$0xff] %v3513
      %3963 = vst.msk [vmem:[%s201 + $0x518] sm:$0xf] %vm3746, %v3514
      %3964 = vst [vmem:[%s201 + $0x51c] sm:$0xff] %v3515
      %3965 = vst.msk [vmem:[%s201 + $0x524] sm:$0xf] %vm3746, %v3516
      %3966 = vst [vmem:[%s201 + $0x528] sm:$0xff] %v3517
      %3967 = vst.msk [vmem:[%s201 + $0x530] sm:$0xf] %vm3746, %v3518
      %3968 = vst [vmem:[%s201 + $0x534] sm:$0xff] %v3519
      %3969 = vst.msk [vmem:[%s201 + $0x53c] sm:$0xf] %vm3746, %v3520
      %s3970 = smul.u32 112, %s15
      %p3971 = scmp.lt.s32.totalorder %s3970, 783
      %s3972 = scalar_select %p3971, %s3970, 783
      %s3973 = smul.addr %s3972, 3
      %s3974 = smul.addr %s3973, 4
      %s3975 = scalar_lea.vmem %s4, %s3974
      // Predicated region
      $region37: #{forward.3} parent=35 // pred_check
        %p3976 = pneg %p122
      $region38: #{forward.3} parent=35 // pred_check_branch
        %3978 = sbr.rel (%p3976) target = $region40
      $region39: #{forward.3} parent=35 // pred_region
        %s3979 = smul.u32 112, %s15
      $region40: #{forward.3} parent=35 // pred_fallthru
        _
    $region36: #{forward.3} parent=5 // pred_fallthru
      _
    %p3980 = scmp.le.s32.totalorder 2, %s10
    // Predicated region
    $region41: #{forward.3} parent=5 // pred_check
      %p3981 = pneg %p3980
    $region42: #{forward.3} parent=5 // pred_check_branch
      %3983 = sbr.rel (%p3981) target = $region44
    $region43: #{forward.3} parent=5 // pred_region
      %s3984 = ssub.s32 %s10, 2
      // Predicated region
      $region45: #{forward.3} parent=43 // pred_check
        %p3985 = pneg %p128
      $region46: #{forward.3} parent=43 // pred_check_branch
        %3987 = sbr.rel (%p3985) target = $region48
      $region47: #{forward.3} parent=43 // pred_region
        %s3988 = smul.u32 112, %s16
        %p3989 = scmp.lt.s32.totalorder %s3988, 783
        %s3990 = scalar_select %p3989, %s3988, 783
        %s3991 = smul.addr %s3990, 3
        %s3992 = smul.addr %s3991, 4
        %s3993 = scalar_lea.vmem %s4, %s3992
      $region48: #{forward.3} parent=43 // pred_fallthru
        _
    $region44: #{forward.3} parent=5 // pred_fallthru
      _
  $region6: #{forward.3} parent=0 // loop_footer
    %s14 = sadd.s32 1, %s10
  $region7: #{forward.3} parent=0 // loop_footer_branch
    %9 = sbr.rel target = $region3
  $region8: #{forward.3} parent=0 // loop_exit
    _

</llo_original>
